<compile_context>
chip_gen: v7x
topology: tpu7x:2x2x1
jax: 0.10.0
libtpu: 0.0.40
codegen_flags: <defaults>
</compile_context>

<pallas_src>
import jax
import jax.numpy as jnp
from jax.experimental import pallas as pl
from jax.experimental.pallas import tpu as pltpu


# -------------------- config (mirrors the PyTorch Config) --------------------
PRE_SEQ_LEN = 10
NUM_HIDDEN_LAYERS = 6
PREFIX_HIDDEN_SIZE = 384
HIDDEN_SIZE = 384
OUT_SIZE = NUM_HIDDEN_LAYERS * 2 * HIDDEN_SIZE  # 4608


def _round_up(x, m):
    return (x + m - 1) // m * m


def _pick_out_tile():
    """Full-width (grid=1) on single-TC chips; half-width (grid=2) on v7x so
    the dominant w2 stream is split across its two TensorCores."""
    try:
        kind = jax.devices()[0].device_kind.lower()
    except Exception:
        kind = ""
    if "v7" in kind:
        return OUT_SIZE // 2  # 2304, still a multiple of 128
    return OUT_SIZE           # 4608 -> grid=(1,)


# ------------------------------ Pallas kernel --------------------------------
def prefix_encoder_kernel(idx_ref, emb_ref, w1_ref, b1_ref, w2_ref, b2_ref, o_ref):
    # idx_ref: (M_pad, 1)   int32  prefix indices (padded rows = 0)
    # emb_ref: (R_pad, D)   bf16   embedding table (rows >= PRE_SEQ_LEN are zero)
    # w1_ref:  (D, P)       bf16
    # b1_ref:  (1, P)       f32
    # w2_ref:  (P, TN)      bf16   current OUT tile of the big projection
    # b2_ref:  (1, TN)      f32
    # o_ref:   (M_pad, TN)  f32
    m_pad = idx_ref.shape[0]
    r_pad = emb_ref.shape[0]

    # MLP hidden over the tiny padded embedding table: (R_pad, P).
    h = jnp.dot(emb_ref[...], w1_ref[...], preferred_element_type=jnp.float32)
    h = jnp.maximum(h + b1_ref[...], 0.0).astype(jnp.bfloat16)

    # Exact per-token row gather of h via a bf16 one-hot matmul on the MXU
    # (0 and 1 are exact in bf16; f32 accumulate => bit-exact row selection).
    iota = jax.lax.broadcasted_iota(jnp.int32, (m_pad, r_pad), 1)
    onehot = (iota == idx_ref[...]).astype(jnp.bfloat16)            # (M_pad, R_pad)
    h_tok = jnp.dot(onehot, h,
                    preferred_element_type=jnp.float32).astype(jnp.bfloat16)

    # Single bf16 MXU matmul per grid step, f32 accumulate + bias.
    o_ref[...] = jnp.dot(h_tok, w2_ref[...],
                         preferred_element_type=jnp.float32) + b2_ref[...]


# ------------------------------ wrapper ---------------------------------------
def prefix_encoder_forward(prefix, emb_table, w1, b1, w2, b2):
    """prefix: (B, L) int indices. Returns (B, L, OUT_SIZE) float32."""
    B, L = prefix.shape
    M = B * L
    M_pad = _round_up(M, 8)
    R_pad = _round_up(PRE_SEQ_LEN, 8)
    D = HIDDEN_SIZE
    P = PREFIX_HIDDEN_SIZE

    TN = _pick_out_tile()
    assert OUT_SIZE % TN == 0 and TN % 128 == 0
    NT = OUT_SIZE // TN

    # bf16 at the boundary: halves the dominant w2 HBM stream. Biases stay f32.
    emb_bf = jnp.zeros((R_pad, D), jnp.bfloat16).at[:PRE_SEQ_LEN].set(
        emb_table.astype(jnp.bfloat16))
    w1_bf = w1.astype(jnp.bfloat16)
    w2_bf = w2.astype(jnp.bfloat16)
    b1_f = b1.reshape(1, P).astype(jnp.float32)
    b2_f = b2.reshape(1, OUT_SIZE).astype(jnp.float32)

    # Row-padded indices (padded rows gather table row 0; sliced off below).
    idx = jnp.zeros((M_pad, 1), jnp.int32).at[:M, 0].set(
        prefix.reshape(-1).astype(jnp.int32))

    flops = (2 * R_pad * D * P               # table @ w1      (per step, tiny)
             + 2 * M_pad * R_pad * P         # one-hot gather  (per step, tiny)
             + 2 * M_pad * P * OUT_SIZE)     # h_tok @ w2      (dominant)
    bytes_accessed = (idx.size * 4 + emb_bf.size * 2 + w1_bf.size * 2
                      + b1_f.size * 4 + w2_bf.size * 2 + b2_f.size * 4
                      + M_pad * OUT_SIZE * 4)

    out_pad = pl.pallas_call(
        prefix_encoder_kernel,
        out_shape=jax.ShapeDtypeStruct((M_pad, OUT_SIZE), jnp.float32),
        grid=(NT,),
        in_specs=[
            pl.BlockSpec((M_pad, 1), lambda j: (0, 0)),
            pl.BlockSpec((R_pad, D), lambda j: (0, 0)),
            pl.BlockSpec((D, P), lambda j: (0, 0)),
            pl.BlockSpec((1, P), lambda j: (0, 0)),
            pl.BlockSpec((P, TN), lambda j: (0, j)),
            pl.BlockSpec((1, TN), lambda j: (0, j)),
        ],
        out_specs=pl.BlockSpec((M_pad, TN), lambda j: (0, j)),
        compiler_params=pltpu.CompilerParams(
            dimension_semantics=("parallel",),
            vmem_limit_bytes=16 << 20,
        ),
        cost_estimate=pl.CostEstimate(
            flops=flops, transcendentals=0, bytes_accessed=bytes_accessed),
    )(idx, emb_bf, w1_bf, b1_f, w2_bf, b2_f)

    return out_pad[:M].reshape(B, L, OUT_SIZE)


# ---------------------------- pure-JAX references ------------------------------
def prefix_encoder_ref_f32(prefix, emb_table, w1, b1, w2, b2):
    x = jnp.take(emb_table, prefix.reshape(-1), axis=0)
    h = jnp.maximum(x @ w1 + b1, 0.0)
    out = h @ w2 + b2
    return out.reshape(prefix.shape[0], prefix.shape[1], OUT_SIZE)


def prefix_encoder_ref_bf16(prefix, emb_table, w1, b1, w2, b2):
    # Matches the kernel's bf16-weight / f32-accumulate numerics.
    x = jnp.take(emb_table.astype(jnp.bfloat16), prefix.reshape(-1), axis=0)
    h = jnp.dot(x, w1.astype(jnp.bfloat16), preferred_element_type=jnp.float32) + b1
    h = jnp.maximum(h, 0.0).astype(jnp.bfloat16)
    out = jnp.dot(h, w2.astype(jnp.bfloat16), preferred_element_type=jnp.float32) + b2
    return out.reshape(prefix.shape[0], prefix.shape[1], OUT_SIZE)


# ---------------------------------- main --------------------------------------
if __name__ == "__main__":
    key = jax.random.PRNGKey(0)
    k_emb, k_w1, k_b1, k_w2, k_b2, k_idx = jax.random.split(key, 6)

    emb_table = jax.random.normal(k_emb, (PRE_SEQ_LEN, HIDDEN_SIZE), jnp.float32) * 0.02
    w1 = jax.random.normal(k_w1, (HIDDEN_SIZE, PREFIX_HIDDEN_SIZE), jnp.float32) * 0.05
    b1 = jax.random.normal(k_b1, (1, PREFIX_HIDDEN_SIZE), jnp.float32) * 0.01
    w2 = jax.random.normal(k_w2, (PREFIX_HIDDEN_SIZE, OUT_SIZE), jnp.float32) * 0.05
    b2 = jax.random.normal(k_b2, (1, OUT_SIZE), jnp.float32) * 0.01

    # Input: (batch=2, prefix_len=10) integer prefix indices in [0, PRE_SEQ_LEN).
    B, L = 2, PRE_SEQ_LEN
    prefix = jax.random.randint(k_idx, (B, L), 0, PRE_SEQ_LEN, dtype=jnp.int32)

    out = prefix_encoder_forward(prefix, emb_table, w1, b1, w2, b2)
    out = jax.block_until_ready(out)
    assert out.shape == (B, L, OUT_SIZE), out.shape

    # Tight check vs. a numerics-matched (bf16 weights, f32 accumulate) reference.
    ref_bf16 = prefix_encoder_ref_bf16(prefix, emb_table, w1, b1, w2, b2)
    assert jnp.allclose(out, ref_bf16, atol=1e-4, rtol=1e-4), "mismatch vs bf16 reference"

    # Sanity check vs. the full-f32 reference (tolerance covers bf16 weight quantization).
    ref_f32 = prefix_encoder_ref_f32(prefix, emb_table, w1, b1, w2, b2)
    assert jnp.allclose(out, ref_f32, atol=3e-3, rtol=3e-2), "mismatch vs f32 reference"

    print("KERNEL_OK")
</pallas_src>

<mosaic_0001>
module attributes {stable_mosaic.version = 11 : i64} {
  func.func @prefix_encoder_kernel(%arg0: i32, %arg1: memref<24x1xi32, #tpu.memory_space<vmem>>, %arg2: memref<16x384xbf16, #tpu.memory_space<vmem>>, %arg3: memref<384x384xbf16, #tpu.memory_space<vmem>>, %arg4: memref<1x384xf32, #tpu.memory_space<vmem>>, %arg5: memref<384x4608xbf16, #tpu.memory_space<vmem>>, %arg6: memref<1x4608xf32, #tpu.memory_space<vmem>>, %arg7: memref<24x4608xf32, #tpu.memory_space<vmem>>) attributes {dimension_semantics = [#tpu.dimension_semantics<parallel>], iteration_bounds = array<i64: 1>, scalar_prefetch = 0 : i64, scratch_operands = 0 : i64, tpu.core_type = #tpu.core_type<tc>, window_params = [{pipeline_mode = #tpu.pipeline_mode<synchronous>, transform_indices = @transform_0, window_bounds = array<i64: 24, 1>}, {pipeline_mode = #tpu.pipeline_mode<synchronous>, transform_indices = @transform_1, window_bounds = array<i64: 16, 384>}, {pipeline_mode = #tpu.pipeline_mode<synchronous>, transform_indices = @transform_2, window_bounds = array<i64: 384, 384>}, {pipeline_mode = #tpu.pipeline_mode<synchronous>, transform_indices = @transform_3, window_bounds = array<i64: 1, 384>}, {transform_indices = @transform_4, window_bounds = array<i64: 384, 4608>}, {transform_indices = @transform_5, window_bounds = array<i64: 1, 4608>}, {transform_indices = @transform_6, window_bounds = array<i64: 24, 4608>}]} {
    %c0 = arith.constant 0 : index
    %c0_0 = arith.constant 0 : index
    %0 = vector.load %arg2[%c0, %c0_0] : memref<16x384xbf16, #tpu.memory_space<vmem>>, vector<16x384xbf16>
    %c0_1 = arith.constant 0 : index
    %c0_2 = arith.constant 0 : index
    %1 = vector.load %arg3[%c0_1, %c0_2] : memref<384x384xbf16, #tpu.memory_space<vmem>>, vector<384x384xbf16>
    %cst = arith.constant dense<0.000000e+00> : vector<16x384xf32>
    %2 = tpu.matmul %0, %1, %cst {dimension_numbers = #tpu.dot_dimension_numbers<[1], [0], [0], [1], [0, 0, 1, 1], [], []>} : vector<16x384xbf16>, vector<384x384xbf16>, vector<16x384xf32> -> vector<16x384xf32>
    %c0_3 = arith.constant 0 : index
    %c0_4 = arith.constant 0 : index
    %3 = vector.load %arg4[%c0_3, %c0_4] : memref<1x384xf32, #tpu.memory_space<vmem>>, vector<1x384xf32>
    %4 = vector.broadcast %3 : vector<1x384xf32> to vector<16x384xf32>
    %5 = arith.addf %2, %4 : vector<16x384xf32>
    %cst_5 = arith.constant 0.000000e+00 : f32
    %6 = vector.broadcast %cst_5 : f32 to vector<16x384xf32>
    %7 = arith.maximumf %5, %6 : vector<16x384xf32>
    %8 = arith.truncf %7 : vector<16x384xf32> to vector<16x384xbf16>
    %9 = tpu.iota {dimensions = array<i32: 1>} : vector<24x16xi32>
    %c0_6 = arith.constant 0 : index
    %c0_7 = arith.constant 0 : index
    %10 = vector.load %arg1[%c0_6, %c0_7] : memref<24x1xi32, #tpu.memory_space<vmem>>, vector<24x1xi32>
    %11 = vector.broadcast %10 : vector<24x1xi32> to vector<24x16xi32>
    %12 = arith.cmpi eq, %9, %11 : vector<24x16xi32>
    %13 = arith.extui %12 : vector<24x16xi1> to vector<24x16xi32>
    %14 = arith.sitofp %13 : vector<24x16xi32> to vector<24x16xf32>
    %15 = arith.truncf %14 : vector<24x16xf32> to vector<24x16xbf16>
    %cst_8 = arith.constant dense<0.000000e+00> : vector<24x384xf32>
    %16 = tpu.matmul %15, %8, %cst_8 {dimension_numbers = #tpu.dot_dimension_numbers<[1], [0], [0], [1], [0, 0, 1, 1], [], []>} : vector<24x16xbf16>, vector<16x384xbf16>, vector<24x384xf32> -> vector<24x384xf32>
    %17 = arith.truncf %16 : vector<24x384xf32> to vector<24x384xbf16>
    %c0_9 = arith.constant 0 : index
    %c0_10 = arith.constant 0 : index
    %18 = vector.load %arg5[%c0_9, %c0_10] : memref<384x4608xbf16, #tpu.memory_space<vmem>>, vector<384x4608xbf16>
    %cst_11 = arith.constant dense<0.000000e+00> : vector<24x4608xf32>
    %19 = tpu.matmul %17, %18, %cst_11 {dimension_numbers = #tpu.dot_dimension_numbers<[1], [0], [0], [1], [0, 0, 1, 1], [], []>} : vector<24x384xbf16>, vector<384x4608xbf16>, vector<24x4608xf32> -> vector<24x4608xf32>
    %c0_12 = arith.constant 0 : index
    %c0_13 = arith.constant 0 : index
    %20 = vector.load %arg6[%c0_12, %c0_13] : memref<1x4608xf32, #tpu.memory_space<vmem>>, vector<1x4608xf32>
    %21 = vector.broadcast %20 : vector<1x4608xf32> to vector<24x4608xf32>
    %22 = arith.addf %19, %21 : vector<24x4608xf32>
    %c0_14 = arith.constant 0 : index
    %c0_15 = arith.constant 0 : index
    %23 = vector.load %arg7[%c0_14, %c0_15] : memref<24x4608xf32, #tpu.memory_space<vmem>>, vector<24x4608xf32>
    tpu.vector_store %arg7[%c0_14, %c0_15], %22 {strides = array<i32>} : memref<24x4608xf32, #tpu.memory_space<vmem>>, vector<24x4608xf32>,
    return
  }
  func.func @transform_0(%arg0: i32) -> (i32, i32) {
    %c0_i32 = arith.constant 0 : i32
    %c0_i32_0 = arith.constant 0 : i32
    %c0_i32_1 = arith.constant 0 : i32
    return %c0_i32, %c0_i32_0 : i32, i32
  }
  func.func @transform_1(%arg0: i32) -> (i32, i32) {
    %c0_i32 = arith.constant 0 : i32
    %c0_i32_0 = arith.constant 0 : i32
    %c0_i32_1 = arith.constant 0 : i32
    return %c0_i32, %c0_i32_0 : i32, i32
  }
  func.func @transform_2(%arg0: i32) -> (i32, i32) {
    %c0_i32 = arith.constant 0 : i32
    %c0_i32_0 = arith.constant 0 : i32
    %c0_i32_1 = arith.constant 0 : i32
    return %c0_i32, %c0_i32_0 : i32, i32
  }
  func.func @transform_3(%arg0: i32) -> (i32, i32) {
    %c0_i32 = arith.constant 0 : i32
    %c0_i32_0 = arith.constant 0 : i32
    %c0_i32_1 = arith.constant 0 : i32
    return %c0_i32, %c0_i32_0 : i32, i32
  }
  func.func @transform_4(%arg0: i32) -> (i32, i32) {
    %c0_i32 = arith.constant 0 : i32
    %c0_i32_0 = arith.constant 0 : i32
    return %c0_i32, %arg0 : i32, i32
  }
  func.func @transform_5(%arg0: i32) -> (i32, i32) {
    %c0_i32 = arith.constant 0 : i32
    %c0_i32_0 = arith.constant 0 : i32
    return %c0_i32, %arg0 : i32, i32
  }
  func.func @transform_6(%arg0: i32) -> (i32, i32) {
    %c0_i32 = arith.constant 0 : i32
    %c0_i32_0 = arith.constant 0 : i32
    return %c0_i32, %arg0 : i32, i32
  }
}

</mosaic_0001>

<llo_original>
// kernel: tpu_custom_call.1
$region0: #{tpu_custom_call.1}
  #allocation0 [shape = 'u32[]', space=smem, size = 0x4, offset = 0x4, fixed_abs, tag = 'smem constant byte address 0x4 - core index']
  #allocation1 [shape = 'u32[144,128]{1,0:T(1,128)}', space=vmem, size = 0x12000, scoped, tag = 'internal scratch']
  %s0 = inlined_call_operand.vmem [shape: s32[24,1], index: 0, kind: input, shape index: {}]
  %s1 = inlined_call_operand.hbm [shape: bf16[16,384], index: 1, kind: input, shape index: {}]
  %s2 = inlined_call_operand.hbm [shape: bf16[384,384], index: 2, kind: input, shape index: {}]
  %s3 = inlined_call_operand.hbm [shape: f32[1,384], index: 3, kind: input, shape index: {}]
  %s4 = inlined_call_operand.hbm [shape: bf16[384,4608], index: 4, kind: input, shape index: {}]
  %s5 = inlined_call_operand.hbm [shape: f32[1,4608], index: 5, kind: input, shape index: {}]
  %s6 = inlined_call_operand.hbm [shape: f32[24,4608], index: 6, kind: output, shape index: {}]
  %s7 = sld [smem:[#allocation0]]
  $region54: #{tpu_custom_call.1} parent=0
    _
  %s9 = ssub.s32 1, %s7
  %s10 = scalar_select 0, %s9, %s7
  $region1: #{tpu_custom_call.1} parent=0
    #allocation2 [shape = 'u8[12288]{0}', space=vmem, size = 0x3000, scoped, tag = 'input window, operand 1, single buffered']
    #allocation3 [shape = 's32[1]{0}', space=sflag, size = 0x4, scoped, tag = 'scoped memory for tpu_custom_call.1']
    #allocation4 [shape = 's32[1]{0}', space=sflag, size = 0x4, scoped, tag = 'scoped memory for tpu_custom_call.1']
    #allocation5 [shape = 'u8[294912]{0}', space=vmem, size = 0x48000, scoped, tag = 'input window, operand 2, single buffered']
    #allocation6 [shape = 's32[1]{0}', space=sflag, size = 0x4, scoped, tag = 'scoped memory for tpu_custom_call.1']
    #allocation7 [shape = 'u8[1536]{0}', space=vmem, size = 0x800, scoped, tag = 'input window, operand 3, single buffered']
    #allocation8 [shape = 'u8[3538944]{0}', space=vmem, size = 0x360000, scoped, tag = 'input window, operand 4, single buffered']
    #allocation9 [shape = 's32[1]{0}', space=sflag, size = 0x4, scoped, tag = 'scoped memory for tpu_custom_call.1']
    #allocation10 [shape = 'u8[18432]{0}', space=vmem, size = 0x4800, scoped, tag = 'input window, operand 5, single buffered']
    #allocation11 [shape = 'u8[442368]{0}', space=vmem, size = 0x6c000, scoped, tag = 'output window, operand 0, single buffered']
    %11 = vsyncpa [#allocation3], 0
    %12 = vsyncpa [#allocation6], 0
    %13 = vsyncpa [#allocation9], 0
    %14 = vsyncpa [#allocation4], 0
    // Predicated region
    $region2: #{tpu_custom_call.1} parent=1 // pred_check
      _
    $region3: #{tpu_custom_call.1} parent=1 // pred_check_branch
      %16 = sbr.rel (0) target = $region5
    $region4: #{tpu_custom_call.1} parent=1 // pred_region
      _
    $region5: #{tpu_custom_call.1} parent=1 // pred_fallthru
      _
    // Predicated region
    $region6: #{tpu_custom_call.1} parent=1 // pred_check
      _
    $region7: #{tpu_custom_call.1} parent=1 // pred_check_branch
      %18 = sbr.rel (0) target = $region9
    $region8: #{tpu_custom_call.1} parent=1 // pred_region
      %s20 = ssub.s32 384, 384
      %21 = vsyncadd [#allocation3], %s20
      %s22 = sshll.u32 [#allocation2], 4
      %s23 = int_to_ptr.vmem [resolvable:$true] %s22
      %28 = dma.hbm_to_vmem [thread:$0]  %s1, 384, %s23, [#allocation3], 192, 192, 12
    $region9: #{tpu_custom_call.1} parent=1 // pred_fallthru
      _
    // Predicated region
    $region10: #{tpu_custom_call.1} parent=1 // pred_check
      _
    $region11: #{tpu_custom_call.1} parent=1 // pred_check_branch
      %30 = sbr.rel (0) target = $region13
    $region12: #{tpu_custom_call.1} parent=1 // pred_region
      %s32 = ssub.s32 9216, 9216
      %33 = vsyncadd [#allocation6], %s32
      %s34 = sshll.u32 [#allocation5], 4
      %s35 = int_to_ptr.vmem [resolvable:$true] %s34
      %40 = dma.hbm_to_vmem [thread:$0]  %s2, 9216, %s35, [#allocation6], 192, 192, 12
    $region13: #{tpu_custom_call.1} parent=1 // pred_fallthru
      _
    // Predicated region
    $region14: #{tpu_custom_call.1} parent=1 // pred_check
      _
    $region15: #{tpu_custom_call.1} parent=1 // pred_check_branch
      %42 = sbr.rel (0) target = $region17
    $region16: #{tpu_custom_call.1} parent=1 // pred_region
      %s44 = ssub.s32 48, 48
      %45 = vsyncadd [#allocation6], %s44
      %s47 = sshll.u32 [#allocation7], 4
      %s48 = int_to_ptr.vmem [resolvable:$true] %s47
      %50 = dma.hbm_to_vmem [thread:$0]  %s3, 48, %s48, [#allocation6]
    $region17: #{tpu_custom_call.1} parent=1 // pred_fallthru
      _
    // Predicated region
    $region18: #{tpu_custom_call.1} parent=1 // pred_check
      _
    $region19: #{tpu_custom_call.1} parent=1 // pred_check_branch
      %52 = sbr.rel (0) target = $region21
    $region20: #{tpu_custom_call.1} parent=1 // pred_region
      %s54 = ssub.s32 110592, 110592
      %55 = vsyncadd [#allocation9], %s54
      %s56 = sshll.u32 [#allocation8], 4
      %s57 = int_to_ptr.vmem [resolvable:$true] %s56
      %62 = dma.hbm_to_vmem [thread:$0]  %s4, 110592, %s57, [#allocation9], 2304, 2304, 144
    $region21: #{tpu_custom_call.1} parent=1 // pred_fallthru
      _
    // Predicated region
    $region22: #{tpu_custom_call.1} parent=1 // pred_check
      _
    $region23: #{tpu_custom_call.1} parent=1 // pred_check_branch
      %64 = sbr.rel (0) target = $region25
    $region24: #{tpu_custom_call.1} parent=1 // pred_region
      %s66 = ssub.s32 576, 576
      %67 = vsyncadd [#allocation9], %s66
      %s69 = sshll.u32 [#allocation10], 4
      %s70 = int_to_ptr.vmem [resolvable:$true] %s69
      %72 = dma.hbm_to_vmem [thread:$0]  %s5, 576, %s70, [#allocation9]
    $region25: #{tpu_custom_call.1} parent=1 // pred_fallthru
      _
    // Predicated region
    $region26: #{tpu_custom_call.1} parent=1 // pred_check
      _
    $region27: #{tpu_custom_call.1} parent=1 // pred_check_branch
      %74 = sbr.rel (0) target = $region29
    $region28: #{tpu_custom_call.1} parent=1 // pred_region
      %75 = dma.done [#allocation3], 384
    $region29: #{tpu_custom_call.1} parent=1 // pred_fallthru
      _
    // Predicated region
    $region30: #{tpu_custom_call.1} parent=1 // pred_check
      _
    $region31: #{tpu_custom_call.1} parent=1 // pred_check_branch
      %77 = sbr.rel (0) target = $region33
    $region32: #{tpu_custom_call.1} parent=1 // pred_region
      %78 = dma.done [#allocation6], 9216
    $region33: #{tpu_custom_call.1} parent=1 // pred_fallthru
      _
    // Predicated region
    $region34: #{tpu_custom_call.1} parent=1 // pred_check
      _
    $region35: #{tpu_custom_call.1} parent=1 // pred_check_branch
      %80 = sbr.rel (0) target = $region37
    $region36: #{tpu_custom_call.1} parent=1 // pred_region
      %81 = dma.done [#allocation6], 48
    $region37: #{tpu_custom_call.1} parent=1 // pred_fallthru
      _
    // Predicated region
    $region38: #{tpu_custom_call.1} parent=1 // pred_check
      _
    $region39: #{tpu_custom_call.1} parent=1 // pred_check_branch
      %83 = sbr.rel (0) target = $region41
    $region40: #{tpu_custom_call.1} parent=1 // pred_region
      %84 = dma.done [#allocation9], 110592
    $region41: #{tpu_custom_call.1} parent=1 // pred_fallthru
      _
    // Predicated region
    $region42: #{tpu_custom_call.1} parent=1 // pred_check
      _
    $region43: #{tpu_custom_call.1} parent=1 // pred_check_branch
      %86 = sbr.rel (0) target = $region45
    $region44: #{tpu_custom_call.1} parent=1 // pred_region
      %87 = dma.done [#allocation9], 576
    $region45: #{tpu_custom_call.1} parent=1 // pred_fallthru
      _
    %v89 = vld [vmem:[#allocation2] sm:$0xff]
    %v90 = vld [vmem:[#allocation2 + $0x8] sm:$0xf]
    %v91 = vld [vmem:[#allocation2 + $0xc] sm:$0xff]
    %v92 = vld [vmem:[#allocation2 + $0x14] sm:$0xf]
    %v93 = vld [vmem:[#allocation5] sm:$0xff]
    %v94 = vld [vmem:[#allocation5 + $0x8] sm:$0xf]
    %v95 = vld [vmem:[#allocation5 + $0xc] sm:$0xff]
    %v96 = vld [vmem:[#allocation5 + $0x14] sm:$0xf]
    %v97 = vld [vmem:[#allocation5 + $0x18] sm:$0xff]
    %v98 = vld [vmem:[#allocation5 + $0x20] sm:$0xf]
    %v99 = vld [vmem:[#allocation5 + $0x24] sm:$0xff]
    %v100 = vld [vmem:[#allocation5 + $0x2c] sm:$0xf]
    %v101 = vld [vmem:[#allocation5 + $0x30] sm:$0xff]
    %v102 = vld [vmem:[#allocation5 + $0x38] sm:$0xf]
    %v103 = vld [vmem:[#allocation5 + $0x3c] sm:$0xff]
    %v104 = vld [vmem:[#allocation5 + $0x44] sm:$0xf]
    %v105 = vld [vmem:[#allocation5 + $0x48] sm:$0xff]
    %v106 = vld [vmem:[#allocation5 + $0x50] sm:$0xf]
    %v107 = vld [vmem:[#allocation5 + $0x54] sm:$0xff]
    %v108 = vld [vmem:[#allocation5 + $0x5c] sm:$0xf]
    %v109 = vld [vmem:[#allocation5 + $0x60] sm:$0xff]
    %v110 = vld [vmem:[#allocation5 + $0x68] sm:$0xf]
    %v111 = vld [vmem:[#allocation5 + $0x6c] sm:$0xff]
    %v112 = vld [vmem:[#allocation5 + $0x74] sm:$0xf]
    %v113 = vld [vmem:[#allocation5 + $0x78] sm:$0xff]
    %v114 = vld [vmem:[#allocation5 + $0x80] sm:$0xf]
    %v115 = vld [vmem:[#allocation5 + $0x84] sm:$0xff]
    %v116 = vld [vmem:[#allocation5 + $0x8c] sm:$0xf]
    %v117 = vld [vmem:[#allocation5 + $0x90] sm:$0xff]
    %v118 = vld [vmem:[#allocation5 + $0x98] sm:$0xf]
    %v119 = vld [vmem:[#allocation5 + $0x9c] sm:$0xff]
    %v120 = vld [vmem:[#allocation5 + $0xa4] sm:$0xf]
    %v121 = vld [vmem:[#allocation5 + $0xa8] sm:$0xff]
    %v122 = vld [vmem:[#allocation5 + $0xb0] sm:$0xf]
    %v123 = vld [vmem:[#allocation5 + $0xb4] sm:$0xff]
    %v124 = vld [vmem:[#allocation5 + $0xbc] sm:$0xf]
    %v125 = vld [vmem:[#allocation5 + $0xc0] sm:$0xff]
    %v126 = vld [vmem:[#allocation5 + $0xc8] sm:$0xf]
    %v127 = vld [vmem:[#allocation5 + $0xcc] sm:$0xff]
    %v128 = vld [vmem:[#allocation5 + $0xd4] sm:$0xf]
    %v129 = vld [vmem:[#allocation5 + $0xd8] sm:$0xff]
    %v130 = vld [vmem:[#allocation5 + $0xe0] sm:$0xf]
    %v131 = vld [vmem:[#allocation5 + $0xe4] sm:$0xff]
    %v132 = vld [vmem:[#allocation5 + $0xec] sm:$0xf]
    %v133 = vld [vmem:[#allocation5 + $0xf0] sm:$0xff]
    %v134 = vld [vmem:[#allocation5 + $0xf8] sm:$0xf]
    %v135 = vld [vmem:[#allocation5 + $0xfc] sm:$0xff]
    %v136 = vld [vmem:[#allocation5 + $0x104] sm:$0xf]
    %v137 = vld [vmem:[#allocation5 + $0x108] sm:$0xff]
    %v138 = vld [vmem:[#allocation5 + $0x110] sm:$0xf]
    %v139 = vld [vmem:[#allocation5 + $0x114] sm:$0xff]
    %v140 = vld [vmem:[#allocation5 + $0x11c] sm:$0xf]
    %v141 = vld [vmem:[#allocation5 + $0x120] sm:$0xff]
    %v142 = vld [vmem:[#allocation5 + $0x128] sm:$0xf]
    %v143 = vld [vmem:[#allocation5 + $0x12c] sm:$0xff]
    %v144 = vld [vmem:[#allocation5 + $0x134] sm:$0xf]
    %v145 = vld [vmem:[#allocation5 + $0x138] sm:$0xff]
    %v146 = vld [vmem:[#allocation5 + $0x140] sm:$0xf]
    %v147 = vld [vmem:[#allocation5 + $0x144] sm:$0xff]
    %v148 = vld [vmem:[#allocation5 + $0x14c] sm:$0xf]
    %v149 = vld [vmem:[#allocation5 + $0x150] sm:$0xff]
    %v150 = vld [vmem:[#allocation5 + $0x158] sm:$0xf]
    %v151 = vld [vmem:[#allocation5 + $0x15c] sm:$0xff]
    %v152 = vld [vmem:[#allocation5 + $0x164] sm:$0xf]
    %v153 = vld [vmem:[#allocation5 + $0x168] sm:$0xff]
    %v154 = vld [vmem:[#allocation5 + $0x170] sm:$0xf]
    %v155 = vld [vmem:[#allocation5 + $0x174] sm:$0xff]
    %v156 = vld [vmem:[#allocation5 + $0x17c] sm:$0xf]
    %v157 = vld [vmem:[#allocation5 + $0x180] sm:$0xff]
    %v158 = vld [vmem:[#allocation5 + $0x188] sm:$0xf]
    %v159 = vld [vmem:[#allocation5 + $0x18c] sm:$0xff]
    %v160 = vld [vmem:[#allocation5 + $0x194] sm:$0xf]
    %v161 = vld [vmem:[#allocation5 + $0x198] sm:$0xff]
    %v162 = vld [vmem:[#allocation5 + $0x1a0] sm:$0xf]
    %v163 = vld [vmem:[#allocation5 + $0x1a4] sm:$0xff]
    %v164 = vld [vmem:[#allocation5 + $0x1ac] sm:$0xf]
    %v165 = vld [vmem:[#allocation5 + $0x1b0] sm:$0xff]
    %v166 = vld [vmem:[#allocation5 + $0x1b8] sm:$0xf]
    %v167 = vld [vmem:[#allocation5 + $0x1bc] sm:$0xff]
    %v168 = vld [vmem:[#allocation5 + $0x1c4] sm:$0xf]
    %v169 = vld [vmem:[#allocation5 + $0x1c8] sm:$0xff]
    %v170 = vld [vmem:[#allocation5 + $0x1d0] sm:$0xf]
    %v171 = vld [vmem:[#allocation5 + $0x1d4] sm:$0xff]
    %v172 = vld [vmem:[#allocation5 + $0x1dc] sm:$0xf]
    %v173 = vld [vmem:[#allocation5 + $0x1e0] sm:$0xff]
    %v174 = vld [vmem:[#allocation5 + $0x1e8] sm:$0xf]
    %v175 = vld [vmem:[#allocation5 + $0x1ec] sm:$0xff]
    %v176 = vld [vmem:[#allocation5 + $0x1f4] sm:$0xf]
    %v177 = vld [vmem:[#allocation5 + $0x1f8] sm:$0xff]
    %v178 = vld [vmem:[#allocation5 + $0x200] sm:$0xf]
    %v179 = vld [vmem:[#allocation5 + $0x204] sm:$0xff]
    %v180 = vld [vmem:[#allocation5 + $0x20c] sm:$0xf]
    %v181 = vld [vmem:[#allocation5 + $0x210] sm:$0xff]
    %v182 = vld [vmem:[#allocation5 + $0x218] sm:$0xf]
    %v183 = vld [vmem:[#allocation5 + $0x21c] sm:$0xff]
    %v184 = vld [vmem:[#allocation5 + $0x224] sm:$0xf]
    %v185 = vld [vmem:[#allocation5 + $0x228] sm:$0xff]
    %v186 = vld [vmem:[#allocation5 + $0x230] sm:$0xf]
    %v187 = vld [vmem:[#allocation5 + $0x234] sm:$0xff]
    %v188 = vld [vmem:[#allocation5 + $0x23c] sm:$0xf]
    %v189 = vld [vmem:[#allocation7] sm:$0x7]
    %v191 = vlaneseq
    %v192 = vshrl.u32 %v191, 7
    %v193 = vsub.s32 0, %v192
    %v194 = vrot.slane %v189, %v193
    %v195 = vlaneseq
    %v196 = vshrl.u32 %v195, 7
    %v197 = vsub.s32 1, %v196
    %v198 = vrot.slane %v189, %v197
    %v199 = vlaneseq
    %v200 = vshrl.u32 %v199, 7
    %v201 = vsub.s32 2, %v200
    %v202 = vrot.slane %v189, %v201
    %v210 = vunpack.c.l.b16 %v89
    %v211 = vunpack.c.h.b16 %v89
    %v212 = vunpack.c.l.b16 %v90
    %v213 = vunpack.c.l.b16 %v91
    %v214 = vunpack.c.h.b16 %v91
    %v215 = vunpack.c.l.b16 %v92
    %v216 = vpack.c.b16 %v213, %v210
    %v217 = vpack.c.b16 %v214, %v211
    %v218 = vpack.c.b16 %v215, %v212
    %v318 = vunpack.c.l.b16 %v93
    %v319 = vunpack.c.h.b16 %v93
    %v320 = vunpack.c.l.b16 %v94
    %v321 = vunpack.c.l.b16 %v95
    %v322 = vunpack.c.h.b16 %v95
    %v323 = vunpack.c.l.b16 %v96
    %v324 = vunpack.c.l.b16 %v97
    %v325 = vunpack.c.h.b16 %v97
    %v326 = vunpack.c.l.b16 %v98
    %v327 = vunpack.c.l.b16 %v99
    %v328 = vunpack.c.h.b16 %v99
    %v329 = vunpack.c.l.b16 %v100
    %v330 = vunpack.c.l.b16 %v101
    %v331 = vunpack.c.h.b16 %v101
    %v332 = vunpack.c.l.b16 %v102
    %v333 = vunpack.c.l.b16 %v103
    %v334 = vunpack.c.h.b16 %v103
    %v335 = vunpack.c.l.b16 %v104
    %v336 = vunpack.c.l.b16 %v105
    %v337 = vunpack.c.h.b16 %v105
    %v338 = vunpack.c.l.b16 %v106
    %v339 = vunpack.c.l.b16 %v107
    %v340 = vunpack.c.h.b16 %v107
    %v341 = vunpack.c.l.b16 %v108
    %v342 = vunpack.c.l.b16 %v109
    %v343 = vunpack.c.h.b16 %v109
    %v344 = vunpack.c.l.b16 %v110
    %v345 = vunpack.c.l.b16 %v111
    %v346 = vunpack.c.h.b16 %v111
    %v347 = vunpack.c.l.b16 %v112
    %v348 = vunpack.c.l.b16 %v113
    %v349 = vunpack.c.h.b16 %v113
    %v350 = vunpack.c.l.b16 %v114
    %v351 = vunpack.c.l.b16 %v115
    %v352 = vunpack.c.h.b16 %v115
    %v353 = vunpack.c.l.b16 %v116
    %v354 = vunpack.c.l.b16 %v117
    %v355 = vunpack.c.h.b16 %v117
    %v356 = vunpack.c.l.b16 %v118
    %v357 = vunpack.c.l.b16 %v119
    %v358 = vunpack.c.h.b16 %v119
    %v359 = vunpack.c.l.b16 %v120
    %v360 = vunpack.c.l.b16 %v121
    %v361 = vunpack.c.h.b16 %v121
    %v362 = vunpack.c.l.b16 %v122
    %v363 = vunpack.c.l.b16 %v123
    %v364 = vunpack.c.h.b16 %v123
    %v365 = vunpack.c.l.b16 %v124
    %v366 = vunpack.c.l.b16 %v125
    %v367 = vunpack.c.h.b16 %v125
    %v368 = vunpack.c.l.b16 %v126
    %v369 = vunpack.c.l.b16 %v127
    %v370 = vunpack.c.h.b16 %v127
    %v371 = vunpack.c.l.b16 %v128
    %v372 = vunpack.c.l.b16 %v129
    %v373 = vunpack.c.h.b16 %v129
    %v374 = vunpack.c.l.b16 %v130
    %v375 = vunpack.c.l.b16 %v131
    %v376 = vunpack.c.h.b16 %v131
    %v377 = vunpack.c.l.b16 %v132
    %v378 = vunpack.c.l.b16 %v133
    %v379 = vunpack.c.h.b16 %v133
    %v380 = vunpack.c.l.b16 %v134
    %v381 = vunpack.c.l.b16 %v135
    %v382 = vunpack.c.h.b16 %v135
    %v383 = vunpack.c.l.b16 %v136
    %v384 = vunpack.c.l.b16 %v137
    %v385 = vunpack.c.h.b16 %v137
    %v386 = vunpack.c.l.b16 %v138
    %v387 = vunpack.c.l.b16 %v139
    %v388 = vunpack.c.h.b16 %v139
    %v389 = vunpack.c.l.b16 %v140
    %v390 = vunpack.c.l.b16 %v141
    %v391 = vunpack.c.h.b16 %v141
    %v392 = vunpack.c.l.b16 %v142
    %v393 = vunpack.c.l.b16 %v143
    %v394 = vunpack.c.h.b16 %v143
    %v395 = vunpack.c.l.b16 %v144
    %v396 = vunpack.c.l.b16 %v145
    %v397 = vunpack.c.h.b16 %v145
    %v398 = vunpack.c.l.b16 %v146
    %v399 = vunpack.c.l.b16 %v147
    %v400 = vunpack.c.h.b16 %v147
    %v401 = vunpack.c.l.b16 %v148
    %v402 = vunpack.c.l.b16 %v149
    %v403 = vunpack.c.h.b16 %v149
    %v404 = vunpack.c.l.b16 %v150
    %v405 = vunpack.c.l.b16 %v151
    %v406 = vunpack.c.h.b16 %v151
    %v407 = vunpack.c.l.b16 %v152
    %v408 = vunpack.c.l.b16 %v153
    %v409 = vunpack.c.h.b16 %v153
    %v410 = vunpack.c.l.b16 %v154
    %v411 = vunpack.c.l.b16 %v155
    %v412 = vunpack.c.h.b16 %v155
    %v413 = vunpack.c.l.b16 %v156
    %v414 = vunpack.c.l.b16 %v157
    %v415 = vunpack.c.h.b16 %v157
    %v416 = vunpack.c.l.b16 %v158
    %v417 = vunpack.c.l.b16 %v159
    %v418 = vunpack.c.h.b16 %v159
    %v419 = vunpack.c.l.b16 %v160
    %v420 = vunpack.c.l.b16 %v161
    %v421 = vunpack.c.h.b16 %v161
    %v422 = vunpack.c.l.b16 %v162
    %v423 = vunpack.c.l.b16 %v163
    %v424 = vunpack.c.h.b16 %v163
    %v425 = vunpack.c.l.b16 %v164
    %v426 = vunpack.c.l.b16 %v165
    %v427 = vunpack.c.h.b16 %v165
    %v428 = vunpack.c.l.b16 %v166
    %v429 = vunpack.c.l.b16 %v167
    %v430 = vunpack.c.h.b16 %v167
    %v431 = vunpack.c.l.b16 %v168
    %v432 = vunpack.c.l.b16 %v169
    %v433 = vunpack.c.h.b16 %v169
    %v434 = vunpack.c.l.b16 %v170
    %v435 = vunpack.c.l.b16 %v171
    %v436 = vunpack.c.h.b16 %v171
    %v437 = vunpack.c.l.b16 %v172
    %v438 = vunpack.c.l.b16 %v173
    %v439 = vunpack.c.h.b16 %v173
    %v440 = vunpack.c.l.b16 %v174
    %v441 = vunpack.c.l.b16 %v175
    %v442 = vunpack.c.h.b16 %v175
    %v443 = vunpack.c.l.b16 %v176
    %v444 = vunpack.c.l.b16 %v177
    %v445 = vunpack.c.h.b16 %v177
    %v446 = vunpack.c.l.b16 %v178
    %v447 = vunpack.c.l.b16 %v179
    %v448 = vunpack.c.h.b16 %v179
    %v449 = vunpack.c.l.b16 %v180
    %v450 = vunpack.c.l.b16 %v181
    %v451 = vunpack.c.h.b16 %v181
    %v452 = vunpack.c.l.b16 %v182
    %v453 = vunpack.c.l.b16 %v183
    %v454 = vunpack.c.h.b16 %v183
    %v455 = vunpack.c.l.b16 %v184
    %v456 = vunpack.c.l.b16 %v185
    %v457 = vunpack.c.h.b16 %v185
    %v458 = vunpack.c.l.b16 %v186
    %v459 = vunpack.c.l.b16 %v187
    %v460 = vunpack.c.h.b16 %v187
    %v461 = vunpack.c.l.b16 %v188
    %v462 = vpack.c.b16 %v321, %v318
    %v463 = vpack.c.b16 %v322, %v319
    %v464 = vpack.c.b16 %v323, %v320
    %v465 = vpack.c.b16 %v327, %v324
    %v466 = vpack.c.b16 %v328, %v325
    %v467 = vpack.c.b16 %v329, %v326
    %v468 = vpack.c.b16 %v333, %v330
    %v469 = vpack.c.b16 %v334, %v331
    %v470 = vpack.c.b16 %v335, %v332
    %v471 = vpack.c.b16 %v339, %v336
    %v472 = vpack.c.b16 %v340, %v337
    %v473 = vpack.c.b16 %v341, %v338
    %v474 = vpack.c.b16 %v345, %v342
    %v475 = vpack.c.b16 %v346, %v343
    %v476 = vpack.c.b16 %v347, %v344
    %v477 = vpack.c.b16 %v351, %v348
    %v478 = vpack.c.b16 %v352, %v349
    %v479 = vpack.c.b16 %v353, %v350
    %v480 = vpack.c.b16 %v357, %v354
    %v481 = vpack.c.b16 %v358, %v355
    %v482 = vpack.c.b16 %v359, %v356
    %v483 = vpack.c.b16 %v363, %v360
    %v484 = vpack.c.b16 %v364, %v361
    %v485 = vpack.c.b16 %v365, %v362
    %v486 = vpack.c.b16 %v369, %v366
    %v487 = vpack.c.b16 %v370, %v367
    %v488 = vpack.c.b16 %v371, %v368
    %v489 = vpack.c.b16 %v375, %v372
    %v490 = vpack.c.b16 %v376, %v373
    %v491 = vpack.c.b16 %v377, %v374
    %v492 = vpack.c.b16 %v381, %v378
    %v493 = vpack.c.b16 %v382, %v379
    %v494 = vpack.c.b16 %v383, %v380
    %v495 = vpack.c.b16 %v387, %v384
    %v496 = vpack.c.b16 %v388, %v385
    %v497 = vpack.c.b16 %v389, %v386
    %v498 = vpack.c.b16 %v393, %v390
    %v499 = vpack.c.b16 %v394, %v391
    %v500 = vpack.c.b16 %v395, %v392
    %v501 = vpack.c.b16 %v399, %v396
    %v502 = vpack.c.b16 %v400, %v397
    %v503 = vpack.c.b16 %v401, %v398
    %v504 = vpack.c.b16 %v405, %v402
    %v505 = vpack.c.b16 %v406, %v403
    %v506 = vpack.c.b16 %v407, %v404
    %v507 = vpack.c.b16 %v411, %v408
    %v508 = vpack.c.b16 %v412, %v409
    %v509 = vpack.c.b16 %v413, %v410
    %v510 = vpack.c.b16 %v417, %v414
    %v511 = vpack.c.b16 %v418, %v415
    %v512 = vpack.c.b16 %v419, %v416
    %v513 = vpack.c.b16 %v423, %v420
    %v514 = vpack.c.b16 %v424, %v421
    %v515 = vpack.c.b16 %v425, %v422
    %v516 = vpack.c.b16 %v429, %v426
    %v517 = vpack.c.b16 %v430, %v427
    %v518 = vpack.c.b16 %v431, %v428
    %v519 = vpack.c.b16 %v435, %v432
    %v520 = vpack.c.b16 %v436, %v433
    %v521 = vpack.c.b16 %v437, %v434
    %v522 = vpack.c.b16 %v441, %v438
    %v523 = vpack.c.b16 %v442, %v439
    %v524 = vpack.c.b16 %v443, %v440
    %v525 = vpack.c.b16 %v447, %v444
    %v526 = vpack.c.b16 %v448, %v445
    %v527 = vpack.c.b16 %v449, %v446
    %v528 = vpack.c.b16 %v453, %v450
    %v529 = vpack.c.b16 %v454, %v451
    %v530 = vpack.c.b16 %v455, %v452
    %v531 = vpack.c.b16 %v459, %v456
    %v532 = vpack.c.b16 %v460, %v457
    %v533 = vpack.c.b16 %v461, %v458
    %606 = vmatprep.subr.bf16.mxu0 %v463
    %607 = vmatpush1.bf16.msra.mxu0 %v462
    %608 = vmatprep.subr.bf16.mxu0 %v466
    %609 = vmatpush1.bf16.msra.mxu0 %v465
    %610 = vmatprep.subr.bf16.mxu0 %v469
    %611 = vmatpush1.bf16.msra.mxu0 %v468
    %612 = vmatprep.subr.bf16.mxu0 %v472
    %613 = vmatpush1.bf16.msra.mxu0 %v471
    %614 = vmatprep.subr.bf16.mxu0 %v475
    %615 = vmatpush1.bf16.msra.mxu0 %v474
    %616 = vmatprep.subr.bf16.mxu0 %v478
    %617 = vmatpush1.bf16.msra.mxu0 %v477
    %618 = vmatprep.subr.bf16.mxu0 %v481
    %619 = vmatpush1.bf16.msra.mxu0 %v480
    %620 = vmatprep.subr.bf16.mxu0 %v484
    %621 = vmatpush1.bf16.msra.mxu0 %v483
    %622 = vmatprep.subr.bf16.mxu0 %v487
    %623 = vmatpush1.bf16.msra.mxu0 %v486
    %624 = vmatprep.subr.bf16.mxu0 %v490
    %625 = vmatpush1.bf16.msra.mxu0 %v489
    %626 = vmatprep.subr.bf16.mxu0 %v493
    %627 = vmatpush1.bf16.msra.mxu0 %v492
    %628 = vmatprep.subr.bf16.mxu0 %v496
    %629 = vmatpush1.bf16.msra.mxu0 %v495
    %630 = vmatprep.subr.bf16.mxu0 %v499
    %631 = vmatpush1.bf16.msra.mxu0 %v498
    %632 = vmatprep.subr.bf16.mxu0 %v502
    %633 = vmatpush1.bf16.msra.mxu0 %v501
    %634 = vmatprep.subr.bf16.mxu0 %v505
    %635 = vmatpush1.bf16.msra.mxu0 %v504
    %636 = vmatprep.subr.bf16.mxu0 %v508
    %637 = vmatpush1.bf16.msra.mxu0 %v507
    %638 = vmatprep.mubr.bf16.mxu0 %v217
    %639 = vmatmul.mubr.bf16.gmra.mrb[0].mxu0 %v216
    %v640 = vpop.f32.mrb[0].mxu0
    %v641 = vadd.f32 %v194, %v640
    %v642 = vpop.f32.mrb[0].mxu0
    %v643 = vadd.f32 %v198, %v642
    %v644 = vpop.f32.mrb[0].mxu0
    %v645 = vadd.f32 %v194, %v644
    %v646 = vpop.f32.mrb[0].mxu0
    %v647 = vadd.f32 %v198, %v646
    %648 = vdwg.mxu0
    %649 = vmatprep.subr.bf16.mxu0 %v511
    %650 = vmatpush1.bf16.msra.mxu0 %v510
    %651 = vmatprep.subr.bf16.mxu0 %v514
    %652 = vmatpush1.bf16.msra.mxu0 %v513
    %653 = vmatprep.subr.bf16.mxu0 %v517
    %654 = vmatpush1.bf16.msra.mxu0 %v516
    %655 = vmatprep.subr.bf16.mxu0 %v520
    %656 = vmatpush1.bf16.msra.mxu0 %v519
    %657 = vmatprep.subr.bf16.mxu0 %v523
    %658 = vmatpush1.bf16.msra.mxu0 %v522
    %659 = vmatprep.subr.bf16.mxu0 %v526
    %660 = vmatpush1.bf16.msra.mxu0 %v525
    %661 = vmatprep.subr.bf16.mxu0 %v529
    %662 = vmatpush1.bf16.msra.mxu0 %v528
    %663 = vmatprep.subr.bf16.mxu0 %v532
    %664 = vmatpush1.bf16.msra.mxu0 %v531
    %665 = vmatprep.subr.bf16.mxu0 0
    %666 = vmatpush1.bf16.msra.mxu0 0
    %667 = vmatprep.subr.bf16.mxu0 0
    %668 = vmatpush1.bf16.msra.mxu0 0
    %669 = vmatprep.subr.bf16.mxu0 0
    %670 = vmatpush1.bf16.msra.mxu0 0
    %671 = vmatprep.subr.bf16.mxu0 0
    %672 = vmatpush1.bf16.msra.mxu0 0
    %673 = vmatprep.subr.bf16.mxu0 0
    %674 = vmatpush1.bf16.msra.mxu0 0
    %675 = vmatprep.subr.bf16.mxu0 0
    %676 = vmatpush1.bf16.msra.mxu0 0
    %677 = vmatprep.subr.bf16.mxu0 0
    %678 = vmatpush1.bf16.msra.mxu0 0
    %679 = vmatprep.subr.bf16.mxu0 0
    %680 = vmatpush1.bf16.msra.mxu0 0
    %681 = vmatprep.mubr.bf16.mxu0 0
    %682 = vmatmul.mubr.bf16.gmra.mrb[0].mxu0 %v218
    %v683 = vpop.f32.mrb[0].mxu0
    %v684 = vadd.f32 %v641, %v683
    %v685 = vpop.f32.mrb[0].mxu0
    %v686 = vadd.f32 %v643, %v685
    %v687 = vpop.f32.mrb[0].mxu0
    %v688 = vadd.f32 %v645, %v687
    %v689 = vpop.f32.mrb[0].mxu0
    %v690 = vadd.f32 %v647, %v689
    %691 = vdwg.mxu0
    %692 = vmatprep.subr.bf16.mxu0 0
    %693 = vmatpush1.bf16.msra.mxu0 %v464
    %694 = vmatprep.subr.bf16.mxu0 0
    %695 = vmatpush1.bf16.msra.mxu0 %v467
    %696 = vmatprep.subr.bf16.mxu0 0
    %697 = vmatpush1.bf16.msra.mxu0 %v470
    %698 = vmatprep.subr.bf16.mxu0 0
    %699 = vmatpush1.bf16.msra.mxu0 %v473
    %700 = vmatprep.subr.bf16.mxu0 0
    %701 = vmatpush1.bf16.msra.mxu0 %v476
    %702 = vmatprep.subr.bf16.mxu0 0
    %703 = vmatpush1.bf16.msra.mxu0 %v479
    %704 = vmatprep.subr.bf16.mxu0 0
    %705 = vmatpush1.bf16.msra.mxu0 %v482
    %706 = vmatprep.subr.bf16.mxu0 0
    %707 = vmatpush1.bf16.msra.mxu0 %v485
    %708 = vmatprep.subr.bf16.mxu0 0
    %709 = vmatpush1.bf16.msra.mxu0 %v488
    %710 = vmatprep.subr.bf16.mxu0 0
    %711 = vmatpush1.bf16.msra.mxu0 %v491
    %712 = vmatprep.subr.bf16.mxu0 0
    %713 = vmatpush1.bf16.msra.mxu0 %v494
    %714 = vmatprep.subr.bf16.mxu0 0
    %715 = vmatpush1.bf16.msra.mxu0 %v497
    %716 = vmatprep.subr.bf16.mxu0 0
    %717 = vmatpush1.bf16.msra.mxu0 %v500
    %718 = vmatprep.subr.bf16.mxu0 0
    %719 = vmatpush1.bf16.msra.mxu0 %v503
    %720 = vmatprep.subr.bf16.mxu0 0
    %721 = vmatpush1.bf16.msra.mxu0 %v506
    %722 = vmatprep.subr.bf16.mxu0 0
    %723 = vmatpush1.bf16.msra.mxu0 %v509
    %724 = vmatprep.mubr.bf16.mxu0 %v217
    %725 = vmatmul.mubr.bf16.gmra.mrb[0].mxu0 %v216
    %v726 = vpop.f32.mrb[0].mxu0
    %v727 = vadd.f32 %v202, %v726
    %v728 = vpop.f32.mrb[0].mxu0
    %v729 = vpop.f32.mrb[0].mxu0
    %v730 = vadd.f32 %v202, %v729
    %v731 = vpop.f32.mrb[0].mxu0
    %732 = vdwg.mxu0
    %733 = vmatprep.subr.bf16.mxu0 0
    %734 = vmatpush1.bf16.msra.mxu0 %v512
    %735 = vmatprep.subr.bf16.mxu0 0
    %736 = vmatpush1.bf16.msra.mxu0 %v515
    %737 = vmatprep.subr.bf16.mxu0 0
    %738 = vmatpush1.bf16.msra.mxu0 %v518
    %739 = vmatprep.subr.bf16.mxu0 0
    %740 = vmatpush1.bf16.msra.mxu0 %v521
    %741 = vmatprep.subr.bf16.mxu0 0
    %742 = vmatpush1.bf16.msra.mxu0 %v524
    %743 = vmatprep.subr.bf16.mxu0 0
    %744 = vmatpush1.bf16.msra.mxu0 %v527
    %745 = vmatprep.subr.bf16.mxu0 0
    %746 = vmatpush1.bf16.msra.mxu0 %v530
    %747 = vmatprep.subr.bf16.mxu0 0
    %748 = vmatpush1.bf16.msra.mxu0 %v533
    %749 = vmatprep.subr.bf16.mxu0 0
    %750 = vmatpush1.bf16.msra.mxu0 0
    %751 = vmatprep.subr.bf16.mxu0 0
    %752 = vmatpush1.bf16.msra.mxu0 0
    %753 = vmatprep.subr.bf16.mxu0 0
    %754 = vmatpush1.bf16.msra.mxu0 0
    %755 = vmatprep.subr.bf16.mxu0 0
    %756 = vmatpush1.bf16.msra.mxu0 0
    %757 = vmatprep.subr.bf16.mxu0 0
    %758 = vmatpush1.bf16.msra.mxu0 0
    %759 = vmatprep.subr.bf16.mxu0 0
    %760 = vmatpush1.bf16.msra.mxu0 0
    %761 = vmatprep.subr.bf16.mxu0 0
    %762 = vmatpush1.bf16.msra.mxu0 0
    %763 = vmatprep.subr.bf16.mxu0 0
    %764 = vmatpush1.bf16.msra.mxu0 0
    %765 = vmatprep.mubr.bf16.mxu0 0
    %766 = vmatmul.mubr.bf16.gmra.mrb[0].mxu0 %v218
    %v767 = vpop.f32.mrb[0].mxu0
    %v768 = vadd.f32 %v727, %v767
    %v769 = vpop.f32.mrb[0].mxu0
    %v770 = vpop.f32.mrb[0].mxu0
    %v771 = vadd.f32 %v730, %v770
    %v772 = vpop.f32.mrb[0].mxu0
    %773 = vdwg.mxu0
    %v774 = vmax.f32 %v684, 0.0
    %v775 = vmax.f32 %v686, 0.0
    %v776 = vmax.f32 %v768, 0.0
    %v777 = vmax.f32 %v688, 0.0
    %v778 = vmax.f32 %v690, 0.0
    %v779 = vmax.f32 %v771, 0.0
    %v780 = vpack.c.bf16 %v777, %v774
    %v781 = vpack.c.bf16 %v778, %v775
    %v782 = vpack.c.bf16 %v779, %v776
    %v783 = vlaneseq
    %v784 = vand.u32 %v783, 127
    %v785 = vld [vmem:[%s0] sm:$0xff]
    %v786 = vld [vmem:[%s0 + $0x8] sm:$0xff]
    %v787 = vld [vmem:[%s0 + $0x10] sm:$0xff]
    %788 = vset.pattern.permute.xlu0 0
    %789 = vperm.xlu0 %788, %v785
    %v790 = vpop.permute.xlu0 %789
    %791 = vset.pattern.permute.xlu0 0
    %792 = vperm.xlu0 %791, %v786
    %v793 = vpop.permute.xlu0 %792
    %794 = vset.pattern.permute.xlu0 0
    %795 = vperm.xlu0 %794, %v787
    %v796 = vpop.permute.xlu0 %795
    %vm797 = vcmp.eq.s32.totalorder %v784, %v790
    %vm798 = vcmp.eq.s32.totalorder %v784, %v793
    %vm799 = vcmp.eq.s32.totalorder %v784, %v796
    %v800 = vsel %vm797, 1, 0
    %v801 = vsel %vm798, 1, 0
    %v802 = vsel %vm799, 1, 0
    %v803 = vcvt.s32.f32 %v800
    %v804 = vcvt.s32.f32 %v801
    %v805 = vcvt.s32.f32 %v802
    %v806 = vpack.c.bf16 %v804, %v803
    %v807 = vpack.c.bf16 %v805, %v805
    %vm808 = vcmask 130048
    %v810 = vsel %vm808, %v806, 0
    %v813 = vsel %vm808, %v807, 0
    %815 = vmatprep.subr.bf16.mxu0 %v781
    %816 = vmatpush1.bf16.msra.mxu0 %v780
    %817 = vmatprep.subr.bf16.mxu0 0
    %818 = vmatpush1.bf16.msra.mxu0 0
    %819 = vmatprep.subr.bf16.mxu0 0
    %820 = vmatpush1.bf16.msra.mxu0 0
    %821 = vmatprep.subr.bf16.mxu0 0
    %822 = vmatpush1.bf16.msra.mxu0 0
    %823 = vmatprep.subr.bf16.mxu0 0
    %824 = vmatpush1.bf16.msra.mxu0 0
    %825 = vmatprep.subr.bf16.mxu0 0
    %826 = vmatpush1.bf16.msra.mxu0 0
    %827 = vmatprep.subr.bf16.mxu0 0
    %828 = vmatpush1.bf16.msra.mxu0 0
    %829 = vmatprep.subr.bf16.mxu0 0
    %830 = vmatpush1.bf16.msra.mxu0 0
    %831 = vmatprep.subr.bf16.mxu0 0
    %832 = vmatpush1.bf16.msra.mxu0 0
    %833 = vmatprep.subr.bf16.mxu0 0
    %834 = vmatpush1.bf16.msra.mxu0 0
    %835 = vmatprep.subr.bf16.mxu0 0
    %836 = vmatpush1.bf16.msra.mxu0 0
    %837 = vmatprep.subr.bf16.mxu0 0
    %838 = vmatpush1.bf16.msra.mxu0 0
    %839 = vmatprep.subr.bf16.mxu0 0
    %840 = vmatpush1.bf16.msra.mxu0 0
    %841 = vmatprep.subr.bf16.mxu0 0
    %842 = vmatpush1.bf16.msra.mxu0 0
    %843 = vmatprep.subr.bf16.mxu0 0
    %844 = vmatpush1.bf16.msra.mxu0 0
    %845 = vmatprep.subr.bf16.mxu0 0
    %846 = vmatpush1.bf16.msra.mxu0 0
    %847 = vmatprep.mubr.bf16.mxu0 0
    %848 = vmatmul.mubr.bf16.gmra.mrb[0].mxu0 %v810
    %v849 = vpop.f32.mrb[0].mxu0
    %v850 = vadd.f32 0.0, %v849
    %v851 = vpop.f32.mrb[0].mxu0
    %v852 = vadd.f32 0.0, %v851
    %v853 = vpop.f32.mrb[0].mxu0
    %v854 = vadd.f32 0.0, %v853
    %v855 = vpop.f32.mrb[0].mxu0
    %v856 = vadd.f32 0.0, %v855
    %857 = vmatprep.mubr.bf16.mxu0 0
    %858 = vmatmul.mubr.bf16.gmra.mrb[0].mxu0 %v813
    %v859 = vpop.f32.mrb[0].mxu0
    %v860 = vadd.f32 0.0, %v859
    %v861 = vpop.f32.mrb[0].mxu0
    %v862 = vadd.f32 0.0, %v861
    %v863 = vpop.f32.mrb[0].mxu0
    %v864 = vpop.f32.mrb[0].mxu0
    %865 = vdwg.mxu0
    %866 = vmatprep.subr.bf16.mxu0 0
    %867 = vmatpush1.bf16.msra.mxu0 %v782
    %868 = vmatprep.subr.bf16.mxu0 0
    %869 = vmatpush1.bf16.msra.mxu0 0
    %870 = vmatprep.subr.bf16.mxu0 0
    %871 = vmatpush1.bf16.msra.mxu0 0
    %872 = vmatprep.subr.bf16.mxu0 0
    %873 = vmatpush1.bf16.msra.mxu0 0
    %874 = vmatprep.subr.bf16.mxu0 0
    %875 = vmatpush1.bf16.msra.mxu0 0
    %876 = vmatprep.subr.bf16.mxu0 0
    %877 = vmatpush1.bf16.msra.mxu0 0
    %878 = vmatprep.subr.bf16.mxu0 0
    %879 = vmatpush1.bf16.msra.mxu0 0
    %880 = vmatprep.subr.bf16.mxu0 0
    %881 = vmatpush1.bf16.msra.mxu0 0
    %882 = vmatprep.subr.bf16.mxu0 0
    %883 = vmatpush1.bf16.msra.mxu0 0
    %884 = vmatprep.subr.bf16.mxu0 0
    %885 = vmatpush1.bf16.msra.mxu0 0
    %886 = vmatprep.subr.bf16.mxu0 0
    %887 = vmatpush1.bf16.msra.mxu0 0
    %888 = vmatprep.subr.bf16.mxu0 0
    %889 = vmatpush1.bf16.msra.mxu0 0
    %890 = vmatprep.subr.bf16.mxu0 0
    %891 = vmatpush1.bf16.msra.mxu0 0
    %892 = vmatprep.subr.bf16.mxu0 0
    %893 = vmatpush1.bf16.msra.mxu0 0
    %894 = vmatprep.subr.bf16.mxu0 0
    %895 = vmatpush1.bf16.msra.mxu0 0
    %896 = vmatprep.subr.bf16.mxu0 0
    %897 = vmatpush1.bf16.msra.mxu0 0
    %898 = vmatprep.mubr.bf16.mxu0 0
    %899 = vmatmul.mubr.bf16.gmra.mrb[0].mxu0 %v810
    %v900 = vpop.f32.mrb[0].mxu0
    %v901 = vadd.f32 0.0, %v900
    %v902 = vpop.f32.mrb[0].mxu0
    %v903 = vpop.f32.mrb[0].mxu0
    %v904 = vadd.f32 0.0, %v903
    %v905 = vpop.f32.mrb[0].mxu0
    %906 = vmatprep.mubr.bf16.mxu0 0
    %907 = vmatmul.mubr.bf16.gmra.mrb[0].mxu0 %v813
    %v908 = vpop.f32.mrb[0].mxu0
    %v909 = vadd.f32 0.0, %v908
    %v910 = vpop.f32.mrb[0].mxu0
    %v911 = vpop.f32.mrb[0].mxu0
    %v912 = vpop.f32.mrb[0].mxu0
    %913 = vdwg.mxu0
    %v914 = vpack.c.bf16 %v854, %v850
    %v915 = vpack.c.bf16 %v856, %v852
    %v916 = vpack.c.bf16 %v904, %v901
    %v917 = vpack.c.bf16 %v860, %v860
    %v918 = vpack.c.bf16 %v862, %v862
    %v919 = vpack.c.bf16 %v909, %v909
    %v920 = vld [vmem:[#allocation8] sm:$0xff]
    %v921 = vld [vmem:[#allocation8 + $0x8] sm:$0xff]
    %v922 = vld [vmem:[#allocation8 + $0x10] sm:$0xff]
    %v923 = vld [vmem:[#allocation8 + $0x18] sm:$0xff]
    %v924 = vld [vmem:[#allocation8 + $0x20] sm:$0xff]
    %v925 = vld [vmem:[#allocation8 + $0x28] sm:$0xff]
    %v926 = vld [vmem:[#allocation8 + $0x30] sm:$0xff]
    %v927 = vld [vmem:[#allocation8 + $0x38] sm:$0xff]
    %v928 = vld [vmem:[#allocation8 + $0x40] sm:$0xff]
    %v929 = vld [vmem:[#allocation8 + $0x48] sm:$0xff]
    %v930 = vld [vmem:[#allocation8 + $0x50] sm:$0xff]
    %v931 = vld [vmem:[#allocation8 + $0x58] sm:$0xff]
    %v932 = vld [vmem:[#allocation8 + $0x60] sm:$0xff]
    %v933 = vld [vmem:[#allocation8 + $0x68] sm:$0xff]
    %v934 = vld [vmem:[#allocation8 + $0x70] sm:$0xff]
    %v935 = vld [vmem:[#allocation8 + $0x78] sm:$0xff]
    %v936 = vld [vmem:[#allocation8 + $0x80] sm:$0xff]
    %v937 = vld [vmem:[#allocation8 + $0x88] sm:$0xff]
    %v938 = vld [vmem:[#allocation8 + $0x90] sm:$0xff]
    %v939 = vld [vmem:[#allocation8 + $0x98] sm:$0xff]
    %v940 = vld [vmem:[#allocation8 + $0xa0] sm:$0xff]
    %v941 = vld [vmem:[#allocation8 + $0xa8] sm:$0xff]
    %v942 = vld [vmem:[#allocation8 + $0xb0] sm:$0xff]
    %v943 = vld [vmem:[#allocation8 + $0xb8] sm:$0xff]
    %v944 = vld [vmem:[#allocation8 + $0xc0] sm:$0xff]
    %v945 = vld [vmem:[#allocation8 + $0xc8] sm:$0xff]
    %v946 = vld [vmem:[#allocation8 + $0xd0] sm:$0xff]
    %v947 = vld [vmem:[#allocation8 + $0xd8] sm:$0xff]
    %v948 = vld [vmem:[#allocation8 + $0xe0] sm:$0xff]
    %v949 = vld [vmem:[#allocation8 + $0xe8] sm:$0xff]
    %v950 = vld [vmem:[#allocation8 + $0xf0] sm:$0xff]
    %v951 = vld [vmem:[#allocation8 + $0xf8] sm:$0xff]
    %v952 = vld [vmem:[#allocation8 + $0x100] sm:$0xff]
    %v953 = vld [vmem:[#allocation8 + $0x108] sm:$0xff]
    %v954 = vld [vmem:[#allocation8 + $0x110] sm:$0xff]
    %v955 = vld [vmem:[#allocation8 + $0x118] sm:$0xff]
    %v956 = vld [vmem:[#allocation8 + $0x120] sm:$0xff]
    %v957 = vld [vmem:[#allocation8 + $0x128] sm:$0xff]
    %v958 = vld [vmem:[#allocation8 + $0x130] sm:$0xff]
    %v959 = vld [vmem:[#allocation8 + $0x138] sm:$0xff]
    %v960 = vld [vmem:[#allocation8 + $0x140] sm:$0xff]
    %v961 = vld [vmem:[#allocation8 + $0x148] sm:$0xff]
    %v962 = vld [vmem:[#allocation8 + $0x150] sm:$0xff]
    %v963 = vld [vmem:[#allocation8 + $0x158] sm:$0xff]
    %v964 = vld [vmem:[#allocation8 + $0x160] sm:$0xff]
    %v965 = vld [vmem:[#allocation8 + $0x168] sm:$0xff]
    %v966 = vld [vmem:[#allocation8 + $0x170] sm:$0xff]
    %v967 = vld [vmem:[#allocation8 + $0x178] sm:$0xff]
    %v968 = vld [vmem:[#allocation8 + $0x180] sm:$0xff]
    %v969 = vld [vmem:[#allocation8 + $0x188] sm:$0xff]
    %v970 = vld [vmem:[#allocation8 + $0x190] sm:$0xff]
    %v971 = vld [vmem:[#allocation8 + $0x198] sm:$0xff]
    %v972 = vld [vmem:[#allocation8 + $0x1a0] sm:$0xff]
    %v973 = vld [vmem:[#allocation8 + $0x1a8] sm:$0xff]
    %v974 = vld [vmem:[#allocation8 + $0x1b0] sm:$0xff]
    %v975 = vld [vmem:[#allocation8 + $0x1b8] sm:$0xff]
    %v976 = vld [vmem:[#allocation8 + $0x1c0] sm:$0xff]
    %v977 = vld [vmem:[#allocation8 + $0x1c8] sm:$0xff]
    %v978 = vld [vmem:[#allocation8 + $0x1d0] sm:$0xff]
    %v979 = vld [vmem:[#allocation8 + $0x1d8] sm:$0xff]
    %v980 = vld [vmem:[#allocation8 + $0x1e0] sm:$0xff]
    %v981 = vld [vmem:[#allocation8 + $0x1e8] sm:$0xff]
    %v982 = vld [vmem:[#allocation8 + $0x1f0] sm:$0xff]
    %v983 = vld [vmem:[#allocation8 + $0x1f8] sm:$0xff]
    %v984 = vld [vmem:[#allocation8 + $0x200] sm:$0xff]
    %v985 = vld [vmem:[#allocation8 + $0x208] sm:$0xff]
    %v986 = vld [vmem:[#allocation8 + $0x210] sm:$0xff]
    %v987 = vld [vmem:[#allocation8 + $0x218] sm:$0xff]
    %v988 = vld [vmem:[#allocation8 + $0x220] sm:$0xff]
    %v989 = vld [vmem:[#allocation8 + $0x228] sm:$0xff]
    %v990 = vld [vmem:[#allocation8 + $0x230] sm:$0xff]
    %v991 = vld [vmem:[#allocation8 + $0x238] sm:$0xff]
    %v992 = vld [vmem:[#allocation8 + $0x240] sm:$0xff]
    %v993 = vld [vmem:[#allocation8 + $0x248] sm:$0xff]
    %v994 = vld [vmem:[#allocation8 + $0x250] sm:$0xff]
    %v995 = vld [vmem:[#allocation8 + $0x258] sm:$0xff]
    %v996 = vld [vmem:[#allocation8 + $0x260] sm:$0xff]
    %v997 = vld [vmem:[#allocation8 + $0x268] sm:$0xff]
    %v998 = vld [vmem:[#allocation8 + $0x270] sm:$0xff]
    %v999 = vld [vmem:[#allocation8 + $0x278] sm:$0xff]
    %v1000 = vld [vmem:[#allocation8 + $0x280] sm:$0xff]
    %v1001 = vld [vmem:[#allocation8 + $0x288] sm:$0xff]
    %v1002 = vld [vmem:[#allocation8 + $0x290] sm:$0xff]
    %v1003 = vld [vmem:[#allocation8 + $0x298] sm:$0xff]
    %v1004 = vld [vmem:[#allocation8 + $0x2a0] sm:$0xff]
    %v1005 = vld [vmem:[#allocation8 + $0x2a8] sm:$0xff]
    %v1006 = vld [vmem:[#allocation8 + $0x2b0] sm:$0xff]
    %v1007 = vld [vmem:[#allocation8 + $0x2b8] sm:$0xff]
    %v1008 = vld [vmem:[#allocation8 + $0x2c0] sm:$0xff]
    %v1009 = vld [vmem:[#allocation8 + $0x2c8] sm:$0xff]
    %v1010 = vld [vmem:[#allocation8 + $0x2d0] sm:$0xff]
    %v1011 = vld [vmem:[#allocation8 + $0x2d8] sm:$0xff]
    %v1012 = vld [vmem:[#allocation8 + $0x2e0] sm:$0xff]
    %v1013 = vld [vmem:[#allocation8 + $0x2e8] sm:$0xff]
    %v1014 = vld [vmem:[#allocation8 + $0x2f0] sm:$0xff]
    %v1015 = vld [vmem:[#allocation8 + $0x2f8] sm:$0xff]
    %v1016 = vld [vmem:[#allocation8 + $0x300] sm:$0xff]
    %v1017 = vld [vmem:[#allocation8 + $0x308] sm:$0xff]
    %v1018 = vld [vmem:[#allocation8 + $0x310] sm:$0xff]
    %v1019 = vld [vmem:[#allocation8 + $0x318] sm:$0xff]
    %v1020 = vld [vmem:[#allocation8 + $0x320] sm:$0xff]
    %v1021 = vld [vmem:[#allocation8 + $0x328] sm:$0xff]
    %v1022 = vld [vmem:[#allocation8 + $0x330] sm:$0xff]
    %v1023 = vld [vmem:[#allocation8 + $0x338] sm:$0xff]
    %v1024 = vld [vmem:[#allocation8 + $0x340] sm:$0xff]
    %v1025 = vld [vmem:[#allocation8 + $0x348] sm:$0xff]
    %v1026 = vld [vmem:[#allocation8 + $0x350] sm:$0xff]
    %v1027 = vld [vmem:[#allocation8 + $0x358] sm:$0xff]
    %v1028 = vld [vmem:[#allocation8 + $0x360] sm:$0xff]
    %v1029 = vld [vmem:[#allocation8 + $0x368] sm:$0xff]
    %v1030 = vld [vmem:[#allocation8 + $0x370] sm:$0xff]
    %v1031 = vld [vmem:[#allocation8 + $0x378] sm:$0xff]
    %v1032 = vld [vmem:[#allocation8 + $0x380] sm:$0xff]
    %v1033 = vld [vmem:[#allocation8 + $0x388] sm:$0xff]
    %v1034 = vld [vmem:[#allocation8 + $0x390] sm:$0xff]
    %v1035 = vld [vmem:[#allocation8 + $0x398] sm:$0xff]
    %v1036 = vld [vmem:[#allocation8 + $0x3a0] sm:$0xff]
    %v1037 = vld [vmem:[#allocation8 + $0x3a8] sm:$0xff]
    %v1038 = vld [vmem:[#allocation8 + $0x3b0] sm:$0xff]
    %v1039 = vld [vmem:[#allocation8 + $0x3b8] sm:$0xff]
    %v1040 = vld [vmem:[#allocation8 + $0x3c0] sm:$0xff]
    %v1041 = vld [vmem:[#allocation8 + $0x3c8] sm:$0xff]
    %v1042 = vld [vmem:[#allocation8 + $0x3d0] sm:$0xff]
    %v1043 = vld [vmem:[#allocation8 + $0x3d8] sm:$0xff]
    %v1044 = vld [vmem:[#allocation8 + $0x3e0] sm:$0xff]
    %v1045 = vld [vmem:[#allocation8 + $0x3e8] sm:$0xff]
    %v1046 = vld [vmem:[#allocation8 + $0x3f0] sm:$0xff]
    %v1047 = vld [vmem:[#allocation8 + $0x3f8] sm:$0xff]
    %v1048 = vld [vmem:[#allocation8 + $0x400] sm:$0xff]
    %v1049 = vld [vmem:[#allocation8 + $0x408] sm:$0xff]
    %v1050 = vld [vmem:[#allocation8 + $0x410] sm:$0xff]
    %v1051 = vld [vmem:[#allocation8 + $0x418] sm:$0xff]
    %v1052 = vld [vmem:[#allocation8 + $0x420] sm:$0xff]
    %v1053 = vld [vmem:[#allocation8 + $0x428] sm:$0xff]
    %v1054 = vld [vmem:[#allocation8 + $0x430] sm:$0xff]
    %v1055 = vld [vmem:[#allocation8 + $0x438] sm:$0xff]
    %v1056 = vld [vmem:[#allocation8 + $0x440] sm:$0xff]
    %v1057 = vld [vmem:[#allocation8 + $0x448] sm:$0xff]
    %v1058 = vld [vmem:[#allocation8 + $0x450] sm:$0xff]
    %v1059 = vld [vmem:[#allocation8 + $0x458] sm:$0xff]
    %v1060 = vld [vmem:[#allocation8 + $0x460] sm:$0xff]
    %v1061 = vld [vmem:[#allocation8 + $0x468] sm:$0xff]
    %v1062 = vld [vmem:[#allocation8 + $0x470] sm:$0xff]
    %v1063 = vld [vmem:[#allocation8 + $0x478] sm:$0xff]
    %v1064 = vld [vmem:[#allocation8 + $0x480] sm:$0xff]
    %v1065 = vld [vmem:[#allocation8 + $0x488] sm:$0xff]
    %v1066 = vld [vmem:[#allocation8 + $0x490] sm:$0xff]
    %v1067 = vld [vmem:[#allocation8 + $0x498] sm:$0xff]
    %v1068 = vld [vmem:[#allocation8 + $0x4a0] sm:$0xff]
    %v1069 = vld [vmem:[#allocation8 + $0x4a8] sm:$0xff]
    %v1070 = vld [vmem:[#allocation8 + $0x4b0] sm:$0xff]
    %v1071 = vld [vmem:[#allocation8 + $0x4b8] sm:$0xff]
    %v1072 = vld [vmem:[#allocation8 + $0x4c0] sm:$0xff]
    %v1073 = vld [vmem:[#allocation8 + $0x4c8] sm:$0xff]
    %v1074 = vld [vmem:[#allocation8 + $0x4d0] sm:$0xff]
    %v1075 = vld [vmem:[#allocation8 + $0x4d8] sm:$0xff]
    %v1076 = vld [vmem:[#allocation8 + $0x4e0] sm:$0xff]
    %v1077 = vld [vmem:[#allocation8 + $0x4e8] sm:$0xff]
    %v1078 = vld [vmem:[#allocation8 + $0x4f0] sm:$0xff]
    %v1079 = vld [vmem:[#allocation8 + $0x4f8] sm:$0xff]
    %v1080 = vld [vmem:[#allocation8 + $0x500] sm:$0xff]
    %v1081 = vld [vmem:[#allocation8 + $0x508] sm:$0xff]
    %v1082 = vld [vmem:[#allocation8 + $0x510] sm:$0xff]
    %v1083 = vld [vmem:[#allocation8 + $0x518] sm:$0xff]
    %v1084 = vld [vmem:[#allocation8 + $0x520] sm:$0xff]
    %v1085 = vld [vmem:[#allocation8 + $0x528] sm:$0xff]
    %v1086 = vld [vmem:[#allocation8 + $0x530] sm:$0xff]
    %v1087 = vld [vmem:[#allocation8 + $0x538] sm:$0xff]
    %v1088 = vld [vmem:[#allocation8 + $0x540] sm:$0xff]
    %v1089 = vld [vmem:[#allocation8 + $0x548] sm:$0xff]
    %v1090 = vld [vmem:[#allocation8 + $0x550] sm:$0xff]
    %v1091 = vld [vmem:[#allocation8 + $0x558] sm:$0xff]
    %v1092 = vld [vmem:[#allocation8 + $0x560] sm:$0xff]
    %v1093 = vld [vmem:[#allocation8 + $0x568] sm:$0xff]
    %v1094 = vld [vmem:[#allocation8 + $0x570] sm:$0xff]
    %v1095 = vld [vmem:[#allocation8 + $0x578] sm:$0xff]
    %v1096 = vld [vmem:[#allocation8 + $0x580] sm:$0xff]
    %v1097 = vld [vmem:[#allocation8 + $0x588] sm:$0xff]
    %v1098 = vld [vmem:[#allocation8 + $0x590] sm:$0xff]
    %v1099 = vld [vmem:[#allocation8 + $0x598] sm:$0xff]
    %v1100 = vld [vmem:[#allocation8 + $0x5a0] sm:$0xff]
    %v1101 = vld [vmem:[#allocation8 + $0x5a8] sm:$0xff]
    %v1102 = vld [vmem:[#allocation8 + $0x5b0] sm:$0xff]
    %v1103 = vld [vmem:[#allocation8 + $0x5b8] sm:$0xff]
    %v1104 = vld [vmem:[#allocation8 + $0x5c0] sm:$0xff]
    %v1105 = vld [vmem:[#allocation8 + $0x5c8] sm:$0xff]
    %v1106 = vld [vmem:[#allocation8 + $0x5d0] sm:$0xff]
    %v1107 = vld [vmem:[#allocation8 + $0x5d8] sm:$0xff]
    %v1108 = vld [vmem:[#allocation8 + $0x5e0] sm:$0xff]
    %v1109 = vld [vmem:[#allocation8 + $0x5e8] sm:$0xff]
    %v1110 = vld [vmem:[#allocation8 + $0x5f0] sm:$0xff]
    %v1111 = vld [vmem:[#allocation8 + $0x5f8] sm:$0xff]
    %v1112 = vld [vmem:[#allocation8 + $0x600] sm:$0xff]
    %v1113 = vld [vmem:[#allocation8 + $0x608] sm:$0xff]
    %v1114 = vld [vmem:[#allocation8 + $0x610] sm:$0xff]
    %v1115 = vld [vmem:[#allocation8 + $0x618] sm:$0xff]
    %v1116 = vld [vmem:[#allocation8 + $0x620] sm:$0xff]
    %v1117 = vld [vmem:[#allocation8 + $0x628] sm:$0xff]
    %v1118 = vld [vmem:[#allocation8 + $0x630] sm:$0xff]
    %v1119 = vld [vmem:[#allocation8 + $0x638] sm:$0xff]
    %v1120 = vld [vmem:[#allocation8 + $0x640] sm:$0xff]
    %v1121 = vld [vmem:[#allocation8 + $0x648] sm:$0xff]
    %v1122 = vld [vmem:[#allocation8 + $0x650] sm:$0xff]
    %v1123 = vld [vmem:[#allocation8 + $0x658] sm:$0xff]
    %v1124 = vld [vmem:[#allocation8 + $0x660] sm:$0xff]
    %v1125 = vld [vmem:[#allocation8 + $0x668] sm:$0xff]
    %v1126 = vld [vmem:[#allocation8 + $0x670] sm:$0xff]
    %v1127 = vld [vmem:[#allocation8 + $0x678] sm:$0xff]
    %v1128 = vld [vmem:[#allocation8 + $0x680] sm:$0xff]
    %v1129 = vld [vmem:[#allocation8 + $0x688] sm:$0xff]
    %v1130 = vld [vmem:[#allocation8 + $0x690] sm:$0xff]
    %v1131 = vld [vmem:[#allocation8 + $0x698] sm:$0xff]
    %v1132 = vld [vmem:[#allocation8 + $0x6a0] sm:$0xff]
    %v1133 = vld [vmem:[#allocation8 + $0x6a8] sm:$0xff]
    %v1134 = vld [vmem:[#allocation8 + $0x6b0] sm:$0xff]
    %v1135 = vld [vmem:[#allocation8 + $0x6b8] sm:$0xff]
    %v1136 = vld [vmem:[#allocation8 + $0x6c0] sm:$0xff]
    %v1137 = vld [vmem:[#allocation8 + $0x6c8] sm:$0xff]
    %v1138 = vld [vmem:[#allocation8 + $0x6d0] sm:$0xff]
    %v1139 = vld [vmem:[#allocation8 + $0x6d8] sm:$0xff]
    %v1140 = vld [vmem:[#allocation8 + $0x6e0] sm:$0xff]
    %v1141 = vld [vmem:[#allocation8 + $0x6e8] sm:$0xff]
    %v1142 = vld [vmem:[#allocation8 + $0x6f0] sm:$0xff]
    %v1143 = vld [vmem:[#allocation8 + $0x6f8] sm:$0xff]
    %v1144 = vld [vmem:[#allocation8 + $0x700] sm:$0xff]
    %v1145 = vld [vmem:[#allocation8 + $0x708] sm:$0xff]
    %v1146 = vld [vmem:[#allocation8 + $0x710] sm:$0xff]
    %v1147 = vld [vmem:[#allocation8 + $0x718] sm:$0xff]
    %v1148 = vld [vmem:[#allocation8 + $0x720] sm:$0xff]
    %v1149 = vld [vmem:[#allocation8 + $0x728] sm:$0xff]
    %v1150 = vld [vmem:[#allocation8 + $0x730] sm:$0xff]
    %v1151 = vld [vmem:[#allocation8 + $0x738] sm:$0xff]
    %v1152 = vld [vmem:[#allocation8 + $0x740] sm:$0xff]
    %v1153 = vld [vmem:[#allocation8 + $0x748] sm:$0xff]
    %v1154 = vld [vmem:[#allocation8 + $0x750] sm:$0xff]
    %v1155 = vld [vmem:[#allocation8 + $0x758] sm:$0xff]
    %v1156 = vld [vmem:[#allocation8 + $0x760] sm:$0xff]
    %v1157 = vld [vmem:[#allocation8 + $0x768] sm:$0xff]
    %v1158 = vld [vmem:[#allocation8 + $0x770] sm:$0xff]
    %v1159 = vld [vmem:[#allocation8 + $0x778] sm:$0xff]
    %v1160 = vld [vmem:[#allocation8 + $0x780] sm:$0xff]
    %v1161 = vld [vmem:[#allocation8 + $0x788] sm:$0xff]
    %v1162 = vld [vmem:[#allocation8 + $0x790] sm:$0xff]
    %v1163 = vld [vmem:[#allocation8 + $0x798] sm:$0xff]
    %v1164 = vld [vmem:[#allocation8 + $0x7a0] sm:$0xff]
    %v1165 = vld [vmem:[#allocation8 + $0x7a8] sm:$0xff]
    %v1166 = vld [vmem:[#allocation8 + $0x7b0] sm:$0xff]
    %v1167 = vld [vmem:[#allocation8 + $0x7b8] sm:$0xff]
    %v1168 = vld [vmem:[#allocation8 + $0x7c0] sm:$0xff]
    %v1169 = vld [vmem:[#allocation8 + $0x7c8] sm:$0xff]
    %v1170 = vld [vmem:[#allocation8 + $0x7d0] sm:$0xff]
    %v1171 = vld [vmem:[#allocation8 + $0x7d8] sm:$0xff]
    %v1172 = vld [vmem:[#allocation8 + $0x7e0] sm:$0xff]
    %v1173 = vld [vmem:[#allocation8 + $0x7e8] sm:$0xff]
    %v1174 = vld [vmem:[#allocation8 + $0x7f0] sm:$0xff]
    %v1175 = vld [vmem:[#allocation8 + $0x7f8] sm:$0xff]
    %v1176 = vld [vmem:[#allocation8 + $0x800] sm:$0xff]
    %v1177 = vld [vmem:[#allocation8 + $0x808] sm:$0xff]
    %v1178 = vld [vmem:[#allocation8 + $0x810] sm:$0xff]
    %v1179 = vld [vmem:[#allocation8 + $0x818] sm:$0xff]
    %v1180 = vld [vmem:[#allocation8 + $0x820] sm:$0xff]
    %v1181 = vld [vmem:[#allocation8 + $0x828] sm:$0xff]
    %v1182 = vld [vmem:[#allocation8 + $0x830] sm:$0xff]
    %v1183 = vld [vmem:[#allocation8 + $0x838] sm:$0xff]
    %v1184 = vld [vmem:[#allocation8 + $0x840] sm:$0xff]
    %v1185 = vld [vmem:[#allocation8 + $0x848] sm:$0xff]
    %v1186 = vld [vmem:[#allocation8 + $0x850] sm:$0xff]
    %v1187 = vld [vmem:[#allocation8 + $0x858] sm:$0xff]
    %v1188 = vld [vmem:[#allocation8 + $0x860] sm:$0xff]
    %v1189 = vld [vmem:[#allocation8 + $0x868] sm:$0xff]
    %v1190 = vld [vmem:[#allocation8 + $0x870] sm:$0xff]
    %v1191 = vld [vmem:[#allocation8 + $0x878] sm:$0xff]
    %v1192 = vld [vmem:[#allocation8 + $0x880] sm:$0xff]
    %v1193 = vld [vmem:[#allocation8 + $0x888] sm:$0xff]
    %v1194 = vld [vmem:[#allocation8 + $0x890] sm:$0xff]
    %v1195 = vld [vmem:[#allocation8 + $0x898] sm:$0xff]
    %v1196 = vld [vmem:[#allocation8 + $0x8a0] sm:$0xff]
    %v1197 = vld [vmem:[#allocation8 + $0x8a8] sm:$0xff]
    %v1198 = vld [vmem:[#allocation8 + $0x8b0] sm:$0xff]
    %v1199 = vld [vmem:[#allocation8 + $0x8b8] sm:$0xff]
    %v1200 = vld [vmem:[#allocation8 + $0x8c0] sm:$0xff]
    %v1201 = vld [vmem:[#allocation8 + $0x8c8] sm:$0xff]
    %v1202 = vld [vmem:[#allocation8 + $0x8d0] sm:$0xff]
    %v1203 = vld [vmem:[#allocation8 + $0x8d8] sm:$0xff]
    %v1204 = vld [vmem:[#allocation8 + $0x8e0] sm:$0xff]
    %v1205 = vld [vmem:[#allocation8 + $0x8e8] sm:$0xff]
    %v1206 = vld [vmem:[#allocation8 + $0x8f0] sm:$0xff]
    %v1207 = vld [vmem:[#allocation8 + $0x8f8] sm:$0xff]
    %v1208 = vld [vmem:[#allocation8 + $0x900] sm:$0xff]
    %v1209 = vld [vmem:[#allocation8 + $0x908] sm:$0xff]
    %v1210 = vld [vmem:[#allocation8 + $0x910] sm:$0xff]
    %v1211 = vld [vmem:[#allocation8 + $0x918] sm:$0xff]
    %v1212 = vld [vmem:[#allocation8 + $0x920] sm:$0xff]
    %v1213 = vld [vmem:[#allocation8 + $0x928] sm:$0xff]
    %v1214 = vld [vmem:[#allocation8 + $0x930] sm:$0xff]
    %v1215 = vld [vmem:[#allocation8 + $0x938] sm:$0xff]
    %v1216 = vld [vmem:[#allocation8 + $0x940] sm:$0xff]
    %v1217 = vld [vmem:[#allocation8 + $0x948] sm:$0xff]
    %v1218 = vld [vmem:[#allocation8 + $0x950] sm:$0xff]
    %v1219 = vld [vmem:[#allocation8 + $0x958] sm:$0xff]
    %v1220 = vld [vmem:[#allocation8 + $0x960] sm:$0xff]
    %v1221 = vld [vmem:[#allocation8 + $0x968] sm:$0xff]
    %v1222 = vld [vmem:[#allocation8 + $0x970] sm:$0xff]
    %v1223 = vld [vmem:[#allocation8 + $0x978] sm:$0xff]
    %v1224 = vld [vmem:[#allocation8 + $0x980] sm:$0xff]
    %v1225 = vld [vmem:[#allocation8 + $0x988] sm:$0xff]
    %v1226 = vld [vmem:[#allocation8 + $0x990] sm:$0xff]
    %v1227 = vld [vmem:[#allocation8 + $0x998] sm:$0xff]
    %v1228 = vld [vmem:[#allocation8 + $0x9a0] sm:$0xff]
    %v1229 = vld [vmem:[#allocation8 + $0x9a8] sm:$0xff]
    %v1230 = vld [vmem:[#allocation8 + $0x9b0] sm:$0xff]
    %v1231 = vld [vmem:[#allocation8 + $0x9b8] sm:$0xff]
    %v1232 = vld [vmem:[#allocation8 + $0x9c0] sm:$0xff]
    %v1233 = vld [vmem:[#allocation8 + $0x9c8] sm:$0xff]
    %v1234 = vld [vmem:[#allocation8 + $0x9d0] sm:$0xff]
    %v1235 = vld [vmem:[#allocation8 + $0x9d8] sm:$0xff]
    %v1236 = vld [vmem:[#allocation8 + $0x9e0] sm:$0xff]
    %v1237 = vld [vmem:[#allocation8 + $0x9e8] sm:$0xff]
    %v1238 = vld [vmem:[#allocation8 + $0x9f0] sm:$0xff]
    %v1239 = vld [vmem:[#allocation8 + $0x9f8] sm:$0xff]
    %v1240 = vld [vmem:[#allocation8 + $0xa00] sm:$0xff]
    %v1241 = vld [vmem:[#allocation8 + $0xa08] sm:$0xff]
    %v1242 = vld [vmem:[#allocation8 + $0xa10] sm:$0xff]
    %v1243 = vld [vmem:[#allocation8 + $0xa18] sm:$0xff]
    %v1244 = vld [vmem:[#allocation8 + $0xa20] sm:$0xff]
    %v1245 = vld [vmem:[#allocation8 + $0xa28] sm:$0xff]
    %v1246 = vld [vmem:[#allocation8 + $0xa30] sm:$0xff]
    %v1247 = vld [vmem:[#allocation8 + $0xa38] sm:$0xff]
    %v1248 = vld [vmem:[#allocation8 + $0xa40] sm:$0xff]
    %v1249 = vld [vmem:[#allocation8 + $0xa48] sm:$0xff]
    %v1250 = vld [vmem:[#allocation8 + $0xa50] sm:$0xff]
    %v1251 = vld [vmem:[#allocation8 + $0xa58] sm:$0xff]
    %v1252 = vld [vmem:[#allocation8 + $0xa60] sm:$0xff]
    %v1253 = vld [vmem:[#allocation8 + $0xa68] sm:$0xff]
    %v1254 = vld [vmem:[#allocation8 + $0xa70] sm:$0xff]
    %v1255 = vld [vmem:[#allocation8 + $0xa78] sm:$0xff]
    %v1256 = vld [vmem:[#allocation8 + $0xa80] sm:$0xff]
    %v1257 = vld [vmem:[#allocation8 + $0xa88] sm:$0xff]
    %v1258 = vld [vmem:[#allocation8 + $0xa90] sm:$0xff]
    %v1259 = vld [vmem:[#allocation8 + $0xa98] sm:$0xff]
    %v1260 = vld [vmem:[#allocation8 + $0xaa0] sm:$0xff]
    %v1261 = vld [vmem:[#allocation8 + $0xaa8] sm:$0xff]
    %v1262 = vld [vmem:[#allocation8 + $0xab0] sm:$0xff]
    %v1263 = vld [vmem:[#allocation8 + $0xab8] sm:$0xff]
    %v1264 = vld [vmem:[#allocation8 + $0xac0] sm:$0xff]
    %v1265 = vld [vmem:[#allocation8 + $0xac8] sm:$0xff]
    %v1266 = vld [vmem:[#allocation8 + $0xad0] sm:$0xff]
    %v1267 = vld [vmem:[#allocation8 + $0xad8] sm:$0xff]
    %v1268 = vld [vmem:[#allocation8 + $0xae0] sm:$0xff]
    %v1269 = vld [vmem:[#allocation8 + $0xae8] sm:$0xff]
    %v1270 = vld [vmem:[#allocation8 + $0xaf0] sm:$0xff]
    %v1271 = vld [vmem:[#allocation8 + $0xaf8] sm:$0xff]
    %v1272 = vld [vmem:[#allocation8 + $0xb00] sm:$0xff]
    %v1273 = vld [vmem:[#allocation8 + $0xb08] sm:$0xff]
    %v1274 = vld [vmem:[#allocation8 + $0xb10] sm:$0xff]
    %v1275 = vld [vmem:[#allocation8 + $0xb18] sm:$0xff]
    %v1276 = vld [vmem:[#allocation8 + $0xb20] sm:$0xff]
    %v1277 = vld [vmem:[#allocation8 + $0xb28] sm:$0xff]
    %v1278 = vld [vmem:[#allocation8 + $0xb30] sm:$0xff]
    %v1279 = vld [vmem:[#allocation8 + $0xb38] sm:$0xff]
    %v1280 = vld [vmem:[#allocation8 + $0xb40] sm:$0xff]
    %v1281 = vld [vmem:[#allocation8 + $0xb48] sm:$0xff]
    %v1282 = vld [vmem:[#allocation8 + $0xb50] sm:$0xff]
    %v1283 = vld [vmem:[#allocation8 + $0xb58] sm:$0xff]
    %v1284 = vld [vmem:[#allocation8 + $0xb60] sm:$0xff]
    %v1285 = vld [vmem:[#allocation8 + $0xb68] sm:$0xff]
    %v1286 = vld [vmem:[#allocation8 + $0xb70] sm:$0xff]
    %v1287 = vld [vmem:[#allocation8 + $0xb78] sm:$0xff]
    %v1288 = vld [vmem:[#allocation8 + $0xb80] sm:$0xff]
    %v1289 = vld [vmem:[#allocation8 + $0xb88] sm:$0xff]
    %v1290 = vld [vmem:[#allocation8 + $0xb90] sm:$0xff]
    %v1291 = vld [vmem:[#allocation8 + $0xb98] sm:$0xff]
    %v1292 = vld [vmem:[#allocation8 + $0xba0] sm:$0xff]
    %v1293 = vld [vmem:[#allocation8 + $0xba8] sm:$0xff]
    %v1294 = vld [vmem:[#allocation8 + $0xbb0] sm:$0xff]
    %v1295 = vld [vmem:[#allocation8 + $0xbb8] sm:$0xff]
    %v1296 = vld [vmem:[#allocation8 + $0xbc0] sm:$0xff]
    %v1297 = vld [vmem:[#allocation8 + $0xbc8] sm:$0xff]
    %v1298 = vld [vmem:[#allocation8 + $0xbd0] sm:$0xff]
    %v1299 = vld [vmem:[#allocation8 + $0xbd8] sm:$0xff]
    %v1300 = vld [vmem:[#allocation8 + $0xbe0] sm:$0xff]
    %v1301 = vld [vmem:[#allocation8 + $0xbe8] sm:$0xff]
    %v1302 = vld [vmem:[#allocation8 + $0xbf0] sm:$0xff]
    %v1303 = vld [vmem:[#allocation8 + $0xbf8] sm:$0xff]
    %v1304 = vld [vmem:[#allocation8 + $0xc00] sm:$0xff]
    %v1305 = vld [vmem:[#allocation8 + $0xc08] sm:$0xff]
    %v1306 = vld [vmem:[#allocation8 + $0xc10] sm:$0xff]
    %v1307 = vld [vmem:[#allocation8 + $0xc18] sm:$0xff]
    %v1308 = vld [vmem:[#allocation8 + $0xc20] sm:$0xff]
    %v1309 = vld [vmem:[#allocation8 + $0xc28] sm:$0xff]
    %v1310 = vld [vmem:[#allocation8 + $0xc30] sm:$0xff]
    %v1311 = vld [vmem:[#allocation8 + $0xc38] sm:$0xff]
    %v1312 = vld [vmem:[#allocation8 + $0xc40] sm:$0xff]
    %v1313 = vld [vmem:[#allocation8 + $0xc48] sm:$0xff]
    %v1314 = vld [vmem:[#allocation8 + $0xc50] sm:$0xff]
    %v1315 = vld [vmem:[#allocation8 + $0xc58] sm:$0xff]
    %v1316 = vld [vmem:[#allocation8 + $0xc60] sm:$0xff]
    %v1317 = vld [vmem:[#allocation8 + $0xc68] sm:$0xff]
    %v1318 = vld [vmem:[#allocation8 + $0xc70] sm:$0xff]
    %v1319 = vld [vmem:[#allocation8 + $0xc78] sm:$0xff]
    %v1320 = vld [vmem:[#allocation8 + $0xc80] sm:$0xff]
    %v1321 = vld [vmem:[#allocation8 + $0xc88] sm:$0xff]
    %v1322 = vld [vmem:[#allocation8 + $0xc90] sm:$0xff]
    %v1323 = vld [vmem:[#allocation8 + $0xc98] sm:$0xff]
    %v1324 = vld [vmem:[#allocation8 + $0xca0] sm:$0xff]
    %v1325 = vld [vmem:[#allocation8 + $0xca8] sm:$0xff]
    %v1326 = vld [vmem:[#allocation8 + $0xcb0] sm:$0xff]
    %v1327 = vld [vmem:[#allocation8 + $0xcb8] sm:$0xff]
    %v1328 = vld [vmem:[#allocation8 + $0xcc0] sm:$0xff]
    %v1329 = vld [vmem:[#allocation8 + $0xcc8] sm:$0xff]
    %v1330 = vld [vmem:[#allocation8 + $0xcd0] sm:$0xff]
    %v1331 = vld [vmem:[#allocation8 + $0xcd8] sm:$0xff]
    %v1332 = vld [vmem:[#allocation8 + $0xce0] sm:$0xff]
    %v1333 = vld [vmem:[#allocation8 + $0xce8] sm:$0xff]
    %v1334 = vld [vmem:[#allocation8 + $0xcf0] sm:$0xff]
    %v1335 = vld [vmem:[#allocation8 + $0xcf8] sm:$0xff]
    %v1336 = vld [vmem:[#allocation8 + $0xd00] sm:$0xff]
    %v1337 = vld [vmem:[#allocation8 + $0xd08] sm:$0xff]
    %v1338 = vld [vmem:[#allocation8 + $0xd10] sm:$0xff]
    %v1339 = vld [vmem:[#allocation8 + $0xd18] sm:$0xff]
    %v1340 = vld [vmem:[#allocation8 + $0xd20] sm:$0xff]
    %v1341 = vld [vmem:[#allocation8 + $0xd28] sm:$0xff]
    %v1342 = vld [vmem:[#allocation8 + $0xd30] sm:$0xff]
    %v1343 = vld [vmem:[#allocation8 + $0xd38] sm:$0xff]
    %v1344 = vld [vmem:[#allocation8 + $0xd40] sm:$0xff]
    %v1345 = vld [vmem:[#allocation8 + $0xd48] sm:$0xff]
    %v1346 = vld [vmem:[#allocation8 + $0xd50] sm:$0xff]
    %v1347 = vld [vmem:[#allocation8 + $0xd58] sm:$0xff]
    %v1348 = vld [vmem:[#allocation8 + $0xd60] sm:$0xff]
    %v1349 = vld [vmem:[#allocation8 + $0xd68] sm:$0xff]
    %v1350 = vld [vmem:[#allocation8 + $0xd70] sm:$0xff]
    %v1351 = vld [vmem:[#allocation8 + $0xd78] sm:$0xff]
    %v1352 = vld [vmem:[#allocation8 + $0xd80] sm:$0xff]
    %v1353 = vld [vmem:[#allocation8 + $0xd88] sm:$0xff]
    %v1354 = vld [vmem:[#allocation8 + $0xd90] sm:$0xff]
    %v1355 = vld [vmem:[#allocation8 + $0xd98] sm:$0xff]
    %v1356 = vld [vmem:[#allocation8 + $0xda0] sm:$0xff]
    %v1357 = vld [vmem:[#allocation8 + $0xda8] sm:$0xff]
    %v1358 = vld [vmem:[#allocation8 + $0xdb0] sm:$0xff]
    %v1359 = vld [vmem:[#allocation8 + $0xdb8] sm:$0xff]
    %v1360 = vld [vmem:[#allocation8 + $0xdc0] sm:$0xff]
    %v1361 = vld [vmem:[#allocation8 + $0xdc8] sm:$0xff]
    %v1362 = vld [vmem:[#allocation8 + $0xdd0] sm:$0xff]
    %v1363 = vld [vmem:[#allocation8 + $0xdd8] sm:$0xff]
    %v1364 = vld [vmem:[#allocation8 + $0xde0] sm:$0xff]
    %v1365 = vld [vmem:[#allocation8 + $0xde8] sm:$0xff]
    %v1366 = vld [vmem:[#allocation8 + $0xdf0] sm:$0xff]
    %v1367 = vld [vmem:[#allocation8 + $0xdf8] sm:$0xff]
    %v1368 = vld [vmem:[#allocation8 + $0xe00] sm:$0xff]
    %v1369 = vld [vmem:[#allocation8 + $0xe08] sm:$0xff]
    %v1370 = vld [vmem:[#allocation8 + $0xe10] sm:$0xff]
    %v1371 = vld [vmem:[#allocation8 + $0xe18] sm:$0xff]
    %v1372 = vld [vmem:[#allocation8 + $0xe20] sm:$0xff]
    %v1373 = vld [vmem:[#allocation8 + $0xe28] sm:$0xff]
    %v1374 = vld [vmem:[#allocation8 + $0xe30] sm:$0xff]
    %v1375 = vld [vmem:[#allocation8 + $0xe38] sm:$0xff]
    %v1376 = vld [vmem:[#allocation8 + $0xe40] sm:$0xff]
    %v1377 = vld [vmem:[#allocation8 + $0xe48] sm:$0xff]
    %v1378 = vld [vmem:[#allocation8 + $0xe50] sm:$0xff]
    %v1379 = vld [vmem:[#allocation8 + $0xe58] sm:$0xff]
    %v1380 = vld [vmem:[#allocation8 + $0xe60] sm:$0xff]
    %v1381 = vld [vmem:[#allocation8 + $0xe68] sm:$0xff]
    %v1382 = vld [vmem:[#allocation8 + $0xe70] sm:$0xff]
    %v1383 = vld [vmem:[#allocation8 + $0xe78] sm:$0xff]
    %v1384 = vld [vmem:[#allocation8 + $0xe80] sm:$0xff]
    %v1385 = vld [vmem:[#allocation8 + $0xe88] sm:$0xff]
    %v1386 = vld [vmem:[#allocation8 + $0xe90] sm:$0xff]
    %v1387 = vld [vmem:[#allocation8 + $0xe98] sm:$0xff]
    %v1388 = vld [vmem:[#allocation8 + $0xea0] sm:$0xff]
    %v1389 = vld [vmem:[#allocation8 + $0xea8] sm:$0xff]
    %v1390 = vld [vmem:[#allocation8 + $0xeb0] sm:$0xff]
    %v1391 = vld [vmem:[#allocation8 + $0xeb8] sm:$0xff]
    %v1392 = vld [vmem:[#allocation8 + $0xec0] sm:$0xff]
    %v1393 = vld [vmem:[#allocation8 + $0xec8] sm:$0xff]
    %v1394 = vld [vmem:[#allocation8 + $0xed0] sm:$0xff]
    %v1395 = vld [vmem:[#allocation8 + $0xed8] sm:$0xff]
    %v1396 = vld [vmem:[#allocation8 + $0xee0] sm:$0xff]
    %v1397 = vld [vmem:[#allocation8 + $0xee8] sm:$0xff]
    %v1398 = vld [vmem:[#allocation8 + $0xef0] sm:$0xff]
    %v1399 = vld [vmem:[#allocation8 + $0xef8] sm:$0xff]
    %v1400 = vld [vmem:[#allocation8 + $0xf00] sm:$0xff]
    %v1401 = vld [vmem:[#allocation8 + $0xf08] sm:$0xff]
    %v1402 = vld [vmem:[#allocation8 + $0xf10] sm:$0xff]
    %v1403 = vld [vmem:[#allocation8 + $0xf18] sm:$0xff]
    %v1404 = vld [vmem:[#allocation8 + $0xf20] sm:$0xff]
    %v1405 = vld [vmem:[#allocation8 + $0xf28] sm:$0xff]
    %v1406 = vld [vmem:[#allocation8 + $0xf30] sm:$0xff]
    %v1407 = vld [vmem:[#allocation8 + $0xf38] sm:$0xff]
    %v1408 = vld [vmem:[#allocation8 + $0xf40] sm:$0xff]
    %v1409 = vld [vmem:[#allocation8 + $0xf48] sm:$0xff]
    %v1410 = vld [vmem:[#allocation8 + $0xf50] sm:$0xff]
    %v1411 = vld [vmem:[#allocation8 + $0xf58] sm:$0xff]
    %v1412 = vld [vmem:[#allocation8 + $0xf60] sm:$0xff]
    %v1413 = vld [vmem:[#allocation8 + $0xf68] sm:$0xff]
    %v1414 = vld [vmem:[#allocation8 + $0xf70] sm:$0xff]
    %v1415 = vld [vmem:[#allocation8 + $0xf78] sm:$0xff]
    %v1416 = vld [vmem:[#allocation8 + $0xf80] sm:$0xff]
    %v1417 = vld [vmem:[#allocation8 + $0xf88] sm:$0xff]
    %v1418 = vld [vmem:[#allocation8 + $0xf90] sm:$0xff]
    %v1419 = vld [vmem:[#allocation8 + $0xf98] sm:$0xff]
    %v1420 = vld [vmem:[#allocation8 + $0xfa0] sm:$0xff]
    %v1421 = vld [vmem:[#allocation8 + $0xfa8] sm:$0xff]
    %v1422 = vld [vmem:[#allocation8 + $0xfb0] sm:$0xff]
    %v1423 = vld [vmem:[#allocation8 + $0xfb8] sm:$0xff]
    %v1424 = vld [vmem:[#allocation8 + $0xfc0] sm:$0xff]
    %v1425 = vld [vmem:[#allocation8 + $0xfc8] sm:$0xff]
    %v1426 = vld [vmem:[#allocation8 + $0xfd0] sm:$0xff]
    %v1427 = vld [vmem:[#allocation8 + $0xfd8] sm:$0xff]
    %v1428 = vld [vmem:[#allocation8 + $0xfe0] sm:$0xff]
    %v1429 = vld [vmem:[#allocation8 + $0xfe8] sm:$0xff]
    %v1430 = vld [vmem:[#allocation8 + $0xff0] sm:$0xff]
    %v1431 = vld [vmem:[#allocation8 + $0xff8] sm:$0xff]
    %v1432 = vld [vmem:[#allocation8 + $0x1000] sm:$0xff]
    %v1433 = vld [vmem:[#allocation8 + $0x1008] sm:$0xff]
    %v1434 = vld [vmem:[#allocation8 + $0x1010] sm:$0xff]
    %v1435 = vld [vmem:[#allocation8 + $0x1018] sm:$0xff]
    %v1436 = vld [vmem:[#allocation8 + $0x1020] sm:$0xff]
    %v1437 = vld [vmem:[#allocation8 + $0x1028] sm:$0xff]
    %v1438 = vld [vmem:[#allocation8 + $0x1030] sm:$0xff]
    %v1439 = vld [vmem:[#allocation8 + $0x1038] sm:$0xff]
    %v1440 = vld [vmem:[#allocation8 + $0x1040] sm:$0xff]
    %v1441 = vld [vmem:[#allocation8 + $0x1048] sm:$0xff]
    %v1442 = vld [vmem:[#allocation8 + $0x1050] sm:$0xff]
    %v1443 = vld [vmem:[#allocation8 + $0x1058] sm:$0xff]
    %v1444 = vld [vmem:[#allocation8 + $0x1060] sm:$0xff]
    %v1445 = vld [vmem:[#allocation8 + $0x1068] sm:$0xff]
    %v1446 = vld [vmem:[#allocation8 + $0x1070] sm:$0xff]
    %v1447 = vld [vmem:[#allocation8 + $0x1078] sm:$0xff]
    %v1448 = vld [vmem:[#allocation8 + $0x1080] sm:$0xff]
    %v1449 = vld [vmem:[#allocation8 + $0x1088] sm:$0xff]
    %v1450 = vld [vmem:[#allocation8 + $0x1090] sm:$0xff]
    %v1451 = vld [vmem:[#allocation8 + $0x1098] sm:$0xff]
    %v1452 = vld [vmem:[#allocation8 + $0x10a0] sm:$0xff]
    %v1453 = vld [vmem:[#allocation8 + $0x10a8] sm:$0xff]
    %v1454 = vld [vmem:[#allocation8 + $0x10b0] sm:$0xff]
    %v1455 = vld [vmem:[#allocation8 + $0x10b8] sm:$0xff]
    %v1456 = vld [vmem:[#allocation8 + $0x10c0] sm:$0xff]
    %v1457 = vld [vmem:[#allocation8 + $0x10c8] sm:$0xff]
    %v1458 = vld [vmem:[#allocation8 + $0x10d0] sm:$0xff]
    %v1459 = vld [vmem:[#allocation8 + $0x10d8] sm:$0xff]
    %v1460 = vld [vmem:[#allocation8 + $0x10e0] sm:$0xff]
    %v1461 = vld [vmem:[#allocation8 + $0x10e8] sm:$0xff]
    %v1462 = vld [vmem:[#allocation8 + $0x10f0] sm:$0xff]
    %v1463 = vld [vmem:[#allocation8 + $0x10f8] sm:$0xff]
    %v1464 = vld [vmem:[#allocation8 + $0x1100] sm:$0xff]
    %v1465 = vld [vmem:[#allocation8 + $0x1108] sm:$0xff]
    %v1466 = vld [vmem:[#allocation8 + $0x1110] sm:$0xff]
    %v1467 = vld [vmem:[#allocation8 + $0x1118] sm:$0xff]
    %v1468 = vld [vmem:[#allocation8 + $0x1120] sm:$0xff]
    %v1469 = vld [vmem:[#allocation8 + $0x1128] sm:$0xff]
    %v1470 = vld [vmem:[#allocation8 + $0x1130] sm:$0xff]
    %v1471 = vld [vmem:[#allocation8 + $0x1138] sm:$0xff]
    %v1472 = vld [vmem:[#allocation8 + $0x1140] sm:$0xff]
    %v1473 = vld [vmem:[#allocation8 + $0x1148] sm:$0xff]
    %v1474 = vld [vmem:[#allocation8 + $0x1150] sm:$0xff]
    %v1475 = vld [vmem:[#allocation8 + $0x1158] sm:$0xff]
    %v1476 = vld [vmem:[#allocation8 + $0x1160] sm:$0xff]
    %v1477 = vld [vmem:[#allocation8 + $0x1168] sm:$0xff]
    %v1478 = vld [vmem:[#allocation8 + $0x1170] sm:$0xff]
    %v1479 = vld [vmem:[#allocation8 + $0x1178] sm:$0xff]
    %v1480 = vld [vmem:[#allocation8 + $0x1180] sm:$0xff]
    %v1481 = vld [vmem:[#allocation8 + $0x1188] sm:$0xff]
    %v1482 = vld [vmem:[#allocation8 + $0x1190] sm:$0xff]
    %v1483 = vld [vmem:[#allocation8 + $0x1198] sm:$0xff]
    %v1484 = vld [vmem:[#allocation8 + $0x11a0] sm:$0xff]
    %v1485 = vld [vmem:[#allocation8 + $0x11a8] sm:$0xff]
    %v1486 = vld [vmem:[#allocation8 + $0x11b0] sm:$0xff]
    %v1487 = vld [vmem:[#allocation8 + $0x11b8] sm:$0xff]
    %v1488 = vld [vmem:[#allocation8 + $0x11c0] sm:$0xff]
    %v1489 = vld [vmem:[#allocation8 + $0x11c8] sm:$0xff]
    %v1490 = vld [vmem:[#allocation8 + $0x11d0] sm:$0xff]
    %v1491 = vld [vmem:[#allocation8 + $0x11d8] sm:$0xff]
    %v1492 = vld [vmem:[#allocation8 + $0x11e0] sm:$0xff]
    %v1493 = vld [vmem:[#allocation8 + $0x11e8] sm:$0xff]
    %v1494 = vld [vmem:[#allocation8 + $0x11f0] sm:$0xff]
    %v1495 = vld [vmem:[#allocation8 + $0x11f8] sm:$0xff]
    %v1496 = vld [vmem:[#allocation8 + $0x1200] sm:$0xff]
    %v1497 = vld [vmem:[#allocation8 + $0x1208] sm:$0xff]
    %v1498 = vld [vmem:[#allocation8 + $0x1210] sm:$0xff]
    %v1499 = vld [vmem:[#allocation8 + $0x1218] sm:$0xff]
    %v1500 = vld [vmem:[#allocation8 + $0x1220] sm:$0xff]
    %v1501 = vld [vmem:[#allocation8 + $0x1228] sm:$0xff]
    %v1502 = vld [vmem:[#allocation8 + $0x1230] sm:$0xff]
    %v1503 = vld [vmem:[#allocation8 + $0x1238] sm:$0xff]
    %v1504 = vld [vmem:[#allocation8 + $0x1240] sm:$0xff]
    %v1505 = vld [vmem:[#allocation8 + $0x1248] sm:$0xff]
    %v1506 = vld [vmem:[#allocation8 + $0x1250] sm:$0xff]
    %v1507 = vld [vmem:[#allocation8 + $0x1258] sm:$0xff]
    %v1508 = vld [vmem:[#allocation8 + $0x1260] sm:$0xff]
    %v1509 = vld [vmem:[#allocation8 + $0x1268] sm:$0xff]
    %v1510 = vld [vmem:[#allocation8 + $0x1270] sm:$0xff]
    %v1511 = vld [vmem:[#allocation8 + $0x1278] sm:$0xff]
    %v1512 = vld [vmem:[#allocation8 + $0x1280] sm:$0xff]
    %v1513 = vld [vmem:[#allocation8 + $0x1288] sm:$0xff]
    %v1514 = vld [vmem:[#allocation8 + $0x1290] sm:$0xff]
    %v1515 = vld [vmem:[#allocation8 + $0x1298] sm:$0xff]
    %v1516 = vld [vmem:[#allocation8 + $0x12a0] sm:$0xff]
    %v1517 = vld [vmem:[#allocation8 + $0x12a8] sm:$0xff]
    %v1518 = vld [vmem:[#allocation8 + $0x12b0] sm:$0xff]
    %v1519 = vld [vmem:[#allocation8 + $0x12b8] sm:$0xff]
    %v1520 = vld [vmem:[#allocation8 + $0x12c0] sm:$0xff]
    %v1521 = vld [vmem:[#allocation8 + $0x12c8] sm:$0xff]
    %v1522 = vld [vmem:[#allocation8 + $0x12d0] sm:$0xff]
    %v1523 = vld [vmem:[#allocation8 + $0x12d8] sm:$0xff]
    %v1524 = vld [vmem:[#allocation8 + $0x12e0] sm:$0xff]
    %v1525 = vld [vmem:[#allocation8 + $0x12e8] sm:$0xff]
    %v1526 = vld [vmem:[#allocation8 + $0x12f0] sm:$0xff]
    %v1527 = vld [vmem:[#allocation8 + $0x12f8] sm:$0xff]
    %v1528 = vld [vmem:[#allocation8 + $0x1300] sm:$0xff]
    %v1529 = vld [vmem:[#allocation8 + $0x1308] sm:$0xff]
    %v1530 = vld [vmem:[#allocation8 + $0x1310] sm:$0xff]
    %v1531 = vld [vmem:[#allocation8 + $0x1318] sm:$0xff]
    %v1532 = vld [vmem:[#allocation8 + $0x1320] sm:$0xff]
    %v1533 = vld [vmem:[#allocation8 + $0x1328] sm:$0xff]
    %v1534 = vld [vmem:[#allocation8 + $0x1330] sm:$0xff]
    %v1535 = vld [vmem:[#allocation8 + $0x1338] sm:$0xff]
    %v1536 = vld [vmem:[#allocation8 + $0x1340] sm:$0xff]
    %v1537 = vld [vmem:[#allocation8 + $0x1348] sm:$0xff]
    %v1538 = vld [vmem:[#allocation8 + $0x1350] sm:$0xff]
    %v1539 = vld [vmem:[#allocation8 + $0x1358] sm:$0xff]
    %v1540 = vld [vmem:[#allocation8 + $0x1360] sm:$0xff]
    %v1541 = vld [vmem:[#allocation8 + $0x1368] sm:$0xff]
    %v1542 = vld [vmem:[#allocation8 + $0x1370] sm:$0xff]
    %v1543 = vld [vmem:[#allocation8 + $0x1378] sm:$0xff]
    %v1544 = vld [vmem:[#allocation8 + $0x1380] sm:$0xff]
    %v1545 = vld [vmem:[#allocation8 + $0x1388] sm:$0xff]
    %v1546 = vld [vmem:[#allocation8 + $0x1390] sm:$0xff]
    %v1547 = vld [vmem:[#allocation8 + $0x1398] sm:$0xff]
    %v1548 = vld [vmem:[#allocation8 + $0x13a0] sm:$0xff]
    %v1549 = vld [vmem:[#allocation8 + $0x13a8] sm:$0xff]
    %v1550 = vld [vmem:[#allocation8 + $0x13b0] sm:$0xff]
    %v1551 = vld [vmem:[#allocation8 + $0x13b8] sm:$0xff]
    %v1552 = vld [vmem:[#allocation8 + $0x13c0] sm:$0xff]
    %v1553 = vld [vmem:[#allocation8 + $0x13c8] sm:$0xff]
    %v1554 = vld [vmem:[#allocation8 + $0x13d0] sm:$0xff]
    %v1555 = vld [vmem:[#allocation8 + $0x13d8] sm:$0xff]
    %v1556 = vld [vmem:[#allocation8 + $0x13e0] sm:$0xff]
    %v1557 = vld [vmem:[#allocation8 + $0x13e8] sm:$0xff]
    %v1558 = vld [vmem:[#allocation8 + $0x13f0] sm:$0xff]
    %v1559 = vld [vmem:[#allocation8 + $0x13f8] sm:$0xff]
    %v1560 = vld [vmem:[#allocation8 + $0x1400] sm:$0xff]
    %v1561 = vld [vmem:[#allocation8 + $0x1408] sm:$0xff]
    %v1562 = vld [vmem:[#allocation8 + $0x1410] sm:$0xff]
    %v1563 = vld [vmem:[#allocation8 + $0x1418] sm:$0xff]
    %v1564 = vld [vmem:[#allocation8 + $0x1420] sm:$0xff]
    %v1565 = vld [vmem:[#allocation8 + $0x1428] sm:$0xff]
    %v1566 = vld [vmem:[#allocation8 + $0x1430] sm:$0xff]
    %v1567 = vld [vmem:[#allocation8 + $0x1438] sm:$0xff]
    %v1568 = vld [vmem:[#allocation8 + $0x1440] sm:$0xff]
    %v1569 = vld [vmem:[#allocation8 + $0x1448] sm:$0xff]
    %v1570 = vld [vmem:[#allocation8 + $0x1450] sm:$0xff]
    %v1571 = vld [vmem:[#allocation8 + $0x1458] sm:$0xff]
    %v1572 = vld [vmem:[#allocation8 + $0x1460] sm:$0xff]
    %v1573 = vld [vmem:[#allocation8 + $0x1468] sm:$0xff]
    %v1574 = vld [vmem:[#allocation8 + $0x1470] sm:$0xff]
    %v1575 = vld [vmem:[#allocation8 + $0x1478] sm:$0xff]
    %v1576 = vld [vmem:[#allocation8 + $0x1480] sm:$0xff]
    %v1577 = vld [vmem:[#allocation8 + $0x1488] sm:$0xff]
    %v1578 = vld [vmem:[#allocation8 + $0x1490] sm:$0xff]
    %v1579 = vld [vmem:[#allocation8 + $0x1498] sm:$0xff]
    %v1580 = vld [vmem:[#allocation8 + $0x14a0] sm:$0xff]
    %v1581 = vld [vmem:[#allocation8 + $0x14a8] sm:$0xff]
    %v1582 = vld [vmem:[#allocation8 + $0x14b0] sm:$0xff]
    %v1583 = vld [vmem:[#allocation8 + $0x14b8] sm:$0xff]
    %v1584 = vld [vmem:[#allocation8 + $0x14c0] sm:$0xff]
    %v1585 = vld [vmem:[#allocation8 + $0x14c8] sm:$0xff]
    %v1586 = vld [vmem:[#allocation8 + $0x14d0] sm:$0xff]
    %v1587 = vld [vmem:[#allocation8 + $0x14d8] sm:$0xff]
    %v1588 = vld [vmem:[#allocation8 + $0x14e0] sm:$0xff]
    %v1589 = vld [vmem:[#allocation8 + $0x14e8] sm:$0xff]
    %v1590 = vld [vmem:[#allocation8 + $0x14f0] sm:$0xff]
    %v1591 = vld [vmem:[#allocation8 + $0x14f8] sm:$0xff]
    %v1592 = vld [vmem:[#allocation8 + $0x1500] sm:$0xff]
    %v1593 = vld [vmem:[#allocation8 + $0x1508] sm:$0xff]
    %v1594 = vld [vmem:[#allocation8 + $0x1510] sm:$0xff]
    %v1595 = vld [vmem:[#allocation8 + $0x1518] sm:$0xff]
    %v1596 = vld [vmem:[#allocation8 + $0x1520] sm:$0xff]
    %v1597 = vld [vmem:[#allocation8 + $0x1528] sm:$0xff]
    %v1598 = vld [vmem:[#allocation8 + $0x1530] sm:$0xff]
    %v1599 = vld [vmem:[#allocation8 + $0x1538] sm:$0xff]
    %v1600 = vld [vmem:[#allocation8 + $0x1540] sm:$0xff]
    %v1601 = vld [vmem:[#allocation8 + $0x1548] sm:$0xff]
    %v1602 = vld [vmem:[#allocation8 + $0x1550] sm:$0xff]
    %v1603 = vld [vmem:[#allocation8 + $0x1558] sm:$0xff]
    %v1604 = vld [vmem:[#allocation8 + $0x1560] sm:$0xff]
    %v1605 = vld [vmem:[#allocation8 + $0x1568] sm:$0xff]
    %v1606 = vld [vmem:[#allocation8 + $0x1570] sm:$0xff]
    %v1607 = vld [vmem:[#allocation8 + $0x1578] sm:$0xff]
    %v1608 = vld [vmem:[#allocation8 + $0x1580] sm:$0xff]
    %v1609 = vld [vmem:[#allocation8 + $0x1588] sm:$0xff]
    %v1610 = vld [vmem:[#allocation8 + $0x1590] sm:$0xff]
    %v1611 = vld [vmem:[#allocation8 + $0x1598] sm:$0xff]
    %v1612 = vld [vmem:[#allocation8 + $0x15a0] sm:$0xff]
    %v1613 = vld [vmem:[#allocation8 + $0x15a8] sm:$0xff]
    %v1614 = vld [vmem:[#allocation8 + $0x15b0] sm:$0xff]
    %v1615 = vld [vmem:[#allocation8 + $0x15b8] sm:$0xff]
    %v1616 = vld [vmem:[#allocation8 + $0x15c0] sm:$0xff]
    %v1617 = vld [vmem:[#allocation8 + $0x15c8] sm:$0xff]
    %v1618 = vld [vmem:[#allocation8 + $0x15d0] sm:$0xff]
    %v1619 = vld [vmem:[#allocation8 + $0x15d8] sm:$0xff]
    %v1620 = vld [vmem:[#allocation8 + $0x15e0] sm:$0xff]
    %v1621 = vld [vmem:[#allocation8 + $0x15e8] sm:$0xff]
    %v1622 = vld [vmem:[#allocation8 + $0x15f0] sm:$0xff]
    %v1623 = vld [vmem:[#allocation8 + $0x15f8] sm:$0xff]
    %v1624 = vld [vmem:[#allocation8 + $0x1600] sm:$0xff]
    %v1625 = vld [vmem:[#allocation8 + $0x1608] sm:$0xff]
    %v1626 = vld [vmem:[#allocation8 + $0x1610] sm:$0xff]
    %v1627 = vld [vmem:[#allocation8 + $0x1618] sm:$0xff]
    %v1628 = vld [vmem:[#allocation8 + $0x1620] sm:$0xff]
    %v1629 = vld [vmem:[#allocation8 + $0x1628] sm:$0xff]
    %v1630 = vld [vmem:[#allocation8 + $0x1630] sm:$0xff]
    %v1631 = vld [vmem:[#allocation8 + $0x1638] sm:$0xff]
    %v1632 = vld [vmem:[#allocation8 + $0x1640] sm:$0xff]
    %v1633 = vld [vmem:[#allocation8 + $0x1648] sm:$0xff]
    %v1634 = vld [vmem:[#allocation8 + $0x1650] sm:$0xff]
    %v1635 = vld [vmem:[#allocation8 + $0x1658] sm:$0xff]
    %v1636 = vld [vmem:[#allocation8 + $0x1660] sm:$0xff]
    %v1637 = vld [vmem:[#allocation8 + $0x1668] sm:$0xff]
    %v1638 = vld [vmem:[#allocation8 + $0x1670] sm:$0xff]
    %v1639 = vld [vmem:[#allocation8 + $0x1678] sm:$0xff]
    %v1640 = vld [vmem:[#allocation8 + $0x1680] sm:$0xff]
    %v1641 = vld [vmem:[#allocation8 + $0x1688] sm:$0xff]
    %v1642 = vld [vmem:[#allocation8 + $0x1690] sm:$0xff]
    %v1643 = vld [vmem:[#allocation8 + $0x1698] sm:$0xff]
    %v1644 = vld [vmem:[#allocation8 + $0x16a0] sm:$0xff]
    %v1645 = vld [vmem:[#allocation8 + $0x16a8] sm:$0xff]
    %v1646 = vld [vmem:[#allocation8 + $0x16b0] sm:$0xff]
    %v1647 = vld [vmem:[#allocation8 + $0x16b8] sm:$0xff]
    %v1648 = vld [vmem:[#allocation8 + $0x16c0] sm:$0xff]
    %v1649 = vld [vmem:[#allocation8 + $0x16c8] sm:$0xff]
    %v1650 = vld [vmem:[#allocation8 + $0x16d0] sm:$0xff]
    %v1651 = vld [vmem:[#allocation8 + $0x16d8] sm:$0xff]
    %v1652 = vld [vmem:[#allocation8 + $0x16e0] sm:$0xff]
    %v1653 = vld [vmem:[#allocation8 + $0x16e8] sm:$0xff]
    %v1654 = vld [vmem:[#allocation8 + $0x16f0] sm:$0xff]
    %v1655 = vld [vmem:[#allocation8 + $0x16f8] sm:$0xff]
    %v1656 = vld [vmem:[#allocation8 + $0x1700] sm:$0xff]
    %v1657 = vld [vmem:[#allocation8 + $0x1708] sm:$0xff]
    %v1658 = vld [vmem:[#allocation8 + $0x1710] sm:$0xff]
    %v1659 = vld [vmem:[#allocation8 + $0x1718] sm:$0xff]
    %v1660 = vld [vmem:[#allocation8 + $0x1720] sm:$0xff]
    %v1661 = vld [vmem:[#allocation8 + $0x1728] sm:$0xff]
    %v1662 = vld [vmem:[#allocation8 + $0x1730] sm:$0xff]
    %v1663 = vld [vmem:[#allocation8 + $0x1738] sm:$0xff]
    %v1664 = vld [vmem:[#allocation8 + $0x1740] sm:$0xff]
    %v1665 = vld [vmem:[#allocation8 + $0x1748] sm:$0xff]
    %v1666 = vld [vmem:[#allocation8 + $0x1750] sm:$0xff]
    %v1667 = vld [vmem:[#allocation8 + $0x1758] sm:$0xff]
    %v1668 = vld [vmem:[#allocation8 + $0x1760] sm:$0xff]
    %v1669 = vld [vmem:[#allocation8 + $0x1768] sm:$0xff]
    %v1670 = vld [vmem:[#allocation8 + $0x1770] sm:$0xff]
    %v1671 = vld [vmem:[#allocation8 + $0x1778] sm:$0xff]
    %v1672 = vld [vmem:[#allocation8 + $0x1780] sm:$0xff]
    %v1673 = vld [vmem:[#allocation8 + $0x1788] sm:$0xff]
    %v1674 = vld [vmem:[#allocation8 + $0x1790] sm:$0xff]
    %v1675 = vld [vmem:[#allocation8 + $0x1798] sm:$0xff]
    %v1676 = vld [vmem:[#allocation8 + $0x17a0] sm:$0xff]
    %v1677 = vld [vmem:[#allocation8 + $0x17a8] sm:$0xff]
    %v1678 = vld [vmem:[#allocation8 + $0x17b0] sm:$0xff]
    %v1679 = vld [vmem:[#allocation8 + $0x17b8] sm:$0xff]
    %v1680 = vld [vmem:[#allocation8 + $0x17c0] sm:$0xff]
    %v1681 = vld [vmem:[#allocation8 + $0x17c8] sm:$0xff]
    %v1682 = vld [vmem:[#allocation8 + $0x17d0] sm:$0xff]
    %v1683 = vld [vmem:[#allocation8 + $0x17d8] sm:$0xff]
    %v1684 = vld [vmem:[#allocation8 + $0x17e0] sm:$0xff]
    %v1685 = vld [vmem:[#allocation8 + $0x17e8] sm:$0xff]
    %v1686 = vld [vmem:[#allocation8 + $0x17f0] sm:$0xff]
    %v1687 = vld [vmem:[#allocation8 + $0x17f8] sm:$0xff]
    %v1688 = vld [vmem:[#allocation8 + $0x1800] sm:$0xff]
    %v1689 = vld [vmem:[#allocation8 + $0x1808] sm:$0xff]
    %v1690 = vld [vmem:[#allocation8 + $0x1810] sm:$0xff]
    %v1691 = vld [vmem:[#allocation8 + $0x1818] sm:$0xff]
    %v1692 = vld [vmem:[#allocation8 + $0x1820] sm:$0xff]
    %v1693 = vld [vmem:[#allocation8 + $0x1828] sm:$0xff]
    %v1694 = vld [vmem:[#allocation8 + $0x1830] sm:$0xff]
    %v1695 = vld [vmem:[#allocation8 + $0x1838] sm:$0xff]
    %v1696 = vld [vmem:[#allocation8 + $0x1840] sm:$0xff]
    %v1697 = vld [vmem:[#allocation8 + $0x1848] sm:$0xff]
    %v1698 = vld [vmem:[#allocation8 + $0x1850] sm:$0xff]
    %v1699 = vld [vmem:[#allocation8 + $0x1858] sm:$0xff]
    %v1700 = vld [vmem:[#allocation8 + $0x1860] sm:$0xff]
    %v1701 = vld [vmem:[#allocation8 + $0x1868] sm:$0xff]
    %v1702 = vld [vmem:[#allocation8 + $0x1870] sm:$0xff]
    %v1703 = vld [vmem:[#allocation8 + $0x1878] sm:$0xff]
    %v1704 = vld [vmem:[#allocation8 + $0x1880] sm:$0xff]
    %v1705 = vld [vmem:[#allocation8 + $0x1888] sm:$0xff]
    %v1706 = vld [vmem:[#allocation8 + $0x1890] sm:$0xff]
    %v1707 = vld [vmem:[#allocation8 + $0x1898] sm:$0xff]
    %v1708 = vld [vmem:[#allocation8 + $0x18a0] sm:$0xff]
    %v1709 = vld [vmem:[#allocation8 + $0x18a8] sm:$0xff]
    %v1710 = vld [vmem:[#allocation8 + $0x18b0] sm:$0xff]
    %v1711 = vld [vmem:[#allocation8 + $0x18b8] sm:$0xff]
    %v1712 = vld [vmem:[#allocation8 + $0x18c0] sm:$0xff]
    %v1713 = vld [vmem:[#allocation8 + $0x18c8] sm:$0xff]
    %v1714 = vld [vmem:[#allocation8 + $0x18d0] sm:$0xff]
    %v1715 = vld [vmem:[#allocation8 + $0x18d8] sm:$0xff]
    %v1716 = vld [vmem:[#allocation8 + $0x18e0] sm:$0xff]
    %v1717 = vld [vmem:[#allocation8 + $0x18e8] sm:$0xff]
    %v1718 = vld [vmem:[#allocation8 + $0x18f0] sm:$0xff]
    %v1719 = vld [vmem:[#allocation8 + $0x18f8] sm:$0xff]
    %v1720 = vld [vmem:[#allocation8 + $0x1900] sm:$0xff]
    %v1721 = vld [vmem:[#allocation8 + $0x1908] sm:$0xff]
    %v1722 = vld [vmem:[#allocation8 + $0x1910] sm:$0xff]
    %v1723 = vld [vmem:[#allocation8 + $0x1918] sm:$0xff]
    %v1724 = vld [vmem:[#allocation8 + $0x1920] sm:$0xff]
    %v1725 = vld [vmem:[#allocation8 + $0x1928] sm:$0xff]
    %v1726 = vld [vmem:[#allocation8 + $0x1930] sm:$0xff]
    %v1727 = vld [vmem:[#allocation8 + $0x1938] sm:$0xff]
    %v1728 = vld [vmem:[#allocation8 + $0x1940] sm:$0xff]
    %v1729 = vld [vmem:[#allocation8 + $0x1948] sm:$0xff]
    %v1730 = vld [vmem:[#allocation8 + $0x1950] sm:$0xff]
    %v1731 = vld [vmem:[#allocation8 + $0x1958] sm:$0xff]
    %v1732 = vld [vmem:[#allocation8 + $0x1960] sm:$0xff]
    %v1733 = vld [vmem:[#allocation8 + $0x1968] sm:$0xff]
    %v1734 = vld [vmem:[#allocation8 + $0x1970] sm:$0xff]
    %v1735 = vld [vmem:[#allocation8 + $0x1978] sm:$0xff]
    %v1736 = vld [vmem:[#allocation8 + $0x1980] sm:$0xff]
    %v1737 = vld [vmem:[#allocation8 + $0x1988] sm:$0xff]
    %v1738 = vld [vmem:[#allocation8 + $0x1990] sm:$0xff]
    %v1739 = vld [vmem:[#allocation8 + $0x1998] sm:$0xff]
    %v1740 = vld [vmem:[#allocation8 + $0x19a0] sm:$0xff]
    %v1741 = vld [vmem:[#allocation8 + $0x19a8] sm:$0xff]
    %v1742 = vld [vmem:[#allocation8 + $0x19b0] sm:$0xff]
    %v1743 = vld [vmem:[#allocation8 + $0x19b8] sm:$0xff]
    %v1744 = vld [vmem:[#allocation8 + $0x19c0] sm:$0xff]
    %v1745 = vld [vmem:[#allocation8 + $0x19c8] sm:$0xff]
    %v1746 = vld [vmem:[#allocation8 + $0x19d0] sm:$0xff]
    %v1747 = vld [vmem:[#allocation8 + $0x19d8] sm:$0xff]
    %v1748 = vld [vmem:[#allocation8 + $0x19e0] sm:$0xff]
    %v1749 = vld [vmem:[#allocation8 + $0x19e8] sm:$0xff]
    %v1750 = vld [vmem:[#allocation8 + $0x19f0] sm:$0xff]
    %v1751 = vld [vmem:[#allocation8 + $0x19f8] sm:$0xff]
    %v1752 = vld [vmem:[#allocation8 + $0x1a00] sm:$0xff]
    %v1753 = vld [vmem:[#allocation8 + $0x1a08] sm:$0xff]
    %v1754 = vld [vmem:[#allocation8 + $0x1a10] sm:$0xff]
    %v1755 = vld [vmem:[#allocation8 + $0x1a18] sm:$0xff]
    %v1756 = vld [vmem:[#allocation8 + $0x1a20] sm:$0xff]
    %v1757 = vld [vmem:[#allocation8 + $0x1a28] sm:$0xff]
    %v1758 = vld [vmem:[#allocation8 + $0x1a30] sm:$0xff]
    %v1759 = vld [vmem:[#allocation8 + $0x1a38] sm:$0xff]
    %v1760 = vld [vmem:[#allocation8 + $0x1a40] sm:$0xff]
    %v1761 = vld [vmem:[#allocation8 + $0x1a48] sm:$0xff]
    %v1762 = vld [vmem:[#allocation8 + $0x1a50] sm:$0xff]
    %v1763 = vld [vmem:[#allocation8 + $0x1a58] sm:$0xff]
    %v1764 = vld [vmem:[#allocation8 + $0x1a60] sm:$0xff]
    %v1765 = vld [vmem:[#allocation8 + $0x1a68] sm:$0xff]
    %v1766 = vld [vmem:[#allocation8 + $0x1a70] sm:$0xff]
    %v1767 = vld [vmem:[#allocation8 + $0x1a78] sm:$0xff]
    %v1768 = vld [vmem:[#allocation8 + $0x1a80] sm:$0xff]
    %v1769 = vld [vmem:[#allocation8 + $0x1a88] sm:$0xff]
    %v1770 = vld [vmem:[#allocation8 + $0x1a90] sm:$0xff]
    %v1771 = vld [vmem:[#allocation8 + $0x1a98] sm:$0xff]
    %v1772 = vld [vmem:[#allocation8 + $0x1aa0] sm:$0xff]
    %v1773 = vld [vmem:[#allocation8 + $0x1aa8] sm:$0xff]
    %v1774 = vld [vmem:[#allocation8 + $0x1ab0] sm:$0xff]
    %v1775 = vld [vmem:[#allocation8 + $0x1ab8] sm:$0xff]
    %v1776 = vld [vmem:[#allocation8 + $0x1ac0] sm:$0xff]
    %v1777 = vld [vmem:[#allocation8 + $0x1ac8] sm:$0xff]
    %v1778 = vld [vmem:[#allocation8 + $0x1ad0] sm:$0xff]
    %v1779 = vld [vmem:[#allocation8 + $0x1ad8] sm:$0xff]
    %v1780 = vld [vmem:[#allocation8 + $0x1ae0] sm:$0xff]
    %v1781 = vld [vmem:[#allocation8 + $0x1ae8] sm:$0xff]
    %v1782 = vld [vmem:[#allocation8 + $0x1af0] sm:$0xff]
    %v1783 = vld [vmem:[#allocation8 + $0x1af8] sm:$0xff]
    %v1784 = vld [vmem:[#allocation10] sm:$0xff]
    %v1785 = vld [vmem:[#allocation10 + $0x8] sm:$0xff]
    %v1786 = vld [vmem:[#allocation10 + $0x10] sm:$0xff]
    %v1787 = vld [vmem:[#allocation10 + $0x18] sm:$0xff]
    %v1788 = vld [vmem:[#allocation10 + $0x20] sm:$0xf]
    %v1794 = vlaneseq
    %v1795 = vshrl.u32 %v1794, 7
    %v1796 = vsub.s32 0, %v1795
    %v1797 = vrot.slane %v1784, %v1796
    %v1798 = vlaneseq
    %v1799 = vshrl.u32 %v1798, 7
    %v1800 = vsub.s32 1, %v1799
    %v1801 = vrot.slane %v1784, %v1800
    %v1802 = vlaneseq
    %v1803 = vshrl.u32 %v1802, 7
    %v1804 = vsub.s32 2, %v1803
    %v1805 = vrot.slane %v1784, %v1804
    %v1806 = vlaneseq
    %v1807 = vshrl.u32 %v1806, 7
    %v1808 = vsub.s32 3, %v1807
    %v1809 = vrot.slane %v1784, %v1808
    %v1810 = vlaneseq
    %v1811 = vshrl.u32 %v1810, 7
    %v1812 = vsub.s32 4, %v1811
    %v1813 = vrot.slane %v1784, %v1812
    %v1814 = vlaneseq
    %v1815 = vshrl.u32 %v1814, 7
    %v1816 = vsub.s32 5, %v1815
    %v1817 = vrot.slane %v1784, %v1816
    %v1818 = vlaneseq
    %v1819 = vshrl.u32 %v1818, 7
    %v1820 = vsub.s32 6, %v1819
    %v1821 = vrot.slane %v1784, %v1820
    %v1822 = vlaneseq
    %v1823 = vshrl.u32 %v1822, 7
    %v1824 = vsub.s32 7, %v1823
    %v1825 = vrot.slane %v1784, %v1824
    %v1826 = vlaneseq
    %v1827 = vshrl.u32 %v1826, 7
    %v1828 = vsub.s32 0, %v1827
    %v1829 = vrot.slane %v1785, %v1828
    %v1830 = vlaneseq
    %v1831 = vshrl.u32 %v1830, 7
    %v1832 = vsub.s32 1, %v1831
    %v1833 = vrot.slane %v1785, %v1832
    %v1834 = vlaneseq
    %v1835 = vshrl.u32 %v1834, 7
    %v1836 = vsub.s32 2, %v1835
    %v1837 = vrot.slane %v1785, %v1836
    %v1838 = vlaneseq
    %v1839 = vshrl.u32 %v1838, 7
    %v1840 = vsub.s32 3, %v1839
    %v1841 = vrot.slane %v1785, %v1840
    %v1842 = vlaneseq
    %v1843 = vshrl.u32 %v1842, 7
    %v1844 = vsub.s32 4, %v1843
    %v1845 = vrot.slane %v1785, %v1844
    %v1846 = vlaneseq
    %v1847 = vshrl.u32 %v1846, 7
    %v1848 = vsub.s32 5, %v1847
    %v1849 = vrot.slane %v1785, %v1848
    %v1850 = vlaneseq
    %v1851 = vshrl.u32 %v1850, 7
    %v1852 = vsub.s32 6, %v1851
    %v1853 = vrot.slane %v1785, %v1852
    %v1854 = vlaneseq
    %v1855 = vshrl.u32 %v1854, 7
    %v1856 = vsub.s32 7, %v1855
    %v1857 = vrot.slane %v1785, %v1856
    %v1858 = vlaneseq
    %v1859 = vshrl.u32 %v1858, 7
    %v1860 = vsub.s32 0, %v1859
    %v1861 = vrot.slane %v1786, %v1860
    %v1862 = vlaneseq
    %v1863 = vshrl.u32 %v1862, 7
    %v1864 = vsub.s32 1, %v1863
    %v1865 = vrot.slane %v1786, %v1864
    %v1866 = vlaneseq
    %v1867 = vshrl.u32 %v1866, 7
    %v1868 = vsub.s32 2, %v1867
    %v1869 = vrot.slane %v1786, %v1868
    %v1870 = vlaneseq
    %v1871 = vshrl.u32 %v1870, 7
    %v1872 = vsub.s32 3, %v1871
    %v1873 = vrot.slane %v1786, %v1872
    %v1874 = vlaneseq
    %v1875 = vshrl.u32 %v1874, 7
    %v1876 = vsub.s32 4, %v1875
    %v1877 = vrot.slane %v1786, %v1876
    %v1878 = vlaneseq
    %v1879 = vshrl.u32 %v1878, 7
    %v1880 = vsub.s32 5, %v1879
    %v1881 = vrot.slane %v1786, %v1880
    %v1882 = vlaneseq
    %v1883 = vshrl.u32 %v1882, 7
    %v1884 = vsub.s32 6, %v1883
    %v1885 = vrot.slane %v1786, %v1884
    %v1886 = vlaneseq
    %v1887 = vshrl.u32 %v1886, 7
    %v1888 = vsub.s32 7, %v1887
    %v1889 = vrot.slane %v1786, %v1888
    %v1890 = vlaneseq
    %v1891 = vshrl.u32 %v1890, 7
    %v1892 = vsub.s32 0, %v1891
    %v1893 = vrot.slane %v1787, %v1892
    %v1894 = vlaneseq
    %v1895 = vshrl.u32 %v1894, 7
    %v1896 = vsub.s32 1, %v1895
    %v1897 = vrot.slane %v1787, %v1896
    %v1898 = vlaneseq
    %v1899 = vshrl.u32 %v1898, 7
    %v1900 = vsub.s32 2, %v1899
    %v1901 = vrot.slane %v1787, %v1900
    %v1902 = vlaneseq
    %v1903 = vshrl.u32 %v1902, 7
    %v1904 = vsub.s32 3, %v1903
    %v1905 = vrot.slane %v1787, %v1904
    %v1906 = vlaneseq
    %v1907 = vshrl.u32 %v1906, 7
    %v1908 = vsub.s32 4, %v1907
    %v1909 = vrot.slane %v1787, %v1908
    %v1910 = vlaneseq
    %v1911 = vshrl.u32 %v1910, 7
    %v1912 = vsub.s32 5, %v1911
    %v1913 = vrot.slane %v1787, %v1912
    %v1914 = vlaneseq
    %v1915 = vshrl.u32 %v1914, 7
    %v1916 = vsub.s32 6, %v1915
    %v1917 = vrot.slane %v1787, %v1916
    %v1918 = vlaneseq
    %v1919 = vshrl.u32 %v1918, 7
    %v1920 = vsub.s32 7, %v1919
    %v1921 = vrot.slane %v1787, %v1920
    %v1922 = vlaneseq
    %v1923 = vshrl.u32 %v1922, 7
    %v1924 = vsub.s32 0, %v1923
    %v1925 = vrot.slane %v1788, %v1924
    %v1926 = vlaneseq
    %v1927 = vshrl.u32 %v1926, 7
    %v1928 = vsub.s32 1, %v1927
    %v1929 = vrot.slane %v1788, %v1928
    %v1930 = vlaneseq
    %v1931 = vshrl.u32 %v1930, 7
    %v1932 = vsub.s32 2, %v1931
    %v1933 = vrot.slane %v1788, %v1932
    %v1934 = vlaneseq
    %v1935 = vshrl.u32 %v1934, 7
    %v1936 = vsub.s32 3, %v1935
    %v1937 = vrot.slane %v1788, %v1936
    %v2838 = vunpack.c.l.b16 %v920
    %v2839 = vunpack.c.h.b16 %v920
    %v2840 = vunpack.c.l.b16 %v921
    %v2841 = vunpack.c.h.b16 %v921
    %v2842 = vunpack.c.l.b16 %v922
    %v2843 = vunpack.c.h.b16 %v922
    %v2844 = vunpack.c.l.b16 %v923
    %v2845 = vunpack.c.h.b16 %v923
    %v2846 = vunpack.c.l.b16 %v924
    %v2847 = vunpack.c.h.b16 %v924
    %v2848 = vunpack.c.l.b16 %v925
    %v2849 = vunpack.c.h.b16 %v925
    %v2850 = vunpack.c.l.b16 %v926
    %v2851 = vunpack.c.h.b16 %v926
    %v2852 = vunpack.c.l.b16 %v927
    %v2853 = vunpack.c.h.b16 %v927
    %v2854 = vunpack.c.l.b16 %v928
    %v2855 = vunpack.c.h.b16 %v928
    %v2856 = vunpack.c.l.b16 %v929
    %v2857 = vunpack.c.h.b16 %v929
    %v2858 = vunpack.c.l.b16 %v930
    %v2859 = vunpack.c.h.b16 %v930
    %v2860 = vunpack.c.l.b16 %v931
    %v2861 = vunpack.c.h.b16 %v931
    %v2862 = vunpack.c.l.b16 %v932
    %v2863 = vunpack.c.h.b16 %v932
    %v2864 = vunpack.c.l.b16 %v933
    %v2865 = vunpack.c.h.b16 %v933
    %v2866 = vunpack.c.l.b16 %v934
    %v2867 = vunpack.c.h.b16 %v934
    %v2868 = vunpack.c.l.b16 %v935
    %v2869 = vunpack.c.h.b16 %v935
    %v2870 = vunpack.c.l.b16 %v936
    %v2871 = vunpack.c.h.b16 %v936
    %v2872 = vunpack.c.l.b16 %v937
    %v2873 = vunpack.c.h.b16 %v937
    %v2874 = vunpack.c.l.b16 %v938
    %v2875 = vunpack.c.h.b16 %v938
    %v2876 = vunpack.c.l.b16 %v939
    %v2877 = vunpack.c.h.b16 %v939
    %v2878 = vunpack.c.l.b16 %v940
    %v2879 = vunpack.c.h.b16 %v940
    %v2880 = vunpack.c.l.b16 %v941
    %v2881 = vunpack.c.h.b16 %v941
    %v2882 = vunpack.c.l.b16 %v942
    %v2883 = vunpack.c.h.b16 %v942
    %v2884 = vunpack.c.l.b16 %v943
    %v2885 = vunpack.c.h.b16 %v943
    %v2886 = vunpack.c.l.b16 %v944
    %v2887 = vunpack.c.h.b16 %v944
    %v2888 = vunpack.c.l.b16 %v945
    %v2889 = vunpack.c.h.b16 %v945
    %v2890 = vunpack.c.l.b16 %v946
    %v2891 = vunpack.c.h.b16 %v946
    %v2892 = vunpack.c.l.b16 %v947
    %v2893 = vunpack.c.h.b16 %v947
    %v2894 = vunpack.c.l.b16 %v948
    %v2895 = vunpack.c.h.b16 %v948
    %v2896 = vunpack.c.l.b16 %v949
    %v2897 = vunpack.c.h.b16 %v949
    %v2898 = vunpack.c.l.b16 %v950
    %v2899 = vunpack.c.h.b16 %v950
    %v2900 = vunpack.c.l.b16 %v951
    %v2901 = vunpack.c.h.b16 %v951
    %v2902 = vunpack.c.l.b16 %v952
    %v2903 = vunpack.c.h.b16 %v952
    %v2904 = vunpack.c.l.b16 %v953
    %v2905 = vunpack.c.h.b16 %v953
    %v2906 = vunpack.c.l.b16 %v954
    %v2907 = vunpack.c.h.b16 %v954
    %v2908 = vunpack.c.l.b16 %v955
    %v2909 = vunpack.c.h.b16 %v955
    %v2910 = vunpack.c.l.b16 %v956
    %v2911 = vunpack.c.h.b16 %v956
    %v2912 = vunpack.c.l.b16 %v957
    %v2913 = vunpack.c.h.b16 %v957
    %v2914 = vunpack.c.l.b16 %v958
    %v2915 = vunpack.c.h.b16 %v958
    %v2916 = vunpack.c.l.b16 %v959
    %v2917 = vunpack.c.h.b16 %v959
    %v2918 = vunpack.c.l.b16 %v960
    %v2919 = vunpack.c.h.b16 %v960
    %v2920 = vunpack.c.l.b16 %v961
    %v2921 = vunpack.c.h.b16 %v961
    %v2922 = vunpack.c.l.b16 %v962
    %v2923 = vunpack.c.h.b16 %v962
    %v2924 = vunpack.c.l.b16 %v963
    %v2925 = vunpack.c.h.b16 %v963
    %v2926 = vunpack.c.l.b16 %v964
    %v2927 = vunpack.c.h.b16 %v964
    %v2928 = vunpack.c.l.b16 %v965
    %v2929 = vunpack.c.h.b16 %v965
    %v2930 = vunpack.c.l.b16 %v966
    %v2931 = vunpack.c.h.b16 %v966
    %v2932 = vunpack.c.l.b16 %v967
    %v2933 = vunpack.c.h.b16 %v967
    %v2934 = vunpack.c.l.b16 %v968
    %v2935 = vunpack.c.h.b16 %v968
    %v2936 = vunpack.c.l.b16 %v969
    %v2937 = vunpack.c.h.b16 %v969
    %v2938 = vunpack.c.l.b16 %v970
    %v2939 = vunpack.c.h.b16 %v970
    %v2940 = vunpack.c.l.b16 %v971
    %v2941 = vunpack.c.h.b16 %v971
    %v2942 = vunpack.c.l.b16 %v972
    %v2943 = vunpack.c.h.b16 %v972
    %v2944 = vunpack.c.l.b16 %v973
    %v2945 = vunpack.c.h.b16 %v973
    %v2946 = vunpack.c.l.b16 %v974
    %v2947 = vunpack.c.h.b16 %v974
    %v2948 = vunpack.c.l.b16 %v975
    %v2949 = vunpack.c.h.b16 %v975
    %v2950 = vunpack.c.l.b16 %v976
    %v2951 = vunpack.c.h.b16 %v976
    %v2952 = vunpack.c.l.b16 %v977
    %v2953 = vunpack.c.h.b16 %v977
    %v2954 = vunpack.c.l.b16 %v978
    %v2955 = vunpack.c.h.b16 %v978
    %v2956 = vunpack.c.l.b16 %v979
    %v2957 = vunpack.c.h.b16 %v979
    %v2958 = vunpack.c.l.b16 %v980
    %v2959 = vunpack.c.h.b16 %v980
    %v2960 = vunpack.c.l.b16 %v981
    %v2961 = vunpack.c.h.b16 %v981
    %v2962 = vunpack.c.l.b16 %v982
    %v2963 = vunpack.c.h.b16 %v982
    %v2964 = vunpack.c.l.b16 %v983
    %v2965 = vunpack.c.h.b16 %v983
    %v2966 = vunpack.c.l.b16 %v984
    %v2967 = vunpack.c.h.b16 %v984
    %v2968 = vunpack.c.l.b16 %v985
    %v2969 = vunpack.c.h.b16 %v985
    %v2970 = vunpack.c.l.b16 %v986
    %v2971 = vunpack.c.h.b16 %v986
    %v2972 = vunpack.c.l.b16 %v987
    %v2973 = vunpack.c.h.b16 %v987
    %v2974 = vunpack.c.l.b16 %v988
    %v2975 = vunpack.c.h.b16 %v988
    %v2976 = vunpack.c.l.b16 %v989
    %v2977 = vunpack.c.h.b16 %v989
    %v2978 = vunpack.c.l.b16 %v990
    %v2979 = vunpack.c.h.b16 %v990
    %v2980 = vunpack.c.l.b16 %v991
    %v2981 = vunpack.c.h.b16 %v991
    %v2982 = vunpack.c.l.b16 %v992
    %v2983 = vunpack.c.h.b16 %v992
    %v2984 = vunpack.c.l.b16 %v993
    %v2985 = vunpack.c.h.b16 %v993
    %v2986 = vunpack.c.l.b16 %v994
    %v2987 = vunpack.c.h.b16 %v994
    %v2988 = vunpack.c.l.b16 %v995
    %v2989 = vunpack.c.h.b16 %v995
    %v2990 = vunpack.c.l.b16 %v996
    %v2991 = vunpack.c.h.b16 %v996
    %v2992 = vunpack.c.l.b16 %v997
    %v2993 = vunpack.c.h.b16 %v997
    %v2994 = vunpack.c.l.b16 %v998
    %v2995 = vunpack.c.h.b16 %v998
    %v2996 = vunpack.c.l.b16 %v999
    %v2997 = vunpack.c.h.b16 %v999
    %v2998 = vunpack.c.l.b16 %v1000
    %v2999 = vunpack.c.h.b16 %v1000
    %v3000 = vunpack.c.l.b16 %v1001
    %v3001 = vunpack.c.h.b16 %v1001
    %v3002 = vunpack.c.l.b16 %v1002
    %v3003 = vunpack.c.h.b16 %v1002
    %v3004 = vunpack.c.l.b16 %v1003
    %v3005 = vunpack.c.h.b16 %v1003
    %v3006 = vunpack.c.l.b16 %v1004
    %v3007 = vunpack.c.h.b16 %v1004
    %v3008 = vunpack.c.l.b16 %v1005
    %v3009 = vunpack.c.h.b16 %v1005
    %v3010 = vunpack.c.l.b16 %v1006
    %v3011 = vunpack.c.h.b16 %v1006
    %v3012 = vunpack.c.l.b16 %v1007
    %v3013 = vunpack.c.h.b16 %v1007
    %v3014 = vunpack.c.l.b16 %v1008
    %v3015 = vunpack.c.h.b16 %v1008
    %v3016 = vunpack.c.l.b16 %v1009
    %v3017 = vunpack.c.h.b16 %v1009
    %v3018 = vunpack.c.l.b16 %v1010
    %v3019 = vunpack.c.h.b16 %v1010
    %v3020 = vunpack.c.l.b16 %v1011
    %v3021 = vunpack.c.h.b16 %v1011
    %v3022 = vunpack.c.l.b16 %v1012
    %v3023 = vunpack.c.h.b16 %v1012
    %v3024 = vunpack.c.l.b16 %v1013
    %v3025 = vunpack.c.h.b16 %v1013
    %v3026 = vunpack.c.l.b16 %v1014
    %v3027 = vunpack.c.h.b16 %v1014
    %v3028 = vunpack.c.l.b16 %v1015
    %v3029 = vunpack.c.h.b16 %v1015
    %v3030 = vunpack.c.l.b16 %v1016
    %v3031 = vunpack.c.h.b16 %v1016
    %v3032 = vunpack.c.l.b16 %v1017
    %v3033 = vunpack.c.h.b16 %v1017
    %v3034 = vunpack.c.l.b16 %v1018
    %v3035 = vunpack.c.h.b16 %v1018
    %v3036 = vunpack.c.l.b16 %v1019
    %v3037 = vunpack.c.h.b16 %v1019
    %v3038 = vunpack.c.l.b16 %v1020
    %v3039 = vunpack.c.h.b16 %v1020
    %v3040 = vunpack.c.l.b16 %v1021
    %v3041 = vunpack.c.h.b16 %v1021
    %v3042 = vunpack.c.l.b16 %v1022
    %v3043 = vunpack.c.h.b16 %v1022
    %v3044 = vunpack.c.l.b16 %v1023
    %v3045 = vunpack.c.h.b16 %v1023
    %v3046 = vunpack.c.l.b16 %v1024
    %v3047 = vunpack.c.h.b16 %v1024
    %v3048 = vunpack.c.l.b16 %v1025
    %v3049 = vunpack.c.h.b16 %v1025
    %v3050 = vunpack.c.l.b16 %v1026
    %v3051 = vunpack.c.h.b16 %v1026
    %v3052 = vunpack.c.l.b16 %v1027
    %v3053 = vunpack.c.h.b16 %v1027
    %v3054 = vunpack.c.l.b16 %v1028
    %v3055 = vunpack.c.h.b16 %v1028
    %v3056 = vunpack.c.l.b16 %v1029
    %v3057 = vunpack.c.h.b16 %v1029
    %v3058 = vunpack.c.l.b16 %v1030
    %v3059 = vunpack.c.h.b16 %v1030
    %v3060 = vunpack.c.l.b16 %v1031
    %v3061 = vunpack.c.h.b16 %v1031
    %v3062 = vunpack.c.l.b16 %v1032
    %v3063 = vunpack.c.h.b16 %v1032
    %v3064 = vunpack.c.l.b16 %v1033
    %v3065 = vunpack.c.h.b16 %v1033
    %v3066 = vunpack.c.l.b16 %v1034
    %v3067 = vunpack.c.h.b16 %v1034
    %v3068 = vunpack.c.l.b16 %v1035
    %v3069 = vunpack.c.h.b16 %v1035
    %v3070 = vunpack.c.l.b16 %v1036
    %v3071 = vunpack.c.h.b16 %v1036
    %v3072 = vunpack.c.l.b16 %v1037
    %v3073 = vunpack.c.h.b16 %v1037
    %v3074 = vunpack.c.l.b16 %v1038
    %v3075 = vunpack.c.h.b16 %v1038
    %v3076 = vunpack.c.l.b16 %v1039
    %v3077 = vunpack.c.h.b16 %v1039
    %v3078 = vunpack.c.l.b16 %v1040
    %v3079 = vunpack.c.h.b16 %v1040
    %v3080 = vunpack.c.l.b16 %v1041
    %v3081 = vunpack.c.h.b16 %v1041
    %v3082 = vunpack.c.l.b16 %v1042
    %v3083 = vunpack.c.h.b16 %v1042
    %v3084 = vunpack.c.l.b16 %v1043
    %v3085 = vunpack.c.h.b16 %v1043
    %v3086 = vunpack.c.l.b16 %v1044
    %v3087 = vunpack.c.h.b16 %v1044
    %v3088 = vunpack.c.l.b16 %v1045
    %v3089 = vunpack.c.h.b16 %v1045
    %v3090 = vunpack.c.l.b16 %v1046
    %v3091 = vunpack.c.h.b16 %v1046
    %v3092 = vunpack.c.l.b16 %v1047
    %v3093 = vunpack.c.h.b16 %v1047
    %v3094 = vunpack.c.l.b16 %v1048
    %v3095 = vunpack.c.h.b16 %v1048
    %v3096 = vunpack.c.l.b16 %v1049
    %v3097 = vunpack.c.h.b16 %v1049
    %v3098 = vunpack.c.l.b16 %v1050
    %v3099 = vunpack.c.h.b16 %v1050
    %v3100 = vunpack.c.l.b16 %v1051
    %v3101 = vunpack.c.h.b16 %v1051
    %v3102 = vunpack.c.l.b16 %v1052
    %v3103 = vunpack.c.h.b16 %v1052
    %v3104 = vunpack.c.l.b16 %v1053
    %v3105 = vunpack.c.h.b16 %v1053
    %v3106 = vunpack.c.l.b16 %v1054
    %v3107 = vunpack.c.h.b16 %v1054
    %v3108 = vunpack.c.l.b16 %v1055
    %v3109 = vunpack.c.h.b16 %v1055
    %v3110 = vunpack.c.l.b16 %v1056
    %v3111 = vunpack.c.h.b16 %v1056
    %v3112 = vunpack.c.l.b16 %v1057
    %v3113 = vunpack.c.h.b16 %v1057
    %v3114 = vunpack.c.l.b16 %v1058
    %v3115 = vunpack.c.h.b16 %v1058
    %v3116 = vunpack.c.l.b16 %v1059
    %v3117 = vunpack.c.h.b16 %v1059
    %v3118 = vunpack.c.l.b16 %v1060
    %v3119 = vunpack.c.h.b16 %v1060
    %v3120 = vunpack.c.l.b16 %v1061
    %v3121 = vunpack.c.h.b16 %v1061
    %v3122 = vunpack.c.l.b16 %v1062
    %v3123 = vunpack.c.h.b16 %v1062
    %v3124 = vunpack.c.l.b16 %v1063
    %v3125 = vunpack.c.h.b16 %v1063
    %v3126 = vunpack.c.l.b16 %v1064
    %v3127 = vunpack.c.h.b16 %v1064
    %v3128 = vunpack.c.l.b16 %v1065
    %v3129 = vunpack.c.h.b16 %v1065
    %v3130 = vunpack.c.l.b16 %v1066
    %v3131 = vunpack.c.h.b16 %v1066
    %v3132 = vunpack.c.l.b16 %v1067
    %v3133 = vunpack.c.h.b16 %v1067
    %v3134 = vunpack.c.l.b16 %v1068
    %v3135 = vunpack.c.h.b16 %v1068
    %v3136 = vunpack.c.l.b16 %v1069
    %v3137 = vunpack.c.h.b16 %v1069
    %v3138 = vunpack.c.l.b16 %v1070
    %v3139 = vunpack.c.h.b16 %v1070
    %v3140 = vunpack.c.l.b16 %v1071
    %v3141 = vunpack.c.h.b16 %v1071
    %v3142 = vunpack.c.l.b16 %v1072
    %v3143 = vunpack.c.h.b16 %v1072
    %v3144 = vunpack.c.l.b16 %v1073
    %v3145 = vunpack.c.h.b16 %v1073
    %v3146 = vunpack.c.l.b16 %v1074
    %v3147 = vunpack.c.h.b16 %v1074
    %v3148 = vunpack.c.l.b16 %v1075
    %v3149 = vunpack.c.h.b16 %v1075
    %v3150 = vunpack.c.l.b16 %v1076
    %v3151 = vunpack.c.h.b16 %v1076
    %v3152 = vunpack.c.l.b16 %v1077
    %v3153 = vunpack.c.h.b16 %v1077
    %v3154 = vunpack.c.l.b16 %v1078
    %v3155 = vunpack.c.h.b16 %v1078
    %v3156 = vunpack.c.l.b16 %v1079
    %v3157 = vunpack.c.h.b16 %v1079
    %v3158 = vunpack.c.l.b16 %v1080
    %v3159 = vunpack.c.h.b16 %v1080
    %v3160 = vunpack.c.l.b16 %v1081
    %v3161 = vunpack.c.h.b16 %v1081
    %v3162 = vunpack.c.l.b16 %v1082
    %v3163 = vunpack.c.h.b16 %v1082
    %v3164 = vunpack.c.l.b16 %v1083
    %v3165 = vunpack.c.h.b16 %v1083
    %v3166 = vunpack.c.l.b16 %v1084
    %v3167 = vunpack.c.h.b16 %v1084
    %v3168 = vunpack.c.l.b16 %v1085
    %v3169 = vunpack.c.h.b16 %v1085
    %v3170 = vunpack.c.l.b16 %v1086
    %v3171 = vunpack.c.h.b16 %v1086
    %v3172 = vunpack.c.l.b16 %v1087
    %v3173 = vunpack.c.h.b16 %v1087
    %v3174 = vunpack.c.l.b16 %v1088
    %v3175 = vunpack.c.h.b16 %v1088
    %v3176 = vunpack.c.l.b16 %v1089
    %v3177 = vunpack.c.h.b16 %v1089
    %v3178 = vunpack.c.l.b16 %v1090
    %v3179 = vunpack.c.h.b16 %v1090
    %v3180 = vunpack.c.l.b16 %v1091
    %v3181 = vunpack.c.h.b16 %v1091
    %v3182 = vunpack.c.l.b16 %v1092
    %v3183 = vunpack.c.h.b16 %v1092
    %v3184 = vunpack.c.l.b16 %v1093
    %v3185 = vunpack.c.h.b16 %v1093
    %v3186 = vunpack.c.l.b16 %v1094
    %v3187 = vunpack.c.h.b16 %v1094
    %v3188 = vunpack.c.l.b16 %v1095
    %v3189 = vunpack.c.h.b16 %v1095
    %v3190 = vunpack.c.l.b16 %v1096
    %v3191 = vunpack.c.h.b16 %v1096
    %v3192 = vunpack.c.l.b16 %v1097
    %v3193 = vunpack.c.h.b16 %v1097
    %v3194 = vunpack.c.l.b16 %v1098
    %v3195 = vunpack.c.h.b16 %v1098
    %v3196 = vunpack.c.l.b16 %v1099
    %v3197 = vunpack.c.h.b16 %v1099
    %v3198 = vunpack.c.l.b16 %v1100
    %v3199 = vunpack.c.h.b16 %v1100
    %v3200 = vunpack.c.l.b16 %v1101
    %v3201 = vunpack.c.h.b16 %v1101
    %v3202 = vunpack.c.l.b16 %v1102
    %v3203 = vunpack.c.h.b16 %v1102
    %v3204 = vunpack.c.l.b16 %v1103
    %v3205 = vunpack.c.h.b16 %v1103
    %v3206 = vunpack.c.l.b16 %v1104
    %v3207 = vunpack.c.h.b16 %v1104
    %v3208 = vunpack.c.l.b16 %v1105
    %v3209 = vunpack.c.h.b16 %v1105
    %v3210 = vunpack.c.l.b16 %v1106
    %v3211 = vunpack.c.h.b16 %v1106
    %v3212 = vunpack.c.l.b16 %v1107
    %v3213 = vunpack.c.h.b16 %v1107
    %v3214 = vunpack.c.l.b16 %v1108
    %v3215 = vunpack.c.h.b16 %v1108
    %v3216 = vunpack.c.l.b16 %v1109
    %v3217 = vunpack.c.h.b16 %v1109
    %v3218 = vunpack.c.l.b16 %v1110
    %v3219 = vunpack.c.h.b16 %v1110
    %v3220 = vunpack.c.l.b16 %v1111
    %v3221 = vunpack.c.h.b16 %v1111
    %v3222 = vunpack.c.l.b16 %v1112
    %v3223 = vunpack.c.h.b16 %v1112
    %v3224 = vunpack.c.l.b16 %v1113
    %v3225 = vunpack.c.h.b16 %v1113
    %v3226 = vunpack.c.l.b16 %v1114
    %v3227 = vunpack.c.h.b16 %v1114
    %v3228 = vunpack.c.l.b16 %v1115
    %v3229 = vunpack.c.h.b16 %v1115
    %v3230 = vunpack.c.l.b16 %v1116
    %v3231 = vunpack.c.h.b16 %v1116
    %v3232 = vunpack.c.l.b16 %v1117
    %v3233 = vunpack.c.h.b16 %v1117
    %v3234 = vunpack.c.l.b16 %v1118
    %v3235 = vunpack.c.h.b16 %v1118
    %v3236 = vunpack.c.l.b16 %v1119
    %v3237 = vunpack.c.h.b16 %v1119
    %v3238 = vunpack.c.l.b16 %v1120
    %v3239 = vunpack.c.h.b16 %v1120
    %v3240 = vunpack.c.l.b16 %v1121
    %v3241 = vunpack.c.h.b16 %v1121
    %v3242 = vunpack.c.l.b16 %v1122
    %v3243 = vunpack.c.h.b16 %v1122
    %v3244 = vunpack.c.l.b16 %v1123
    %v3245 = vunpack.c.h.b16 %v1123
    %v3246 = vunpack.c.l.b16 %v1124
    %v3247 = vunpack.c.h.b16 %v1124
    %v3248 = vunpack.c.l.b16 %v1125
    %v3249 = vunpack.c.h.b16 %v1125
    %v3250 = vunpack.c.l.b16 %v1126
    %v3251 = vunpack.c.h.b16 %v1126
    %v3252 = vunpack.c.l.b16 %v1127
    %v3253 = vunpack.c.h.b16 %v1127
    %v3254 = vunpack.c.l.b16 %v1128
    %v3255 = vunpack.c.h.b16 %v1128
    %v3256 = vunpack.c.l.b16 %v1129
    %v3257 = vunpack.c.h.b16 %v1129
    %v3258 = vunpack.c.l.b16 %v1130
    %v3259 = vunpack.c.h.b16 %v1130
    %v3260 = vunpack.c.l.b16 %v1131
    %v3261 = vunpack.c.h.b16 %v1131
    %v3262 = vunpack.c.l.b16 %v1132
    %v3263 = vunpack.c.h.b16 %v1132
    %v3264 = vunpack.c.l.b16 %v1133
    %v3265 = vunpack.c.h.b16 %v1133
    %v3266 = vunpack.c.l.b16 %v1134
    %v3267 = vunpack.c.h.b16 %v1134
    %v3268 = vunpack.c.l.b16 %v1135
    %v3269 = vunpack.c.h.b16 %v1135
    %v3270 = vunpack.c.l.b16 %v1136
    %v3271 = vunpack.c.h.b16 %v1136
    %v3272 = vunpack.c.l.b16 %v1137
    %v3273 = vunpack.c.h.b16 %v1137
    %v3274 = vunpack.c.l.b16 %v1138
    %v3275 = vunpack.c.h.b16 %v1138
    %v3276 = vunpack.c.l.b16 %v1139
    %v3277 = vunpack.c.h.b16 %v1139
    %v3278 = vunpack.c.l.b16 %v1140
    %v3279 = vunpack.c.h.b16 %v1140
    %v3280 = vunpack.c.l.b16 %v1141
    %v3281 = vunpack.c.h.b16 %v1141
    %v3282 = vunpack.c.l.b16 %v1142
    %v3283 = vunpack.c.h.b16 %v1142
    %v3284 = vunpack.c.l.b16 %v1143
    %v3285 = vunpack.c.h.b16 %v1143
    %v3286 = vunpack.c.l.b16 %v1144
    %v3287 = vunpack.c.h.b16 %v1144
    %v3288 = vunpack.c.l.b16 %v1145
    %v3289 = vunpack.c.h.b16 %v1145
    %v3290 = vunpack.c.l.b16 %v1146
    %v3291 = vunpack.c.h.b16 %v1146
    %v3292 = vunpack.c.l.b16 %v1147
    %v3293 = vunpack.c.h.b16 %v1147
    %v3294 = vunpack.c.l.b16 %v1148
    %v3295 = vunpack.c.h.b16 %v1148
    %v3296 = vunpack.c.l.b16 %v1149
    %v3297 = vunpack.c.h.b16 %v1149
    %v3298 = vunpack.c.l.b16 %v1150
    %v3299 = vunpack.c.h.b16 %v1150
    %v3300 = vunpack.c.l.b16 %v1151
    %v3301 = vunpack.c.h.b16 %v1151
    %v3302 = vunpack.c.l.b16 %v1152
    %v3303 = vunpack.c.h.b16 %v1152
    %v3304 = vunpack.c.l.b16 %v1153
    %v3305 = vunpack.c.h.b16 %v1153
    %v3306 = vunpack.c.l.b16 %v1154
    %v3307 = vunpack.c.h.b16 %v1154
    %v3308 = vunpack.c.l.b16 %v1155
    %v3309 = vunpack.c.h.b16 %v1155
    %v3310 = vunpack.c.l.b16 %v1156
    %v3311 = vunpack.c.h.b16 %v1156
    %v3312 = vunpack.c.l.b16 %v1157
    %v3313 = vunpack.c.h.b16 %v1157
    %v3314 = vunpack.c.l.b16 %v1158
    %v3315 = vunpack.c.h.b16 %v1158
    %v3316 = vunpack.c.l.b16 %v1159
    %v3317 = vunpack.c.h.b16 %v1159
    %v3318 = vunpack.c.l.b16 %v1160
    %v3319 = vunpack.c.h.b16 %v1160
    %v3320 = vunpack.c.l.b16 %v1161
    %v3321 = vunpack.c.h.b16 %v1161
    %v3322 = vunpack.c.l.b16 %v1162
    %v3323 = vunpack.c.h.b16 %v1162
    %v3324 = vunpack.c.l.b16 %v1163
    %v3325 = vunpack.c.h.b16 %v1163
    %v3326 = vunpack.c.l.b16 %v1164
    %v3327 = vunpack.c.h.b16 %v1164
    %v3328 = vunpack.c.l.b16 %v1165
    %v3329 = vunpack.c.h.b16 %v1165
    %v3330 = vunpack.c.l.b16 %v1166
    %v3331 = vunpack.c.h.b16 %v1166
    %v3332 = vunpack.c.l.b16 %v1167
    %v3333 = vunpack.c.h.b16 %v1167
    %v3334 = vunpack.c.l.b16 %v1168
    %v3335 = vunpack.c.h.b16 %v1168
    %v3336 = vunpack.c.l.b16 %v1169
    %v3337 = vunpack.c.h.b16 %v1169
    %v3338 = vunpack.c.l.b16 %v1170
    %v3339 = vunpack.c.h.b16 %v1170
    %v3340 = vunpack.c.l.b16 %v1171
    %v3341 = vunpack.c.h.b16 %v1171
    %v3342 = vunpack.c.l.b16 %v1172
    %v3343 = vunpack.c.h.b16 %v1172
    %v3344 = vunpack.c.l.b16 %v1173
    %v3345 = vunpack.c.h.b16 %v1173
    %v3346 = vunpack.c.l.b16 %v1174
    %v3347 = vunpack.c.h.b16 %v1174
    %v3348 = vunpack.c.l.b16 %v1175
    %v3349 = vunpack.c.h.b16 %v1175
    %v3350 = vunpack.c.l.b16 %v1176
    %v3351 = vunpack.c.h.b16 %v1176
    %v3352 = vunpack.c.l.b16 %v1177
    %v3353 = vunpack.c.h.b16 %v1177
    %v3354 = vunpack.c.l.b16 %v1178
    %v3355 = vunpack.c.h.b16 %v1178
    %v3356 = vunpack.c.l.b16 %v1179
    %v3357 = vunpack.c.h.b16 %v1179
    %v3358 = vunpack.c.l.b16 %v1180
    %v3359 = vunpack.c.h.b16 %v1180
    %v3360 = vunpack.c.l.b16 %v1181
    %v3361 = vunpack.c.h.b16 %v1181
    %v3362 = vunpack.c.l.b16 %v1182
    %v3363 = vunpack.c.h.b16 %v1182
    %v3364 = vunpack.c.l.b16 %v1183
    %v3365 = vunpack.c.h.b16 %v1183
    %v3366 = vunpack.c.l.b16 %v1184
    %v3367 = vunpack.c.h.b16 %v1184
    %v3368 = vunpack.c.l.b16 %v1185
    %v3369 = vunpack.c.h.b16 %v1185
    %v3370 = vunpack.c.l.b16 %v1186
    %v3371 = vunpack.c.h.b16 %v1186
    %v3372 = vunpack.c.l.b16 %v1187
    %v3373 = vunpack.c.h.b16 %v1187
    %v3374 = vunpack.c.l.b16 %v1188
    %v3375 = vunpack.c.h.b16 %v1188
    %v3376 = vunpack.c.l.b16 %v1189
    %v3377 = vunpack.c.h.b16 %v1189
    %v3378 = vunpack.c.l.b16 %v1190
    %v3379 = vunpack.c.h.b16 %v1190
    %v3380 = vunpack.c.l.b16 %v1191
    %v3381 = vunpack.c.h.b16 %v1191
    %v3382 = vunpack.c.l.b16 %v1192
    %v3383 = vunpack.c.h.b16 %v1192
    %v3384 = vunpack.c.l.b16 %v1193
    %v3385 = vunpack.c.h.b16 %v1193
    %v3386 = vunpack.c.l.b16 %v1194
    %v3387 = vunpack.c.h.b16 %v1194
    %v3388 = vunpack.c.l.b16 %v1195
    %v3389 = vunpack.c.h.b16 %v1195
    %v3390 = vunpack.c.l.b16 %v1196
    %v3391 = vunpack.c.h.b16 %v1196
    %v3392 = vunpack.c.l.b16 %v1197
    %v3393 = vunpack.c.h.b16 %v1197
    %v3394 = vunpack.c.l.b16 %v1198
    %v3395 = vunpack.c.h.b16 %v1198
    %v3396 = vunpack.c.l.b16 %v1199
    %v3397 = vunpack.c.h.b16 %v1199
    %v3398 = vunpack.c.l.b16 %v1200
    %v3399 = vunpack.c.h.b16 %v1200
    %v3400 = vunpack.c.l.b16 %v1201
    %v3401 = vunpack.c.h.b16 %v1201
    %v3402 = vunpack.c.l.b16 %v1202
    %v3403 = vunpack.c.h.b16 %v1202
    %v3404 = vunpack.c.l.b16 %v1203
    %v3405 = vunpack.c.h.b16 %v1203
    %v3406 = vunpack.c.l.b16 %v1204
    %v3407 = vunpack.c.h.b16 %v1204
    %v3408 = vunpack.c.l.b16 %v1205
    %v3409 = vunpack.c.h.b16 %v1205
    %v3410 = vunpack.c.l.b16 %v1206
    %v3411 = vunpack.c.h.b16 %v1206
    %v3412 = vunpack.c.l.b16 %v1207
    %v3413 = vunpack.c.h.b16 %v1207
    %v3414 = vunpack.c.l.b16 %v1208
    %v3415 = vunpack.c.h.b16 %v1208
    %v3416 = vunpack.c.l.b16 %v1209
    %v3417 = vunpack.c.h.b16 %v1209
    %v3418 = vunpack.c.l.b16 %v1210
    %v3419 = vunpack.c.h.b16 %v1210
    %v3420 = vunpack.c.l.b16 %v1211
    %v3421 = vunpack.c.h.b16 %v1211
    %v3422 = vunpack.c.l.b16 %v1212
    %v3423 = vunpack.c.h.b16 %v1212
    %v3424 = vunpack.c.l.b16 %v1213
    %v3425 = vunpack.c.h.b16 %v1213
    %v3426 = vunpack.c.l.b16 %v1214
    %v3427 = vunpack.c.h.b16 %v1214
    %v3428 = vunpack.c.l.b16 %v1215
    %v3429 = vunpack.c.h.b16 %v1215
    %v3430 = vunpack.c.l.b16 %v1216
    %v3431 = vunpack.c.h.b16 %v1216
    %v3432 = vunpack.c.l.b16 %v1217
    %v3433 = vunpack.c.h.b16 %v1217
    %v3434 = vunpack.c.l.b16 %v1218
    %v3435 = vunpack.c.h.b16 %v1218
    %v3436 = vunpack.c.l.b16 %v1219
    %v3437 = vunpack.c.h.b16 %v1219
    %v3438 = vunpack.c.l.b16 %v1220
    %v3439 = vunpack.c.h.b16 %v1220
    %v3440 = vunpack.c.l.b16 %v1221
    %v3441 = vunpack.c.h.b16 %v1221
    %v3442 = vunpack.c.l.b16 %v1222
    %v3443 = vunpack.c.h.b16 %v1222
    %v3444 = vunpack.c.l.b16 %v1223
    %v3445 = vunpack.c.h.b16 %v1223
    %v3446 = vunpack.c.l.b16 %v1224
    %v3447 = vunpack.c.h.b16 %v1224
    %v3448 = vunpack.c.l.b16 %v1225
    %v3449 = vunpack.c.h.b16 %v1225
    %v3450 = vunpack.c.l.b16 %v1226
    %v3451 = vunpack.c.h.b16 %v1226
    %v3452 = vunpack.c.l.b16 %v1227
    %v3453 = vunpack.c.h.b16 %v1227
    %v3454 = vunpack.c.l.b16 %v1228
    %v3455 = vunpack.c.h.b16 %v1228
    %v3456 = vunpack.c.l.b16 %v1229
    %v3457 = vunpack.c.h.b16 %v1229
    %v3458 = vunpack.c.l.b16 %v1230
    %v3459 = vunpack.c.h.b16 %v1230
    %v3460 = vunpack.c.l.b16 %v1231
    %v3461 = vunpack.c.h.b16 %v1231
    %v3462 = vunpack.c.l.b16 %v1232
    %v3463 = vunpack.c.h.b16 %v1232
    %v3464 = vunpack.c.l.b16 %v1233
    %v3465 = vunpack.c.h.b16 %v1233
    %v3466 = vunpack.c.l.b16 %v1234
    %v3467 = vunpack.c.h.b16 %v1234
    %v3468 = vunpack.c.l.b16 %v1235
    %v3469 = vunpack.c.h.b16 %v1235
    %v3470 = vunpack.c.l.b16 %v1236
    %v3471 = vunpack.c.h.b16 %v1236
    %v3472 = vunpack.c.l.b16 %v1237
    %v3473 = vunpack.c.h.b16 %v1237
    %v3474 = vunpack.c.l.b16 %v1238
    %v3475 = vunpack.c.h.b16 %v1238
    %v3476 = vunpack.c.l.b16 %v1239
    %v3477 = vunpack.c.h.b16 %v1239
    %v3478 = vunpack.c.l.b16 %v1240
    %v3479 = vunpack.c.h.b16 %v1240
    %v3480 = vunpack.c.l.b16 %v1241
    %v3481 = vunpack.c.h.b16 %v1241
    %v3482 = vunpack.c.l.b16 %v1242
    %v3483 = vunpack.c.h.b16 %v1242
    %v3484 = vunpack.c.l.b16 %v1243
    %v3485 = vunpack.c.h.b16 %v1243
    %v3486 = vunpack.c.l.b16 %v1244
    %v3487 = vunpack.c.h.b16 %v1244
    %v3488 = vunpack.c.l.b16 %v1245
    %v3489 = vunpack.c.h.b16 %v1245
    %v3490 = vunpack.c.l.b16 %v1246
    %v3491 = vunpack.c.h.b16 %v1246
    %v3492 = vunpack.c.l.b16 %v1247
    %v3493 = vunpack.c.h.b16 %v1247
    %v3494 = vunpack.c.l.b16 %v1248
    %v3495 = vunpack.c.h.b16 %v1248
    %v3496 = vunpack.c.l.b16 %v1249
    %v3497 = vunpack.c.h.b16 %v1249
    %v3498 = vunpack.c.l.b16 %v1250
    %v3499 = vunpack.c.h.b16 %v1250
    %v3500 = vunpack.c.l.b16 %v1251
    %v3501 = vunpack.c.h.b16 %v1251
    %v3502 = vunpack.c.l.b16 %v1252
    %v3503 = vunpack.c.h.b16 %v1252
    %v3504 = vunpack.c.l.b16 %v1253
    %v3505 = vunpack.c.h.b16 %v1253
    %v3506 = vunpack.c.l.b16 %v1254
    %v3507 = vunpack.c.h.b16 %v1254
    %v3508 = vunpack.c.l.b16 %v1255
    %v3509 = vunpack.c.h.b16 %v1255
    %v3510 = vunpack.c.l.b16 %v1256
    %v3511 = vunpack.c.h.b16 %v1256
    %v3512 = vunpack.c.l.b16 %v1257
    %v3513 = vunpack.c.h.b16 %v1257
    %v3514 = vunpack.c.l.b16 %v1258
    %v3515 = vunpack.c.h.b16 %v1258
    %v3516 = vunpack.c.l.b16 %v1259
    %v3517 = vunpack.c.h.b16 %v1259
    %v3518 = vunpack.c.l.b16 %v1260
    %v3519 = vunpack.c.h.b16 %v1260
    %v3520 = vunpack.c.l.b16 %v1261
    %v3521 = vunpack.c.h.b16 %v1261
    %v3522 = vunpack.c.l.b16 %v1262
    %v3523 = vunpack.c.h.b16 %v1262
    %v3524 = vunpack.c.l.b16 %v1263
    %v3525 = vunpack.c.h.b16 %v1263
    %v3526 = vunpack.c.l.b16 %v1264
    %v3527 = vunpack.c.h.b16 %v1264
    %v3528 = vunpack.c.l.b16 %v1265
    %v3529 = vunpack.c.h.b16 %v1265
    %v3530 = vunpack.c.l.b16 %v1266
    %v3531 = vunpack.c.h.b16 %v1266
    %v3532 = vunpack.c.l.b16 %v1267
    %v3533 = vunpack.c.h.b16 %v1267
    %v3534 = vunpack.c.l.b16 %v1268
    %v3535 = vunpack.c.h.b16 %v1268
    %v3536 = vunpack.c.l.b16 %v1269
    %v3537 = vunpack.c.h.b16 %v1269
    %v3538 = vunpack.c.l.b16 %v1270
    %v3539 = vunpack.c.h.b16 %v1270
    %v3540 = vunpack.c.l.b16 %v1271
    %v3541 = vunpack.c.h.b16 %v1271
    %v3542 = vunpack.c.l.b16 %v1272
    %v3543 = vunpack.c.h.b16 %v1272
    %v3544 = vunpack.c.l.b16 %v1273
    %v3545 = vunpack.c.h.b16 %v1273
    %v3546 = vunpack.c.l.b16 %v1274
    %v3547 = vunpack.c.h.b16 %v1274
    %v3548 = vunpack.c.l.b16 %v1275
    %v3549 = vunpack.c.h.b16 %v1275
    %v3550 = vunpack.c.l.b16 %v1276
    %v3551 = vunpack.c.h.b16 %v1276
    %v3552 = vunpack.c.l.b16 %v1277
    %v3553 = vunpack.c.h.b16 %v1277
    %v3554 = vunpack.c.l.b16 %v1278
    %v3555 = vunpack.c.h.b16 %v1278
    %v3556 = vunpack.c.l.b16 %v1279
    %v3557 = vunpack.c.h.b16 %v1279
    %v3558 = vunpack.c.l.b16 %v1280
    %v3559 = vunpack.c.h.b16 %v1280
    %v3560 = vunpack.c.l.b16 %v1281
    %v3561 = vunpack.c.h.b16 %v1281
    %v3562 = vunpack.c.l.b16 %v1282
    %v3563 = vunpack.c.h.b16 %v1282
    %v3564 = vunpack.c.l.b16 %v1283
    %v3565 = vunpack.c.h.b16 %v1283
    %v3566 = vunpack.c.l.b16 %v1284
    %v3567 = vunpack.c.h.b16 %v1284
    %v3568 = vunpack.c.l.b16 %v1285
    %v3569 = vunpack.c.h.b16 %v1285
    %v3570 = vunpack.c.l.b16 %v1286
    %v3571 = vunpack.c.h.b16 %v1286
    %v3572 = vunpack.c.l.b16 %v1287
    %v3573 = vunpack.c.h.b16 %v1287
    %v3574 = vunpack.c.l.b16 %v1288
    %v3575 = vunpack.c.h.b16 %v1288
    %v3576 = vunpack.c.l.b16 %v1289
    %v3577 = vunpack.c.h.b16 %v1289
    %v3578 = vunpack.c.l.b16 %v1290
    %v3579 = vunpack.c.h.b16 %v1290
    %v3580 = vunpack.c.l.b16 %v1291
    %v3581 = vunpack.c.h.b16 %v1291
    %v3582 = vunpack.c.l.b16 %v1292
    %v3583 = vunpack.c.h.b16 %v1292
    %v3584 = vunpack.c.l.b16 %v1293
    %v3585 = vunpack.c.h.b16 %v1293
    %v3586 = vunpack.c.l.b16 %v1294
    %v3587 = vunpack.c.h.b16 %v1294
    %v3588 = vunpack.c.l.b16 %v1295
    %v3589 = vunpack.c.h.b16 %v1295
    %v3590 = vunpack.c.l.b16 %v1296
    %v3591 = vunpack.c.h.b16 %v1296
    %v3592 = vunpack.c.l.b16 %v1297
    %v3593 = vunpack.c.h.b16 %v1297
    %v3594 = vunpack.c.l.b16 %v1298
    %v3595 = vunpack.c.h.b16 %v1298
    %v3596 = vunpack.c.l.b16 %v1299
    %v3597 = vunpack.c.h.b16 %v1299
    %v3598 = vunpack.c.l.b16 %v1300
    %v3599 = vunpack.c.h.b16 %v1300
    %v3600 = vunpack.c.l.b16 %v1301
    %v3601 = vunpack.c.h.b16 %v1301
    %v3602 = vunpack.c.l.b16 %v1302
    %v3603 = vunpack.c.h.b16 %v1302
    %v3604 = vunpack.c.l.b16 %v1303
    %v3605 = vunpack.c.h.b16 %v1303
    %v3606 = vunpack.c.l.b16 %v1304
    %v3607 = vunpack.c.h.b16 %v1304
    %v3608 = vunpack.c.l.b16 %v1305
    %v3609 = vunpack.c.h.b16 %v1305
    %v3610 = vunpack.c.l.b16 %v1306
    %v3611 = vunpack.c.h.b16 %v1306
    %v3612 = vunpack.c.l.b16 %v1307
    %v3613 = vunpack.c.h.b16 %v1307
    %v3614 = vunpack.c.l.b16 %v1308
    %v3615 = vunpack.c.h.b16 %v1308
    %v3616 = vunpack.c.l.b16 %v1309
    %v3617 = vunpack.c.h.b16 %v1309
    %v3618 = vunpack.c.l.b16 %v1310
    %v3619 = vunpack.c.h.b16 %v1310
    %v3620 = vunpack.c.l.b16 %v1311
    %v3621 = vunpack.c.h.b16 %v1311
    %v3622 = vunpack.c.l.b16 %v1312
    %v3623 = vunpack.c.h.b16 %v1312
    %v3624 = vunpack.c.l.b16 %v1313
    %v3625 = vunpack.c.h.b16 %v1313
    %v3626 = vunpack.c.l.b16 %v1314
    %v3627 = vunpack.c.h.b16 %v1314
    %v3628 = vunpack.c.l.b16 %v1315
    %v3629 = vunpack.c.h.b16 %v1315
    %v3630 = vunpack.c.l.b16 %v1316
    %v3631 = vunpack.c.h.b16 %v1316
    %v3632 = vunpack.c.l.b16 %v1317
    %v3633 = vunpack.c.h.b16 %v1317
    %v3634 = vunpack.c.l.b16 %v1318
    %v3635 = vunpack.c.h.b16 %v1318
    %v3636 = vunpack.c.l.b16 %v1319
    %v3637 = vunpack.c.h.b16 %v1319
    %v3638 = vunpack.c.l.b16 %v1320
    %v3639 = vunpack.c.h.b16 %v1320
    %v3640 = vunpack.c.l.b16 %v1321
    %v3641 = vunpack.c.h.b16 %v1321
    %v3642 = vunpack.c.l.b16 %v1322
    %v3643 = vunpack.c.h.b16 %v1322
    %v3644 = vunpack.c.l.b16 %v1323
    %v3645 = vunpack.c.h.b16 %v1323
    %v3646 = vunpack.c.l.b16 %v1324
    %v3647 = vunpack.c.h.b16 %v1324
    %v3648 = vunpack.c.l.b16 %v1325
    %v3649 = vunpack.c.h.b16 %v1325
    %v3650 = vunpack.c.l.b16 %v1326
    %v3651 = vunpack.c.h.b16 %v1326
    %v3652 = vunpack.c.l.b16 %v1327
    %v3653 = vunpack.c.h.b16 %v1327
    %v3654 = vunpack.c.l.b16 %v1328
    %v3655 = vunpack.c.h.b16 %v1328
    %v3656 = vunpack.c.l.b16 %v1329
    %v3657 = vunpack.c.h.b16 %v1329
    %v3658 = vunpack.c.l.b16 %v1330
    %v3659 = vunpack.c.h.b16 %v1330
    %v3660 = vunpack.c.l.b16 %v1331
    %v3661 = vunpack.c.h.b16 %v1331
    %v3662 = vunpack.c.l.b16 %v1332
    %v3663 = vunpack.c.h.b16 %v1332
    %v3664 = vunpack.c.l.b16 %v1333
    %v3665 = vunpack.c.h.b16 %v1333
    %v3666 = vunpack.c.l.b16 %v1334
    %v3667 = vunpack.c.h.b16 %v1334
    %v3668 = vunpack.c.l.b16 %v1335
    %v3669 = vunpack.c.h.b16 %v1335
    %v3670 = vunpack.c.l.b16 %v1336
    %v3671 = vunpack.c.h.b16 %v1336
    %v3672 = vunpack.c.l.b16 %v1337
    %v3673 = vunpack.c.h.b16 %v1337
    %v3674 = vunpack.c.l.b16 %v1338
    %v3675 = vunpack.c.h.b16 %v1338
    %v3676 = vunpack.c.l.b16 %v1339
    %v3677 = vunpack.c.h.b16 %v1339
    %v3678 = vunpack.c.l.b16 %v1340
    %v3679 = vunpack.c.h.b16 %v1340
    %v3680 = vunpack.c.l.b16 %v1341
    %v3681 = vunpack.c.h.b16 %v1341
    %v3682 = vunpack.c.l.b16 %v1342
    %v3683 = vunpack.c.h.b16 %v1342
    %v3684 = vunpack.c.l.b16 %v1343
    %v3685 = vunpack.c.h.b16 %v1343
    %v3686 = vunpack.c.l.b16 %v1344
    %v3687 = vunpack.c.h.b16 %v1344
    %v3688 = vunpack.c.l.b16 %v1345
    %v3689 = vunpack.c.h.b16 %v1345
    %v3690 = vunpack.c.l.b16 %v1346
    %v3691 = vunpack.c.h.b16 %v1346
    %v3692 = vunpack.c.l.b16 %v1347
    %v3693 = vunpack.c.h.b16 %v1347
    %v3694 = vunpack.c.l.b16 %v1348
    %v3695 = vunpack.c.h.b16 %v1348
    %v3696 = vunpack.c.l.b16 %v1349
    %v3697 = vunpack.c.h.b16 %v1349
    %v3698 = vunpack.c.l.b16 %v1350
    %v3699 = vunpack.c.h.b16 %v1350
    %v3700 = vunpack.c.l.b16 %v1351
    %v3701 = vunpack.c.h.b16 %v1351
    %v3702 = vunpack.c.l.b16 %v1352
    %v3703 = vunpack.c.h.b16 %v1352
    %v3704 = vunpack.c.l.b16 %v1353
    %v3705 = vunpack.c.h.b16 %v1353
    %v3706 = vunpack.c.l.b16 %v1354
    %v3707 = vunpack.c.h.b16 %v1354
    %v3708 = vunpack.c.l.b16 %v1355
    %v3709 = vunpack.c.h.b16 %v1355
    %v3710 = vunpack.c.l.b16 %v1356
    %v3711 = vunpack.c.h.b16 %v1356
    %v3712 = vunpack.c.l.b16 %v1357
    %v3713 = vunpack.c.h.b16 %v1357
    %v3714 = vunpack.c.l.b16 %v1358
    %v3715 = vunpack.c.h.b16 %v1358
    %v3716 = vunpack.c.l.b16 %v1359
    %v3717 = vunpack.c.h.b16 %v1359
    %v3718 = vunpack.c.l.b16 %v1360
    %v3719 = vunpack.c.h.b16 %v1360
    %v3720 = vunpack.c.l.b16 %v1361
    %v3721 = vunpack.c.h.b16 %v1361
    %v3722 = vunpack.c.l.b16 %v1362
    %v3723 = vunpack.c.h.b16 %v1362
    %v3724 = vunpack.c.l.b16 %v1363
    %v3725 = vunpack.c.h.b16 %v1363
    %v3726 = vunpack.c.l.b16 %v1364
    %v3727 = vunpack.c.h.b16 %v1364
    %v3728 = vunpack.c.l.b16 %v1365
    %v3729 = vunpack.c.h.b16 %v1365
    %v3730 = vunpack.c.l.b16 %v1366
    %v3731 = vunpack.c.h.b16 %v1366
    %v3732 = vunpack.c.l.b16 %v1367
    %v3733 = vunpack.c.h.b16 %v1367
    %v3734 = vunpack.c.l.b16 %v1368
    %v3735 = vunpack.c.h.b16 %v1368
    %v3736 = vunpack.c.l.b16 %v1369
    %v3737 = vunpack.c.h.b16 %v1369
    %v3738 = vunpack.c.l.b16 %v1370
    %v3739 = vunpack.c.h.b16 %v1370
    %v3740 = vunpack.c.l.b16 %v1371
    %v3741 = vunpack.c.h.b16 %v1371
    %v3742 = vunpack.c.l.b16 %v1372
    %v3743 = vunpack.c.h.b16 %v1372
    %v3744 = vunpack.c.l.b16 %v1373
    %v3745 = vunpack.c.h.b16 %v1373
    %v3746 = vunpack.c.l.b16 %v1374
    %v3747 = vunpack.c.h.b16 %v1374
    %v3748 = vunpack.c.l.b16 %v1375
    %v3749 = vunpack.c.h.b16 %v1375
    %v3750 = vunpack.c.l.b16 %v1376
    %v3751 = vunpack.c.h.b16 %v1376
    %v3752 = vunpack.c.l.b16 %v1377
    %v3753 = vunpack.c.h.b16 %v1377
    %v3754 = vunpack.c.l.b16 %v1378
    %v3755 = vunpack.c.h.b16 %v1378
    %v3756 = vunpack.c.l.b16 %v1379
    %v3757 = vunpack.c.h.b16 %v1379
    %v3758 = vunpack.c.l.b16 %v1380
    %v3759 = vunpack.c.h.b16 %v1380
    %v3760 = vunpack.c.l.b16 %v1381
    %v3761 = vunpack.c.h.b16 %v1381
    %v3762 = vunpack.c.l.b16 %v1382
    %v3763 = vunpack.c.h.b16 %v1382
    %v3764 = vunpack.c.l.b16 %v1383
    %v3765 = vunpack.c.h.b16 %v1383
    %v3766 = vunpack.c.l.b16 %v1384
    %v3767 = vunpack.c.h.b16 %v1384
    %v3768 = vunpack.c.l.b16 %v1385
    %v3769 = vunpack.c.h.b16 %v1385
    %v3770 = vunpack.c.l.b16 %v1386
    %v3771 = vunpack.c.h.b16 %v1386
    %v3772 = vunpack.c.l.b16 %v1387
    %v3773 = vunpack.c.h.b16 %v1387
    %v3774 = vunpack.c.l.b16 %v1388
    %v3775 = vunpack.c.h.b16 %v1388
    %v3776 = vunpack.c.l.b16 %v1389
    %v3777 = vunpack.c.h.b16 %v1389
    %v3778 = vunpack.c.l.b16 %v1390
    %v3779 = vunpack.c.h.b16 %v1390
    %v3780 = vunpack.c.l.b16 %v1391
    %v3781 = vunpack.c.h.b16 %v1391
    %v3782 = vunpack.c.l.b16 %v1392
    %v3783 = vunpack.c.h.b16 %v1392
    %v3784 = vunpack.c.l.b16 %v1393
    %v3785 = vunpack.c.h.b16 %v1393
    %v3786 = vunpack.c.l.b16 %v1394
    %v3787 = vunpack.c.h.b16 %v1394
    %v3788 = vunpack.c.l.b16 %v1395
    %v3789 = vunpack.c.h.b16 %v1395
    %v3790 = vunpack.c.l.b16 %v1396
    %v3791 = vunpack.c.h.b16 %v1396
    %v3792 = vunpack.c.l.b16 %v1397
    %v3793 = vunpack.c.h.b16 %v1397
    %v3794 = vunpack.c.l.b16 %v1398
    %v3795 = vunpack.c.h.b16 %v1398
    %v3796 = vunpack.c.l.b16 %v1399
    %v3797 = vunpack.c.h.b16 %v1399
    %v3798 = vunpack.c.l.b16 %v1400
    %v3799 = vunpack.c.h.b16 %v1400
    %v3800 = vunpack.c.l.b16 %v1401
    %v3801 = vunpack.c.h.b16 %v1401
    %v3802 = vunpack.c.l.b16 %v1402
    %v3803 = vunpack.c.h.b16 %v1402
    %v3804 = vunpack.c.l.b16 %v1403
    %v3805 = vunpack.c.h.b16 %v1403
    %v3806 = vunpack.c.l.b16 %v1404
    %v3807 = vunpack.c.h.b16 %v1404
    %v3808 = vunpack.c.l.b16 %v1405
    %v3809 = vunpack.c.h.b16 %v1405
    %v3810 = vunpack.c.l.b16 %v1406
    %v3811 = vunpack.c.h.b16 %v1406
    %v3812 = vunpack.c.l.b16 %v1407
    %v3813 = vunpack.c.h.b16 %v1407
    %v3814 = vunpack.c.l.b16 %v1408
    %v3815 = vunpack.c.h.b16 %v1408
    %v3816 = vunpack.c.l.b16 %v1409
    %v3817 = vunpack.c.h.b16 %v1409
    %v3818 = vunpack.c.l.b16 %v1410
    %v3819 = vunpack.c.h.b16 %v1410
    %v3820 = vunpack.c.l.b16 %v1411
    %v3821 = vunpack.c.h.b16 %v1411
    %v3822 = vunpack.c.l.b16 %v1412
    %v3823 = vunpack.c.h.b16 %v1412
    %v3824 = vunpack.c.l.b16 %v1413
    %v3825 = vunpack.c.h.b16 %v1413
    %v3826 = vunpack.c.l.b16 %v1414
    %v3827 = vunpack.c.h.b16 %v1414
    %v3828 = vunpack.c.l.b16 %v1415
    %v3829 = vunpack.c.h.b16 %v1415
    %v3830 = vunpack.c.l.b16 %v1416
    %v3831 = vunpack.c.h.b16 %v1416
    %v3832 = vunpack.c.l.b16 %v1417
    %v3833 = vunpack.c.h.b16 %v1417
    %v3834 = vunpack.c.l.b16 %v1418
    %v3835 = vunpack.c.h.b16 %v1418
    %v3836 = vunpack.c.l.b16 %v1419
    %v3837 = vunpack.c.h.b16 %v1419
    %v3838 = vunpack.c.l.b16 %v1420
    %v3839 = vunpack.c.h.b16 %v1420
    %v3840 = vunpack.c.l.b16 %v1421
    %v3841 = vunpack.c.h.b16 %v1421
    %v3842 = vunpack.c.l.b16 %v1422
    %v3843 = vunpack.c.h.b16 %v1422
    %v3844 = vunpack.c.l.b16 %v1423
    %v3845 = vunpack.c.h.b16 %v1423
    %v3846 = vunpack.c.l.b16 %v1424
    %v3847 = vunpack.c.h.b16 %v1424
    %v3848 = vunpack.c.l.b16 %v1425
    %v3849 = vunpack.c.h.b16 %v1425
    %v3850 = vunpack.c.l.b16 %v1426
    %v3851 = vunpack.c.h.b16 %v1426
    %v3852 = vunpack.c.l.b16 %v1427
    %v3853 = vunpack.c.h.b16 %v1427
    %v3854 = vunpack.c.l.b16 %v1428
    %v3855 = vunpack.c.h.b16 %v1428
    %v3856 = vunpack.c.l.b16 %v1429
    %v3857 = vunpack.c.h.b16 %v1429
    %v3858 = vunpack.c.l.b16 %v1430
    %v3859 = vunpack.c.h.b16 %v1430
    %v3860 = vunpack.c.l.b16 %v1431
    %v3861 = vunpack.c.h.b16 %v1431
    %v3862 = vunpack.c.l.b16 %v1432
    %v3863 = vunpack.c.h.b16 %v1432
    %v3864 = vunpack.c.l.b16 %v1433
    %v3865 = vunpack.c.h.b16 %v1433
    %v3866 = vunpack.c.l.b16 %v1434
    %v3867 = vunpack.c.h.b16 %v1434
    %v3868 = vunpack.c.l.b16 %v1435
    %v3869 = vunpack.c.h.b16 %v1435
    %v3870 = vunpack.c.l.b16 %v1436
    %v3871 = vunpack.c.h.b16 %v1436
    %v3872 = vunpack.c.l.b16 %v1437
    %v3873 = vunpack.c.h.b16 %v1437
    %v3874 = vunpack.c.l.b16 %v1438
    %v3875 = vunpack.c.h.b16 %v1438
    %v3876 = vunpack.c.l.b16 %v1439
    %v3877 = vunpack.c.h.b16 %v1439
    %v3878 = vunpack.c.l.b16 %v1440
    %v3879 = vunpack.c.h.b16 %v1440
    %v3880 = vunpack.c.l.b16 %v1441
    %v3881 = vunpack.c.h.b16 %v1441
    %v3882 = vunpack.c.l.b16 %v1442
    %v3883 = vunpack.c.h.b16 %v1442
    %v3884 = vunpack.c.l.b16 %v1443
    %v3885 = vunpack.c.h.b16 %v1443
    %v3886 = vunpack.c.l.b16 %v1444
    %v3887 = vunpack.c.h.b16 %v1444
    %v3888 = vunpack.c.l.b16 %v1445
    %v3889 = vunpack.c.h.b16 %v1445
    %v3890 = vunpack.c.l.b16 %v1446
    %v3891 = vunpack.c.h.b16 %v1446
    %v3892 = vunpack.c.l.b16 %v1447
    %v3893 = vunpack.c.h.b16 %v1447
    %v3894 = vunpack.c.l.b16 %v1448
    %v3895 = vunpack.c.h.b16 %v1448
    %v3896 = vunpack.c.l.b16 %v1449
    %v3897 = vunpack.c.h.b16 %v1449
    %v3898 = vunpack.c.l.b16 %v1450
    %v3899 = vunpack.c.h.b16 %v1450
    %v3900 = vunpack.c.l.b16 %v1451
    %v3901 = vunpack.c.h.b16 %v1451
    %v3902 = vunpack.c.l.b16 %v1452
    %v3903 = vunpack.c.h.b16 %v1452
    %v3904 = vunpack.c.l.b16 %v1453
    %v3905 = vunpack.c.h.b16 %v1453
    %v3906 = vunpack.c.l.b16 %v1454
    %v3907 = vunpack.c.h.b16 %v1454
    %v3908 = vunpack.c.l.b16 %v1455
    %v3909 = vunpack.c.h.b16 %v1455
    %v3910 = vunpack.c.l.b16 %v1456
    %v3911 = vunpack.c.h.b16 %v1456
    %v3912 = vunpack.c.l.b16 %v1457
    %v3913 = vunpack.c.h.b16 %v1457
    %v3914 = vunpack.c.l.b16 %v1458
    %v3915 = vunpack.c.h.b16 %v1458
    %v3916 = vunpack.c.l.b16 %v1459
    %v3917 = vunpack.c.h.b16 %v1459
    %v3918 = vunpack.c.l.b16 %v1460
    %v3919 = vunpack.c.h.b16 %v1460
    %v3920 = vunpack.c.l.b16 %v1461
    %v3921 = vunpack.c.h.b16 %v1461
    %v3922 = vunpack.c.l.b16 %v1462
    %v3923 = vunpack.c.h.b16 %v1462
    %v3924 = vunpack.c.l.b16 %v1463
    %v3925 = vunpack.c.h.b16 %v1463
    %v3926 = vunpack.c.l.b16 %v1464
    %v3927 = vunpack.c.h.b16 %v1464
    %v3928 = vunpack.c.l.b16 %v1465
    %v3929 = vunpack.c.h.b16 %v1465
    %v3930 = vunpack.c.l.b16 %v1466
    %v3931 = vunpack.c.h.b16 %v1466
    %v3932 = vunpack.c.l.b16 %v1467
    %v3933 = vunpack.c.h.b16 %v1467
    %v3934 = vunpack.c.l.b16 %v1468
    %v3935 = vunpack.c.h.b16 %v1468
    %v3936 = vunpack.c.l.b16 %v1469
    %v3937 = vunpack.c.h.b16 %v1469
    %v3938 = vunpack.c.l.b16 %v1470
    %v3939 = vunpack.c.h.b16 %v1470
    %v3940 = vunpack.c.l.b16 %v1471
    %v3941 = vunpack.c.h.b16 %v1471
    %v3942 = vunpack.c.l.b16 %v1472
    %v3943 = vunpack.c.h.b16 %v1472
    %v3944 = vunpack.c.l.b16 %v1473
    %v3945 = vunpack.c.h.b16 %v1473
    %v3946 = vunpack.c.l.b16 %v1474
    %v3947 = vunpack.c.h.b16 %v1474
    %v3948 = vunpack.c.l.b16 %v1475
    %v3949 = vunpack.c.h.b16 %v1475
    %v3950 = vunpack.c.l.b16 %v1476
    %v3951 = vunpack.c.h.b16 %v1476
    %v3952 = vunpack.c.l.b16 %v1477
    %v3953 = vunpack.c.h.b16 %v1477
    %v3954 = vunpack.c.l.b16 %v1478
    %v3955 = vunpack.c.h.b16 %v1478
    %v3956 = vunpack.c.l.b16 %v1479
    %v3957 = vunpack.c.h.b16 %v1479
    %v3958 = vunpack.c.l.b16 %v1480
    %v3959 = vunpack.c.h.b16 %v1480
    %v3960 = vunpack.c.l.b16 %v1481
    %v3961 = vunpack.c.h.b16 %v1481
    %v3962 = vunpack.c.l.b16 %v1482
    %v3963 = vunpack.c.h.b16 %v1482
    %v3964 = vunpack.c.l.b16 %v1483
    %v3965 = vunpack.c.h.b16 %v1483
    %v3966 = vunpack.c.l.b16 %v1484
    %v3967 = vunpack.c.h.b16 %v1484
    %v3968 = vunpack.c.l.b16 %v1485
    %v3969 = vunpack.c.h.b16 %v1485
    %v3970 = vunpack.c.l.b16 %v1486
    %v3971 = vunpack.c.h.b16 %v1486
    %v3972 = vunpack.c.l.b16 %v1487
    %v3973 = vunpack.c.h.b16 %v1487
    %v3974 = vunpack.c.l.b16 %v1488
    %v3975 = vunpack.c.h.b16 %v1488
    %v3976 = vunpack.c.l.b16 %v1489
    %v3977 = vunpack.c.h.b16 %v1489
    %v3978 = vunpack.c.l.b16 %v1490
    %v3979 = vunpack.c.h.b16 %v1490
    %v3980 = vunpack.c.l.b16 %v1491
    %v3981 = vunpack.c.h.b16 %v1491
    %v3982 = vunpack.c.l.b16 %v1492
    %v3983 = vunpack.c.h.b16 %v1492
    %v3984 = vunpack.c.l.b16 %v1493
    %v3985 = vunpack.c.h.b16 %v1493
    %v3986 = vunpack.c.l.b16 %v1494
    %v3987 = vunpack.c.h.b16 %v1494
    %v3988 = vunpack.c.l.b16 %v1495
    %v3989 = vunpack.c.h.b16 %v1495
    %v3990 = vunpack.c.l.b16 %v1496
    %v3991 = vunpack.c.h.b16 %v1496
    %v3992 = vunpack.c.l.b16 %v1497
    %v3993 = vunpack.c.h.b16 %v1497
    %v3994 = vunpack.c.l.b16 %v1498
    %v3995 = vunpack.c.h.b16 %v1498
    %v3996 = vunpack.c.l.b16 %v1499
    %v3997 = vunpack.c.h.b16 %v1499
    %v3998 = vunpack.c.l.b16 %v1500
    %v3999 = vunpack.c.h.b16 %v1500
    %v4000 = vunpack.c.l.b16 %v1501
    %v4001 = vunpack.c.h.b16 %v1501
    %v4002 = vunpack.c.l.b16 %v1502
    %v4003 = vunpack.c.h.b16 %v1502
    %v4004 = vunpack.c.l.b16 %v1503
    %v4005 = vunpack.c.h.b16 %v1503
    %v4006 = vunpack.c.l.b16 %v1504
    %v4007 = vunpack.c.h.b16 %v1504
    %v4008 = vunpack.c.l.b16 %v1505
    %v4009 = vunpack.c.h.b16 %v1505
    %v4010 = vunpack.c.l.b16 %v1506
    %v4011 = vunpack.c.h.b16 %v1506
    %v4012 = vunpack.c.l.b16 %v1507
    %v4013 = vunpack.c.h.b16 %v1507
    %v4014 = vunpack.c.l.b16 %v1508
    %v4015 = vunpack.c.h.b16 %v1508
    %v4016 = vunpack.c.l.b16 %v1509
    %v4017 = vunpack.c.h.b16 %v1509
    %v4018 = vunpack.c.l.b16 %v1510
    %v4019 = vunpack.c.h.b16 %v1510
    %v4020 = vunpack.c.l.b16 %v1511
    %v4021 = vunpack.c.h.b16 %v1511
    %v4022 = vunpack.c.l.b16 %v1512
    %v4023 = vunpack.c.h.b16 %v1512
    %v4024 = vunpack.c.l.b16 %v1513
    %v4025 = vunpack.c.h.b16 %v1513
    %v4026 = vunpack.c.l.b16 %v1514
    %v4027 = vunpack.c.h.b16 %v1514
    %v4028 = vunpack.c.l.b16 %v1515
    %v4029 = vunpack.c.h.b16 %v1515
    %v4030 = vunpack.c.l.b16 %v1516
    %v4031 = vunpack.c.h.b16 %v1516
    %v4032 = vunpack.c.l.b16 %v1517
    %v4033 = vunpack.c.h.b16 %v1517
    %v4034 = vunpack.c.l.b16 %v1518
    %v4035 = vunpack.c.h.b16 %v1518
    %v4036 = vunpack.c.l.b16 %v1519
    %v4037 = vunpack.c.h.b16 %v1519
    %v4038 = vunpack.c.l.b16 %v1520
    %v4039 = vunpack.c.h.b16 %v1520
    %v4040 = vunpack.c.l.b16 %v1521
    %v4041 = vunpack.c.h.b16 %v1521
    %v4042 = vunpack.c.l.b16 %v1522
    %v4043 = vunpack.c.h.b16 %v1522
    %v4044 = vunpack.c.l.b16 %v1523
    %v4045 = vunpack.c.h.b16 %v1523
    %v4046 = vunpack.c.l.b16 %v1524
    %v4047 = vunpack.c.h.b16 %v1524
    %v4048 = vunpack.c.l.b16 %v1525
    %v4049 = vunpack.c.h.b16 %v1525
    %v4050 = vunpack.c.l.b16 %v1526
    %v4051 = vunpack.c.h.b16 %v1526
    %v4052 = vunpack.c.l.b16 %v1527
    %v4053 = vunpack.c.h.b16 %v1527
    %v4054 = vunpack.c.l.b16 %v1528
    %v4055 = vunpack.c.h.b16 %v1528
    %v4056 = vunpack.c.l.b16 %v1529
    %v4057 = vunpack.c.h.b16 %v1529
    %v4058 = vunpack.c.l.b16 %v1530
    %v4059 = vunpack.c.h.b16 %v1530
    %v4060 = vunpack.c.l.b16 %v1531
    %v4061 = vunpack.c.h.b16 %v1531
    %v4062 = vunpack.c.l.b16 %v1532
    %v4063 = vunpack.c.h.b16 %v1532
    %v4064 = vunpack.c.l.b16 %v1533
    %v4065 = vunpack.c.h.b16 %v1533
    %v4066 = vunpack.c.l.b16 %v1534
    %v4067 = vunpack.c.h.b16 %v1534
    %v4068 = vunpack.c.l.b16 %v1535
    %v4069 = vunpack.c.h.b16 %v1535
    %v4070 = vunpack.c.l.b16 %v1536
    %v4071 = vunpack.c.h.b16 %v1536
    %v4072 = vunpack.c.l.b16 %v1537
    %v4073 = vunpack.c.h.b16 %v1537
    %v4074 = vunpack.c.l.b16 %v1538
    %v4075 = vunpack.c.h.b16 %v1538
    %v4076 = vunpack.c.l.b16 %v1539
    %v4077 = vunpack.c.h.b16 %v1539
    %v4078 = vunpack.c.l.b16 %v1540
    %v4079 = vunpack.c.h.b16 %v1540
    %v4080 = vunpack.c.l.b16 %v1541
    %v4081 = vunpack.c.h.b16 %v1541
    %v4082 = vunpack.c.l.b16 %v1542
    %v4083 = vunpack.c.h.b16 %v1542
    %v4084 = vunpack.c.l.b16 %v1543
    %v4085 = vunpack.c.h.b16 %v1543
    %v4086 = vunpack.c.l.b16 %v1544
    %v4087 = vunpack.c.h.b16 %v1544
    %v4088 = vunpack.c.l.b16 %v1545
    %v4089 = vunpack.c.h.b16 %v1545
    %v4090 = vunpack.c.l.b16 %v1546
    %v4091 = vunpack.c.h.b16 %v1546
    %v4092 = vunpack.c.l.b16 %v1547
    %v4093 = vunpack.c.h.b16 %v1547
    %v4094 = vunpack.c.l.b16 %v1548
    %v4095 = vunpack.c.h.b16 %v1548
    %v4096 = vunpack.c.l.b16 %v1549
    %v4097 = vunpack.c.h.b16 %v1549
    %v4098 = vunpack.c.l.b16 %v1550
    %v4099 = vunpack.c.h.b16 %v1550
    %v4100 = vunpack.c.l.b16 %v1551
    %v4101 = vunpack.c.h.b16 %v1551
    %v4102 = vunpack.c.l.b16 %v1552
    %v4103 = vunpack.c.h.b16 %v1552
    %v4104 = vunpack.c.l.b16 %v1553
    %v4105 = vunpack.c.h.b16 %v1553
    %v4106 = vunpack.c.l.b16 %v1554
    %v4107 = vunpack.c.h.b16 %v1554
    %v4108 = vunpack.c.l.b16 %v1555
    %v4109 = vunpack.c.h.b16 %v1555
    %v4110 = vunpack.c.l.b16 %v1556
    %v4111 = vunpack.c.h.b16 %v1556
    %v4112 = vunpack.c.l.b16 %v1557
    %v4113 = vunpack.c.h.b16 %v1557
    %v4114 = vunpack.c.l.b16 %v1558
    %v4115 = vunpack.c.h.b16 %v1558
    %v4116 = vunpack.c.l.b16 %v1559
    %v4117 = vunpack.c.h.b16 %v1559
    %v4118 = vunpack.c.l.b16 %v1560
    %v4119 = vunpack.c.h.b16 %v1560
    %v4120 = vunpack.c.l.b16 %v1561
    %v4121 = vunpack.c.h.b16 %v1561
    %v4122 = vunpack.c.l.b16 %v1562
    %v4123 = vunpack.c.h.b16 %v1562
    %v4124 = vunpack.c.l.b16 %v1563
    %v4125 = vunpack.c.h.b16 %v1563
    %v4126 = vunpack.c.l.b16 %v1564
    %v4127 = vunpack.c.h.b16 %v1564
    %v4128 = vunpack.c.l.b16 %v1565
    %v4129 = vunpack.c.h.b16 %v1565
    %v4130 = vunpack.c.l.b16 %v1566
    %v4131 = vunpack.c.h.b16 %v1566
    %v4132 = vunpack.c.l.b16 %v1567
    %v4133 = vunpack.c.h.b16 %v1567
    %v4134 = vunpack.c.l.b16 %v1568
    %v4135 = vunpack.c.h.b16 %v1568
    %v4136 = vunpack.c.l.b16 %v1569
    %v4137 = vunpack.c.h.b16 %v1569
    %v4138 = vunpack.c.l.b16 %v1570
    %v4139 = vunpack.c.h.b16 %v1570
    %v4140 = vunpack.c.l.b16 %v1571
    %v4141 = vunpack.c.h.b16 %v1571
    %v4142 = vunpack.c.l.b16 %v1572
    %v4143 = vunpack.c.h.b16 %v1572
    %v4144 = vunpack.c.l.b16 %v1573
    %v4145 = vunpack.c.h.b16 %v1573
    %v4146 = vunpack.c.l.b16 %v1574
    %v4147 = vunpack.c.h.b16 %v1574
    %v4148 = vunpack.c.l.b16 %v1575
    %v4149 = vunpack.c.h.b16 %v1575
    %v4150 = vunpack.c.l.b16 %v1576
    %v4151 = vunpack.c.h.b16 %v1576
    %v4152 = vunpack.c.l.b16 %v1577
    %v4153 = vunpack.c.h.b16 %v1577
    %v4154 = vunpack.c.l.b16 %v1578
    %v4155 = vunpack.c.h.b16 %v1578
    %v4156 = vunpack.c.l.b16 %v1579
    %v4157 = vunpack.c.h.b16 %v1579
    %v4158 = vunpack.c.l.b16 %v1580
    %v4159 = vunpack.c.h.b16 %v1580
    %v4160 = vunpack.c.l.b16 %v1581
    %v4161 = vunpack.c.h.b16 %v1581
    %v4162 = vunpack.c.l.b16 %v1582
    %v4163 = vunpack.c.h.b16 %v1582
    %v4164 = vunpack.c.l.b16 %v1583
    %v4165 = vunpack.c.h.b16 %v1583
    %v4166 = vunpack.c.l.b16 %v1584
    %v4167 = vunpack.c.h.b16 %v1584
    %v4168 = vunpack.c.l.b16 %v1585
    %v4169 = vunpack.c.h.b16 %v1585
    %v4170 = vunpack.c.l.b16 %v1586
    %v4171 = vunpack.c.h.b16 %v1586
    %v4172 = vunpack.c.l.b16 %v1587
    %v4173 = vunpack.c.h.b16 %v1587
    %v4174 = vunpack.c.l.b16 %v1588
    %v4175 = vunpack.c.h.b16 %v1588
    %v4176 = vunpack.c.l.b16 %v1589
    %v4177 = vunpack.c.h.b16 %v1589
    %v4178 = vunpack.c.l.b16 %v1590
    %v4179 = vunpack.c.h.b16 %v1590
    %v4180 = vunpack.c.l.b16 %v1591
    %v4181 = vunpack.c.h.b16 %v1591
    %v4182 = vunpack.c.l.b16 %v1592
    %v4183 = vunpack.c.h.b16 %v1592
    %v4184 = vunpack.c.l.b16 %v1593
    %v4185 = vunpack.c.h.b16 %v1593
    %v4186 = vunpack.c.l.b16 %v1594
    %v4187 = vunpack.c.h.b16 %v1594
    %v4188 = vunpack.c.l.b16 %v1595
    %v4189 = vunpack.c.h.b16 %v1595
    %v4190 = vunpack.c.l.b16 %v1596
    %v4191 = vunpack.c.h.b16 %v1596
    %v4192 = vunpack.c.l.b16 %v1597
    %v4193 = vunpack.c.h.b16 %v1597
    %v4194 = vunpack.c.l.b16 %v1598
    %v4195 = vunpack.c.h.b16 %v1598
    %v4196 = vunpack.c.l.b16 %v1599
    %v4197 = vunpack.c.h.b16 %v1599
    %v4198 = vunpack.c.l.b16 %v1600
    %v4199 = vunpack.c.h.b16 %v1600
    %v4200 = vunpack.c.l.b16 %v1601
    %v4201 = vunpack.c.h.b16 %v1601
    %v4202 = vunpack.c.l.b16 %v1602
    %v4203 = vunpack.c.h.b16 %v1602
    %v4204 = vunpack.c.l.b16 %v1603
    %v4205 = vunpack.c.h.b16 %v1603
    %v4206 = vunpack.c.l.b16 %v1604
    %v4207 = vunpack.c.h.b16 %v1604
    %v4208 = vunpack.c.l.b16 %v1605
    %v4209 = vunpack.c.h.b16 %v1605
    %v4210 = vunpack.c.l.b16 %v1606
    %v4211 = vunpack.c.h.b16 %v1606
    %v4212 = vunpack.c.l.b16 %v1607
    %v4213 = vunpack.c.h.b16 %v1607
    %v4214 = vunpack.c.l.b16 %v1608
    %v4215 = vunpack.c.h.b16 %v1608
    %v4216 = vunpack.c.l.b16 %v1609
    %v4217 = vunpack.c.h.b16 %v1609
    %v4218 = vunpack.c.l.b16 %v1610
    %v4219 = vunpack.c.h.b16 %v1610
    %v4220 = vunpack.c.l.b16 %v1611
    %v4221 = vunpack.c.h.b16 %v1611
    %v4222 = vunpack.c.l.b16 %v1612
    %v4223 = vunpack.c.h.b16 %v1612
    %v4224 = vunpack.c.l.b16 %v1613
    %v4225 = vunpack.c.h.b16 %v1613
    %v4226 = vunpack.c.l.b16 %v1614
    %v4227 = vunpack.c.h.b16 %v1614
    %v4228 = vunpack.c.l.b16 %v1615
    %v4229 = vunpack.c.h.b16 %v1615
    %v4230 = vunpack.c.l.b16 %v1616
    %v4231 = vunpack.c.h.b16 %v1616
    %v4232 = vunpack.c.l.b16 %v1617
    %v4233 = vunpack.c.h.b16 %v1617
    %v4234 = vunpack.c.l.b16 %v1618
    %v4235 = vunpack.c.h.b16 %v1618
    %v4236 = vunpack.c.l.b16 %v1619
    %v4237 = vunpack.c.h.b16 %v1619
    %v4238 = vunpack.c.l.b16 %v1620
    %v4239 = vunpack.c.h.b16 %v1620
    %v4240 = vunpack.c.l.b16 %v1621
    %v4241 = vunpack.c.h.b16 %v1621
    %v4242 = vunpack.c.l.b16 %v1622
    %v4243 = vunpack.c.h.b16 %v1622
    %v4244 = vunpack.c.l.b16 %v1623
    %v4245 = vunpack.c.h.b16 %v1623
    %v4246 = vunpack.c.l.b16 %v1624
    %v4247 = vunpack.c.h.b16 %v1624
    %v4248 = vunpack.c.l.b16 %v1625
    %v4249 = vunpack.c.h.b16 %v1625
    %v4250 = vunpack.c.l.b16 %v1626
    %v4251 = vunpack.c.h.b16 %v1626
    %v4252 = vunpack.c.l.b16 %v1627
    %v4253 = vunpack.c.h.b16 %v1627
    %v4254 = vunpack.c.l.b16 %v1628
    %v4255 = vunpack.c.h.b16 %v1628
    %v4256 = vunpack.c.l.b16 %v1629
    %v4257 = vunpack.c.h.b16 %v1629
    %v4258 = vunpack.c.l.b16 %v1630
    %v4259 = vunpack.c.h.b16 %v1630
    %v4260 = vunpack.c.l.b16 %v1631
    %v4261 = vunpack.c.h.b16 %v1631
    %v4262 = vunpack.c.l.b16 %v1632
    %v4263 = vunpack.c.h.b16 %v1632
    %v4264 = vunpack.c.l.b16 %v1633
    %v4265 = vunpack.c.h.b16 %v1633
    %v4266 = vunpack.c.l.b16 %v1634
    %v4267 = vunpack.c.h.b16 %v1634
    %v4268 = vunpack.c.l.b16 %v1635
    %v4269 = vunpack.c.h.b16 %v1635
    %v4270 = vunpack.c.l.b16 %v1636
    %v4271 = vunpack.c.h.b16 %v1636
    %v4272 = vunpack.c.l.b16 %v1637
    %v4273 = vunpack.c.h.b16 %v1637
    %v4274 = vunpack.c.l.b16 %v1638
    %v4275 = vunpack.c.h.b16 %v1638
    %v4276 = vunpack.c.l.b16 %v1639
    %v4277 = vunpack.c.h.b16 %v1639
    %v4278 = vunpack.c.l.b16 %v1640
    %v4279 = vunpack.c.h.b16 %v1640
    %v4280 = vunpack.c.l.b16 %v1641
    %v4281 = vunpack.c.h.b16 %v1641
    %v4282 = vunpack.c.l.b16 %v1642
    %v4283 = vunpack.c.h.b16 %v1642
    %v4284 = vunpack.c.l.b16 %v1643
    %v4285 = vunpack.c.h.b16 %v1643
    %v4286 = vunpack.c.l.b16 %v1644
    %v4287 = vunpack.c.h.b16 %v1644
    %v4288 = vunpack.c.l.b16 %v1645
    %v4289 = vunpack.c.h.b16 %v1645
    %v4290 = vunpack.c.l.b16 %v1646
    %v4291 = vunpack.c.h.b16 %v1646
    %v4292 = vunpack.c.l.b16 %v1647
    %v4293 = vunpack.c.h.b16 %v1647
    %v4294 = vunpack.c.l.b16 %v1648
    %v4295 = vunpack.c.h.b16 %v1648
    %v4296 = vunpack.c.l.b16 %v1649
    %v4297 = vunpack.c.h.b16 %v1649
    %v4298 = vunpack.c.l.b16 %v1650
    %v4299 = vunpack.c.h.b16 %v1650
    %v4300 = vunpack.c.l.b16 %v1651
    %v4301 = vunpack.c.h.b16 %v1651
    %v4302 = vunpack.c.l.b16 %v1652
    %v4303 = vunpack.c.h.b16 %v1652
    %v4304 = vunpack.c.l.b16 %v1653
    %v4305 = vunpack.c.h.b16 %v1653
    %v4306 = vunpack.c.l.b16 %v1654
    %v4307 = vunpack.c.h.b16 %v1654
    %v4308 = vunpack.c.l.b16 %v1655
    %v4309 = vunpack.c.h.b16 %v1655
    %v4310 = vunpack.c.l.b16 %v1656
    %v4311 = vunpack.c.h.b16 %v1656
    %v4312 = vunpack.c.l.b16 %v1657
    %v4313 = vunpack.c.h.b16 %v1657
    %v4314 = vunpack.c.l.b16 %v1658
    %v4315 = vunpack.c.h.b16 %v1658
    %v4316 = vunpack.c.l.b16 %v1659
    %v4317 = vunpack.c.h.b16 %v1659
    %v4318 = vunpack.c.l.b16 %v1660
    %v4319 = vunpack.c.h.b16 %v1660
    %v4320 = vunpack.c.l.b16 %v1661
    %v4321 = vunpack.c.h.b16 %v1661
    %v4322 = vunpack.c.l.b16 %v1662
    %v4323 = vunpack.c.h.b16 %v1662
    %v4324 = vunpack.c.l.b16 %v1663
    %v4325 = vunpack.c.h.b16 %v1663
    %v4326 = vunpack.c.l.b16 %v1664
    %v4327 = vunpack.c.h.b16 %v1664
    %v4328 = vunpack.c.l.b16 %v1665
    %v4329 = vunpack.c.h.b16 %v1665
    %v4330 = vunpack.c.l.b16 %v1666
    %v4331 = vunpack.c.h.b16 %v1666
    %v4332 = vunpack.c.l.b16 %v1667
    %v4333 = vunpack.c.h.b16 %v1667
    %v4334 = vunpack.c.l.b16 %v1668
    %v4335 = vunpack.c.h.b16 %v1668
    %v4336 = vunpack.c.l.b16 %v1669
    %v4337 = vunpack.c.h.b16 %v1669
    %v4338 = vunpack.c.l.b16 %v1670
    %v4339 = vunpack.c.h.b16 %v1670
    %v4340 = vunpack.c.l.b16 %v1671
    %v4341 = vunpack.c.h.b16 %v1671
    %v4342 = vunpack.c.l.b16 %v1672
    %v4343 = vunpack.c.h.b16 %v1672
    %v4344 = vunpack.c.l.b16 %v1673
    %v4345 = vunpack.c.h.b16 %v1673
    %v4346 = vunpack.c.l.b16 %v1674
    %v4347 = vunpack.c.h.b16 %v1674
    %v4348 = vunpack.c.l.b16 %v1675
    %v4349 = vunpack.c.h.b16 %v1675
    %v4350 = vunpack.c.l.b16 %v1676
    %v4351 = vunpack.c.h.b16 %v1676
    %v4352 = vunpack.c.l.b16 %v1677
    %v4353 = vunpack.c.h.b16 %v1677
    %v4354 = vunpack.c.l.b16 %v1678
    %v4355 = vunpack.c.h.b16 %v1678
    %v4356 = vunpack.c.l.b16 %v1679
    %v4357 = vunpack.c.h.b16 %v1679
    %v4358 = vunpack.c.l.b16 %v1680
    %v4359 = vunpack.c.h.b16 %v1680
    %v4360 = vunpack.c.l.b16 %v1681
    %v4361 = vunpack.c.h.b16 %v1681
    %v4362 = vunpack.c.l.b16 %v1682
    %v4363 = vunpack.c.h.b16 %v1682
    %v4364 = vunpack.c.l.b16 %v1683
    %v4365 = vunpack.c.h.b16 %v1683
    %v4366 = vunpack.c.l.b16 %v1684
    %v4367 = vunpack.c.h.b16 %v1684
    %v4368 = vunpack.c.l.b16 %v1685
    %v4369 = vunpack.c.h.b16 %v1685
    %v4370 = vunpack.c.l.b16 %v1686
    %v4371 = vunpack.c.h.b16 %v1686
    %v4372 = vunpack.c.l.b16 %v1687
    %v4373 = vunpack.c.h.b16 %v1687
    %v4374 = vunpack.c.l.b16 %v1688
    %v4375 = vunpack.c.h.b16 %v1688
    %v4376 = vunpack.c.l.b16 %v1689
    %v4377 = vunpack.c.h.b16 %v1689
    %v4378 = vunpack.c.l.b16 %v1690
    %v4379 = vunpack.c.h.b16 %v1690
    %v4380 = vunpack.c.l.b16 %v1691
    %v4381 = vunpack.c.h.b16 %v1691
    %v4382 = vunpack.c.l.b16 %v1692
    %v4383 = vunpack.c.h.b16 %v1692
    %v4384 = vunpack.c.l.b16 %v1693
    %v4385 = vunpack.c.h.b16 %v1693
    %v4386 = vunpack.c.l.b16 %v1694
    %v4387 = vunpack.c.h.b16 %v1694
    %v4388 = vunpack.c.l.b16 %v1695
    %v4389 = vunpack.c.h.b16 %v1695
    %v4390 = vunpack.c.l.b16 %v1696
    %v4391 = vunpack.c.h.b16 %v1696
    %v4392 = vunpack.c.l.b16 %v1697
    %v4393 = vunpack.c.h.b16 %v1697
    %v4394 = vunpack.c.l.b16 %v1698
    %v4395 = vunpack.c.h.b16 %v1698
    %v4396 = vunpack.c.l.b16 %v1699
    %v4397 = vunpack.c.h.b16 %v1699
    %v4398 = vunpack.c.l.b16 %v1700
    %v4399 = vunpack.c.h.b16 %v1700
    %v4400 = vunpack.c.l.b16 %v1701
    %v4401 = vunpack.c.h.b16 %v1701
    %v4402 = vunpack.c.l.b16 %v1702
    %v4403 = vunpack.c.h.b16 %v1702
    %v4404 = vunpack.c.l.b16 %v1703
    %v4405 = vunpack.c.h.b16 %v1703
    %v4406 = vunpack.c.l.b16 %v1704
    %v4407 = vunpack.c.h.b16 %v1704
    %v4408 = vunpack.c.l.b16 %v1705
    %v4409 = vunpack.c.h.b16 %v1705
    %v4410 = vunpack.c.l.b16 %v1706
    %v4411 = vunpack.c.h.b16 %v1706
    %v4412 = vunpack.c.l.b16 %v1707
    %v4413 = vunpack.c.h.b16 %v1707
    %v4414 = vunpack.c.l.b16 %v1708
    %v4415 = vunpack.c.h.b16 %v1708
    %v4416 = vunpack.c.l.b16 %v1709
    %v4417 = vunpack.c.h.b16 %v1709
    %v4418 = vunpack.c.l.b16 %v1710
    %v4419 = vunpack.c.h.b16 %v1710
    %v4420 = vunpack.c.l.b16 %v1711
    %v4421 = vunpack.c.h.b16 %v1711
    %v4422 = vunpack.c.l.b16 %v1712
    %v4423 = vunpack.c.h.b16 %v1712
    %v4424 = vunpack.c.l.b16 %v1713
    %v4425 = vunpack.c.h.b16 %v1713
    %v4426 = vunpack.c.l.b16 %v1714
    %v4427 = vunpack.c.h.b16 %v1714
    %v4428 = vunpack.c.l.b16 %v1715
    %v4429 = vunpack.c.h.b16 %v1715
    %v4430 = vunpack.c.l.b16 %v1716
    %v4431 = vunpack.c.h.b16 %v1716
    %v4432 = vunpack.c.l.b16 %v1717
    %v4433 = vunpack.c.h.b16 %v1717
    %v4434 = vunpack.c.l.b16 %v1718
    %v4435 = vunpack.c.h.b16 %v1718
    %v4436 = vunpack.c.l.b16 %v1719
    %v4437 = vunpack.c.h.b16 %v1719
    %v4438 = vunpack.c.l.b16 %v1720
    %v4439 = vunpack.c.h.b16 %v1720
    %v4440 = vunpack.c.l.b16 %v1721
    %v4441 = vunpack.c.h.b16 %v1721
    %v4442 = vunpack.c.l.b16 %v1722
    %v4443 = vunpack.c.h.b16 %v1722
    %v4444 = vunpack.c.l.b16 %v1723
    %v4445 = vunpack.c.h.b16 %v1723
    %v4446 = vunpack.c.l.b16 %v1724
    %v4447 = vunpack.c.h.b16 %v1724
    %v4448 = vunpack.c.l.b16 %v1725
    %v4449 = vunpack.c.h.b16 %v1725
    %v4450 = vunpack.c.l.b16 %v1726
    %v4451 = vunpack.c.h.b16 %v1726
    %v4452 = vunpack.c.l.b16 %v1727
    %v4453 = vunpack.c.h.b16 %v1727
    %v4454 = vunpack.c.l.b16 %v1728
    %v4455 = vunpack.c.h.b16 %v1728
    %v4456 = vunpack.c.l.b16 %v1729
    %v4457 = vunpack.c.h.b16 %v1729
    %v4458 = vunpack.c.l.b16 %v1730
    %v4459 = vunpack.c.h.b16 %v1730
    %v4460 = vunpack.c.l.b16 %v1731
    %v4461 = vunpack.c.h.b16 %v1731
    %v4462 = vunpack.c.l.b16 %v1732
    %v4463 = vunpack.c.h.b16 %v1732
    %v4464 = vunpack.c.l.b16 %v1733
    %v4465 = vunpack.c.h.b16 %v1733
    %v4466 = vunpack.c.l.b16 %v1734
    %v4467 = vunpack.c.h.b16 %v1734
    %v4468 = vunpack.c.l.b16 %v1735
    %v4469 = vunpack.c.h.b16 %v1735
    %v4470 = vunpack.c.l.b16 %v1736
    %v4471 = vunpack.c.h.b16 %v1736
    %v4472 = vunpack.c.l.b16 %v1737
    %v4473 = vunpack.c.h.b16 %v1737
    %v4474 = vunpack.c.l.b16 %v1738
    %v4475 = vunpack.c.h.b16 %v1738
    %v4476 = vunpack.c.l.b16 %v1739
    %v4477 = vunpack.c.h.b16 %v1739
    %v4478 = vunpack.c.l.b16 %v1740
    %v4479 = vunpack.c.h.b16 %v1740
    %v4480 = vunpack.c.l.b16 %v1741
    %v4481 = vunpack.c.h.b16 %v1741
    %v4482 = vunpack.c.l.b16 %v1742
    %v4483 = vunpack.c.h.b16 %v1742
    %v4484 = vunpack.c.l.b16 %v1743
    %v4485 = vunpack.c.h.b16 %v1743
    %v4486 = vunpack.c.l.b16 %v1744
    %v4487 = vunpack.c.h.b16 %v1744
    %v4488 = vunpack.c.l.b16 %v1745
    %v4489 = vunpack.c.h.b16 %v1745
    %v4490 = vunpack.c.l.b16 %v1746
    %v4491 = vunpack.c.h.b16 %v1746
    %v4492 = vunpack.c.l.b16 %v1747
    %v4493 = vunpack.c.h.b16 %v1747
    %v4494 = vunpack.c.l.b16 %v1748
    %v4495 = vunpack.c.h.b16 %v1748
    %v4496 = vunpack.c.l.b16 %v1749
    %v4497 = vunpack.c.h.b16 %v1749
    %v4498 = vunpack.c.l.b16 %v1750
    %v4499 = vunpack.c.h.b16 %v1750
    %v4500 = vunpack.c.l.b16 %v1751
    %v4501 = vunpack.c.h.b16 %v1751
    %v4502 = vunpack.c.l.b16 %v1752
    %v4503 = vunpack.c.h.b16 %v1752
    %v4504 = vunpack.c.l.b16 %v1753
    %v4505 = vunpack.c.h.b16 %v1753
    %v4506 = vunpack.c.l.b16 %v1754
    %v4507 = vunpack.c.h.b16 %v1754
    %v4508 = vunpack.c.l.b16 %v1755
    %v4509 = vunpack.c.h.b16 %v1755
    %v4510 = vunpack.c.l.b16 %v1756
    %v4511 = vunpack.c.h.b16 %v1756
    %v4512 = vunpack.c.l.b16 %v1757
    %v4513 = vunpack.c.h.b16 %v1757
    %v4514 = vunpack.c.l.b16 %v1758
    %v4515 = vunpack.c.h.b16 %v1758
    %v4516 = vunpack.c.l.b16 %v1759
    %v4517 = vunpack.c.h.b16 %v1759
    %v4518 = vunpack.c.l.b16 %v1760
    %v4519 = vunpack.c.h.b16 %v1760
    %v4520 = vunpack.c.l.b16 %v1761
    %v4521 = vunpack.c.h.b16 %v1761
    %v4522 = vunpack.c.l.b16 %v1762
    %v4523 = vunpack.c.h.b16 %v1762
    %v4524 = vunpack.c.l.b16 %v1763
    %v4525 = vunpack.c.h.b16 %v1763
    %v4526 = vunpack.c.l.b16 %v1764
    %v4527 = vunpack.c.h.b16 %v1764
    %v4528 = vunpack.c.l.b16 %v1765
    %v4529 = vunpack.c.h.b16 %v1765
    %v4530 = vunpack.c.l.b16 %v1766
    %v4531 = vunpack.c.h.b16 %v1766
    %v4532 = vunpack.c.l.b16 %v1767
    %v4533 = vunpack.c.h.b16 %v1767
    %v4534 = vunpack.c.l.b16 %v1768
    %v4535 = vunpack.c.h.b16 %v1768
    %v4536 = vunpack.c.l.b16 %v1769
    %v4537 = vunpack.c.h.b16 %v1769
    %v4538 = vunpack.c.l.b16 %v1770
    %v4539 = vunpack.c.h.b16 %v1770
    %v4540 = vunpack.c.l.b16 %v1771
    %v4541 = vunpack.c.h.b16 %v1771
    %v4542 = vunpack.c.l.b16 %v1772
    %v4543 = vunpack.c.h.b16 %v1772
    %v4544 = vunpack.c.l.b16 %v1773
    %v4545 = vunpack.c.h.b16 %v1773
    %v4546 = vunpack.c.l.b16 %v1774
    %v4547 = vunpack.c.h.b16 %v1774
    %v4548 = vunpack.c.l.b16 %v1775
    %v4549 = vunpack.c.h.b16 %v1775
    %v4550 = vunpack.c.l.b16 %v1776
    %v4551 = vunpack.c.h.b16 %v1776
    %v4552 = vunpack.c.l.b16 %v1777
    %v4553 = vunpack.c.h.b16 %v1777
    %v4554 = vunpack.c.l.b16 %v1778
    %v4555 = vunpack.c.h.b16 %v1778
    %v4556 = vunpack.c.l.b16 %v1779
    %v4557 = vunpack.c.h.b16 %v1779
    %v4558 = vunpack.c.l.b16 %v1780
    %v4559 = vunpack.c.h.b16 %v1780
    %v4560 = vunpack.c.l.b16 %v1781
    %v4561 = vunpack.c.h.b16 %v1781
    %v4562 = vunpack.c.l.b16 %v1782
    %v4563 = vunpack.c.h.b16 %v1782
    %v4564 = vunpack.c.l.b16 %v1783
    %v4565 = vunpack.c.h.b16 %v1783
    %v4566 = vpack.c.b16 %v2874, %v2838
    %v4567 = vpack.c.b16 %v2875, %v2839
    %v4568 = vpack.c.b16 %v2876, %v2840
    %v4569 = vpack.c.b16 %v2877, %v2841
    %v4570 = vpack.c.b16 %v2878, %v2842
    %v4571 = vpack.c.b16 %v2879, %v2843
    %v4572 = vpack.c.b16 %v2880, %v2844
    %v4573 = vpack.c.b16 %v2881, %v2845
    %v4574 = vpack.c.b16 %v2882, %v2846
    %v4575 = vpack.c.b16 %v2883, %v2847
    %v4576 = vpack.c.b16 %v2884, %v2848
    %v4577 = vpack.c.b16 %v2885, %v2849
    %v4578 = vpack.c.b16 %v2886, %v2850
    %v4579 = vpack.c.b16 %v2887, %v2851
    %v4580 = vpack.c.b16 %v2888, %v2852
    %v4581 = vpack.c.b16 %v2889, %v2853
    %v4582 = vpack.c.b16 %v2890, %v2854
    %v4583 = vpack.c.b16 %v2891, %v2855
    %v4584 = vpack.c.b16 %v2892, %v2856
    %v4585 = vpack.c.b16 %v2893, %v2857
    %v4586 = vpack.c.b16 %v2894, %v2858
    %v4587 = vpack.c.b16 %v2895, %v2859
    %v4588 = vpack.c.b16 %v2896, %v2860
    %v4589 = vpack.c.b16 %v2897, %v2861
    %v4590 = vpack.c.b16 %v2898, %v2862
    %v4591 = vpack.c.b16 %v2899, %v2863
    %v4592 = vpack.c.b16 %v2900, %v2864
    %v4593 = vpack.c.b16 %v2901, %v2865
    %v4594 = vpack.c.b16 %v2902, %v2866
    %v4595 = vpack.c.b16 %v2903, %v2867
    %v4596 = vpack.c.b16 %v2904, %v2868
    %v4597 = vpack.c.b16 %v2905, %v2869
    %v4598 = vpack.c.b16 %v2906, %v2870
    %v4599 = vpack.c.b16 %v2907, %v2871
    %v4600 = vpack.c.b16 %v2908, %v2872
    %v4601 = vpack.c.b16 %v2909, %v2873
    %v4602 = vpack.c.b16 %v2946, %v2910
    %v4603 = vpack.c.b16 %v2947, %v2911
    %v4604 = vpack.c.b16 %v2948, %v2912
    %v4605 = vpack.c.b16 %v2949, %v2913
    %v4606 = vpack.c.b16 %v2950, %v2914
    %v4607 = vpack.c.b16 %v2951, %v2915
    %v4608 = vpack.c.b16 %v2952, %v2916
    %v4609 = vpack.c.b16 %v2953, %v2917
    %v4610 = vpack.c.b16 %v2954, %v2918
    %v4611 = vpack.c.b16 %v2955, %v2919
    %v4612 = vpack.c.b16 %v2956, %v2920
    %v4613 = vpack.c.b16 %v2957, %v2921
    %v4614 = vpack.c.b16 %v2958, %v2922
    %v4615 = vpack.c.b16 %v2959, %v2923
    %v4616 = vpack.c.b16 %v2960, %v2924
    %v4617 = vpack.c.b16 %v2961, %v2925
    %v4618 = vpack.c.b16 %v2962, %v2926
    %v4619 = vpack.c.b16 %v2963, %v2927
    %v4620 = vpack.c.b16 %v2964, %v2928
    %v4621 = vpack.c.b16 %v2965, %v2929
    %v4622 = vpack.c.b16 %v2966, %v2930
    %v4623 = vpack.c.b16 %v2967, %v2931
    %v4624 = vpack.c.b16 %v2968, %v2932
    %v4625 = vpack.c.b16 %v2969, %v2933
    %v4626 = vpack.c.b16 %v2970, %v2934
    %v4627 = vpack.c.b16 %v2971, %v2935
    %v4628 = vpack.c.b16 %v2972, %v2936
    %v4629 = vpack.c.b16 %v2973, %v2937
    %v4630 = vpack.c.b16 %v2974, %v2938
    %v4631 = vpack.c.b16 %v2975, %v2939
    %v4632 = vpack.c.b16 %v2976, %v2940
    %v4633 = vpack.c.b16 %v2977, %v2941
    %v4634 = vpack.c.b16 %v2978, %v2942
    %v4635 = vpack.c.b16 %v2979, %v2943
    %v4636 = vpack.c.b16 %v2980, %v2944
    %v4637 = vpack.c.b16 %v2981, %v2945
    %v4638 = vpack.c.b16 %v3018, %v2982
    %v4639 = vpack.c.b16 %v3019, %v2983
    %v4640 = vpack.c.b16 %v3020, %v2984
    %v4641 = vpack.c.b16 %v3021, %v2985
    %v4642 = vpack.c.b16 %v3022, %v2986
    %v4643 = vpack.c.b16 %v3023, %v2987
    %v4644 = vpack.c.b16 %v3024, %v2988
    %v4645 = vpack.c.b16 %v3025, %v2989
    %v4646 = vpack.c.b16 %v3026, %v2990
    %v4647 = vpack.c.b16 %v3027, %v2991
    %v4648 = vpack.c.b16 %v3028, %v2992
    %v4649 = vpack.c.b16 %v3029, %v2993
    %v4650 = vpack.c.b16 %v3030, %v2994
    %v4651 = vpack.c.b16 %v3031, %v2995
    %v4652 = vpack.c.b16 %v3032, %v2996
    %v4653 = vpack.c.b16 %v3033, %v2997
    %v4654 = vpack.c.b16 %v3034, %v2998
    %v4655 = vpack.c.b16 %v3035, %v2999
    %v4656 = vpack.c.b16 %v3036, %v3000
    %v4657 = vpack.c.b16 %v3037, %v3001
    %v4658 = vpack.c.b16 %v3038, %v3002
    %v4659 = vpack.c.b16 %v3039, %v3003
    %v4660 = vpack.c.b16 %v3040, %v3004
    %v4661 = vpack.c.b16 %v3041, %v3005
    %v4662 = vpack.c.b16 %v3042, %v3006
    %v4663 = vpack.c.b16 %v3043, %v3007
    %v4664 = vpack.c.b16 %v3044, %v3008
    %v4665 = vpack.c.b16 %v3045, %v3009
    %v4666 = vpack.c.b16 %v3046, %v3010
    %v4667 = vpack.c.b16 %v3047, %v3011
    %v4668 = vpack.c.b16 %v3048, %v3012
    %v4669 = vpack.c.b16 %v3049, %v3013
    %v4670 = vpack.c.b16 %v3050, %v3014
    %v4671 = vpack.c.b16 %v3051, %v3015
    %v4672 = vpack.c.b16 %v3052, %v3016
    %v4673 = vpack.c.b16 %v3053, %v3017
    %v4674 = vpack.c.b16 %v3090, %v3054
    %v4675 = vpack.c.b16 %v3091, %v3055
    %v4676 = vpack.c.b16 %v3092, %v3056
    %v4677 = vpack.c.b16 %v3093, %v3057
    %v4678 = vpack.c.b16 %v3094, %v3058
    %v4679 = vpack.c.b16 %v3095, %v3059
    %v4680 = vpack.c.b16 %v3096, %v3060
    %v4681 = vpack.c.b16 %v3097, %v3061
    %v4682 = vpack.c.b16 %v3098, %v3062
    %v4683 = vpack.c.b16 %v3099, %v3063
    %v4684 = vpack.c.b16 %v3100, %v3064
    %v4685 = vpack.c.b16 %v3101, %v3065
    %v4686 = vpack.c.b16 %v3102, %v3066
    %v4687 = vpack.c.b16 %v3103, %v3067
    %v4688 = vpack.c.b16 %v3104, %v3068
    %v4689 = vpack.c.b16 %v3105, %v3069
    %v4690 = vpack.c.b16 %v3106, %v3070
    %v4691 = vpack.c.b16 %v3107, %v3071
    %v4692 = vpack.c.b16 %v3108, %v3072
    %v4693 = vpack.c.b16 %v3109, %v3073
    %v4694 = vpack.c.b16 %v3110, %v3074
    %v4695 = vpack.c.b16 %v3111, %v3075
    %v4696 = vpack.c.b16 %v3112, %v3076
    %v4697 = vpack.c.b16 %v3113, %v3077
    %v4698 = vpack.c.b16 %v3114, %v3078
    %v4699 = vpack.c.b16 %v3115, %v3079
    %v4700 = vpack.c.b16 %v3116, %v3080
    %v4701 = vpack.c.b16 %v3117, %v3081
    %v4702 = vpack.c.b16 %v3118, %v3082
    %v4703 = vpack.c.b16 %v3119, %v3083
    %v4704 = vpack.c.b16 %v3120, %v3084
    %v4705 = vpack.c.b16 %v3121, %v3085
    %v4706 = vpack.c.b16 %v3122, %v3086
    %v4707 = vpack.c.b16 %v3123, %v3087
    %v4708 = vpack.c.b16 %v3124, %v3088
    %v4709 = vpack.c.b16 %v3125, %v3089
    %v4710 = vpack.c.b16 %v3162, %v3126
    %v4711 = vpack.c.b16 %v3163, %v3127
    %v4712 = vpack.c.b16 %v3164, %v3128
    %v4713 = vpack.c.b16 %v3165, %v3129
    %v4714 = vpack.c.b16 %v3166, %v3130
    %v4715 = vpack.c.b16 %v3167, %v3131
    %v4716 = vpack.c.b16 %v3168, %v3132
    %v4717 = vpack.c.b16 %v3169, %v3133
    %v4718 = vpack.c.b16 %v3170, %v3134
    %v4719 = vpack.c.b16 %v3171, %v3135
    %v4720 = vpack.c.b16 %v3172, %v3136
    %v4721 = vpack.c.b16 %v3173, %v3137
    %v4722 = vpack.c.b16 %v3174, %v3138
    %v4723 = vpack.c.b16 %v3175, %v3139
    %v4724 = vpack.c.b16 %v3176, %v3140
    %v4725 = vpack.c.b16 %v3177, %v3141
    %v4726 = vpack.c.b16 %v3178, %v3142
    %v4727 = vpack.c.b16 %v3179, %v3143
    %v4728 = vpack.c.b16 %v3180, %v3144
    %v4729 = vpack.c.b16 %v3181, %v3145
    %v4730 = vpack.c.b16 %v3182, %v3146
    %v4731 = vpack.c.b16 %v3183, %v3147
    %v4732 = vpack.c.b16 %v3184, %v3148
    %v4733 = vpack.c.b16 %v3185, %v3149
    %v4734 = vpack.c.b16 %v3186, %v3150
    %v4735 = vpack.c.b16 %v3187, %v3151
    %v4736 = vpack.c.b16 %v3188, %v3152
    %v4737 = vpack.c.b16 %v3189, %v3153
    %v4738 = vpack.c.b16 %v3190, %v3154
    %v4739 = vpack.c.b16 %v3191, %v3155
    %v4740 = vpack.c.b16 %v3192, %v3156
    %v4741 = vpack.c.b16 %v3193, %v3157
    %v4742 = vpack.c.b16 %v3194, %v3158
    %v4743 = vpack.c.b16 %v3195, %v3159
    %v4744 = vpack.c.b16 %v3196, %v3160
    %v4745 = vpack.c.b16 %v3197, %v3161
    %v4746 = vpack.c.b16 %v3234, %v3198
    %v4747 = vpack.c.b16 %v3235, %v3199
    %v4748 = vpack.c.b16 %v3236, %v3200
    %v4749 = vpack.c.b16 %v3237, %v3201
    %v4750 = vpack.c.b16 %v3238, %v3202
    %v4751 = vpack.c.b16 %v3239, %v3203
    %v4752 = vpack.c.b16 %v3240, %v3204
    %v4753 = vpack.c.b16 %v3241, %v3205
    %v4754 = vpack.c.b16 %v3242, %v3206
    %v4755 = vpack.c.b16 %v3243, %v3207
    %v4756 = vpack.c.b16 %v3244, %v3208
    %v4757 = vpack.c.b16 %v3245, %v3209
    %v4758 = vpack.c.b16 %v3246, %v3210
    %v4759 = vpack.c.b16 %v3247, %v3211
    %v4760 = vpack.c.b16 %v3248, %v3212
    %v4761 = vpack.c.b16 %v3249, %v3213
    %v4762 = vpack.c.b16 %v3250, %v3214
    %v4763 = vpack.c.b16 %v3251, %v3215
    %v4764 = vpack.c.b16 %v3252, %v3216
    %v4765 = vpack.c.b16 %v3253, %v3217
    %v4766 = vpack.c.b16 %v3254, %v3218
    %v4767 = vpack.c.b16 %v3255, %v3219
    %v4768 = vpack.c.b16 %v3256, %v3220
    %v4769 = vpack.c.b16 %v3257, %v3221
    %v4770 = vpack.c.b16 %v3258, %v3222
    %v4771 = vpack.c.b16 %v3259, %v3223
    %v4772 = vpack.c.b16 %v3260, %v3224
    %v4773 = vpack.c.b16 %v3261, %v3225
    %v4774 = vpack.c.b16 %v3262, %v3226
    %v4775 = vpack.c.b16 %v3263, %v3227
    %v4776 = vpack.c.b16 %v3264, %v3228
    %v4777 = vpack.c.b16 %v3265, %v3229
    %v4778 = vpack.c.b16 %v3266, %v3230
    %v4779 = vpack.c.b16 %v3267, %v3231
    %v4780 = vpack.c.b16 %v3268, %v3232
    %v4781 = vpack.c.b16 %v3269, %v3233
    %v4782 = vpack.c.b16 %v3306, %v3270
    %v4783 = vpack.c.b16 %v3307, %v3271
    %v4784 = vpack.c.b16 %v3308, %v3272
    %v4785 = vpack.c.b16 %v3309, %v3273
    %v4786 = vpack.c.b16 %v3310, %v3274
    %v4787 = vpack.c.b16 %v3311, %v3275
    %v4788 = vpack.c.b16 %v3312, %v3276
    %v4789 = vpack.c.b16 %v3313, %v3277
    %v4790 = vpack.c.b16 %v3314, %v3278
    %v4791 = vpack.c.b16 %v3315, %v3279
    %v4792 = vpack.c.b16 %v3316, %v3280
    %v4793 = vpack.c.b16 %v3317, %v3281
    %v4794 = vpack.c.b16 %v3318, %v3282
    %v4795 = vpack.c.b16 %v3319, %v3283
    %v4796 = vpack.c.b16 %v3320, %v3284
    %v4797 = vpack.c.b16 %v3321, %v3285
    %v4798 = vpack.c.b16 %v3322, %v3286
    %v4799 = vpack.c.b16 %v3323, %v3287
    %v4800 = vpack.c.b16 %v3324, %v3288
    %v4801 = vpack.c.b16 %v3325, %v3289
    %v4802 = vpack.c.b16 %v3326, %v3290
    %v4803 = vpack.c.b16 %v3327, %v3291
    %v4804 = vpack.c.b16 %v3328, %v3292
    %v4805 = vpack.c.b16 %v3329, %v3293
    %v4806 = vpack.c.b16 %v3330, %v3294
    %v4807 = vpack.c.b16 %v3331, %v3295
    %v4808 = vpack.c.b16 %v3332, %v3296
    %v4809 = vpack.c.b16 %v3333, %v3297
    %v4810 = vpack.c.b16 %v3334, %v3298
    %v4811 = vpack.c.b16 %v3335, %v3299
    %v4812 = vpack.c.b16 %v3336, %v3300
    %v4813 = vpack.c.b16 %v3337, %v3301
    %v4814 = vpack.c.b16 %v3338, %v3302
    %v4815 = vpack.c.b16 %v3339, %v3303
    %v4816 = vpack.c.b16 %v3340, %v3304
    %v4817 = vpack.c.b16 %v3341, %v3305
    %v4818 = vpack.c.b16 %v3378, %v3342
    %v4819 = vpack.c.b16 %v3379, %v3343
    %v4820 = vpack.c.b16 %v3380, %v3344
    %v4821 = vpack.c.b16 %v3381, %v3345
    %v4822 = vpack.c.b16 %v3382, %v3346
    %v4823 = vpack.c.b16 %v3383, %v3347
    %v4824 = vpack.c.b16 %v3384, %v3348
    %v4825 = vpack.c.b16 %v3385, %v3349
    %v4826 = vpack.c.b16 %v3386, %v3350
    %v4827 = vpack.c.b16 %v3387, %v3351
    %v4828 = vpack.c.b16 %v3388, %v3352
    %v4829 = vpack.c.b16 %v3389, %v3353
    %v4830 = vpack.c.b16 %v3390, %v3354
    %v4831 = vpack.c.b16 %v3391, %v3355
    %v4832 = vpack.c.b16 %v3392, %v3356
    %v4833 = vpack.c.b16 %v3393, %v3357
    %v4834 = vpack.c.b16 %v3394, %v3358
    %v4835 = vpack.c.b16 %v3395, %v3359
    %v4836 = vpack.c.b16 %v3396, %v3360
    %v4837 = vpack.c.b16 %v3397, %v3361
    %v4838 = vpack.c.b16 %v3398, %v3362
    %v4839 = vpack.c.b16 %v3399, %v3363
    %v4840 = vpack.c.b16 %v3400, %v3364
    %v4841 = vpack.c.b16 %v3401, %v3365
    %v4842 = vpack.c.b16 %v3402, %v3366
    %v4843 = vpack.c.b16 %v3403, %v3367
    %v4844 = vpack.c.b16 %v3404, %v3368
    %v4845 = vpack.c.b16 %v3405, %v3369
    %v4846 = vpack.c.b16 %v3406, %v3370
    %v4847 = vpack.c.b16 %v3407, %v3371
    %v4848 = vpack.c.b16 %v3408, %v3372
    %v4849 = vpack.c.b16 %v3409, %v3373
    %v4850 = vpack.c.b16 %v3410, %v3374
    %v4851 = vpack.c.b16 %v3411, %v3375
    %v4852 = vpack.c.b16 %v3412, %v3376
    %v4853 = vpack.c.b16 %v3413, %v3377
    %v4854 = vpack.c.b16 %v3450, %v3414
    %v4855 = vpack.c.b16 %v3451, %v3415
    %v4856 = vpack.c.b16 %v3452, %v3416
    %v4857 = vpack.c.b16 %v3453, %v3417
    %v4858 = vpack.c.b16 %v3454, %v3418
    %v4859 = vpack.c.b16 %v3455, %v3419
    %v4860 = vpack.c.b16 %v3456, %v3420
    %v4861 = vpack.c.b16 %v3457, %v3421
    %v4862 = vpack.c.b16 %v3458, %v3422
    %v4863 = vpack.c.b16 %v3459, %v3423
    %v4864 = vpack.c.b16 %v3460, %v3424
    %v4865 = vpack.c.b16 %v3461, %v3425
    %v4866 = vpack.c.b16 %v3462, %v3426
    %v4867 = vpack.c.b16 %v3463, %v3427
    %v4868 = vpack.c.b16 %v3464, %v3428
    %v4869 = vpack.c.b16 %v3465, %v3429
    %v4870 = vpack.c.b16 %v3466, %v3430
    %v4871 = vpack.c.b16 %v3467, %v3431
    %v4872 = vpack.c.b16 %v3468, %v3432
    %v4873 = vpack.c.b16 %v3469, %v3433
    %v4874 = vpack.c.b16 %v3470, %v3434
    %v4875 = vpack.c.b16 %v3471, %v3435
    %v4876 = vpack.c.b16 %v3472, %v3436
    %v4877 = vpack.c.b16 %v3473, %v3437
    %v4878 = vpack.c.b16 %v3474, %v3438
    %v4879 = vpack.c.b16 %v3475, %v3439
    %v4880 = vpack.c.b16 %v3476, %v3440
    %v4881 = vpack.c.b16 %v3477, %v3441
    %v4882 = vpack.c.b16 %v3478, %v3442
    %v4883 = vpack.c.b16 %v3479, %v3443
    %v4884 = vpack.c.b16 %v3480, %v3444
    %v4885 = vpack.c.b16 %v3481, %v3445
    %v4886 = vpack.c.b16 %v3482, %v3446
    %v4887 = vpack.c.b16 %v3483, %v3447
    %v4888 = vpack.c.b16 %v3484, %v3448
    %v4889 = vpack.c.b16 %v3485, %v3449
    %v4890 = vpack.c.b16 %v3522, %v3486
    %v4891 = vpack.c.b16 %v3523, %v3487
    %v4892 = vpack.c.b16 %v3524, %v3488
    %v4893 = vpack.c.b16 %v3525, %v3489
    %v4894 = vpack.c.b16 %v3526, %v3490
    %v4895 = vpack.c.b16 %v3527, %v3491
    %v4896 = vpack.c.b16 %v3528, %v3492
    %v4897 = vpack.c.b16 %v3529, %v3493
    %v4898 = vpack.c.b16 %v3530, %v3494
    %v4899 = vpack.c.b16 %v3531, %v3495
    %v4900 = vpack.c.b16 %v3532, %v3496
    %v4901 = vpack.c.b16 %v3533, %v3497
    %v4902 = vpack.c.b16 %v3534, %v3498
    %v4903 = vpack.c.b16 %v3535, %v3499
    %v4904 = vpack.c.b16 %v3536, %v3500
    %v4905 = vpack.c.b16 %v3537, %v3501
    %v4906 = vpack.c.b16 %v3538, %v3502
    %v4907 = vpack.c.b16 %v3539, %v3503
    %v4908 = vpack.c.b16 %v3540, %v3504
    %v4909 = vpack.c.b16 %v3541, %v3505
    %v4910 = vpack.c.b16 %v3542, %v3506
    %v4911 = vpack.c.b16 %v3543, %v3507
    %v4912 = vpack.c.b16 %v3544, %v3508
    %v4913 = vpack.c.b16 %v3545, %v3509
    %v4914 = vpack.c.b16 %v3546, %v3510
    %v4915 = vpack.c.b16 %v3547, %v3511
    %v4916 = vpack.c.b16 %v3548, %v3512
    %v4917 = vpack.c.b16 %v3549, %v3513
    %v4918 = vpack.c.b16 %v3550, %v3514
    %v4919 = vpack.c.b16 %v3551, %v3515
    %v4920 = vpack.c.b16 %v3552, %v3516
    %v4921 = vpack.c.b16 %v3553, %v3517
    %v4922 = vpack.c.b16 %v3554, %v3518
    %v4923 = vpack.c.b16 %v3555, %v3519
    %v4924 = vpack.c.b16 %v3556, %v3520
    %v4925 = vpack.c.b16 %v3557, %v3521
    %v4926 = vpack.c.b16 %v3594, %v3558
    %v4927 = vpack.c.b16 %v3595, %v3559
    %v4928 = vpack.c.b16 %v3596, %v3560
    %v4929 = vpack.c.b16 %v3597, %v3561
    %v4930 = vpack.c.b16 %v3598, %v3562
    %v4931 = vpack.c.b16 %v3599, %v3563
    %v4932 = vpack.c.b16 %v3600, %v3564
    %v4933 = vpack.c.b16 %v3601, %v3565
    %v4934 = vpack.c.b16 %v3602, %v3566
    %v4935 = vpack.c.b16 %v3603, %v3567
    %v4936 = vpack.c.b16 %v3604, %v3568
    %v4937 = vpack.c.b16 %v3605, %v3569
    %v4938 = vpack.c.b16 %v3606, %v3570
    %v4939 = vpack.c.b16 %v3607, %v3571
    %v4940 = vpack.c.b16 %v3608, %v3572
    %v4941 = vpack.c.b16 %v3609, %v3573
    %v4942 = vpack.c.b16 %v3610, %v3574
    %v4943 = vpack.c.b16 %v3611, %v3575
    %v4944 = vpack.c.b16 %v3612, %v3576
    %v4945 = vpack.c.b16 %v3613, %v3577
    %v4946 = vpack.c.b16 %v3614, %v3578
    %v4947 = vpack.c.b16 %v3615, %v3579
    %v4948 = vpack.c.b16 %v3616, %v3580
    %v4949 = vpack.c.b16 %v3617, %v3581
    %v4950 = vpack.c.b16 %v3618, %v3582
    %v4951 = vpack.c.b16 %v3619, %v3583
    %v4952 = vpack.c.b16 %v3620, %v3584
    %v4953 = vpack.c.b16 %v3621, %v3585
    %v4954 = vpack.c.b16 %v3622, %v3586
    %v4955 = vpack.c.b16 %v3623, %v3587
    %v4956 = vpack.c.b16 %v3624, %v3588
    %v4957 = vpack.c.b16 %v3625, %v3589
    %v4958 = vpack.c.b16 %v3626, %v3590
    %v4959 = vpack.c.b16 %v3627, %v3591
    %v4960 = vpack.c.b16 %v3628, %v3592
    %v4961 = vpack.c.b16 %v3629, %v3593
    %v4962 = vpack.c.b16 %v3666, %v3630
    %v4963 = vpack.c.b16 %v3667, %v3631
    %v4964 = vpack.c.b16 %v3668, %v3632
    %v4965 = vpack.c.b16 %v3669, %v3633
    %v4966 = vpack.c.b16 %v3670, %v3634
    %v4967 = vpack.c.b16 %v3671, %v3635
    %v4968 = vpack.c.b16 %v3672, %v3636
    %v4969 = vpack.c.b16 %v3673, %v3637
    %v4970 = vpack.c.b16 %v3674, %v3638
    %v4971 = vpack.c.b16 %v3675, %v3639
    %v4972 = vpack.c.b16 %v3676, %v3640
    %v4973 = vpack.c.b16 %v3677, %v3641
    %v4974 = vpack.c.b16 %v3678, %v3642
    %v4975 = vpack.c.b16 %v3679, %v3643
    %v4976 = vpack.c.b16 %v3680, %v3644
    %v4977 = vpack.c.b16 %v3681, %v3645
    %v4978 = vpack.c.b16 %v3682, %v3646
    %v4979 = vpack.c.b16 %v3683, %v3647
    %v4980 = vpack.c.b16 %v3684, %v3648
    %v4981 = vpack.c.b16 %v3685, %v3649
    %v4982 = vpack.c.b16 %v3686, %v3650
    %v4983 = vpack.c.b16 %v3687, %v3651
    %v4984 = vpack.c.b16 %v3688, %v3652
    %v4985 = vpack.c.b16 %v3689, %v3653
    %v4986 = vpack.c.b16 %v3690, %v3654
    %v4987 = vpack.c.b16 %v3691, %v3655
    %v4988 = vpack.c.b16 %v3692, %v3656
    %v4989 = vpack.c.b16 %v3693, %v3657
    %v4990 = vpack.c.b16 %v3694, %v3658
    %v4991 = vpack.c.b16 %v3695, %v3659
    %v4992 = vpack.c.b16 %v3696, %v3660
    %v4993 = vpack.c.b16 %v3697, %v3661
    %v4994 = vpack.c.b16 %v3698, %v3662
    %v4995 = vpack.c.b16 %v3699, %v3663
    %v4996 = vpack.c.b16 %v3700, %v3664
    %v4997 = vpack.c.b16 %v3701, %v3665
    %v4998 = vpack.c.b16 %v3738, %v3702
    %v4999 = vpack.c.b16 %v3739, %v3703
    %v5000 = vpack.c.b16 %v3740, %v3704
    %v5001 = vpack.c.b16 %v3741, %v3705
    %v5002 = vpack.c.b16 %v3742, %v3706
    %v5003 = vpack.c.b16 %v3743, %v3707
    %v5004 = vpack.c.b16 %v3744, %v3708
    %v5005 = vpack.c.b16 %v3745, %v3709
    %v5006 = vpack.c.b16 %v3746, %v3710
    %v5007 = vpack.c.b16 %v3747, %v3711
    %v5008 = vpack.c.b16 %v3748, %v3712
    %v5009 = vpack.c.b16 %v3749, %v3713
    %v5010 = vpack.c.b16 %v3750, %v3714
    %v5011 = vpack.c.b16 %v3751, %v3715
    %v5012 = vpack.c.b16 %v3752, %v3716
    %v5013 = vpack.c.b16 %v3753, %v3717
    %v5014 = vpack.c.b16 %v3754, %v3718
    %v5015 = vpack.c.b16 %v3755, %v3719
    %v5016 = vpack.c.b16 %v3756, %v3720
    %v5017 = vpack.c.b16 %v3757, %v3721
    %v5018 = vpack.c.b16 %v3758, %v3722
    %v5019 = vpack.c.b16 %v3759, %v3723
    %v5020 = vpack.c.b16 %v3760, %v3724
    %v5021 = vpack.c.b16 %v3761, %v3725
    %v5022 = vpack.c.b16 %v3762, %v3726
    %v5023 = vpack.c.b16 %v3763, %v3727
    %v5024 = vpack.c.b16 %v3764, %v3728
    %v5025 = vpack.c.b16 %v3765, %v3729
    %v5026 = vpack.c.b16 %v3766, %v3730
    %v5027 = vpack.c.b16 %v3767, %v3731
    %v5028 = vpack.c.b16 %v3768, %v3732
    %v5029 = vpack.c.b16 %v3769, %v3733
    %v5030 = vpack.c.b16 %v3770, %v3734
    %v5031 = vpack.c.b16 %v3771, %v3735
    %v5032 = vpack.c.b16 %v3772, %v3736
    %v5033 = vpack.c.b16 %v3773, %v3737
    %v5034 = vpack.c.b16 %v3810, %v3774
    %v5035 = vpack.c.b16 %v3811, %v3775
    %v5036 = vpack.c.b16 %v3812, %v3776
    %v5037 = vpack.c.b16 %v3813, %v3777
    %v5038 = vpack.c.b16 %v3814, %v3778
    %v5039 = vpack.c.b16 %v3815, %v3779
    %v5040 = vpack.c.b16 %v3816, %v3780
    %v5041 = vpack.c.b16 %v3817, %v3781
    %v5042 = vpack.c.b16 %v3818, %v3782
    %v5043 = vpack.c.b16 %v3819, %v3783
    %v5044 = vpack.c.b16 %v3820, %v3784
    %v5045 = vpack.c.b16 %v3821, %v3785
    %v5046 = vpack.c.b16 %v3822, %v3786
    %v5047 = vpack.c.b16 %v3823, %v3787
    %v5048 = vpack.c.b16 %v3824, %v3788
    %v5049 = vpack.c.b16 %v3825, %v3789
    %v5050 = vpack.c.b16 %v3826, %v3790
    %v5051 = vpack.c.b16 %v3827, %v3791
    %v5052 = vpack.c.b16 %v3828, %v3792
    %v5053 = vpack.c.b16 %v3829, %v3793
    %v5054 = vpack.c.b16 %v3830, %v3794
    %v5055 = vpack.c.b16 %v3831, %v3795
    %v5056 = vpack.c.b16 %v3832, %v3796
    %v5057 = vpack.c.b16 %v3833, %v3797
    %v5058 = vpack.c.b16 %v3834, %v3798
    %v5059 = vpack.c.b16 %v3835, %v3799
    %v5060 = vpack.c.b16 %v3836, %v3800
    %v5061 = vpack.c.b16 %v3837, %v3801
    %v5062 = vpack.c.b16 %v3838, %v3802
    %v5063 = vpack.c.b16 %v3839, %v3803
    %v5064 = vpack.c.b16 %v3840, %v3804
    %v5065 = vpack.c.b16 %v3841, %v3805
    %v5066 = vpack.c.b16 %v3842, %v3806
    %v5067 = vpack.c.b16 %v3843, %v3807
    %v5068 = vpack.c.b16 %v3844, %v3808
    %v5069 = vpack.c.b16 %v3845, %v3809
    %v5070 = vpack.c.b16 %v3882, %v3846
    %v5071 = vpack.c.b16 %v3883, %v3847
    %v5072 = vpack.c.b16 %v3884, %v3848
    %v5073 = vpack.c.b16 %v3885, %v3849
    %v5074 = vpack.c.b16 %v3886, %v3850
    %v5075 = vpack.c.b16 %v3887, %v3851
    %v5076 = vpack.c.b16 %v3888, %v3852
    %v5077 = vpack.c.b16 %v3889, %v3853
    %v5078 = vpack.c.b16 %v3890, %v3854
    %v5079 = vpack.c.b16 %v3891, %v3855
    %v5080 = vpack.c.b16 %v3892, %v3856
    %v5081 = vpack.c.b16 %v3893, %v3857
    %v5082 = vpack.c.b16 %v3894, %v3858
    %v5083 = vpack.c.b16 %v3895, %v3859
    %v5084 = vpack.c.b16 %v3896, %v3860
    %v5085 = vpack.c.b16 %v3897, %v3861
    %v5086 = vpack.c.b16 %v3898, %v3862
    %v5087 = vpack.c.b16 %v3899, %v3863
    %v5088 = vpack.c.b16 %v3900, %v3864
    %v5089 = vpack.c.b16 %v3901, %v3865
    %v5090 = vpack.c.b16 %v3902, %v3866
    %v5091 = vpack.c.b16 %v3903, %v3867
    %v5092 = vpack.c.b16 %v3904, %v3868
    %v5093 = vpack.c.b16 %v3905, %v3869
    %v5094 = vpack.c.b16 %v3906, %v3870
    %v5095 = vpack.c.b16 %v3907, %v3871
    %v5096 = vpack.c.b16 %v3908, %v3872
    %v5097 = vpack.c.b16 %v3909, %v3873
    %v5098 = vpack.c.b16 %v3910, %v3874
    %v5099 = vpack.c.b16 %v3911, %v3875
    %v5100 = vpack.c.b16 %v3912, %v3876
    %v5101 = vpack.c.b16 %v3913, %v3877
    %v5102 = vpack.c.b16 %v3914, %v3878
    %v5103 = vpack.c.b16 %v3915, %v3879
    %v5104 = vpack.c.b16 %v3916, %v3880
    %v5105 = vpack.c.b16 %v3917, %v3881
    %v5106 = vpack.c.b16 %v3954, %v3918
    %v5107 = vpack.c.b16 %v3955, %v3919
    %v5108 = vpack.c.b16 %v3956, %v3920
    %v5109 = vpack.c.b16 %v3957, %v3921
    %v5110 = vpack.c.b16 %v3958, %v3922
    %v5111 = vpack.c.b16 %v3959, %v3923
    %v5112 = vpack.c.b16 %v3960, %v3924
    %v5113 = vpack.c.b16 %v3961, %v3925
    %v5114 = vpack.c.b16 %v3962, %v3926
    %v5115 = vpack.c.b16 %v3963, %v3927
    %v5116 = vpack.c.b16 %v3964, %v3928
    %v5117 = vpack.c.b16 %v3965, %v3929
    %v5118 = vpack.c.b16 %v3966, %v3930
    %v5119 = vpack.c.b16 %v3967, %v3931
    %v5120 = vpack.c.b16 %v3968, %v3932
    %v5121 = vpack.c.b16 %v3969, %v3933
    %v5122 = vpack.c.b16 %v3970, %v3934
    %v5123 = vpack.c.b16 %v3971, %v3935
    %v5124 = vpack.c.b16 %v3972, %v3936
    %v5125 = vpack.c.b16 %v3973, %v3937
    %v5126 = vpack.c.b16 %v3974, %v3938
    %v5127 = vpack.c.b16 %v3975, %v3939
    %v5128 = vpack.c.b16 %v3976, %v3940
    %v5129 = vpack.c.b16 %v3977, %v3941
    %v5130 = vpack.c.b16 %v3978, %v3942
    %v5131 = vpack.c.b16 %v3979, %v3943
    %v5132 = vpack.c.b16 %v3980, %v3944
    %v5133 = vpack.c.b16 %v3981, %v3945
    %v5134 = vpack.c.b16 %v3982, %v3946
    %v5135 = vpack.c.b16 %v3983, %v3947
    %v5136 = vpack.c.b16 %v3984, %v3948
    %v5137 = vpack.c.b16 %v3985, %v3949
    %v5138 = vpack.c.b16 %v3986, %v3950
    %v5139 = vpack.c.b16 %v3987, %v3951
    %v5140 = vpack.c.b16 %v3988, %v3952
    %v5141 = vpack.c.b16 %v3989, %v3953
    %v5142 = vpack.c.b16 %v4026, %v3990
    %v5143 = vpack.c.b16 %v4027, %v3991
    %v5144 = vpack.c.b16 %v4028, %v3992
    %v5145 = vpack.c.b16 %v4029, %v3993
    %v5146 = vpack.c.b16 %v4030, %v3994
    %v5147 = vpack.c.b16 %v4031, %v3995
    %v5148 = vpack.c.b16 %v4032, %v3996
    %v5149 = vpack.c.b16 %v4033, %v3997
    %v5150 = vpack.c.b16 %v4034, %v3998
    %v5151 = vpack.c.b16 %v4035, %v3999
    %v5152 = vpack.c.b16 %v4036, %v4000
    %v5153 = vpack.c.b16 %v4037, %v4001
    %v5154 = vpack.c.b16 %v4038, %v4002
    %v5155 = vpack.c.b16 %v4039, %v4003
    %v5156 = vpack.c.b16 %v4040, %v4004
    %v5157 = vpack.c.b16 %v4041, %v4005
    %v5158 = vpack.c.b16 %v4042, %v4006
    %v5159 = vpack.c.b16 %v4043, %v4007
    %v5160 = vpack.c.b16 %v4044, %v4008
    %v5161 = vpack.c.b16 %v4045, %v4009
    %v5162 = vpack.c.b16 %v4046, %v4010
    %v5163 = vpack.c.b16 %v4047, %v4011
    %v5164 = vpack.c.b16 %v4048, %v4012
    %v5165 = vpack.c.b16 %v4049, %v4013
    %v5166 = vpack.c.b16 %v4050, %v4014
    %v5167 = vpack.c.b16 %v4051, %v4015
    %v5168 = vpack.c.b16 %v4052, %v4016
    %v5169 = vpack.c.b16 %v4053, %v4017
    %v5170 = vpack.c.b16 %v4054, %v4018
    %v5171 = vpack.c.b16 %v4055, %v4019
    %v5172 = vpack.c.b16 %v4056, %v4020
    %v5173 = vpack.c.b16 %v4057, %v4021
    %v5174 = vpack.c.b16 %v4058, %v4022
    %v5175 = vpack.c.b16 %v4059, %v4023
    %v5176 = vpack.c.b16 %v4060, %v4024
    %v5177 = vpack.c.b16 %v4061, %v4025
    %v5178 = vpack.c.b16 %v4098, %v4062
    %v5179 = vpack.c.b16 %v4099, %v4063
    %v5180 = vpack.c.b16 %v4100, %v4064
    %v5181 = vpack.c.b16 %v4101, %v4065
    %v5182 = vpack.c.b16 %v4102, %v4066
    %v5183 = vpack.c.b16 %v4103, %v4067
    %v5184 = vpack.c.b16 %v4104, %v4068
    %v5185 = vpack.c.b16 %v4105, %v4069
    %v5186 = vpack.c.b16 %v4106, %v4070
    %v5187 = vpack.c.b16 %v4107, %v4071
    %v5188 = vpack.c.b16 %v4108, %v4072
    %v5189 = vpack.c.b16 %v4109, %v4073
    %v5190 = vpack.c.b16 %v4110, %v4074
    %v5191 = vpack.c.b16 %v4111, %v4075
    %v5192 = vpack.c.b16 %v4112, %v4076
    %v5193 = vpack.c.b16 %v4113, %v4077
    %v5194 = vpack.c.b16 %v4114, %v4078
    %v5195 = vpack.c.b16 %v4115, %v4079
    %v5196 = vpack.c.b16 %v4116, %v4080
    %v5197 = vpack.c.b16 %v4117, %v4081
    %v5198 = vpack.c.b16 %v4118, %v4082
    %v5199 = vpack.c.b16 %v4119, %v4083
    %v5200 = vpack.c.b16 %v4120, %v4084
    %v5201 = vpack.c.b16 %v4121, %v4085
    %v5202 = vpack.c.b16 %v4122, %v4086
    %v5203 = vpack.c.b16 %v4123, %v4087
    %v5204 = vpack.c.b16 %v4124, %v4088
    %v5205 = vpack.c.b16 %v4125, %v4089
    %v5206 = vpack.c.b16 %v4126, %v4090
    %v5207 = vpack.c.b16 %v4127, %v4091
    %v5208 = vpack.c.b16 %v4128, %v4092
    %v5209 = vpack.c.b16 %v4129, %v4093
    %v5210 = vpack.c.b16 %v4130, %v4094
    %v5211 = vpack.c.b16 %v4131, %v4095
    %v5212 = vpack.c.b16 %v4132, %v4096
    %v5213 = vpack.c.b16 %v4133, %v4097
    %v5214 = vpack.c.b16 %v4170, %v4134
    %v5215 = vpack.c.b16 %v4171, %v4135
    %v5216 = vpack.c.b16 %v4172, %v4136
    %v5217 = vpack.c.b16 %v4173, %v4137
    %v5218 = vpack.c.b16 %v4174, %v4138
    %v5219 = vpack.c.b16 %v4175, %v4139
    %v5220 = vpack.c.b16 %v4176, %v4140
    %v5221 = vpack.c.b16 %v4177, %v4141
    %v5222 = vpack.c.b16 %v4178, %v4142
    %v5223 = vpack.c.b16 %v4179, %v4143
    %v5224 = vpack.c.b16 %v4180, %v4144
    %v5225 = vpack.c.b16 %v4181, %v4145
    %v5226 = vpack.c.b16 %v4182, %v4146
    %v5227 = vpack.c.b16 %v4183, %v4147
    %v5228 = vpack.c.b16 %v4184, %v4148
    %v5229 = vpack.c.b16 %v4185, %v4149
    %v5230 = vpack.c.b16 %v4186, %v4150
    %v5231 = vpack.c.b16 %v4187, %v4151
    %v5232 = vpack.c.b16 %v4188, %v4152
    %v5233 = vpack.c.b16 %v4189, %v4153
    %v5234 = vpack.c.b16 %v4190, %v4154
    %v5235 = vpack.c.b16 %v4191, %v4155
    %v5236 = vpack.c.b16 %v4192, %v4156
    %v5237 = vpack.c.b16 %v4193, %v4157
    %v5238 = vpack.c.b16 %v4194, %v4158
    %v5239 = vpack.c.b16 %v4195, %v4159
    %v5240 = vpack.c.b16 %v4196, %v4160
    %v5241 = vpack.c.b16 %v4197, %v4161
    %v5242 = vpack.c.b16 %v4198, %v4162
    %v5243 = vpack.c.b16 %v4199, %v4163
    %v5244 = vpack.c.b16 %v4200, %v4164
    %v5245 = vpack.c.b16 %v4201, %v4165
    %v5246 = vpack.c.b16 %v4202, %v4166
    %v5247 = vpack.c.b16 %v4203, %v4167
    %v5248 = vpack.c.b16 %v4204, %v4168
    %v5249 = vpack.c.b16 %v4205, %v4169
    %v5250 = vpack.c.b16 %v4242, %v4206
    %v5251 = vpack.c.b16 %v4243, %v4207
    %v5252 = vpack.c.b16 %v4244, %v4208
    %v5253 = vpack.c.b16 %v4245, %v4209
    %v5254 = vpack.c.b16 %v4246, %v4210
    %v5255 = vpack.c.b16 %v4247, %v4211
    %v5256 = vpack.c.b16 %v4248, %v4212
    %v5257 = vpack.c.b16 %v4249, %v4213
    %v5258 = vpack.c.b16 %v4250, %v4214
    %v5259 = vpack.c.b16 %v4251, %v4215
    %v5260 = vpack.c.b16 %v4252, %v4216
    %v5261 = vpack.c.b16 %v4253, %v4217
    %v5262 = vpack.c.b16 %v4254, %v4218
    %v5263 = vpack.c.b16 %v4255, %v4219
    %v5264 = vpack.c.b16 %v4256, %v4220
    %v5265 = vpack.c.b16 %v4257, %v4221
    %v5266 = vpack.c.b16 %v4258, %v4222
    %v5267 = vpack.c.b16 %v4259, %v4223
    %v5268 = vpack.c.b16 %v4260, %v4224
    %v5269 = vpack.c.b16 %v4261, %v4225
    %v5270 = vpack.c.b16 %v4262, %v4226
    %v5271 = vpack.c.b16 %v4263, %v4227
    %v5272 = vpack.c.b16 %v4264, %v4228
    %v5273 = vpack.c.b16 %v4265, %v4229
    %v5274 = vpack.c.b16 %v4266, %v4230
    %v5275 = vpack.c.b16 %v4267, %v4231
    %v5276 = vpack.c.b16 %v4268, %v4232
    %v5277 = vpack.c.b16 %v4269, %v4233
    %v5278 = vpack.c.b16 %v4270, %v4234
    %v5279 = vpack.c.b16 %v4271, %v4235
    %v5280 = vpack.c.b16 %v4272, %v4236
    %v5281 = vpack.c.b16 %v4273, %v4237
    %v5282 = vpack.c.b16 %v4274, %v4238
    %v5283 = vpack.c.b16 %v4275, %v4239
    %v5284 = vpack.c.b16 %v4276, %v4240
    %v5285 = vpack.c.b16 %v4277, %v4241
    %v5286 = vpack.c.b16 %v4314, %v4278
    %v5287 = vpack.c.b16 %v4315, %v4279
    %v5288 = vpack.c.b16 %v4316, %v4280
    %v5289 = vpack.c.b16 %v4317, %v4281
    %v5290 = vpack.c.b16 %v4318, %v4282
    %v5291 = vpack.c.b16 %v4319, %v4283
    %v5292 = vpack.c.b16 %v4320, %v4284
    %v5293 = vpack.c.b16 %v4321, %v4285
    %v5294 = vpack.c.b16 %v4322, %v4286
    %v5295 = vpack.c.b16 %v4323, %v4287
    %v5296 = vpack.c.b16 %v4324, %v4288
    %v5297 = vpack.c.b16 %v4325, %v4289
    %v5298 = vpack.c.b16 %v4326, %v4290
    %v5299 = vpack.c.b16 %v4327, %v4291
    %v5300 = vpack.c.b16 %v4328, %v4292
    %v5301 = vpack.c.b16 %v4329, %v4293
    %v5302 = vpack.c.b16 %v4330, %v4294
    %v5303 = vpack.c.b16 %v4331, %v4295
    %v5304 = vpack.c.b16 %v4332, %v4296
    %v5305 = vpack.c.b16 %v4333, %v4297
    %v5306 = vpack.c.b16 %v4334, %v4298
    %v5307 = vpack.c.b16 %v4335, %v4299
    %v5308 = vpack.c.b16 %v4336, %v4300
    %v5309 = vpack.c.b16 %v4337, %v4301
    %v5310 = vpack.c.b16 %v4338, %v4302
    %v5311 = vpack.c.b16 %v4339, %v4303
    %v5312 = vpack.c.b16 %v4340, %v4304
    %v5313 = vpack.c.b16 %v4341, %v4305
    %v5314 = vpack.c.b16 %v4342, %v4306
    %v5315 = vpack.c.b16 %v4343, %v4307
    %v5316 = vpack.c.b16 %v4344, %v4308
    %v5317 = vpack.c.b16 %v4345, %v4309
    %v5318 = vpack.c.b16 %v4346, %v4310
    %v5319 = vpack.c.b16 %v4347, %v4311
    %v5320 = vpack.c.b16 %v4348, %v4312
    %v5321 = vpack.c.b16 %v4349, %v4313
    %v5322 = vpack.c.b16 %v4386, %v4350
    %v5323 = vpack.c.b16 %v4387, %v4351
    %v5324 = vpack.c.b16 %v4388, %v4352
    %v5325 = vpack.c.b16 %v4389, %v4353
    %v5326 = vpack.c.b16 %v4390, %v4354
    %v5327 = vpack.c.b16 %v4391, %v4355
    %v5328 = vpack.c.b16 %v4392, %v4356
    %v5329 = vpack.c.b16 %v4393, %v4357
    %v5330 = vpack.c.b16 %v4394, %v4358
    %v5331 = vpack.c.b16 %v4395, %v4359
    %v5332 = vpack.c.b16 %v4396, %v4360
    %v5333 = vpack.c.b16 %v4397, %v4361
    %v5334 = vpack.c.b16 %v4398, %v4362
    %v5335 = vpack.c.b16 %v4399, %v4363
    %v5336 = vpack.c.b16 %v4400, %v4364
    %v5337 = vpack.c.b16 %v4401, %v4365
    %v5338 = vpack.c.b16 %v4402, %v4366
    %v5339 = vpack.c.b16 %v4403, %v4367
    %v5340 = vpack.c.b16 %v4404, %v4368
    %v5341 = vpack.c.b16 %v4405, %v4369
    %v5342 = vpack.c.b16 %v4406, %v4370
    %v5343 = vpack.c.b16 %v4407, %v4371
    %v5344 = vpack.c.b16 %v4408, %v4372
    %v5345 = vpack.c.b16 %v4409, %v4373
    %v5346 = vpack.c.b16 %v4410, %v4374
    %v5347 = vpack.c.b16 %v4411, %v4375
    %v5348 = vpack.c.b16 %v4412, %v4376
    %v5349 = vpack.c.b16 %v4413, %v4377
    %v5350 = vpack.c.b16 %v4414, %v4378
    %v5351 = vpack.c.b16 %v4415, %v4379
    %v5352 = vpack.c.b16 %v4416, %v4380
    %v5353 = vpack.c.b16 %v4417, %v4381
    %v5354 = vpack.c.b16 %v4418, %v4382
    %v5355 = vpack.c.b16 %v4419, %v4383
    %v5356 = vpack.c.b16 %v4420, %v4384
    %v5357 = vpack.c.b16 %v4421, %v4385
    %v5358 = vpack.c.b16 %v4458, %v4422
    %v5359 = vpack.c.b16 %v4459, %v4423
    %v5360 = vpack.c.b16 %v4460, %v4424
    %v5361 = vpack.c.b16 %v4461, %v4425
    %v5362 = vpack.c.b16 %v4462, %v4426
    %v5363 = vpack.c.b16 %v4463, %v4427
    %v5364 = vpack.c.b16 %v4464, %v4428
    %v5365 = vpack.c.b16 %v4465, %v4429
    %v5366 = vpack.c.b16 %v4466, %v4430
    %v5367 = vpack.c.b16 %v4467, %v4431
    %v5368 = vpack.c.b16 %v4468, %v4432
    %v5369 = vpack.c.b16 %v4469, %v4433
    %v5370 = vpack.c.b16 %v4470, %v4434
    %v5371 = vpack.c.b16 %v4471, %v4435
    %v5372 = vpack.c.b16 %v4472, %v4436
    %v5373 = vpack.c.b16 %v4473, %v4437
    %v5374 = vpack.c.b16 %v4474, %v4438
    %v5375 = vpack.c.b16 %v4475, %v4439
    %v5376 = vpack.c.b16 %v4476, %v4440
    %v5377 = vpack.c.b16 %v4477, %v4441
    %v5378 = vpack.c.b16 %v4478, %v4442
    %v5379 = vpack.c.b16 %v4479, %v4443
    %v5380 = vpack.c.b16 %v4480, %v4444
    %v5381 = vpack.c.b16 %v4481, %v4445
    %v5382 = vpack.c.b16 %v4482, %v4446
    %v5383 = vpack.c.b16 %v4483, %v4447
    %v5384 = vpack.c.b16 %v4484, %v4448
    %v5385 = vpack.c.b16 %v4485, %v4449
    %v5386 = vpack.c.b16 %v4486, %v4450
    %v5387 = vpack.c.b16 %v4487, %v4451
    %v5388 = vpack.c.b16 %v4488, %v4452
    %v5389 = vpack.c.b16 %v4489, %v4453
    %v5390 = vpack.c.b16 %v4490, %v4454
    %v5391 = vpack.c.b16 %v4491, %v4455
    %v5392 = vpack.c.b16 %v4492, %v4456
    %v5393 = vpack.c.b16 %v4493, %v4457
    %v5394 = vpack.c.b16 %v4530, %v4494
    %v5395 = vpack.c.b16 %v4531, %v4495
    %v5396 = vpack.c.b16 %v4532, %v4496
    %v5397 = vpack.c.b16 %v4533, %v4497
    %v5398 = vpack.c.b16 %v4534, %v4498
    %v5399 = vpack.c.b16 %v4535, %v4499
    %v5400 = vpack.c.b16 %v4536, %v4500
    %v5401 = vpack.c.b16 %v4537, %v4501
    %v5402 = vpack.c.b16 %v4538, %v4502
    %v5403 = vpack.c.b16 %v4539, %v4503
    %v5404 = vpack.c.b16 %v4540, %v4504
    %v5405 = vpack.c.b16 %v4541, %v4505
    %v5406 = vpack.c.b16 %v4542, %v4506
    %v5407 = vpack.c.b16 %v4543, %v4507
    %v5408 = vpack.c.b16 %v4544, %v4508
    %v5409 = vpack.c.b16 %v4545, %v4509
    %v5410 = vpack.c.b16 %v4546, %v4510
    %v5411 = vpack.c.b16 %v4547, %v4511
    %v5412 = vpack.c.b16 %v4548, %v4512
    %v5413 = vpack.c.b16 %v4549, %v4513
    %v5414 = vpack.c.b16 %v4550, %v4514
    %v5415 = vpack.c.b16 %v4551, %v4515
    %v5416 = vpack.c.b16 %v4552, %v4516
    %v5417 = vpack.c.b16 %v4553, %v4517
    %v5418 = vpack.c.b16 %v4554, %v4518
    %v5419 = vpack.c.b16 %v4555, %v4519
    %v5420 = vpack.c.b16 %v4556, %v4520
    %v5421 = vpack.c.b16 %v4557, %v4521
    %v5422 = vpack.c.b16 %v4558, %v4522
    %v5423 = vpack.c.b16 %v4559, %v4523
    %v5424 = vpack.c.b16 %v4560, %v4524
    %v5425 = vpack.c.b16 %v4561, %v4525
    %v5426 = vpack.c.b16 %v4562, %v4526
    %v5427 = vpack.c.b16 %v4563, %v4527
    %v5428 = vpack.c.b16 %v4564, %v4528
    %v5429 = vpack.c.b16 %v4565, %v4529
    %6294 = vmatprep.subr.bf16.mxu0 %v4567
    %6295 = vmatpush1.bf16.msra.mxu0 %v4566
    %6296 = vmatprep.subr.bf16.mxu0 %v4603
    %6297 = vmatpush1.bf16.msra.mxu0 %v4602
    %6298 = vmatprep.subr.bf16.mxu0 %v4639
    %6299 = vmatpush1.bf16.msra.mxu0 %v4638
    %6300 = vmatprep.subr.bf16.mxu0 %v4675
    %6301 = vmatpush1.bf16.msra.mxu0 %v4674
    %6302 = vmatprep.subr.bf16.mxu0 %v4711
    %6303 = vmatpush1.bf16.msra.mxu0 %v4710
    %6304 = vmatprep.subr.bf16.mxu0 %v4747
    %6305 = vmatpush1.bf16.msra.mxu0 %v4746
    %6306 = vmatprep.subr.bf16.mxu0 %v4783
    %6307 = vmatpush1.bf16.msra.mxu0 %v4782
    %6308 = vmatprep.subr.bf16.mxu0 %v4819
    %6309 = vmatpush1.bf16.msra.mxu0 %v4818
    %6310 = vmatprep.subr.bf16.mxu0 %v4855
    %6311 = vmatpush1.bf16.msra.mxu0 %v4854
    %6312 = vmatprep.subr.bf16.mxu0 %v4891
    %6313 = vmatpush1.bf16.msra.mxu0 %v4890
    %6314 = vmatprep.subr.bf16.mxu0 %v4927
    %6315 = vmatpush1.bf16.msra.mxu0 %v4926
    %6316 = vmatprep.subr.bf16.mxu0 %v4963
    %6317 = vmatpush1.bf16.msra.mxu0 %v4962
    %6318 = vmatprep.subr.bf16.mxu0 %v4999
    %6319 = vmatpush1.bf16.msra.mxu0 %v4998
    %6320 = vmatprep.subr.bf16.mxu0 %v5035
    %6321 = vmatpush1.bf16.msra.mxu0 %v5034
    %6322 = vmatprep.subr.bf16.mxu0 %v5071
    %6323 = vmatpush1.bf16.msra.mxu0 %v5070
    %6324 = vmatprep.subr.bf16.mxu0 %v5107
    %6325 = vmatpush1.bf16.msra.mxu0 %v5106
    %6326 = vmatprep.mubr.bf16.mxu0 %v915
    %6327 = vmatmul.mubr.bf16.gmra.mrb[0].mxu0 %v914
    %v6328 = vpop.f32.mrb[0].mxu0
    %v6329 = vadd.f32 %v1797, %v6328
    %v6330 = vpop.f32.mrb[0].mxu0
    %v6331 = vadd.f32 %v1801, %v6330
    %v6332 = vpop.f32.mrb[0].mxu0
    %v6333 = vadd.f32 %v1797, %v6332
    %v6334 = vpop.f32.mrb[0].mxu0
    %v6335 = vadd.f32 %v1801, %v6334
    %6336 = vmatprep.mubr.bf16.mxu0 %v918
    %6337 = vmatmul.mubr.bf16.gmra.mrb[0].mxu0 %v917
    %v6338 = vpop.f32.mrb[0].mxu0
    %v6339 = vadd.f32 %v1797, %v6338
    %v6340 = vpop.f32.mrb[0].mxu0
    %v6341 = vadd.f32 %v1801, %v6340
    %v6342 = vpop.f32.mrb[0].mxu0
    %v6343 = vpop.f32.mrb[0].mxu0
    %6344 = vdwg.mxu0
    %6345 = vmatprep.subr.bf16.mxu0 %v5143
    %6346 = vmatpush1.bf16.msra.mxu0 %v5142
    %6347 = vmatprep.subr.bf16.mxu0 %v5179
    %6348 = vmatpush1.bf16.msra.mxu0 %v5178
    %6349 = vmatprep.subr.bf16.mxu0 %v5215
    %6350 = vmatpush1.bf16.msra.mxu0 %v5214
    %6351 = vmatprep.subr.bf16.mxu0 %v5251
    %6352 = vmatpush1.bf16.msra.mxu0 %v5250
    %6353 = vmatprep.subr.bf16.mxu0 %v5287
    %6354 = vmatpush1.bf16.msra.mxu0 %v5286
    %6355 = vmatprep.subr.bf16.mxu0 %v5323
    %6356 = vmatpush1.bf16.msra.mxu0 %v5322
    %6357 = vmatprep.subr.bf16.mxu0 %v5359
    %6358 = vmatpush1.bf16.msra.mxu0 %v5358
    %6359 = vmatprep.subr.bf16.mxu0 %v5395
    %6360 = vmatpush1.bf16.msra.mxu0 %v5394
    %6361 = vmatprep.subr.bf16.mxu0 0
    %6362 = vmatpush1.bf16.msra.mxu0 0
    %6363 = vmatprep.subr.bf16.mxu0 0
    %6364 = vmatpush1.bf16.msra.mxu0 0
    %6365 = vmatprep.subr.bf16.mxu0 0
    %6366 = vmatpush1.bf16.msra.mxu0 0
    %6367 = vmatprep.subr.bf16.mxu0 0
    %6368 = vmatpush1.bf16.msra.mxu0 0
    %6369 = vmatprep.subr.bf16.mxu0 0
    %6370 = vmatpush1.bf16.msra.mxu0 0
    %6371 = vmatprep.subr.bf16.mxu0 0
    %6372 = vmatpush1.bf16.msra.mxu0 0
    %6373 = vmatprep.subr.bf16.mxu0 0
    %6374 = vmatpush1.bf16.msra.mxu0 0
    %6375 = vmatprep.subr.bf16.mxu0 0
    %6376 = vmatpush1.bf16.msra.mxu0 0
    %6377 = vmatprep.mubr.bf16.mxu0 0
    %6378 = vmatmul.mubr.bf16.gmra.mrb[0].mxu0 %v916
    %v6379 = vpop.f32.mrb[0].mxu0
    %v6380 = vadd.f32 %v6329, %v6379
    %v6381 = vpop.f32.mrb[0].mxu0
    %v6382 = vadd.f32 %v6331, %v6381
    %v6383 = vpop.f32.mrb[0].mxu0
    %v6384 = vadd.f32 %v6333, %v6383
    %v6385 = vpop.f32.mrb[0].mxu0
    %v6386 = vadd.f32 %v6335, %v6385
    %6387 = vmatprep.mubr.bf16.mxu0 0
    %6388 = vmatmul.mubr.bf16.gmra.mrb[0].mxu0 %v919
    %v6389 = vpop.f32.mrb[0].mxu0
    %v6390 = vadd.f32 %v6339, %v6389
    %v6391 = vpop.f32.mrb[0].mxu0
    %v6392 = vadd.f32 %v6341, %v6391
    %v6393 = vpop.f32.mrb[0].mxu0
    %v6394 = vpop.f32.mrb[0].mxu0
    %6395 = vdwg.mxu0
    %6396 = vmatprep.subr.bf16.mxu0 %v4569
    %6397 = vmatpush1.bf16.msra.mxu0 %v4568
    %6398 = vmatprep.subr.bf16.mxu0 %v4605
    %6399 = vmatpush1.bf16.msra.mxu0 %v4604
    %6400 = vmatprep.subr.bf16.mxu0 %v4641
    %6401 = vmatpush1.bf16.msra.mxu0 %v4640
    %6402 = vmatprep.subr.bf16.mxu0 %v4677
    %6403 = vmatpush1.bf16.msra.mxu0 %v4676
    %6404 = vmatprep.subr.bf16.mxu0 %v4713
    %6405 = vmatpush1.bf16.msra.mxu0 %v4712
    %6406 = vmatprep.subr.bf16.mxu0 %v4749
    %6407 = vmatpush1.bf16.msra.mxu0 %v4748
    %6408 = vmatprep.subr.bf16.mxu0 %v4785
    %6409 = vmatpush1.bf16.msra.mxu0 %v4784
    %6410 = vmatprep.subr.bf16.mxu0 %v4821
    %6411 = vmatpush1.bf16.msra.mxu0 %v4820
    %6412 = vmatprep.subr.bf16.mxu0 %v4857
    %6413 = vmatpush1.bf16.msra.mxu0 %v4856
    %6414 = vmatprep.subr.bf16.mxu0 %v4893
    %6415 = vmatpush1.bf16.msra.mxu0 %v4892
    %6416 = vmatprep.subr.bf16.mxu0 %v4929
    %6417 = vmatpush1.bf16.msra.mxu0 %v4928
    %6418 = vmatprep.subr.bf16.mxu0 %v4965
    %6419 = vmatpush1.bf16.msra.mxu0 %v4964
    %6420 = vmatprep.subr.bf16.mxu0 %v5001
    %6421 = vmatpush1.bf16.msra.mxu0 %v5000
    %6422 = vmatprep.subr.bf16.mxu0 %v5037
    %6423 = vmatpush1.bf16.msra.mxu0 %v5036
    %6424 = vmatprep.subr.bf16.mxu0 %v5073
    %6425 = vmatpush1.bf16.msra.mxu0 %v5072
    %6426 = vmatprep.subr.bf16.mxu0 %v5109
    %6427 = vmatpush1.bf16.msra.mxu0 %v5108
    %6428 = vmatprep.mubr.bf16.mxu0 %v915
    %6429 = vmatmul.mubr.bf16.gmra.mrb[0].mxu0 %v914
    %v6430 = vpop.f32.mrb[0].mxu0
    %v6431 = vadd.f32 %v1805, %v6430
    %v6432 = vpop.f32.mrb[0].mxu0
    %v6433 = vadd.f32 %v1809, %v6432
    %v6434 = vpop.f32.mrb[0].mxu0
    %v6435 = vadd.f32 %v1805, %v6434
    %v6436 = vpop.f32.mrb[0].mxu0
    %v6437 = vadd.f32 %v1809, %v6436
    %6438 = vmatprep.mubr.bf16.mxu0 %v918
    %6439 = vmatmul.mubr.bf16.gmra.mrb[0].mxu0 %v917
    %v6440 = vpop.f32.mrb[0].mxu0
    %v6441 = vadd.f32 %v1805, %v6440
    %v6442 = vpop.f32.mrb[0].mxu0
    %v6443 = vadd.f32 %v1809, %v6442
    %v6444 = vpop.f32.mrb[0].mxu0
    %v6445 = vpop.f32.mrb[0].mxu0
    %6446 = vdwg.mxu0
    %6447 = vmatprep.subr.bf16.mxu0 %v5145
    %6448 = vmatpush1.bf16.msra.mxu0 %v5144
    %6449 = vmatprep.subr.bf16.mxu0 %v5181
    %6450 = vmatpush1.bf16.msra.mxu0 %v5180
    %6451 = vmatprep.subr.bf16.mxu0 %v5217
    %6452 = vmatpush1.bf16.msra.mxu0 %v5216
    %6453 = vmatprep.subr.bf16.mxu0 %v5253
    %6454 = vmatpush1.bf16.msra.mxu0 %v5252
    %6455 = vmatprep.subr.bf16.mxu0 %v5289
    %6456 = vmatpush1.bf16.msra.mxu0 %v5288
    %6457 = vmatprep.subr.bf16.mxu0 %v5325
    %6458 = vmatpush1.bf16.msra.mxu0 %v5324
    %6459 = vmatprep.subr.bf16.mxu0 %v5361
    %6460 = vmatpush1.bf16.msra.mxu0 %v5360
    %6461 = vmatprep.subr.bf16.mxu0 %v5397
    %6462 = vmatpush1.bf16.msra.mxu0 %v5396
    %6463 = vmatprep.subr.bf16.mxu0 0
    %6464 = vmatpush1.bf16.msra.mxu0 0
    %6465 = vmatprep.subr.bf16.mxu0 0
    %6466 = vmatpush1.bf16.msra.mxu0 0
    %6467 = vmatprep.subr.bf16.mxu0 0
    %6468 = vmatpush1.bf16.msra.mxu0 0
    %6469 = vmatprep.subr.bf16.mxu0 0
    %6470 = vmatpush1.bf16.msra.mxu0 0
    %6471 = vmatprep.subr.bf16.mxu0 0
    %6472 = vmatpush1.bf16.msra.mxu0 0
    %6473 = vmatprep.subr.bf16.mxu0 0
    %6474 = vmatpush1.bf16.msra.mxu0 0
    %6475 = vmatprep.subr.bf16.mxu0 0
    %6476 = vmatpush1.bf16.msra.mxu0 0
    %6477 = vmatprep.subr.bf16.mxu0 0
    %6478 = vmatpush1.bf16.msra.mxu0 0
    %6479 = vmatprep.mubr.bf16.mxu0 0
    %6480 = vmatmul.mubr.bf16.gmra.mrb[0].mxu0 %v916
    %v6481 = vpop.f32.mrb[0].mxu0
    %v6482 = vadd.f32 %v6431, %v6481
    %v6483 = vpop.f32.mrb[0].mxu0
    %v6484 = vadd.f32 %v6433, %v6483
    %v6485 = vpop.f32.mrb[0].mxu0
    %v6486 = vadd.f32 %v6435, %v6485
    %v6487 = vpop.f32.mrb[0].mxu0
    %v6488 = vadd.f32 %v6437, %v6487
    %6489 = vmatprep.mubr.bf16.mxu0 0
    %6490 = vmatmul.mubr.bf16.gmra.mrb[0].mxu0 %v919
    %v6491 = vpop.f32.mrb[0].mxu0
    %v6492 = vadd.f32 %v6441, %v6491
    %v6493 = vpop.f32.mrb[0].mxu0
    %v6494 = vadd.f32 %v6443, %v6493
    %v6495 = vpop.f32.mrb[0].mxu0
    %v6496 = vpop.f32.mrb[0].mxu0
    %6497 = vdwg.mxu0
    %6498 = vmatprep.subr.bf16.mxu0 %v4571
    %6499 = vmatpush1.bf16.msra.mxu0 %v4570
    %6500 = vmatprep.subr.bf16.mxu0 %v4607
    %6501 = vmatpush1.bf16.msra.mxu0 %v4606
    %6502 = vmatprep.subr.bf16.mxu0 %v4643
    %6503 = vmatpush1.bf16.msra.mxu0 %v4642
    %6504 = vmatprep.subr.bf16.mxu0 %v4679
    %6505 = vmatpush1.bf16.msra.mxu0 %v4678
    %6506 = vmatprep.subr.bf16.mxu0 %v4715
    %6507 = vmatpush1.bf16.msra.mxu0 %v4714
    %6508 = vmatprep.subr.bf16.mxu0 %v4751
    %6509 = vmatpush1.bf16.msra.mxu0 %v4750
    %6510 = vmatprep.subr.bf16.mxu0 %v4787
    %6511 = vmatpush1.bf16.msra.mxu0 %v4786
    %6512 = vmatprep.subr.bf16.mxu0 %v4823
    %6513 = vmatpush1.bf16.msra.mxu0 %v4822
    %6514 = vmatprep.subr.bf16.mxu0 %v4859
    %6515 = vmatpush1.bf16.msra.mxu0 %v4858
    %6516 = vmatprep.subr.bf16.mxu0 %v4895
    %6517 = vmatpush1.bf16.msra.mxu0 %v4894
    %6518 = vmatprep.subr.bf16.mxu0 %v4931
    %6519 = vmatpush1.bf16.msra.mxu0 %v4930
    %6520 = vmatprep.subr.bf16.mxu0 %v4967
    %6521 = vmatpush1.bf16.msra.mxu0 %v4966
    %6522 = vmatprep.subr.bf16.mxu0 %v5003
    %6523 = vmatpush1.bf16.msra.mxu0 %v5002
    %6524 = vmatprep.subr.bf16.mxu0 %v5039
    %6525 = vmatpush1.bf16.msra.mxu0 %v5038
    %6526 = vmatprep.subr.bf16.mxu0 %v5075
    %6527 = vmatpush1.bf16.msra.mxu0 %v5074
    %6528 = vmatprep.subr.bf16.mxu0 %v5111
    %6529 = vmatpush1.bf16.msra.mxu0 %v5110
    %6530 = vmatprep.mubr.bf16.mxu0 %v915
    %6531 = vmatmul.mubr.bf16.gmra.mrb[0].mxu0 %v914
    %v6532 = vpop.f32.mrb[0].mxu0
    %v6533 = vadd.f32 %v1813, %v6532
    %v6534 = vpop.f32.mrb[0].mxu0
    %v6535 = vadd.f32 %v1817, %v6534
    %v6536 = vpop.f32.mrb[0].mxu0
    %v6537 = vadd.f32 %v1813, %v6536
    %v6538 = vpop.f32.mrb[0].mxu0
    %v6539 = vadd.f32 %v1817, %v6538
    %6540 = vmatprep.mubr.bf16.mxu0 %v918
    %6541 = vmatmul.mubr.bf16.gmra.mrb[0].mxu0 %v917
    %v6542 = vpop.f32.mrb[0].mxu0
    %v6543 = vadd.f32 %v1813, %v6542
    %v6544 = vpop.f32.mrb[0].mxu0
    %v6545 = vadd.f32 %v1817, %v6544
    %v6546 = vpop.f32.mrb[0].mxu0
    %v6547 = vpop.f32.mrb[0].mxu0
    %6548 = vdwg.mxu0
    %6549 = vmatprep.subr.bf16.mxu0 %v5147
    %6550 = vmatpush1.bf16.msra.mxu0 %v5146
    %6551 = vmatprep.subr.bf16.mxu0 %v5183
    %6552 = vmatpush1.bf16.msra.mxu0 %v5182
    %6553 = vmatprep.subr.bf16.mxu0 %v5219
    %6554 = vmatpush1.bf16.msra.mxu0 %v5218
    %6555 = vmatprep.subr.bf16.mxu0 %v5255
    %6556 = vmatpush1.bf16.msra.mxu0 %v5254
    %6557 = vmatprep.subr.bf16.mxu0 %v5291
    %6558 = vmatpush1.bf16.msra.mxu0 %v5290
    %6559 = vmatprep.subr.bf16.mxu0 %v5327
    %6560 = vmatpush1.bf16.msra.mxu0 %v5326
    %6561 = vmatprep.subr.bf16.mxu0 %v5363
    %6562 = vmatpush1.bf16.msra.mxu0 %v5362
    %6563 = vmatprep.subr.bf16.mxu0 %v5399
    %6564 = vmatpush1.bf16.msra.mxu0 %v5398
    %6565 = vmatprep.subr.bf16.mxu0 0
    %6566 = vmatpush1.bf16.msra.mxu0 0
    %6567 = vmatprep.subr.bf16.mxu0 0
    %6568 = vmatpush1.bf16.msra.mxu0 0
    %6569 = vmatprep.subr.bf16.mxu0 0
    %6570 = vmatpush1.bf16.msra.mxu0 0
    %6571 = vmatprep.subr.bf16.mxu0 0
    %6572 = vmatpush1.bf16.msra.mxu0 0
    %6573 = vmatprep.subr.bf16.mxu0 0
    %6574 = vmatpush1.bf16.msra.mxu0 0
    %6575 = vmatprep.subr.bf16.mxu0 0
    %6576 = vmatpush1.bf16.msra.mxu0 0
    %6577 = vmatprep.subr.bf16.mxu0 0
    %6578 = vmatpush1.bf16.msra.mxu0 0
    %6579 = vmatprep.subr.bf16.mxu0 0
    %6580 = vmatpush1.bf16.msra.mxu0 0
    %6581 = vmatprep.mubr.bf16.mxu0 0
    %6582 = vmatmul.mubr.bf16.gmra.mrb[0].mxu0 %v916
    %v6583 = vpop.f32.mrb[0].mxu0
    %v6584 = vadd.f32 %v6533, %v6583
    %v6585 = vpop.f32.mrb[0].mxu0
    %v6586 = vadd.f32 %v6535, %v6585
    %v6587 = vpop.f32.mrb[0].mxu0
    %v6588 = vadd.f32 %v6537, %v6587
    %v6589 = vpop.f32.mrb[0].mxu0
    %v6590 = vadd.f32 %v6539, %v6589
    %6591 = vmatprep.mubr.bf16.mxu0 0
    %6592 = vmatmul.mubr.bf16.gmra.mrb[0].mxu0 %v919
    %v6593 = vpop.f32.mrb[0].mxu0
    %v6594 = vadd.f32 %v6543, %v6593
    %v6595 = vpop.f32.mrb[0].mxu0
    %v6596 = vadd.f32 %v6545, %v6595
    %v6597 = vpop.f32.mrb[0].mxu0
    %v6598 = vpop.f32.mrb[0].mxu0
    %6599 = vdwg.mxu0
    %6600 = vmatprep.subr.bf16.mxu0 %v4573
    %6601 = vmatpush1.bf16.msra.mxu0 %v4572
    %6602 = vmatprep.subr.bf16.mxu0 %v4609
    %6603 = vmatpush1.bf16.msra.mxu0 %v4608
    %6604 = vmatprep.subr.bf16.mxu0 %v4645
    %6605 = vmatpush1.bf16.msra.mxu0 %v4644
    %6606 = vmatprep.subr.bf16.mxu0 %v4681
    %6607 = vmatpush1.bf16.msra.mxu0 %v4680
    %6608 = vmatprep.subr.bf16.mxu0 %v4717
    %6609 = vmatpush1.bf16.msra.mxu0 %v4716
    %6610 = vmatprep.subr.bf16.mxu0 %v4753
    %6611 = vmatpush1.bf16.msra.mxu0 %v4752
    %6612 = vmatprep.subr.bf16.mxu0 %v4789
    %6613 = vmatpush1.bf16.msra.mxu0 %v4788
    %6614 = vmatprep.subr.bf16.mxu0 %v4825
    %6615 = vmatpush1.bf16.msra.mxu0 %v4824
    %6616 = vmatprep.subr.bf16.mxu0 %v4861
    %6617 = vmatpush1.bf16.msra.mxu0 %v4860
    %6618 = vmatprep.subr.bf16.mxu0 %v4897
    %6619 = vmatpush1.bf16.msra.mxu0 %v4896
    %6620 = vmatprep.subr.bf16.mxu0 %v4933
    %6621 = vmatpush1.bf16.msra.mxu0 %v4932
    %6622 = vmatprep.subr.bf16.mxu0 %v4969
    %6623 = vmatpush1.bf16.msra.mxu0 %v4968
    %6624 = vmatprep.subr.bf16.mxu0 %v5005
    %6625 = vmatpush1.bf16.msra.mxu0 %v5004
    %6626 = vmatprep.subr.bf16.mxu0 %v5041
    %6627 = vmatpush1.bf16.msra.mxu0 %v5040
    %6628 = vmatprep.subr.bf16.mxu0 %v5077
    %6629 = vmatpush1.bf16.msra.mxu0 %v5076
    %6630 = vmatprep.subr.bf16.mxu0 %v5113
    %6631 = vmatpush1.bf16.msra.mxu0 %v5112
    %6632 = vmatprep.mubr.bf16.mxu0 %v915
    %6633 = vmatmul.mubr.bf16.gmra.mrb[0].mxu0 %v914
    %v6634 = vpop.f32.mrb[0].mxu0
    %v6635 = vadd.f32 %v1821, %v6634
    %v6636 = vpop.f32.mrb[0].mxu0
    %v6637 = vadd.f32 %v1825, %v6636
    %v6638 = vpop.f32.mrb[0].mxu0
    %v6639 = vadd.f32 %v1821, %v6638
    %v6640 = vpop.f32.mrb[0].mxu0
    %v6641 = vadd.f32 %v1825, %v6640
    %6642 = vmatprep.mubr.bf16.mxu0 %v918
    %6643 = vmatmul.mubr.bf16.gmra.mrb[0].mxu0 %v917
    %v6644 = vpop.f32.mrb[0].mxu0
    %v6645 = vadd.f32 %v1821, %v6644
    %v6646 = vpop.f32.mrb[0].mxu0
    %v6647 = vadd.f32 %v1825, %v6646
    %v6648 = vpop.f32.mrb[0].mxu0
    %v6649 = vpop.f32.mrb[0].mxu0
    %6650 = vdwg.mxu0
    %6651 = vmatprep.subr.bf16.mxu0 %v5149
    %6652 = vmatpush1.bf16.msra.mxu0 %v5148
    %6653 = vmatprep.subr.bf16.mxu0 %v5185
    %6654 = vmatpush1.bf16.msra.mxu0 %v5184
    %6655 = vmatprep.subr.bf16.mxu0 %v5221
    %6656 = vmatpush1.bf16.msra.mxu0 %v5220
    %6657 = vmatprep.subr.bf16.mxu0 %v5257
    %6658 = vmatpush1.bf16.msra.mxu0 %v5256
    %6659 = vmatprep.subr.bf16.mxu0 %v5293
    %6660 = vmatpush1.bf16.msra.mxu0 %v5292
    %6661 = vmatprep.subr.bf16.mxu0 %v5329
    %6662 = vmatpush1.bf16.msra.mxu0 %v5328
    %6663 = vmatprep.subr.bf16.mxu0 %v5365
    %6664 = vmatpush1.bf16.msra.mxu0 %v5364
    %6665 = vmatprep.subr.bf16.mxu0 %v5401
    %6666 = vmatpush1.bf16.msra.mxu0 %v5400
    %6667 = vmatprep.subr.bf16.mxu0 0
    %6668 = vmatpush1.bf16.msra.mxu0 0
    %6669 = vmatprep.subr.bf16.mxu0 0
    %6670 = vmatpush1.bf16.msra.mxu0 0
    %6671 = vmatprep.subr.bf16.mxu0 0
    %6672 = vmatpush1.bf16.msra.mxu0 0
    %6673 = vmatprep.subr.bf16.mxu0 0
    %6674 = vmatpush1.bf16.msra.mxu0 0
    %6675 = vmatprep.subr.bf16.mxu0 0
    %6676 = vmatpush1.bf16.msra.mxu0 0
    %6677 = vmatprep.subr.bf16.mxu0 0
    %6678 = vmatpush1.bf16.msra.mxu0 0
    %6679 = vmatprep.subr.bf16.mxu0 0
    %6680 = vmatpush1.bf16.msra.mxu0 0
    %6681 = vmatprep.subr.bf16.mxu0 0
    %6682 = vmatpush1.bf16.msra.mxu0 0
    %6683 = vmatprep.mubr.bf16.mxu0 0
    %6684 = vmatmul.mubr.bf16.gmra.mrb[0].mxu0 %v916
    %v6685 = vpop.f32.mrb[0].mxu0
    %v6686 = vadd.f32 %v6635, %v6685
    %v6687 = vpop.f32.mrb[0].mxu0
    %v6688 = vadd.f32 %v6637, %v6687
    %v6689 = vpop.f32.mrb[0].mxu0
    %v6690 = vadd.f32 %v6639, %v6689
    %v6691 = vpop.f32.mrb[0].mxu0
    %v6692 = vadd.f32 %v6641, %v6691
    %6693 = vmatprep.mubr.bf16.mxu0 0
    %6694 = vmatmul.mubr.bf16.gmra.mrb[0].mxu0 %v919
    %v6695 = vpop.f32.mrb[0].mxu0
    %v6696 = vadd.f32 %v6645, %v6695
    %v6697 = vpop.f32.mrb[0].mxu0
    %v6698 = vadd.f32 %v6647, %v6697
    %v6699 = vpop.f32.mrb[0].mxu0
    %v6700 = vpop.f32.mrb[0].mxu0
    %6701 = vdwg.mxu0
    %6702 = vmatprep.subr.bf16.mxu0 %v4575
    %6703 = vmatpush1.bf16.msra.mxu0 %v4574
    %6704 = vmatprep.subr.bf16.mxu0 %v4611
    %6705 = vmatpush1.bf16.msra.mxu0 %v4610
    %6706 = vmatprep.subr.bf16.mxu0 %v4647
    %6707 = vmatpush1.bf16.msra.mxu0 %v4646
    %6708 = vmatprep.subr.bf16.mxu0 %v4683
    %6709 = vmatpush1.bf16.msra.mxu0 %v4682
    %6710 = vmatprep.subr.bf16.mxu0 %v4719
    %6711 = vmatpush1.bf16.msra.mxu0 %v4718
    %6712 = vmatprep.subr.bf16.mxu0 %v4755
    %6713 = vmatpush1.bf16.msra.mxu0 %v4754
    %6714 = vmatprep.subr.bf16.mxu0 %v4791
    %6715 = vmatpush1.bf16.msra.mxu0 %v4790
    %6716 = vmatprep.subr.bf16.mxu0 %v4827
    %6717 = vmatpush1.bf16.msra.mxu0 %v4826
    %6718 = vmatprep.subr.bf16.mxu0 %v4863
    %6719 = vmatpush1.bf16.msra.mxu0 %v4862
    %6720 = vmatprep.subr.bf16.mxu0 %v4899
    %6721 = vmatpush1.bf16.msra.mxu0 %v4898
    %6722 = vmatprep.subr.bf16.mxu0 %v4935
    %6723 = vmatpush1.bf16.msra.mxu0 %v4934
    %6724 = vmatprep.subr.bf16.mxu0 %v4971
    %6725 = vmatpush1.bf16.msra.mxu0 %v4970
    %6726 = vmatprep.subr.bf16.mxu0 %v5007
    %6727 = vmatpush1.bf16.msra.mxu0 %v5006
    %6728 = vmatprep.subr.bf16.mxu0 %v5043
    %6729 = vmatpush1.bf16.msra.mxu0 %v5042
    %6730 = vmatprep.subr.bf16.mxu0 %v5079
    %6731 = vmatpush1.bf16.msra.mxu0 %v5078
    %6732 = vmatprep.subr.bf16.mxu0 %v5115
    %6733 = vmatpush1.bf16.msra.mxu0 %v5114
    %6734 = vmatprep.mubr.bf16.mxu0 %v915
    %6735 = vmatmul.mubr.bf16.gmra.mrb[0].mxu0 %v914
    %v6736 = vpop.f32.mrb[0].mxu0
    %v6737 = vadd.f32 %v1829, %v6736
    %v6738 = vpop.f32.mrb[0].mxu0
    %v6739 = vadd.f32 %v1833, %v6738
    %v6740 = vpop.f32.mrb[0].mxu0
    %v6741 = vadd.f32 %v1829, %v6740
    %v6742 = vpop.f32.mrb[0].mxu0
    %v6743 = vadd.f32 %v1833, %v6742
    %6744 = vmatprep.mubr.bf16.mxu0 %v918
    %6745 = vmatmul.mubr.bf16.gmra.mrb[0].mxu0 %v917
    %v6746 = vpop.f32.mrb[0].mxu0
    %v6747 = vadd.f32 %v1829, %v6746
    %v6748 = vpop.f32.mrb[0].mxu0
    %v6749 = vadd.f32 %v1833, %v6748
    %v6750 = vpop.f32.mrb[0].mxu0
    %v6751 = vpop.f32.mrb[0].mxu0
    %6752 = vdwg.mxu0
    %6753 = vmatprep.subr.bf16.mxu0 %v5151
    %6754 = vmatpush1.bf16.msra.mxu0 %v5150
    %6755 = vmatprep.subr.bf16.mxu0 %v5187
    %6756 = vmatpush1.bf16.msra.mxu0 %v5186
    %6757 = vmatprep.subr.bf16.mxu0 %v5223
    %6758 = vmatpush1.bf16.msra.mxu0 %v5222
    %6759 = vmatprep.subr.bf16.mxu0 %v5259
    %6760 = vmatpush1.bf16.msra.mxu0 %v5258
    %6761 = vmatprep.subr.bf16.mxu0 %v5295
    %6762 = vmatpush1.bf16.msra.mxu0 %v5294
    %6763 = vmatprep.subr.bf16.mxu0 %v5331
    %6764 = vmatpush1.bf16.msra.mxu0 %v5330
    %6765 = vmatprep.subr.bf16.mxu0 %v5367
    %6766 = vmatpush1.bf16.msra.mxu0 %v5366
    %6767 = vmatprep.subr.bf16.mxu0 %v5403
    %6768 = vmatpush1.bf16.msra.mxu0 %v5402
    %6769 = vmatprep.subr.bf16.mxu0 0
    %6770 = vmatpush1.bf16.msra.mxu0 0
    %6771 = vmatprep.subr.bf16.mxu0 0
    %6772 = vmatpush1.bf16.msra.mxu0 0
    %6773 = vmatprep.subr.bf16.mxu0 0
    %6774 = vmatpush1.bf16.msra.mxu0 0
    %6775 = vmatprep.subr.bf16.mxu0 0
    %6776 = vmatpush1.bf16.msra.mxu0 0
    %6777 = vmatprep.subr.bf16.mxu0 0
    %6778 = vmatpush1.bf16.msra.mxu0 0
    %6779 = vmatprep.subr.bf16.mxu0 0
    %6780 = vmatpush1.bf16.msra.mxu0 0
    %6781 = vmatprep.subr.bf16.mxu0 0
    %6782 = vmatpush1.bf16.msra.mxu0 0
    %6783 = vmatprep.subr.bf16.mxu0 0
    %6784 = vmatpush1.bf16.msra.mxu0 0
    %6785 = vmatprep.mubr.bf16.mxu0 0
    %6786 = vmatmul.mubr.bf16.gmra.mrb[0].mxu0 %v916
    %v6787 = vpop.f32.mrb[0].mxu0
    %v6788 = vadd.f32 %v6737, %v6787
    %v6789 = vpop.f32.mrb[0].mxu0
    %v6790 = vadd.f32 %v6739, %v6789
    %v6791 = vpop.f32.mrb[0].mxu0
    %v6792 = vadd.f32 %v6741, %v6791
    %v6793 = vpop.f32.mrb[0].mxu0
    %v6794 = vadd.f32 %v6743, %v6793
    %6795 = vmatprep.mubr.bf16.mxu0 0
    %6796 = vmatmul.mubr.bf16.gmra.mrb[0].mxu0 %v919
    %v6797 = vpop.f32.mrb[0].mxu0
    %v6798 = vadd.f32 %v6747, %v6797
    %v6799 = vpop.f32.mrb[0].mxu0
    %v6800 = vadd.f32 %v6749, %v6799
    %v6801 = vpop.f32.mrb[0].mxu0
    %v6802 = vpop.f32.mrb[0].mxu0
    %6803 = vdwg.mxu0
    %6804 = vmatprep.subr.bf16.mxu0 %v4577
    %6805 = vmatpush1.bf16.msra.mxu0 %v4576
    %6806 = vmatprep.subr.bf16.mxu0 %v4613
    %6807 = vmatpush1.bf16.msra.mxu0 %v4612
    %6808 = vmatprep.subr.bf16.mxu0 %v4649
    %6809 = vmatpush1.bf16.msra.mxu0 %v4648
    %6810 = vmatprep.subr.bf16.mxu0 %v4685
    %6811 = vmatpush1.bf16.msra.mxu0 %v4684
    %6812 = vmatprep.subr.bf16.mxu0 %v4721
    %6813 = vmatpush1.bf16.msra.mxu0 %v4720
    %6814 = vmatprep.subr.bf16.mxu0 %v4757
    %6815 = vmatpush1.bf16.msra.mxu0 %v4756
    %6816 = vmatprep.subr.bf16.mxu0 %v4793
    %6817 = vmatpush1.bf16.msra.mxu0 %v4792
    %6818 = vmatprep.subr.bf16.mxu0 %v4829
    %6819 = vmatpush1.bf16.msra.mxu0 %v4828
    %6820 = vmatprep.subr.bf16.mxu0 %v4865
    %6821 = vmatpush1.bf16.msra.mxu0 %v4864
    %6822 = vmatprep.subr.bf16.mxu0 %v4901
    %6823 = vmatpush1.bf16.msra.mxu0 %v4900
    %6824 = vmatprep.subr.bf16.mxu0 %v4937
    %6825 = vmatpush1.bf16.msra.mxu0 %v4936
    %6826 = vmatprep.subr.bf16.mxu0 %v4973
    %6827 = vmatpush1.bf16.msra.mxu0 %v4972
    %6828 = vmatprep.subr.bf16.mxu0 %v5009
    %6829 = vmatpush1.bf16.msra.mxu0 %v5008
    %6830 = vmatprep.subr.bf16.mxu0 %v5045
    %6831 = vmatpush1.bf16.msra.mxu0 %v5044
    %6832 = vmatprep.subr.bf16.mxu0 %v5081
    %6833 = vmatpush1.bf16.msra.mxu0 %v5080
    %6834 = vmatprep.subr.bf16.mxu0 %v5117
    %6835 = vmatpush1.bf16.msra.mxu0 %v5116
    %6836 = vmatprep.mubr.bf16.mxu0 %v915
    %6837 = vmatmul.mubr.bf16.gmra.mrb[0].mxu0 %v914
    %v6838 = vpop.f32.mrb[0].mxu0
    %v6839 = vadd.f32 %v1837, %v6838
    %v6840 = vpop.f32.mrb[0].mxu0
    %v6841 = vadd.f32 %v1841, %v6840
    %v6842 = vpop.f32.mrb[0].mxu0
    %v6843 = vadd.f32 %v1837, %v6842
    %v6844 = vpop.f32.mrb[0].mxu0
    %v6845 = vadd.f32 %v1841, %v6844
    %6846 = vmatprep.mubr.bf16.mxu0 %v918
    %6847 = vmatmul.mubr.bf16.gmra.mrb[0].mxu0 %v917
    %v6848 = vpop.f32.mrb[0].mxu0
    %v6849 = vadd.f32 %v1837, %v6848
    %v6850 = vpop.f32.mrb[0].mxu0
    %v6851 = vadd.f32 %v1841, %v6850
    %v6852 = vpop.f32.mrb[0].mxu0
    %v6853 = vpop.f32.mrb[0].mxu0
    %6854 = vdwg.mxu0
    %6855 = vmatprep.subr.bf16.mxu0 %v5153
    %6856 = vmatpush1.bf16.msra.mxu0 %v5152
    %6857 = vmatprep.subr.bf16.mxu0 %v5189
    %6858 = vmatpush1.bf16.msra.mxu0 %v5188
    %6859 = vmatprep.subr.bf16.mxu0 %v5225
    %6860 = vmatpush1.bf16.msra.mxu0 %v5224
    %6861 = vmatprep.subr.bf16.mxu0 %v5261
    %6862 = vmatpush1.bf16.msra.mxu0 %v5260
    %6863 = vmatprep.subr.bf16.mxu0 %v5297
    %6864 = vmatpush1.bf16.msra.mxu0 %v5296
    %6865 = vmatprep.subr.bf16.mxu0 %v5333
    %6866 = vmatpush1.bf16.msra.mxu0 %v5332
    %6867 = vmatprep.subr.bf16.mxu0 %v5369
    %6868 = vmatpush1.bf16.msra.mxu0 %v5368
    %6869 = vmatprep.subr.bf16.mxu0 %v5405
    %6870 = vmatpush1.bf16.msra.mxu0 %v5404
    %6871 = vmatprep.subr.bf16.mxu0 0
    %6872 = vmatpush1.bf16.msra.mxu0 0
    %6873 = vmatprep.subr.bf16.mxu0 0
    %6874 = vmatpush1.bf16.msra.mxu0 0
    %6875 = vmatprep.subr.bf16.mxu0 0
    %6876 = vmatpush1.bf16.msra.mxu0 0
    %6877 = vmatprep.subr.bf16.mxu0 0
    %6878 = vmatpush1.bf16.msra.mxu0 0
    %6879 = vmatprep.subr.bf16.mxu0 0
    %6880 = vmatpush1.bf16.msra.mxu0 0
    %6881 = vmatprep.subr.bf16.mxu0 0
    %6882 = vmatpush1.bf16.msra.mxu0 0
    %6883 = vmatprep.subr.bf16.mxu0 0
    %6884 = vmatpush1.bf16.msra.mxu0 0
    %6885 = vmatprep.subr.bf16.mxu0 0
    %6886 = vmatpush1.bf16.msra.mxu0 0
    %6887 = vmatprep.mubr.bf16.mxu0 0
    %6888 = vmatmul.mubr.bf16.gmra.mrb[0].mxu0 %v916
    %v6889 = vpop.f32.mrb[0].mxu0
    %v6890 = vadd.f32 %v6839, %v6889
    %v6891 = vpop.f32.mrb[0].mxu0
    %v6892 = vadd.f32 %v6841, %v6891
    %v6893 = vpop.f32.mrb[0].mxu0
    %v6894 = vadd.f32 %v6843, %v6893
    %v6895 = vpop.f32.mrb[0].mxu0
    %v6896 = vadd.f32 %v6845, %v6895
    %6897 = vmatprep.mubr.bf16.mxu0 0
    %6898 = vmatmul.mubr.bf16.gmra.mrb[0].mxu0 %v919
    %v6899 = vpop.f32.mrb[0].mxu0
    %v6900 = vadd.f32 %v6849, %v6899
    %v6901 = vpop.f32.mrb[0].mxu0
    %v6902 = vadd.f32 %v6851, %v6901
    %v6903 = vpop.f32.mrb[0].mxu0
    %v6904 = vpop.f32.mrb[0].mxu0
    %6905 = vdwg.mxu0
    %6906 = vmatprep.subr.bf16.mxu0 %v4579
    %6907 = vmatpush1.bf16.msra.mxu0 %v4578
    %6908 = vmatprep.subr.bf16.mxu0 %v4615
    %6909 = vmatpush1.bf16.msra.mxu0 %v4614
    %6910 = vmatprep.subr.bf16.mxu0 %v4651
    %6911 = vmatpush1.bf16.msra.mxu0 %v4650
    %6912 = vmatprep.subr.bf16.mxu0 %v4687
    %6913 = vmatpush1.bf16.msra.mxu0 %v4686
    %6914 = vmatprep.subr.bf16.mxu0 %v4723
    %6915 = vmatpush1.bf16.msra.mxu0 %v4722
    %6916 = vmatprep.subr.bf16.mxu0 %v4759
    %6917 = vmatpush1.bf16.msra.mxu0 %v4758
    %6918 = vmatprep.subr.bf16.mxu0 %v4795
    %6919 = vmatpush1.bf16.msra.mxu0 %v4794
    %6920 = vmatprep.subr.bf16.mxu0 %v4831
    %6921 = vmatpush1.bf16.msra.mxu0 %v4830
    %6922 = vmatprep.subr.bf16.mxu0 %v4867
    %6923 = vmatpush1.bf16.msra.mxu0 %v4866
    %6924 = vmatprep.subr.bf16.mxu0 %v4903
    %6925 = vmatpush1.bf16.msra.mxu0 %v4902
    %6926 = vmatprep.subr.bf16.mxu0 %v4939
    %6927 = vmatpush1.bf16.msra.mxu0 %v4938
    %6928 = vmatprep.subr.bf16.mxu0 %v4975
    %6929 = vmatpush1.bf16.msra.mxu0 %v4974
    %6930 = vmatprep.subr.bf16.mxu0 %v5011
    %6931 = vmatpush1.bf16.msra.mxu0 %v5010
    %6932 = vmatprep.subr.bf16.mxu0 %v5047
    %6933 = vmatpush1.bf16.msra.mxu0 %v5046
    %6934 = vmatprep.subr.bf16.mxu0 %v5083
    %6935 = vmatpush1.bf16.msra.mxu0 %v5082
    %6936 = vmatprep.subr.bf16.mxu0 %v5119
    %6937 = vmatpush1.bf16.msra.mxu0 %v5118
    %6938 = vmatprep.mubr.bf16.mxu0 %v915
    %6939 = vmatmul.mubr.bf16.gmra.mrb[0].mxu0 %v914
    %v6940 = vpop.f32.mrb[0].mxu0
    %v6941 = vadd.f32 %v1845, %v6940
    %v6942 = vpop.f32.mrb[0].mxu0
    %v6943 = vadd.f32 %v1849, %v6942
    %v6944 = vpop.f32.mrb[0].mxu0
    %v6945 = vadd.f32 %v1845, %v6944
    %v6946 = vpop.f32.mrb[0].mxu0
    %v6947 = vadd.f32 %v1849, %v6946
    %6948 = vmatprep.mubr.bf16.mxu0 %v918
    %6949 = vmatmul.mubr.bf16.gmra.mrb[0].mxu0 %v917
    %v6950 = vpop.f32.mrb[0].mxu0
    %v6951 = vadd.f32 %v1845, %v6950
    %v6952 = vpop.f32.mrb[0].mxu0
    %v6953 = vadd.f32 %v1849, %v6952
    %v6954 = vpop.f32.mrb[0].mxu0
    %v6955 = vpop.f32.mrb[0].mxu0
    %6956 = vdwg.mxu0
    %6957 = vmatprep.subr.bf16.mxu0 %v5155
    %6958 = vmatpush1.bf16.msra.mxu0 %v5154
    %6959 = vmatprep.subr.bf16.mxu0 %v5191
    %6960 = vmatpush1.bf16.msra.mxu0 %v5190
    %6961 = vmatprep.subr.bf16.mxu0 %v5227
    %6962 = vmatpush1.bf16.msra.mxu0 %v5226
    %6963 = vmatprep.subr.bf16.mxu0 %v5263
    %6964 = vmatpush1.bf16.msra.mxu0 %v5262
    %6965 = vmatprep.subr.bf16.mxu0 %v5299
    %6966 = vmatpush1.bf16.msra.mxu0 %v5298
    %6967 = vmatprep.subr.bf16.mxu0 %v5335
    %6968 = vmatpush1.bf16.msra.mxu0 %v5334
    %6969 = vmatprep.subr.bf16.mxu0 %v5371
    %6970 = vmatpush1.bf16.msra.mxu0 %v5370
    %6971 = vmatprep.subr.bf16.mxu0 %v5407
    %6972 = vmatpush1.bf16.msra.mxu0 %v5406
    %6973 = vmatprep.subr.bf16.mxu0 0
    %6974 = vmatpush1.bf16.msra.mxu0 0
    %6975 = vmatprep.subr.bf16.mxu0 0
    %6976 = vmatpush1.bf16.msra.mxu0 0
    %6977 = vmatprep.subr.bf16.mxu0 0
    %6978 = vmatpush1.bf16.msra.mxu0 0
    %6979 = vmatprep.subr.bf16.mxu0 0
    %6980 = vmatpush1.bf16.msra.mxu0 0
    %6981 = vmatprep.subr.bf16.mxu0 0
    %6982 = vmatpush1.bf16.msra.mxu0 0
    %6983 = vmatprep.subr.bf16.mxu0 0
    %6984 = vmatpush1.bf16.msra.mxu0 0
    %6985 = vmatprep.subr.bf16.mxu0 0
    %6986 = vmatpush1.bf16.msra.mxu0 0
    %6987 = vmatprep.subr.bf16.mxu0 0
    %6988 = vmatpush1.bf16.msra.mxu0 0
    %6989 = vmatprep.mubr.bf16.mxu0 0
    %6990 = vmatmul.mubr.bf16.gmra.mrb[0].mxu0 %v916
    %v6991 = vpop.f32.mrb[0].mxu0
    %v6992 = vadd.f32 %v6941, %v6991
    %v6993 = vpop.f32.mrb[0].mxu0
    %v6994 = vadd.f32 %v6943, %v6993
    %v6995 = vpop.f32.mrb[0].mxu0
    %v6996 = vadd.f32 %v6945, %v6995
    %v6997 = vpop.f32.mrb[0].mxu0
    %v6998 = vadd.f32 %v6947, %v6997
    %6999 = vmatprep.mubr.bf16.mxu0 0
    %7000 = vmatmul.mubr.bf16.gmra.mrb[0].mxu0 %v919
    %v7001 = vpop.f32.mrb[0].mxu0
    %v7002 = vadd.f32 %v6951, %v7001
    %v7003 = vpop.f32.mrb[0].mxu0
    %v7004 = vadd.f32 %v6953, %v7003
    %v7005 = vpop.f32.mrb[0].mxu0
    %v7006 = vpop.f32.mrb[0].mxu0
    %7007 = vdwg.mxu0
    %7008 = vmatprep.subr.bf16.mxu0 %v4581
    %7009 = vmatpush1.bf16.msra.mxu0 %v4580
    %7010 = vmatprep.subr.bf16.mxu0 %v4617
    %7011 = vmatpush1.bf16.msra.mxu0 %v4616
    %7012 = vmatprep.subr.bf16.mxu0 %v4653
    %7013 = vmatpush1.bf16.msra.mxu0 %v4652
    %7014 = vmatprep.subr.bf16.mxu0 %v4689
    %7015 = vmatpush1.bf16.msra.mxu0 %v4688
    %7016 = vmatprep.subr.bf16.mxu0 %v4725
    %7017 = vmatpush1.bf16.msra.mxu0 %v4724
    %7018 = vmatprep.subr.bf16.mxu0 %v4761
    %7019 = vmatpush1.bf16.msra.mxu0 %v4760
    %7020 = vmatprep.subr.bf16.mxu0 %v4797
    %7021 = vmatpush1.bf16.msra.mxu0 %v4796
    %7022 = vmatprep.subr.bf16.mxu0 %v4833
    %7023 = vmatpush1.bf16.msra.mxu0 %v4832
    %7024 = vmatprep.subr.bf16.mxu0 %v4869
    %7025 = vmatpush1.bf16.msra.mxu0 %v4868
    %7026 = vmatprep.subr.bf16.mxu0 %v4905
    %7027 = vmatpush1.bf16.msra.mxu0 %v4904
    %7028 = vmatprep.subr.bf16.mxu0 %v4941
    %7029 = vmatpush1.bf16.msra.mxu0 %v4940
    %7030 = vmatprep.subr.bf16.mxu0 %v4977
    %7031 = vmatpush1.bf16.msra.mxu0 %v4976
    %7032 = vmatprep.subr.bf16.mxu0 %v5013
    %7033 = vmatpush1.bf16.msra.mxu0 %v5012
    %7034 = vmatprep.subr.bf16.mxu0 %v5049
    %7035 = vmatpush1.bf16.msra.mxu0 %v5048
    %7036 = vmatprep.subr.bf16.mxu0 %v5085
    %7037 = vmatpush1.bf16.msra.mxu0 %v5084
    %7038 = vmatprep.subr.bf16.mxu0 %v5121
    %7039 = vmatpush1.bf16.msra.mxu0 %v5120
    %7040 = vmatprep.mubr.bf16.mxu0 %v915
    %7041 = vmatmul.mubr.bf16.gmra.mrb[0].mxu0 %v914
    %v7042 = vpop.f32.mrb[0].mxu0
    %v7043 = vadd.f32 %v1853, %v7042
    %v7044 = vpop.f32.mrb[0].mxu0
    %v7045 = vadd.f32 %v1857, %v7044
    %v7046 = vpop.f32.mrb[0].mxu0
    %v7047 = vadd.f32 %v1853, %v7046
    %v7048 = vpop.f32.mrb[0].mxu0
    %v7049 = vadd.f32 %v1857, %v7048
    %7050 = vmatprep.mubr.bf16.mxu0 %v918
    %7051 = vmatmul.mubr.bf16.gmra.mrb[0].mxu0 %v917
    %v7052 = vpop.f32.mrb[0].mxu0
    %v7053 = vadd.f32 %v1853, %v7052
    %v7054 = vpop.f32.mrb[0].mxu0
    %v7055 = vadd.f32 %v1857, %v7054
    %v7056 = vpop.f32.mrb[0].mxu0
    %v7057 = vpop.f32.mrb[0].mxu0
    %7058 = vdwg.mxu0
    %7059 = vmatprep.subr.bf16.mxu0 %v5157
    %7060 = vmatpush1.bf16.msra.mxu0 %v5156
    %7061 = vmatprep.subr.bf16.mxu0 %v5193
    %7062 = vmatpush1.bf16.msra.mxu0 %v5192
    %7063 = vmatprep.subr.bf16.mxu0 %v5229
    %7064 = vmatpush1.bf16.msra.mxu0 %v5228
    %7065 = vmatprep.subr.bf16.mxu0 %v5265
    %7066 = vmatpush1.bf16.msra.mxu0 %v5264
    %7067 = vmatprep.subr.bf16.mxu0 %v5301
    %7068 = vmatpush1.bf16.msra.mxu0 %v5300
    %7069 = vmatprep.subr.bf16.mxu0 %v5337
    %7070 = vmatpush1.bf16.msra.mxu0 %v5336
    %7071 = vmatprep.subr.bf16.mxu0 %v5373
    %7072 = vmatpush1.bf16.msra.mxu0 %v5372
    %7073 = vmatprep.subr.bf16.mxu0 %v5409
    %7074 = vmatpush1.bf16.msra.mxu0 %v5408
    %7075 = vmatprep.subr.bf16.mxu0 0
    %7076 = vmatpush1.bf16.msra.mxu0 0
    %7077 = vmatprep.subr.bf16.mxu0 0
    %7078 = vmatpush1.bf16.msra.mxu0 0
    %7079 = vmatprep.subr.bf16.mxu0 0
    %7080 = vmatpush1.bf16.msra.mxu0 0
    %7081 = vmatprep.subr.bf16.mxu0 0
    %7082 = vmatpush1.bf16.msra.mxu0 0
    %7083 = vmatprep.subr.bf16.mxu0 0
    %7084 = vmatpush1.bf16.msra.mxu0 0
    %7085 = vmatprep.subr.bf16.mxu0 0
    %7086 = vmatpush1.bf16.msra.mxu0 0
    %7087 = vmatprep.subr.bf16.mxu0 0
    %7088 = vmatpush1.bf16.msra.mxu0 0
    %7089 = vmatprep.subr.bf16.mxu0 0
    %7090 = vmatpush1.bf16.msra.mxu0 0
    %7091 = vmatprep.mubr.bf16.mxu0 0
    %7092 = vmatmul.mubr.bf16.gmra.mrb[0].mxu0 %v916
    %v7093 = vpop.f32.mrb[0].mxu0
    %v7094 = vadd.f32 %v7043, %v7093
    %v7095 = vpop.f32.mrb[0].mxu0
    %v7096 = vadd.f32 %v7045, %v7095
    %v7097 = vpop.f32.mrb[0].mxu0
    %v7098 = vadd.f32 %v7047, %v7097
    %v7099 = vpop.f32.mrb[0].mxu0
    %v7100 = vadd.f32 %v7049, %v7099
    %7101 = vmatprep.mubr.bf16.mxu0 0
    %7102 = vmatmul.mubr.bf16.gmra.mrb[0].mxu0 %v919
    %v7103 = vpop.f32.mrb[0].mxu0
    %v7104 = vadd.f32 %v7053, %v7103
    %v7105 = vpop.f32.mrb[0].mxu0
    %v7106 = vadd.f32 %v7055, %v7105
    %v7107 = vpop.f32.mrb[0].mxu0
    %v7108 = vpop.f32.mrb[0].mxu0
    %7109 = vdwg.mxu0
    %7110 = vmatprep.subr.bf16.mxu0 %v4583
    %7111 = vmatpush1.bf16.msra.mxu0 %v4582
    %7112 = vmatprep.subr.bf16.mxu0 %v4619
    %7113 = vmatpush1.bf16.msra.mxu0 %v4618
    %7114 = vmatprep.subr.bf16.mxu0 %v4655
    %7115 = vmatpush1.bf16.msra.mxu0 %v4654
    %7116 = vmatprep.subr.bf16.mxu0 %v4691
    %7117 = vmatpush1.bf16.msra.mxu0 %v4690
    %7118 = vmatprep.subr.bf16.mxu0 %v4727
    %7119 = vmatpush1.bf16.msra.mxu0 %v4726
    %7120 = vmatprep.subr.bf16.mxu0 %v4763
    %7121 = vmatpush1.bf16.msra.mxu0 %v4762
    %7122 = vmatprep.subr.bf16.mxu0 %v4799
    %7123 = vmatpush1.bf16.msra.mxu0 %v4798
    %7124 = vmatprep.subr.bf16.mxu0 %v4835
    %7125 = vmatpush1.bf16.msra.mxu0 %v4834
    %7126 = vmatprep.subr.bf16.mxu0 %v4871
    %7127 = vmatpush1.bf16.msra.mxu0 %v4870
    %7128 = vmatprep.subr.bf16.mxu0 %v4907
    %7129 = vmatpush1.bf16.msra.mxu0 %v4906
    %7130 = vmatprep.subr.bf16.mxu0 %v4943
    %7131 = vmatpush1.bf16.msra.mxu0 %v4942
    %7132 = vmatprep.subr.bf16.mxu0 %v4979
    %7133 = vmatpush1.bf16.msra.mxu0 %v4978
    %7134 = vmatprep.subr.bf16.mxu0 %v5015
    %7135 = vmatpush1.bf16.msra.mxu0 %v5014
    %7136 = vmatprep.subr.bf16.mxu0 %v5051
    %7137 = vmatpush1.bf16.msra.mxu0 %v5050
    %7138 = vmatprep.subr.bf16.mxu0 %v5087
    %7139 = vmatpush1.bf16.msra.mxu0 %v5086
    %7140 = vmatprep.subr.bf16.mxu0 %v5123
    %7141 = vmatpush1.bf16.msra.mxu0 %v5122
    %7142 = vmatprep.mubr.bf16.mxu0 %v915
    %7143 = vmatmul.mubr.bf16.gmra.mrb[0].mxu0 %v914
    %v7144 = vpop.f32.mrb[0].mxu0
    %v7145 = vadd.f32 %v1861, %v7144
    %v7146 = vpop.f32.mrb[0].mxu0
    %v7147 = vadd.f32 %v1865, %v7146
    %v7148 = vpop.f32.mrb[0].mxu0
    %v7149 = vadd.f32 %v1861, %v7148
    %v7150 = vpop.f32.mrb[0].mxu0
    %v7151 = vadd.f32 %v1865, %v7150
    %7152 = vmatprep.mubr.bf16.mxu0 %v918
    %7153 = vmatmul.mubr.bf16.gmra.mrb[0].mxu0 %v917
    %v7154 = vpop.f32.mrb[0].mxu0
    %v7155 = vadd.f32 %v1861, %v7154
    %v7156 = vpop.f32.mrb[0].mxu0
    %v7157 = vadd.f32 %v1865, %v7156
    %v7158 = vpop.f32.mrb[0].mxu0
    %v7159 = vpop.f32.mrb[0].mxu0
    %7160 = vdwg.mxu0
    %7161 = vmatprep.subr.bf16.mxu0 %v5159
    %7162 = vmatpush1.bf16.msra.mxu0 %v5158
    %7163 = vmatprep.subr.bf16.mxu0 %v5195
    %7164 = vmatpush1.bf16.msra.mxu0 %v5194
    %7165 = vmatprep.subr.bf16.mxu0 %v5231
    %7166 = vmatpush1.bf16.msra.mxu0 %v5230
    %7167 = vmatprep.subr.bf16.mxu0 %v5267
    %7168 = vmatpush1.bf16.msra.mxu0 %v5266
    %7169 = vmatprep.subr.bf16.mxu0 %v5303
    %7170 = vmatpush1.bf16.msra.mxu0 %v5302
    %7171 = vmatprep.subr.bf16.mxu0 %v5339
    %7172 = vmatpush1.bf16.msra.mxu0 %v5338
    %7173 = vmatprep.subr.bf16.mxu0 %v5375
    %7174 = vmatpush1.bf16.msra.mxu0 %v5374
    %7175 = vmatprep.subr.bf16.mxu0 %v5411
    %7176 = vmatpush1.bf16.msra.mxu0 %v5410
    %7177 = vmatprep.subr.bf16.mxu0 0
    %7178 = vmatpush1.bf16.msra.mxu0 0
    %7179 = vmatprep.subr.bf16.mxu0 0
    %7180 = vmatpush1.bf16.msra.mxu0 0
    %7181 = vmatprep.subr.bf16.mxu0 0
    %7182 = vmatpush1.bf16.msra.mxu0 0
    %7183 = vmatprep.subr.bf16.mxu0 0
    %7184 = vmatpush1.bf16.msra.mxu0 0
    %7185 = vmatprep.subr.bf16.mxu0 0
    %7186 = vmatpush1.bf16.msra.mxu0 0
    %7187 = vmatprep.subr.bf16.mxu0 0
    %7188 = vmatpush1.bf16.msra.mxu0 0
    %7189 = vmatprep.subr.bf16.mxu0 0
    %7190 = vmatpush1.bf16.msra.mxu0 0
    %7191 = vmatprep.subr.bf16.mxu0 0
    %7192 = vmatpush1.bf16.msra.mxu0 0
    %7193 = vmatprep.mubr.bf16.mxu0 0
    %7194 = vmatmul.mubr.bf16.gmra.mrb[0].mxu0 %v916
    %v7195 = vpop.f32.mrb[0].mxu0
    %v7196 = vadd.f32 %v7145, %v7195
    %v7197 = vpop.f32.mrb[0].mxu0
    %v7198 = vadd.f32 %v7147, %v7197
    %v7199 = vpop.f32.mrb[0].mxu0
    %v7200 = vadd.f32 %v7149, %v7199
    %v7201 = vpop.f32.mrb[0].mxu0
    %v7202 = vadd.f32 %v7151, %v7201
    %7203 = vmatprep.mubr.bf16.mxu0 0
    %7204 = vmatmul.mubr.bf16.gmra.mrb[0].mxu0 %v919
    %v7205 = vpop.f32.mrb[0].mxu0
    %v7206 = vadd.f32 %v7155, %v7205
    %v7207 = vpop.f32.mrb[0].mxu0
    %v7208 = vadd.f32 %v7157, %v7207
    %v7209 = vpop.f32.mrb[0].mxu0
    %v7210 = vpop.f32.mrb[0].mxu0
    %7211 = vdwg.mxu0
    %7212 = vmatprep.subr.bf16.mxu0 %v4585
    %7213 = vmatpush1.bf16.msra.mxu0 %v4584
    %7214 = vmatprep.subr.bf16.mxu0 %v4621
    %7215 = vmatpush1.bf16.msra.mxu0 %v4620
    %7216 = vmatprep.subr.bf16.mxu0 %v4657
    %7217 = vmatpush1.bf16.msra.mxu0 %v4656
    %7218 = vmatprep.subr.bf16.mxu0 %v4693
    %7219 = vmatpush1.bf16.msra.mxu0 %v4692
    %7220 = vmatprep.subr.bf16.mxu0 %v4729
    %7221 = vmatpush1.bf16.msra.mxu0 %v4728
    %7222 = vmatprep.subr.bf16.mxu0 %v4765
    %7223 = vmatpush1.bf16.msra.mxu0 %v4764
    %7224 = vmatprep.subr.bf16.mxu0 %v4801
    %7225 = vmatpush1.bf16.msra.mxu0 %v4800
    %7226 = vmatprep.subr.bf16.mxu0 %v4837
    %7227 = vmatpush1.bf16.msra.mxu0 %v4836
    %7228 = vmatprep.subr.bf16.mxu0 %v4873
    %7229 = vmatpush1.bf16.msra.mxu0 %v4872
    %7230 = vmatprep.subr.bf16.mxu0 %v4909
    %7231 = vmatpush1.bf16.msra.mxu0 %v4908
    %7232 = vmatprep.subr.bf16.mxu0 %v4945
    %7233 = vmatpush1.bf16.msra.mxu0 %v4944
    %7234 = vmatprep.subr.bf16.mxu0 %v4981
    %7235 = vmatpush1.bf16.msra.mxu0 %v4980
    %7236 = vmatprep.subr.bf16.mxu0 %v5017
    %7237 = vmatpush1.bf16.msra.mxu0 %v5016
    %7238 = vmatprep.subr.bf16.mxu0 %v5053
    %7239 = vmatpush1.bf16.msra.mxu0 %v5052
    %7240 = vmatprep.subr.bf16.mxu0 %v5089
    %7241 = vmatpush1.bf16.msra.mxu0 %v5088
    %7242 = vmatprep.subr.bf16.mxu0 %v5125
    %7243 = vmatpush1.bf16.msra.mxu0 %v5124
    %7244 = vmatprep.mubr.bf16.mxu0 %v915
    %7245 = vmatmul.mubr.bf16.gmra.mrb[0].mxu0 %v914
    %v7246 = vpop.f32.mrb[0].mxu0
    %v7247 = vadd.f32 %v1869, %v7246
    %v7248 = vpop.f32.mrb[0].mxu0
    %v7249 = vadd.f32 %v1873, %v7248
    %v7250 = vpop.f32.mrb[0].mxu0
    %v7251 = vadd.f32 %v1869, %v7250
    %v7252 = vpop.f32.mrb[0].mxu0
    %v7253 = vadd.f32 %v1873, %v7252
    %7254 = vmatprep.mubr.bf16.mxu0 %v918
    %7255 = vmatmul.mubr.bf16.gmra.mrb[0].mxu0 %v917
    %v7256 = vpop.f32.mrb[0].mxu0
    %v7257 = vadd.f32 %v1869, %v7256
    %v7258 = vpop.f32.mrb[0].mxu0
    %v7259 = vadd.f32 %v1873, %v7258
    %v7260 = vpop.f32.mrb[0].mxu0
    %v7261 = vpop.f32.mrb[0].mxu0
    %7262 = vdwg.mxu0
    %7263 = vmatprep.subr.bf16.mxu0 %v5161
    %7264 = vmatpush1.bf16.msra.mxu0 %v5160
    %7265 = vmatprep.subr.bf16.mxu0 %v5197
    %7266 = vmatpush1.bf16.msra.mxu0 %v5196
    %7267 = vmatprep.subr.bf16.mxu0 %v5233
    %7268 = vmatpush1.bf16.msra.mxu0 %v5232
    %7269 = vmatprep.subr.bf16.mxu0 %v5269
    %7270 = vmatpush1.bf16.msra.mxu0 %v5268
    %7271 = vmatprep.subr.bf16.mxu0 %v5305
    %7272 = vmatpush1.bf16.msra.mxu0 %v5304
    %7273 = vmatprep.subr.bf16.mxu0 %v5341
    %7274 = vmatpush1.bf16.msra.mxu0 %v5340
    %7275 = vmatprep.subr.bf16.mxu0 %v5377
    %7276 = vmatpush1.bf16.msra.mxu0 %v5376
    %7277 = vmatprep.subr.bf16.mxu0 %v5413
    %7278 = vmatpush1.bf16.msra.mxu0 %v5412
    %7279 = vmatprep.subr.bf16.mxu0 0
    %7280 = vmatpush1.bf16.msra.mxu0 0
    %7281 = vmatprep.subr.bf16.mxu0 0
    %7282 = vmatpush1.bf16.msra.mxu0 0
    %7283 = vmatprep.subr.bf16.mxu0 0
    %7284 = vmatpush1.bf16.msra.mxu0 0
    %7285 = vmatprep.subr.bf16.mxu0 0
    %7286 = vmatpush1.bf16.msra.mxu0 0
    %7287 = vmatprep.subr.bf16.mxu0 0
    %7288 = vmatpush1.bf16.msra.mxu0 0
    %7289 = vmatprep.subr.bf16.mxu0 0
    %7290 = vmatpush1.bf16.msra.mxu0 0
    %7291 = vmatprep.subr.bf16.mxu0 0
    %7292 = vmatpush1.bf16.msra.mxu0 0
    %7293 = vmatprep.subr.bf16.mxu0 0
    %7294 = vmatpush1.bf16.msra.mxu0 0
    %7295 = vmatprep.mubr.bf16.mxu0 0
    %7296 = vmatmul.mubr.bf16.gmra.mrb[0].mxu0 %v916
    %v7297 = vpop.f32.mrb[0].mxu0
    %v7298 = vadd.f32 %v7247, %v7297
    %v7299 = vpop.f32.mrb[0].mxu0
    %v7300 = vadd.f32 %v7249, %v7299
    %v7301 = vpop.f32.mrb[0].mxu0
    %v7302 = vadd.f32 %v7251, %v7301
    %v7303 = vpop.f32.mrb[0].mxu0
    %v7304 = vadd.f32 %v7253, %v7303
    %7305 = vmatprep.mubr.bf16.mxu0 0
    %7306 = vmatmul.mubr.bf16.gmra.mrb[0].mxu0 %v919
    %v7307 = vpop.f32.mrb[0].mxu0
    %v7308 = vadd.f32 %v7257, %v7307
    %v7309 = vpop.f32.mrb[0].mxu0
    %v7310 = vadd.f32 %v7259, %v7309
    %v7311 = vpop.f32.mrb[0].mxu0
    %v7312 = vpop.f32.mrb[0].mxu0
    %7313 = vdwg.mxu0
    %7314 = vmatprep.subr.bf16.mxu0 %v4587
    %7315 = vmatpush1.bf16.msra.mxu0 %v4586
    %7316 = vmatprep.subr.bf16.mxu0 %v4623
    %7317 = vmatpush1.bf16.msra.mxu0 %v4622
    %7318 = vmatprep.subr.bf16.mxu0 %v4659
    %7319 = vmatpush1.bf16.msra.mxu0 %v4658
    %7320 = vmatprep.subr.bf16.mxu0 %v4695
    %7321 = vmatpush1.bf16.msra.mxu0 %v4694
    %7322 = vmatprep.subr.bf16.mxu0 %v4731
    %7323 = vmatpush1.bf16.msra.mxu0 %v4730
    %7324 = vmatprep.subr.bf16.mxu0 %v4767
    %7325 = vmatpush1.bf16.msra.mxu0 %v4766
    %7326 = vmatprep.subr.bf16.mxu0 %v4803
    %7327 = vmatpush1.bf16.msra.mxu0 %v4802
    %7328 = vmatprep.subr.bf16.mxu0 %v4839
    %7329 = vmatpush1.bf16.msra.mxu0 %v4838
    %7330 = vmatprep.subr.bf16.mxu0 %v4875
    %7331 = vmatpush1.bf16.msra.mxu0 %v4874
    %7332 = vmatprep.subr.bf16.mxu0 %v4911
    %7333 = vmatpush1.bf16.msra.mxu0 %v4910
    %7334 = vmatprep.subr.bf16.mxu0 %v4947
    %7335 = vmatpush1.bf16.msra.mxu0 %v4946
    %7336 = vmatprep.subr.bf16.mxu0 %v4983
    %7337 = vmatpush1.bf16.msra.mxu0 %v4982
    %7338 = vmatprep.subr.bf16.mxu0 %v5019
    %7339 = vmatpush1.bf16.msra.mxu0 %v5018
    %7340 = vmatprep.subr.bf16.mxu0 %v5055
    %7341 = vmatpush1.bf16.msra.mxu0 %v5054
    %7342 = vmatprep.subr.bf16.mxu0 %v5091
    %7343 = vmatpush1.bf16.msra.mxu0 %v5090
    %7344 = vmatprep.subr.bf16.mxu0 %v5127
    %7345 = vmatpush1.bf16.msra.mxu0 %v5126
    %7346 = vmatprep.mubr.bf16.mxu0 %v915
    %7347 = vmatmul.mubr.bf16.gmra.mrb[0].mxu0 %v914
    %v7348 = vpop.f32.mrb[0].mxu0
    %v7349 = vadd.f32 %v1877, %v7348
    %v7350 = vpop.f32.mrb[0].mxu0
    %v7351 = vadd.f32 %v1881, %v7350
    %v7352 = vpop.f32.mrb[0].mxu0
    %v7353 = vadd.f32 %v1877, %v7352
    %v7354 = vpop.f32.mrb[0].mxu0
    %v7355 = vadd.f32 %v1881, %v7354
    %7356 = vmatprep.mubr.bf16.mxu0 %v918
    %7357 = vmatmul.mubr.bf16.gmra.mrb[0].mxu0 %v917
    %v7358 = vpop.f32.mrb[0].mxu0
    %v7359 = vadd.f32 %v1877, %v7358
    %v7360 = vpop.f32.mrb[0].mxu0
    %v7361 = vadd.f32 %v1881, %v7360
    %v7362 = vpop.f32.mrb[0].mxu0
    %v7363 = vpop.f32.mrb[0].mxu0
    %7364 = vdwg.mxu0
    %7365 = vmatprep.subr.bf16.mxu0 %v5163
    %7366 = vmatpush1.bf16.msra.mxu0 %v5162
    %7367 = vmatprep.subr.bf16.mxu0 %v5199
    %7368 = vmatpush1.bf16.msra.mxu0 %v5198
    %7369 = vmatprep.subr.bf16.mxu0 %v5235
    %7370 = vmatpush1.bf16.msra.mxu0 %v5234
    %7371 = vmatprep.subr.bf16.mxu0 %v5271
    %7372 = vmatpush1.bf16.msra.mxu0 %v5270
    %7373 = vmatprep.subr.bf16.mxu0 %v5307
    %7374 = vmatpush1.bf16.msra.mxu0 %v5306
    %7375 = vmatprep.subr.bf16.mxu0 %v5343
    %7376 = vmatpush1.bf16.msra.mxu0 %v5342
    %7377 = vmatprep.subr.bf16.mxu0 %v5379
    %7378 = vmatpush1.bf16.msra.mxu0 %v5378
    %7379 = vmatprep.subr.bf16.mxu0 %v5415
    %7380 = vmatpush1.bf16.msra.mxu0 %v5414
    %7381 = vmatprep.subr.bf16.mxu0 0
    %7382 = vmatpush1.bf16.msra.mxu0 0
    %7383 = vmatprep.subr.bf16.mxu0 0
    %7384 = vmatpush1.bf16.msra.mxu0 0
    %7385 = vmatprep.subr.bf16.mxu0 0
    %7386 = vmatpush1.bf16.msra.mxu0 0
    %7387 = vmatprep.subr.bf16.mxu0 0
    %7388 = vmatpush1.bf16.msra.mxu0 0
    %7389 = vmatprep.subr.bf16.mxu0 0
    %7390 = vmatpush1.bf16.msra.mxu0 0
    %7391 = vmatprep.subr.bf16.mxu0 0
    %7392 = vmatpush1.bf16.msra.mxu0 0
    %7393 = vmatprep.subr.bf16.mxu0 0
    %7394 = vmatpush1.bf16.msra.mxu0 0
    %7395 = vmatprep.subr.bf16.mxu0 0
    %7396 = vmatpush1.bf16.msra.mxu0 0
    %7397 = vmatprep.mubr.bf16.mxu0 0
    %7398 = vmatmul.mubr.bf16.gmra.mrb[0].mxu0 %v916
    %v7399 = vpop.f32.mrb[0].mxu0
    %v7400 = vadd.f32 %v7349, %v7399
    %v7401 = vpop.f32.mrb[0].mxu0
    %v7402 = vadd.f32 %v7351, %v7401
    %v7403 = vpop.f32.mrb[0].mxu0
    %v7404 = vadd.f32 %v7353, %v7403
    %v7405 = vpop.f32.mrb[0].mxu0
    %v7406 = vadd.f32 %v7355, %v7405
    %7407 = vmatprep.mubr.bf16.mxu0 0
    %7408 = vmatmul.mubr.bf16.gmra.mrb[0].mxu0 %v919
    %v7409 = vpop.f32.mrb[0].mxu0
    %v7410 = vadd.f32 %v7359, %v7409
    %v7411 = vpop.f32.mrb[0].mxu0
    %v7412 = vadd.f32 %v7361, %v7411
    %v7413 = vpop.f32.mrb[0].mxu0
    %v7414 = vpop.f32.mrb[0].mxu0
    %7415 = vdwg.mxu0
    %7416 = vmatprep.subr.bf16.mxu0 %v4589
    %7417 = vmatpush1.bf16.msra.mxu0 %v4588
    %7418 = vmatprep.subr.bf16.mxu0 %v4625
    %7419 = vmatpush1.bf16.msra.mxu0 %v4624
    %7420 = vmatprep.subr.bf16.mxu0 %v4661
    %7421 = vmatpush1.bf16.msra.mxu0 %v4660
    %7422 = vmatprep.subr.bf16.mxu0 %v4697
    %7423 = vmatpush1.bf16.msra.mxu0 %v4696
    %7424 = vmatprep.subr.bf16.mxu0 %v4733
    %7425 = vmatpush1.bf16.msra.mxu0 %v4732
    %7426 = vmatprep.subr.bf16.mxu0 %v4769
    %7427 = vmatpush1.bf16.msra.mxu0 %v4768
    %7428 = vmatprep.subr.bf16.mxu0 %v4805
    %7429 = vmatpush1.bf16.msra.mxu0 %v4804
    %7430 = vmatprep.subr.bf16.mxu0 %v4841
    %7431 = vmatpush1.bf16.msra.mxu0 %v4840
    %7432 = vmatprep.subr.bf16.mxu0 %v4877
    %7433 = vmatpush1.bf16.msra.mxu0 %v4876
    %7434 = vmatprep.subr.bf16.mxu0 %v4913
    %7435 = vmatpush1.bf16.msra.mxu0 %v4912
    %7436 = vmatprep.subr.bf16.mxu0 %v4949
    %7437 = vmatpush1.bf16.msra.mxu0 %v4948
    %7438 = vmatprep.subr.bf16.mxu0 %v4985
    %7439 = vmatpush1.bf16.msra.mxu0 %v4984
    %7440 = vmatprep.subr.bf16.mxu0 %v5021
    %7441 = vmatpush1.bf16.msra.mxu0 %v5020
    %7442 = vmatprep.subr.bf16.mxu0 %v5057
    %7443 = vmatpush1.bf16.msra.mxu0 %v5056
    %7444 = vmatprep.subr.bf16.mxu0 %v5093
    %7445 = vmatpush1.bf16.msra.mxu0 %v5092
    %7446 = vmatprep.subr.bf16.mxu0 %v5129
    %7447 = vmatpush1.bf16.msra.mxu0 %v5128
    %7448 = vmatprep.mubr.bf16.mxu0 %v915
    %7449 = vmatmul.mubr.bf16.gmra.mrb[0].mxu0 %v914
    %v7450 = vpop.f32.mrb[0].mxu0
    %v7451 = vadd.f32 %v1885, %v7450
    %v7452 = vpop.f32.mrb[0].mxu0
    %v7453 = vadd.f32 %v1889, %v7452
    %v7454 = vpop.f32.mrb[0].mxu0
    %v7455 = vadd.f32 %v1885, %v7454
    %v7456 = vpop.f32.mrb[0].mxu0
    %v7457 = vadd.f32 %v1889, %v7456
    %7458 = vmatprep.mubr.bf16.mxu0 %v918
    %7459 = vmatmul.mubr.bf16.gmra.mrb[0].mxu0 %v917
    %v7460 = vpop.f32.mrb[0].mxu0
    %v7461 = vadd.f32 %v1885, %v7460
    %v7462 = vpop.f32.mrb[0].mxu0
    %v7463 = vadd.f32 %v1889, %v7462
    %v7464 = vpop.f32.mrb[0].mxu0
    %v7465 = vpop.f32.mrb[0].mxu0
    %7466 = vdwg.mxu0
    %7467 = vmatprep.subr.bf16.mxu0 %v5165
    %7468 = vmatpush1.bf16.msra.mxu0 %v5164
    %7469 = vmatprep.subr.bf16.mxu0 %v5201
    %7470 = vmatpush1.bf16.msra.mxu0 %v5200
    %7471 = vmatprep.subr.bf16.mxu0 %v5237
    %7472 = vmatpush1.bf16.msra.mxu0 %v5236
    %7473 = vmatprep.subr.bf16.mxu0 %v5273
    %7474 = vmatpush1.bf16.msra.mxu0 %v5272
    %7475 = vmatprep.subr.bf16.mxu0 %v5309
    %7476 = vmatpush1.bf16.msra.mxu0 %v5308
    %7477 = vmatprep.subr.bf16.mxu0 %v5345
    %7478 = vmatpush1.bf16.msra.mxu0 %v5344
    %7479 = vmatprep.subr.bf16.mxu0 %v5381
    %7480 = vmatpush1.bf16.msra.mxu0 %v5380
    %7481 = vmatprep.subr.bf16.mxu0 %v5417
    %7482 = vmatpush1.bf16.msra.mxu0 %v5416
    %7483 = vmatprep.subr.bf16.mxu0 0
    %7484 = vmatpush1.bf16.msra.mxu0 0
    %7485 = vmatprep.subr.bf16.mxu0 0
    %7486 = vmatpush1.bf16.msra.mxu0 0
    %7487 = vmatprep.subr.bf16.mxu0 0
    %7488 = vmatpush1.bf16.msra.mxu0 0
    %7489 = vmatprep.subr.bf16.mxu0 0
    %7490 = vmatpush1.bf16.msra.mxu0 0
    %7491 = vmatprep.subr.bf16.mxu0 0
    %7492 = vmatpush1.bf16.msra.mxu0 0
    %7493 = vmatprep.subr.bf16.mxu0 0
    %7494 = vmatpush1.bf16.msra.mxu0 0
    %7495 = vmatprep.subr.bf16.mxu0 0
    %7496 = vmatpush1.bf16.msra.mxu0 0
    %7497 = vmatprep.subr.bf16.mxu0 0
    %7498 = vmatpush1.bf16.msra.mxu0 0
    %7499 = vmatprep.mubr.bf16.mxu0 0
    %7500 = vmatmul.mubr.bf16.gmra.mrb[0].mxu0 %v916
    %v7501 = vpop.f32.mrb[0].mxu0
    %v7502 = vadd.f32 %v7451, %v7501
    %v7503 = vpop.f32.mrb[0].mxu0
    %v7504 = vadd.f32 %v7453, %v7503
    %v7505 = vpop.f32.mrb[0].mxu0
    %v7506 = vadd.f32 %v7455, %v7505
    %v7507 = vpop.f32.mrb[0].mxu0
    %v7508 = vadd.f32 %v7457, %v7507
    %7509 = vmatprep.mubr.bf16.mxu0 0
    %7510 = vmatmul.mubr.bf16.gmra.mrb[0].mxu0 %v919
    %v7511 = vpop.f32.mrb[0].mxu0
    %v7512 = vadd.f32 %v7461, %v7511
    %v7513 = vpop.f32.mrb[0].mxu0
    %v7514 = vadd.f32 %v7463, %v7513
    %v7515 = vpop.f32.mrb[0].mxu0
    %v7516 = vpop.f32.mrb[0].mxu0
    %7517 = vdwg.mxu0
    %7518 = vmatprep.subr.bf16.mxu0 %v4591
    %7519 = vmatpush1.bf16.msra.mxu0 %v4590
    %7520 = vmatprep.subr.bf16.mxu0 %v4627
    %7521 = vmatpush1.bf16.msra.mxu0 %v4626
    %7522 = vmatprep.subr.bf16.mxu0 %v4663
    %7523 = vmatpush1.bf16.msra.mxu0 %v4662
    %7524 = vmatprep.subr.bf16.mxu0 %v4699
    %7525 = vmatpush1.bf16.msra.mxu0 %v4698
    %7526 = vmatprep.subr.bf16.mxu0 %v4735
    %7527 = vmatpush1.bf16.msra.mxu0 %v4734
    %7528 = vmatprep.subr.bf16.mxu0 %v4771
    %7529 = vmatpush1.bf16.msra.mxu0 %v4770
    %7530 = vmatprep.subr.bf16.mxu0 %v4807
    %7531 = vmatpush1.bf16.msra.mxu0 %v4806
    %7532 = vmatprep.subr.bf16.mxu0 %v4843
    %7533 = vmatpush1.bf16.msra.mxu0 %v4842
    %7534 = vmatprep.subr.bf16.mxu0 %v4879
    %7535 = vmatpush1.bf16.msra.mxu0 %v4878
    %7536 = vmatprep.subr.bf16.mxu0 %v4915
    %7537 = vmatpush1.bf16.msra.mxu0 %v4914
    %7538 = vmatprep.subr.bf16.mxu0 %v4951
    %7539 = vmatpush1.bf16.msra.mxu0 %v4950
    %7540 = vmatprep.subr.bf16.mxu0 %v4987
    %7541 = vmatpush1.bf16.msra.mxu0 %v4986
    %7542 = vmatprep.subr.bf16.mxu0 %v5023
    %7543 = vmatpush1.bf16.msra.mxu0 %v5022
    %7544 = vmatprep.subr.bf16.mxu0 %v5059
    %7545 = vmatpush1.bf16.msra.mxu0 %v5058
    %7546 = vmatprep.subr.bf16.mxu0 %v5095
    %7547 = vmatpush1.bf16.msra.mxu0 %v5094
    %7548 = vmatprep.subr.bf16.mxu0 %v5131
    %7549 = vmatpush1.bf16.msra.mxu0 %v5130
    %7550 = vmatprep.mubr.bf16.mxu0 %v915
    %7551 = vmatmul.mubr.bf16.gmra.mrb[0].mxu0 %v914
    %v7552 = vpop.f32.mrb[0].mxu0
    %v7553 = vadd.f32 %v1893, %v7552
    %v7554 = vpop.f32.mrb[0].mxu0
    %v7555 = vadd.f32 %v1897, %v7554
    %v7556 = vpop.f32.mrb[0].mxu0
    %v7557 = vadd.f32 %v1893, %v7556
    %v7558 = vpop.f32.mrb[0].mxu0
    %v7559 = vadd.f32 %v1897, %v7558
    %7560 = vmatprep.mubr.bf16.mxu0 %v918
    %7561 = vmatmul.mubr.bf16.gmra.mrb[0].mxu0 %v917
    %v7562 = vpop.f32.mrb[0].mxu0
    %v7563 = vadd.f32 %v1893, %v7562
    %v7564 = vpop.f32.mrb[0].mxu0
    %v7565 = vadd.f32 %v1897, %v7564
    %v7566 = vpop.f32.mrb[0].mxu0
    %v7567 = vpop.f32.mrb[0].mxu0
    %7568 = vdwg.mxu0
    %7569 = vmatprep.subr.bf16.mxu0 %v5167
    %7570 = vmatpush1.bf16.msra.mxu0 %v5166
    %7571 = vmatprep.subr.bf16.mxu0 %v5203
    %7572 = vmatpush1.bf16.msra.mxu0 %v5202
    %7573 = vmatprep.subr.bf16.mxu0 %v5239
    %7574 = vmatpush1.bf16.msra.mxu0 %v5238
    %7575 = vmatprep.subr.bf16.mxu0 %v5275
    %7576 = vmatpush1.bf16.msra.mxu0 %v5274
    %7577 = vmatprep.subr.bf16.mxu0 %v5311
    %7578 = vmatpush1.bf16.msra.mxu0 %v5310
    %7579 = vmatprep.subr.bf16.mxu0 %v5347
    %7580 = vmatpush1.bf16.msra.mxu0 %v5346
    %7581 = vmatprep.subr.bf16.mxu0 %v5383
    %7582 = vmatpush1.bf16.msra.mxu0 %v5382
    %7583 = vmatprep.subr.bf16.mxu0 %v5419
    %7584 = vmatpush1.bf16.msra.mxu0 %v5418
    %7585 = vmatprep.subr.bf16.mxu0 0
    %7586 = vmatpush1.bf16.msra.mxu0 0
    %7587 = vmatprep.subr.bf16.mxu0 0
    %7588 = vmatpush1.bf16.msra.mxu0 0
    %7589 = vmatprep.subr.bf16.mxu0 0
    %7590 = vmatpush1.bf16.msra.mxu0 0
    %7591 = vmatprep.subr.bf16.mxu0 0
    %7592 = vmatpush1.bf16.msra.mxu0 0
    %7593 = vmatprep.subr.bf16.mxu0 0
    %7594 = vmatpush1.bf16.msra.mxu0 0
    %7595 = vmatprep.subr.bf16.mxu0 0
    %7596 = vmatpush1.bf16.msra.mxu0 0
    %7597 = vmatprep.subr.bf16.mxu0 0
    %7598 = vmatpush1.bf16.msra.mxu0 0
    %7599 = vmatprep.subr.bf16.mxu0 0
    %7600 = vmatpush1.bf16.msra.mxu0 0
    %7601 = vmatprep.mubr.bf16.mxu0 0
    %7602 = vmatmul.mubr.bf16.gmra.mrb[0].mxu0 %v916
    %v7603 = vpop.f32.mrb[0].mxu0
    %v7604 = vadd.f32 %v7553, %v7603
    %v7605 = vpop.f32.mrb[0].mxu0
    %v7606 = vadd.f32 %v7555, %v7605
    %v7607 = vpop.f32.mrb[0].mxu0
    %v7608 = vadd.f32 %v7557, %v7607
    %v7609 = vpop.f32.mrb[0].mxu0
    %v7610 = vadd.f32 %v7559, %v7609
    %7611 = vmatprep.mubr.bf16.mxu0 0
    %7612 = vmatmul.mubr.bf16.gmra.mrb[0].mxu0 %v919
    %v7613 = vpop.f32.mrb[0].mxu0
    %v7614 = vadd.f32 %v7563, %v7613
    %v7615 = vpop.f32.mrb[0].mxu0
    %v7616 = vadd.f32 %v7565, %v7615
    %v7617 = vpop.f32.mrb[0].mxu0
    %v7618 = vpop.f32.mrb[0].mxu0
    %7619 = vdwg.mxu0
    %7620 = vmatprep.subr.bf16.mxu0 %v4593
    %7621 = vmatpush1.bf16.msra.mxu0 %v4592
    %7622 = vmatprep.subr.bf16.mxu0 %v4629
    %7623 = vmatpush1.bf16.msra.mxu0 %v4628
    %7624 = vmatprep.subr.bf16.mxu0 %v4665
    %7625 = vmatpush1.bf16.msra.mxu0 %v4664
    %7626 = vmatprep.subr.bf16.mxu0 %v4701
    %7627 = vmatpush1.bf16.msra.mxu0 %v4700
    %7628 = vmatprep.subr.bf16.mxu0 %v4737
    %7629 = vmatpush1.bf16.msra.mxu0 %v4736
    %7630 = vmatprep.subr.bf16.mxu0 %v4773
    %7631 = vmatpush1.bf16.msra.mxu0 %v4772
    %7632 = vmatprep.subr.bf16.mxu0 %v4809
    %7633 = vmatpush1.bf16.msra.mxu0 %v4808
    %7634 = vmatprep.subr.bf16.mxu0 %v4845
    %7635 = vmatpush1.bf16.msra.mxu0 %v4844
    %7636 = vmatprep.subr.bf16.mxu0 %v4881
    %7637 = vmatpush1.bf16.msra.mxu0 %v4880
    %7638 = vmatprep.subr.bf16.mxu0 %v4917
    %7639 = vmatpush1.bf16.msra.mxu0 %v4916
    %7640 = vmatprep.subr.bf16.mxu0 %v4953
    %7641 = vmatpush1.bf16.msra.mxu0 %v4952
    %7642 = vmatprep.subr.bf16.mxu0 %v4989
    %7643 = vmatpush1.bf16.msra.mxu0 %v4988
    %7644 = vmatprep.subr.bf16.mxu0 %v5025
    %7645 = vmatpush1.bf16.msra.mxu0 %v5024
    %7646 = vmatprep.subr.bf16.mxu0 %v5061
    %7647 = vmatpush1.bf16.msra.mxu0 %v5060
    %7648 = vmatprep.subr.bf16.mxu0 %v5097
    %7649 = vmatpush1.bf16.msra.mxu0 %v5096
    %7650 = vmatprep.subr.bf16.mxu0 %v5133
    %7651 = vmatpush1.bf16.msra.mxu0 %v5132
    %7652 = vmatprep.mubr.bf16.mxu0 %v915
    %7653 = vmatmul.mubr.bf16.gmra.mrb[0].mxu0 %v914
    %v7654 = vpop.f32.mrb[0].mxu0
    %v7655 = vadd.f32 %v1901, %v7654
    %v7656 = vpop.f32.mrb[0].mxu0
    %v7657 = vadd.f32 %v1905, %v7656
    %v7658 = vpop.f32.mrb[0].mxu0
    %v7659 = vadd.f32 %v1901, %v7658
    %v7660 = vpop.f32.mrb[0].mxu0
    %v7661 = vadd.f32 %v1905, %v7660
    %7662 = vmatprep.mubr.bf16.mxu0 %v918
    %7663 = vmatmul.mubr.bf16.gmra.mrb[0].mxu0 %v917
    %v7664 = vpop.f32.mrb[0].mxu0
    %v7665 = vadd.f32 %v1901, %v7664
    %v7666 = vpop.f32.mrb[0].mxu0
    %v7667 = vadd.f32 %v1905, %v7666
    %v7668 = vpop.f32.mrb[0].mxu0
    %v7669 = vpop.f32.mrb[0].mxu0
    %7670 = vdwg.mxu0
    %7671 = vmatprep.subr.bf16.mxu0 %v5169
    %7672 = vmatpush1.bf16.msra.mxu0 %v5168
    %7673 = vmatprep.subr.bf16.mxu0 %v5205
    %7674 = vmatpush1.bf16.msra.mxu0 %v5204
    %7675 = vmatprep.subr.bf16.mxu0 %v5241
    %7676 = vmatpush1.bf16.msra.mxu0 %v5240
    %7677 = vmatprep.subr.bf16.mxu0 %v5277
    %7678 = vmatpush1.bf16.msra.mxu0 %v5276
    %7679 = vmatprep.subr.bf16.mxu0 %v5313
    %7680 = vmatpush1.bf16.msra.mxu0 %v5312
    %7681 = vmatprep.subr.bf16.mxu0 %v5349
    %7682 = vmatpush1.bf16.msra.mxu0 %v5348
    %7683 = vmatprep.subr.bf16.mxu0 %v5385
    %7684 = vmatpush1.bf16.msra.mxu0 %v5384
    %7685 = vmatprep.subr.bf16.mxu0 %v5421
    %7686 = vmatpush1.bf16.msra.mxu0 %v5420
    %7687 = vmatprep.subr.bf16.mxu0 0
    %7688 = vmatpush1.bf16.msra.mxu0 0
    %7689 = vmatprep.subr.bf16.mxu0 0
    %7690 = vmatpush1.bf16.msra.mxu0 0
    %7691 = vmatprep.subr.bf16.mxu0 0
    %7692 = vmatpush1.bf16.msra.mxu0 0
    %7693 = vmatprep.subr.bf16.mxu0 0
    %7694 = vmatpush1.bf16.msra.mxu0 0
    %7695 = vmatprep.subr.bf16.mxu0 0
    %7696 = vmatpush1.bf16.msra.mxu0 0
    %7697 = vmatprep.subr.bf16.mxu0 0
    %7698 = vmatpush1.bf16.msra.mxu0 0
    %7699 = vmatprep.subr.bf16.mxu0 0
    %7700 = vmatpush1.bf16.msra.mxu0 0
    %7701 = vmatprep.subr.bf16.mxu0 0
    %7702 = vmatpush1.bf16.msra.mxu0 0
    %7703 = vmatprep.mubr.bf16.mxu0 0
    %7704 = vmatmul.mubr.bf16.gmra.mrb[0].mxu0 %v916
    %v7705 = vpop.f32.mrb[0].mxu0
    %v7706 = vadd.f32 %v7655, %v7705
    %v7707 = vpop.f32.mrb[0].mxu0
    %v7708 = vadd.f32 %v7657, %v7707
    %v7709 = vpop.f32.mrb[0].mxu0
    %v7710 = vadd.f32 %v7659, %v7709
    %v7711 = vpop.f32.mrb[0].mxu0
    %v7712 = vadd.f32 %v7661, %v7711
    %7713 = vmatprep.mubr.bf16.mxu0 0
    %7714 = vmatmul.mubr.bf16.gmra.mrb[0].mxu0 %v919
    %v7715 = vpop.f32.mrb[0].mxu0
    %v7716 = vadd.f32 %v7665, %v7715
    %v7717 = vpop.f32.mrb[0].mxu0
    %v7718 = vadd.f32 %v7667, %v7717
    %v7719 = vpop.f32.mrb[0].mxu0
    %v7720 = vpop.f32.mrb[0].mxu0
    %7721 = vdwg.mxu0
    %7722 = vmatprep.subr.bf16.mxu0 %v4595
    %7723 = vmatpush1.bf16.msra.mxu0 %v4594
    %7724 = vmatprep.subr.bf16.mxu0 %v4631
    %7725 = vmatpush1.bf16.msra.mxu0 %v4630
    %7726 = vmatprep.subr.bf16.mxu0 %v4667
    %7727 = vmatpush1.bf16.msra.mxu0 %v4666
    %7728 = vmatprep.subr.bf16.mxu0 %v4703
    %7729 = vmatpush1.bf16.msra.mxu0 %v4702
    %7730 = vmatprep.subr.bf16.mxu0 %v4739
    %7731 = vmatpush1.bf16.msra.mxu0 %v4738
    %7732 = vmatprep.subr.bf16.mxu0 %v4775
    %7733 = vmatpush1.bf16.msra.mxu0 %v4774
    %7734 = vmatprep.subr.bf16.mxu0 %v4811
    %7735 = vmatpush1.bf16.msra.mxu0 %v4810
    %7736 = vmatprep.subr.bf16.mxu0 %v4847
    %7737 = vmatpush1.bf16.msra.mxu0 %v4846
    %7738 = vmatprep.subr.bf16.mxu0 %v4883
    %7739 = vmatpush1.bf16.msra.mxu0 %v4882
    %7740 = vmatprep.subr.bf16.mxu0 %v4919
    %7741 = vmatpush1.bf16.msra.mxu0 %v4918
    %7742 = vmatprep.subr.bf16.mxu0 %v4955
    %7743 = vmatpush1.bf16.msra.mxu0 %v4954
    %7744 = vmatprep.subr.bf16.mxu0 %v4991
    %7745 = vmatpush1.bf16.msra.mxu0 %v4990
    %7746 = vmatprep.subr.bf16.mxu0 %v5027
    %7747 = vmatpush1.bf16.msra.mxu0 %v5026
    %7748 = vmatprep.subr.bf16.mxu0 %v5063
    %7749 = vmatpush1.bf16.msra.mxu0 %v5062
    %7750 = vmatprep.subr.bf16.mxu0 %v5099
    %7751 = vmatpush1.bf16.msra.mxu0 %v5098
    %7752 = vmatprep.subr.bf16.mxu0 %v5135
    %7753 = vmatpush1.bf16.msra.mxu0 %v5134
    %7754 = vmatprep.mubr.bf16.mxu0 %v915
    %7755 = vmatmul.mubr.bf16.gmra.mrb[0].mxu0 %v914
    %v7756 = vpop.f32.mrb[0].mxu0
    %v7757 = vadd.f32 %v1909, %v7756
    %v7758 = vpop.f32.mrb[0].mxu0
    %v7759 = vadd.f32 %v1913, %v7758
    %v7760 = vpop.f32.mrb[0].mxu0
    %v7761 = vadd.f32 %v1909, %v7760
    %v7762 = vpop.f32.mrb[0].mxu0
    %v7763 = vadd.f32 %v1913, %v7762
    %7764 = vmatprep.mubr.bf16.mxu0 %v918
    %7765 = vmatmul.mubr.bf16.gmra.mrb[0].mxu0 %v917
    %v7766 = vpop.f32.mrb[0].mxu0
    %v7767 = vadd.f32 %v1909, %v7766
    %v7768 = vpop.f32.mrb[0].mxu0
    %v7769 = vadd.f32 %v1913, %v7768
    %v7770 = vpop.f32.mrb[0].mxu0
    %v7771 = vpop.f32.mrb[0].mxu0
    %7772 = vdwg.mxu0
    %7773 = vmatprep.subr.bf16.mxu0 %v5171
    %7774 = vmatpush1.bf16.msra.mxu0 %v5170
    %7775 = vmatprep.subr.bf16.mxu0 %v5207
    %7776 = vmatpush1.bf16.msra.mxu0 %v5206
    %7777 = vmatprep.subr.bf16.mxu0 %v5243
    %7778 = vmatpush1.bf16.msra.mxu0 %v5242
    %7779 = vmatprep.subr.bf16.mxu0 %v5279
    %7780 = vmatpush1.bf16.msra.mxu0 %v5278
    %7781 = vmatprep.subr.bf16.mxu0 %v5315
    %7782 = vmatpush1.bf16.msra.mxu0 %v5314
    %7783 = vmatprep.subr.bf16.mxu0 %v5351
    %7784 = vmatpush1.bf16.msra.mxu0 %v5350
    %7785 = vmatprep.subr.bf16.mxu0 %v5387
    %7786 = vmatpush1.bf16.msra.mxu0 %v5386
    %7787 = vmatprep.subr.bf16.mxu0 %v5423
    %7788 = vmatpush1.bf16.msra.mxu0 %v5422
    %7789 = vmatprep.subr.bf16.mxu0 0
    %7790 = vmatpush1.bf16.msra.mxu0 0
    %7791 = vmatprep.subr.bf16.mxu0 0
    %7792 = vmatpush1.bf16.msra.mxu0 0
    %7793 = vmatprep.subr.bf16.mxu0 0
    %7794 = vmatpush1.bf16.msra.mxu0 0
    %7795 = vmatprep.subr.bf16.mxu0 0
    %7796 = vmatpush1.bf16.msra.mxu0 0
    %7797 = vmatprep.subr.bf16.mxu0 0
    %7798 = vmatpush1.bf16.msra.mxu0 0
    %7799 = vmatprep.subr.bf16.mxu0 0
    %7800 = vmatpush1.bf16.msra.mxu0 0
    %7801 = vmatprep.subr.bf16.mxu0 0
    %7802 = vmatpush1.bf16.msra.mxu0 0
    %7803 = vmatprep.subr.bf16.mxu0 0
    %7804 = vmatpush1.bf16.msra.mxu0 0
    %7805 = vmatprep.mubr.bf16.mxu0 0
    %7806 = vmatmul.mubr.bf16.gmra.mrb[0].mxu0 %v916
    %v7807 = vpop.f32.mrb[0].mxu0
    %v7808 = vadd.f32 %v7757, %v7807
    %v7809 = vpop.f32.mrb[0].mxu0
    %v7810 = vadd.f32 %v7759, %v7809
    %v7811 = vpop.f32.mrb[0].mxu0
    %v7812 = vadd.f32 %v7761, %v7811
    %v7813 = vpop.f32.mrb[0].mxu0
    %v7814 = vadd.f32 %v7763, %v7813
    %7815 = vmatprep.mubr.bf16.mxu0 0
    %7816 = vmatmul.mubr.bf16.gmra.mrb[0].mxu0 %v919
    %v7817 = vpop.f32.mrb[0].mxu0
    %v7818 = vadd.f32 %v7767, %v7817
    %v7819 = vpop.f32.mrb[0].mxu0
    %v7820 = vadd.f32 %v7769, %v7819
    %v7821 = vpop.f32.mrb[0].mxu0
    %v7822 = vpop.f32.mrb[0].mxu0
    %7823 = vdwg.mxu0
    %7824 = vmatprep.subr.bf16.mxu0 %v4597
    %7825 = vmatpush1.bf16.msra.mxu0 %v4596
    %7826 = vmatprep.subr.bf16.mxu0 %v4633
    %7827 = vmatpush1.bf16.msra.mxu0 %v4632
    %7828 = vmatprep.subr.bf16.mxu0 %v4669
    %7829 = vmatpush1.bf16.msra.mxu0 %v4668
    %7830 = vmatprep.subr.bf16.mxu0 %v4705
    %7831 = vmatpush1.bf16.msra.mxu0 %v4704
    %7832 = vmatprep.subr.bf16.mxu0 %v4741
    %7833 = vmatpush1.bf16.msra.mxu0 %v4740
    %7834 = vmatprep.subr.bf16.mxu0 %v4777
    %7835 = vmatpush1.bf16.msra.mxu0 %v4776
    %7836 = vmatprep.subr.bf16.mxu0 %v4813
    %7837 = vmatpush1.bf16.msra.mxu0 %v4812
    %7838 = vmatprep.subr.bf16.mxu0 %v4849
    %7839 = vmatpush1.bf16.msra.mxu0 %v4848
    %7840 = vmatprep.subr.bf16.mxu0 %v4885
    %7841 = vmatpush1.bf16.msra.mxu0 %v4884
    %7842 = vmatprep.subr.bf16.mxu0 %v4921
    %7843 = vmatpush1.bf16.msra.mxu0 %v4920
    %7844 = vmatprep.subr.bf16.mxu0 %v4957
    %7845 = vmatpush1.bf16.msra.mxu0 %v4956
    %7846 = vmatprep.subr.bf16.mxu0 %v4993
    %7847 = vmatpush1.bf16.msra.mxu0 %v4992
    %7848 = vmatprep.subr.bf16.mxu0 %v5029
    %7849 = vmatpush1.bf16.msra.mxu0 %v5028
    %7850 = vmatprep.subr.bf16.mxu0 %v5065
    %7851 = vmatpush1.bf16.msra.mxu0 %v5064
    %7852 = vmatprep.subr.bf16.mxu0 %v5101
    %7853 = vmatpush1.bf16.msra.mxu0 %v5100
    %7854 = vmatprep.subr.bf16.mxu0 %v5137
    %7855 = vmatpush1.bf16.msra.mxu0 %v5136
    %7856 = vmatprep.mubr.bf16.mxu0 %v915
    %7857 = vmatmul.mubr.bf16.gmra.mrb[0].mxu0 %v914
    %v7858 = vpop.f32.mrb[0].mxu0
    %v7859 = vadd.f32 %v1917, %v7858
    %v7860 = vpop.f32.mrb[0].mxu0
    %v7861 = vadd.f32 %v1921, %v7860
    %v7862 = vpop.f32.mrb[0].mxu0
    %v7863 = vadd.f32 %v1917, %v7862
    %v7864 = vpop.f32.mrb[0].mxu0
    %v7865 = vadd.f32 %v1921, %v7864
    %7866 = vmatprep.mubr.bf16.mxu0 %v918
    %7867 = vmatmul.mubr.bf16.gmra.mrb[0].mxu0 %v917
    %v7868 = vpop.f32.mrb[0].mxu0
    %v7869 = vadd.f32 %v1917, %v7868
    %v7870 = vpop.f32.mrb[0].mxu0
    %v7871 = vadd.f32 %v1921, %v7870
    %v7872 = vpop.f32.mrb[0].mxu0
    %v7873 = vpop.f32.mrb[0].mxu0
    %7874 = vdwg.mxu0
    %7875 = vmatprep.subr.bf16.mxu0 %v5173
    %7876 = vmatpush1.bf16.msra.mxu0 %v5172
    %7877 = vmatprep.subr.bf16.mxu0 %v5209
    %7878 = vmatpush1.bf16.msra.mxu0 %v5208
    %7879 = vmatprep.subr.bf16.mxu0 %v5245
    %7880 = vmatpush1.bf16.msra.mxu0 %v5244
    %7881 = vmatprep.subr.bf16.mxu0 %v5281
    %7882 = vmatpush1.bf16.msra.mxu0 %v5280
    %7883 = vmatprep.subr.bf16.mxu0 %v5317
    %7884 = vmatpush1.bf16.msra.mxu0 %v5316
    %7885 = vmatprep.subr.bf16.mxu0 %v5353
    %7886 = vmatpush1.bf16.msra.mxu0 %v5352
    %7887 = vmatprep.subr.bf16.mxu0 %v5389
    %7888 = vmatpush1.bf16.msra.mxu0 %v5388
    %7889 = vmatprep.subr.bf16.mxu0 %v5425
    %7890 = vmatpush1.bf16.msra.mxu0 %v5424
    %7891 = vmatprep.subr.bf16.mxu0 0
    %7892 = vmatpush1.bf16.msra.mxu0 0
    %7893 = vmatprep.subr.bf16.mxu0 0
    %7894 = vmatpush1.bf16.msra.mxu0 0
    %7895 = vmatprep.subr.bf16.mxu0 0
    %7896 = vmatpush1.bf16.msra.mxu0 0
    %7897 = vmatprep.subr.bf16.mxu0 0
    %7898 = vmatpush1.bf16.msra.mxu0 0
    %7899 = vmatprep.subr.bf16.mxu0 0
    %7900 = vmatpush1.bf16.msra.mxu0 0
    %7901 = vmatprep.subr.bf16.mxu0 0
    %7902 = vmatpush1.bf16.msra.mxu0 0
    %7903 = vmatprep.subr.bf16.mxu0 0
    %7904 = vmatpush1.bf16.msra.mxu0 0
    %7905 = vmatprep.subr.bf16.mxu0 0
    %7906 = vmatpush1.bf16.msra.mxu0 0
    %7907 = vmatprep.mubr.bf16.mxu0 0
    %7908 = vmatmul.mubr.bf16.gmra.mrb[0].mxu0 %v916
    %v7909 = vpop.f32.mrb[0].mxu0
    %v7910 = vadd.f32 %v7859, %v7909
    %v7911 = vpop.f32.mrb[0].mxu0
    %v7912 = vadd.f32 %v7861, %v7911
    %v7913 = vpop.f32.mrb[0].mxu0
    %v7914 = vadd.f32 %v7863, %v7913
    %v7915 = vpop.f32.mrb[0].mxu0
    %v7916 = vadd.f32 %v7865, %v7915
    %7917 = vmatprep.mubr.bf16.mxu0 0
    %7918 = vmatmul.mubr.bf16.gmra.mrb[0].mxu0 %v919
    %v7919 = vpop.f32.mrb[0].mxu0
    %v7920 = vadd.f32 %v7869, %v7919
    %v7921 = vpop.f32.mrb[0].mxu0
    %v7922 = vadd.f32 %v7871, %v7921
    %v7923 = vpop.f32.mrb[0].mxu0
    %v7924 = vpop.f32.mrb[0].mxu0
    %7925 = vdwg.mxu0
    %7926 = vmatprep.subr.bf16.mxu0 %v4599
    %7927 = vmatpush1.bf16.msra.mxu0 %v4598
    %7928 = vmatprep.subr.bf16.mxu0 %v4635
    %7929 = vmatpush1.bf16.msra.mxu0 %v4634
    %7930 = vmatprep.subr.bf16.mxu0 %v4671
    %7931 = vmatpush1.bf16.msra.mxu0 %v4670
    %7932 = vmatprep.subr.bf16.mxu0 %v4707
    %7933 = vmatpush1.bf16.msra.mxu0 %v4706
    %7934 = vmatprep.subr.bf16.mxu0 %v4743
    %7935 = vmatpush1.bf16.msra.mxu0 %v4742
    %7936 = vmatprep.subr.bf16.mxu0 %v4779
    %7937 = vmatpush1.bf16.msra.mxu0 %v4778
    %7938 = vmatprep.subr.bf16.mxu0 %v4815
    %7939 = vmatpush1.bf16.msra.mxu0 %v4814
    %7940 = vmatprep.subr.bf16.mxu0 %v4851
    %7941 = vmatpush1.bf16.msra.mxu0 %v4850
    %7942 = vmatprep.subr.bf16.mxu0 %v4887
    %7943 = vmatpush1.bf16.msra.mxu0 %v4886
    %7944 = vmatprep.subr.bf16.mxu0 %v4923
    %7945 = vmatpush1.bf16.msra.mxu0 %v4922
    %7946 = vmatprep.subr.bf16.mxu0 %v4959
    %7947 = vmatpush1.bf16.msra.mxu0 %v4958
    %7948 = vmatprep.subr.bf16.mxu0 %v4995
    %7949 = vmatpush1.bf16.msra.mxu0 %v4994
    %7950 = vmatprep.subr.bf16.mxu0 %v5031
    %7951 = vmatpush1.bf16.msra.mxu0 %v5030
    %7952 = vmatprep.subr.bf16.mxu0 %v5067
    %7953 = vmatpush1.bf16.msra.mxu0 %v5066
    %7954 = vmatprep.subr.bf16.mxu0 %v5103
    %7955 = vmatpush1.bf16.msra.mxu0 %v5102
    %7956 = vmatprep.subr.bf16.mxu0 %v5139
    %7957 = vmatpush1.bf16.msra.mxu0 %v5138
    %7958 = vmatprep.mubr.bf16.mxu0 %v915
    %7959 = vmatmul.mubr.bf16.gmra.mrb[0].mxu0 %v914
    %v7960 = vpop.f32.mrb[0].mxu0
    %v7961 = vadd.f32 %v1925, %v7960
    %v7962 = vpop.f32.mrb[0].mxu0
    %v7963 = vadd.f32 %v1929, %v7962
    %v7964 = vpop.f32.mrb[0].mxu0
    %v7965 = vadd.f32 %v1925, %v7964
    %v7966 = vpop.f32.mrb[0].mxu0
    %v7967 = vadd.f32 %v1929, %v7966
    %7968 = vmatprep.mubr.bf16.mxu0 %v918
    %7969 = vmatmul.mubr.bf16.gmra.mrb[0].mxu0 %v917
    %v7970 = vpop.f32.mrb[0].mxu0
    %v7971 = vadd.f32 %v1925, %v7970
    %v7972 = vpop.f32.mrb[0].mxu0
    %v7973 = vadd.f32 %v1929, %v7972
    %v7974 = vpop.f32.mrb[0].mxu0
    %v7975 = vpop.f32.mrb[0].mxu0
    %7976 = vdwg.mxu0
    %7977 = vmatprep.subr.bf16.mxu0 %v5175
    %7978 = vmatpush1.bf16.msra.mxu0 %v5174
    %7979 = vmatprep.subr.bf16.mxu0 %v5211
    %7980 = vmatpush1.bf16.msra.mxu0 %v5210
    %7981 = vmatprep.subr.bf16.mxu0 %v5247
    %7982 = vmatpush1.bf16.msra.mxu0 %v5246
    %7983 = vmatprep.subr.bf16.mxu0 %v5283
    %7984 = vmatpush1.bf16.msra.mxu0 %v5282
    %7985 = vmatprep.subr.bf16.mxu0 %v5319
    %7986 = vmatpush1.bf16.msra.mxu0 %v5318
    %7987 = vmatprep.subr.bf16.mxu0 %v5355
    %7988 = vmatpush1.bf16.msra.mxu0 %v5354
    %7989 = vmatprep.subr.bf16.mxu0 %v5391
    %7990 = vmatpush1.bf16.msra.mxu0 %v5390
    %7991 = vmatprep.subr.bf16.mxu0 %v5427
    %7992 = vmatpush1.bf16.msra.mxu0 %v5426
    %7993 = vmatprep.subr.bf16.mxu0 0
    %7994 = vmatpush1.bf16.msra.mxu0 0
    %7995 = vmatprep.subr.bf16.mxu0 0
    %7996 = vmatpush1.bf16.msra.mxu0 0
    %7997 = vmatprep.subr.bf16.mxu0 0
    %7998 = vmatpush1.bf16.msra.mxu0 0
    %7999 = vmatprep.subr.bf16.mxu0 0
    %8000 = vmatpush1.bf16.msra.mxu0 0
    %8001 = vmatprep.subr.bf16.mxu0 0
    %8002 = vmatpush1.bf16.msra.mxu0 0
    %8003 = vmatprep.subr.bf16.mxu0 0
    %8004 = vmatpush1.bf16.msra.mxu0 0
    %8005 = vmatprep.subr.bf16.mxu0 0
    %8006 = vmatpush1.bf16.msra.mxu0 0
    %8007 = vmatprep.subr.bf16.mxu0 0
    %8008 = vmatpush1.bf16.msra.mxu0 0
    %8009 = vmatprep.mubr.bf16.mxu0 0
    %8010 = vmatmul.mubr.bf16.gmra.mrb[0].mxu0 %v916
    %v8011 = vpop.f32.mrb[0].mxu0
    %v8012 = vadd.f32 %v7961, %v8011
    %v8013 = vpop.f32.mrb[0].mxu0
    %v8014 = vadd.f32 %v7963, %v8013
    %v8015 = vpop.f32.mrb[0].mxu0
    %v8016 = vadd.f32 %v7965, %v8015
    %v8017 = vpop.f32.mrb[0].mxu0
    %v8018 = vadd.f32 %v7967, %v8017
    %8019 = vmatprep.mubr.bf16.mxu0 0
    %8020 = vmatmul.mubr.bf16.gmra.mrb[0].mxu0 %v919
    %v8021 = vpop.f32.mrb[0].mxu0
    %v8022 = vadd.f32 %v7971, %v8021
    %v8023 = vpop.f32.mrb[0].mxu0
    %v8024 = vadd.f32 %v7973, %v8023
    %v8025 = vpop.f32.mrb[0].mxu0
    %v8026 = vpop.f32.mrb[0].mxu0
    %8027 = vdwg.mxu0
    %8028 = vmatprep.subr.bf16.mxu0 %v4601
    %8029 = vmatpush1.bf16.msra.mxu0 %v4600
    %8030 = vmatprep.subr.bf16.mxu0 %v4637
    %8031 = vmatpush1.bf16.msra.mxu0 %v4636
    %8032 = vmatprep.subr.bf16.mxu0 %v4673
    %8033 = vmatpush1.bf16.msra.mxu0 %v4672
    %8034 = vmatprep.subr.bf16.mxu0 %v4709
    %8035 = vmatpush1.bf16.msra.mxu0 %v4708
    %8036 = vmatprep.subr.bf16.mxu0 %v4745
    %8037 = vmatpush1.bf16.msra.mxu0 %v4744
    %8038 = vmatprep.subr.bf16.mxu0 %v4781
    %8039 = vmatpush1.bf16.msra.mxu0 %v4780
    %8040 = vmatprep.subr.bf16.mxu0 %v4817
    %8041 = vmatpush1.bf16.msra.mxu0 %v4816
    %8042 = vmatprep.subr.bf16.mxu0 %v4853
    %8043 = vmatpush1.bf16.msra.mxu0 %v4852
    %8044 = vmatprep.subr.bf16.mxu0 %v4889
    %8045 = vmatpush1.bf16.msra.mxu0 %v4888
    %8046 = vmatprep.subr.bf16.mxu0 %v4925
    %8047 = vmatpush1.bf16.msra.mxu0 %v4924
    %8048 = vmatprep.subr.bf16.mxu0 %v4961
    %8049 = vmatpush1.bf16.msra.mxu0 %v4960
    %8050 = vmatprep.subr.bf16.mxu0 %v4997
    %8051 = vmatpush1.bf16.msra.mxu0 %v4996
    %8052 = vmatprep.subr.bf16.mxu0 %v5033
    %8053 = vmatpush1.bf16.msra.mxu0 %v5032
    %8054 = vmatprep.subr.bf16.mxu0 %v5069
    %8055 = vmatpush1.bf16.msra.mxu0 %v5068
    %8056 = vmatprep.subr.bf16.mxu0 %v5105
    %8057 = vmatpush1.bf16.msra.mxu0 %v5104
    %8058 = vmatprep.subr.bf16.mxu0 %v5141
    %8059 = vmatpush1.bf16.msra.mxu0 %v5140
    %8060 = vmatprep.mubr.bf16.mxu0 %v915
    %8061 = vmatmul.mubr.bf16.gmra.mrb[0].mxu0 %v914
    %v8062 = vpop.f32.mrb[0].mxu0
    %v8063 = vadd.f32 %v1933, %v8062
    %v8064 = vpop.f32.mrb[0].mxu0
    %v8065 = vadd.f32 %v1937, %v8064
    %v8066 = vpop.f32.mrb[0].mxu0
    %v8067 = vadd.f32 %v1933, %v8066
    %v8068 = vpop.f32.mrb[0].mxu0
    %v8069 = vadd.f32 %v1937, %v8068
    %8070 = vmatprep.mubr.bf16.mxu0 %v918
    %8071 = vmatmul.mubr.bf16.gmra.mrb[0].mxu0 %v917
    %v8072 = vpop.f32.mrb[0].mxu0
    %v8073 = vadd.f32 %v1933, %v8072
    %v8074 = vpop.f32.mrb[0].mxu0
    %v8075 = vadd.f32 %v1937, %v8074
    %v8076 = vpop.f32.mrb[0].mxu0
    %v8077 = vpop.f32.mrb[0].mxu0
    %8078 = vdwg.mxu0
    %8079 = vmatprep.subr.bf16.mxu0 %v5177
    %8080 = vmatpush1.bf16.msra.mxu0 %v5176
    %8081 = vmatprep.subr.bf16.mxu0 %v5213
    %8082 = vmatpush1.bf16.msra.mxu0 %v5212
    %8083 = vmatprep.subr.bf16.mxu0 %v5249
    %8084 = vmatpush1.bf16.msra.mxu0 %v5248
    %8085 = vmatprep.subr.bf16.mxu0 %v5285
    %8086 = vmatpush1.bf16.msra.mxu0 %v5284
    %8087 = vmatprep.subr.bf16.mxu0 %v5321
    %8088 = vmatpush1.bf16.msra.mxu0 %v5320
    %8089 = vmatprep.subr.bf16.mxu0 %v5357
    %8090 = vmatpush1.bf16.msra.mxu0 %v5356
    %8091 = vmatprep.subr.bf16.mxu0 %v5393
    %8092 = vmatpush1.bf16.msra.mxu0 %v5392
    %8093 = vmatprep.subr.bf16.mxu0 %v5429
    %8094 = vmatpush1.bf16.msra.mxu0 %v5428
    %8095 = vmatprep.subr.bf16.mxu0 0
    %8096 = vmatpush1.bf16.msra.mxu0 0
    %8097 = vmatprep.subr.bf16.mxu0 0
    %8098 = vmatpush1.bf16.msra.mxu0 0
    %8099 = vmatprep.subr.bf16.mxu0 0
    %8100 = vmatpush1.bf16.msra.mxu0 0
    %8101 = vmatprep.subr.bf16.mxu0 0
    %8102 = vmatpush1.bf16.msra.mxu0 0
    %8103 = vmatprep.subr.bf16.mxu0 0
    %8104 = vmatpush1.bf16.msra.mxu0 0
    %8105 = vmatprep.subr.bf16.mxu0 0
    %8106 = vmatpush1.bf16.msra.mxu0 0
    %8107 = vmatprep.subr.bf16.mxu0 0
    %8108 = vmatpush1.bf16.msra.mxu0 0
    %8109 = vmatprep.subr.bf16.mxu0 0
    %8110 = vmatpush1.bf16.msra.mxu0 0
    %8111 = vmatprep.mubr.bf16.mxu0 0
    %8112 = vmatmul.mubr.bf16.gmra.mrb[0].mxu0 %v916
    %v8113 = vpop.f32.mrb[0].mxu0
    %v8114 = vadd.f32 %v8063, %v8113
    %v8115 = vpop.f32.mrb[0].mxu0
    %v8116 = vadd.f32 %v8065, %v8115
    %v8117 = vpop.f32.mrb[0].mxu0
    %v8118 = vadd.f32 %v8067, %v8117
    %v8119 = vpop.f32.mrb[0].mxu0
    %v8120 = vadd.f32 %v8069, %v8119
    %8121 = vmatprep.mubr.bf16.mxu0 0
    %8122 = vmatmul.mubr.bf16.gmra.mrb[0].mxu0 %v919
    %v8123 = vpop.f32.mrb[0].mxu0
    %v8124 = vadd.f32 %v8073, %v8123
    %v8125 = vpop.f32.mrb[0].mxu0
    %v8126 = vadd.f32 %v8075, %v8125
    %v8127 = vpop.f32.mrb[0].mxu0
    %v8128 = vpop.f32.mrb[0].mxu0
    %8129 = vdwg.mxu0
    %8130 = vst [vmem:[#allocation11] sm:$0xff] %v6380
    %8131 = vst [vmem:[#allocation11 + $0x8] sm:$0xff] %v6382
    %8132 = vst [vmem:[#allocation11 + $0x10] sm:$0xff] %v6482
    %8133 = vst [vmem:[#allocation11 + $0x18] sm:$0xff] %v6484
    %8134 = vst [vmem:[#allocation11 + $0x20] sm:$0xff] %v6584
    %8135 = vst [vmem:[#allocation11 + $0x28] sm:$0xff] %v6586
    %8136 = vst [vmem:[#allocation11 + $0x30] sm:$0xff] %v6686
    %8137 = vst [vmem:[#allocation11 + $0x38] sm:$0xff] %v6688
    %8138 = vst [vmem:[#allocation11 + $0x40] sm:$0xff] %v6788
    %8139 = vst [vmem:[#allocation11 + $0x48] sm:$0xff] %v6790
    %8140 = vst [vmem:[#allocation11 + $0x50] sm:$0xff] %v6890
    %8141 = vst [vmem:[#allocation11 + $0x58] sm:$0xff] %v6892
    %8142 = vst [vmem:[#allocation11 + $0x60] sm:$0xff] %v6992
    %8143 = vst [vmem:[#allocation11 + $0x68] sm:$0xff] %v6994
    %8144 = vst [vmem:[#allocation11 + $0x70] sm:$0xff] %v7094
    %8145 = vst [vmem:[#allocation11 + $0x78] sm:$0xff] %v7096
    %8146 = vst [vmem:[#allocation11 + $0x80] sm:$0xff] %v7196
    %8147 = vst [vmem:[#allocation11 + $0x88] sm:$0xff] %v7198
    %8148 = vst [vmem:[#allocation11 + $0x90] sm:$0xff] %v7298
    %8149 = vst [vmem:[#allocation11 + $0x98] sm:$0xff] %v7300
    %8150 = vst [vmem:[#allocation11 + $0xa0] sm:$0xff] %v7400
    %8151 = vst [vmem:[#allocation11 + $0xa8] sm:$0xff] %v7402
    %8152 = vst [vmem:[#allocation11 + $0xb0] sm:$0xff] %v7502
    %8153 = vst [vmem:[#allocation11 + $0xb8] sm:$0xff] %v7504
    %8154 = vst [vmem:[#allocation11 + $0xc0] sm:$0xff] %v7604
    %8155 = vst [vmem:[#allocation11 + $0xc8] sm:$0xff] %v7606
    %8156 = vst [vmem:[#allocation11 + $0xd0] sm:$0xff] %v7706
    %8157 = vst [vmem:[#allocation11 + $0xd8] sm:$0xff] %v7708
    %8158 = vst [vmem:[#allocation11 + $0xe0] sm:$0xff] %v7808
    %8159 = vst [vmem:[#allocation11 + $0xe8] sm:$0xff] %v7810
    %8160 = vst [vmem:[#allocation11 + $0xf0] sm:$0xff] %v7910
    %8161 = vst [vmem:[#allocation11 + $0xf8] sm:$0xff] %v7912
    %8162 = vst [vmem:[#allocation11 + $0x100] sm:$0xff] %v8012
    %8163 = vst [vmem:[#allocation11 + $0x108] sm:$0xff] %v8014
    %8164 = vst [vmem:[#allocation11 + $0x110] sm:$0xff] %v8114
    %8165 = vst [vmem:[#allocation11 + $0x118] sm:$0xff] %v8116
    %8166 = vst [vmem:[#allocation11 + $0x120] sm:$0xff] %v6384
    %8167 = vst [vmem:[#allocation11 + $0x128] sm:$0xff] %v6386
    %8168 = vst [vmem:[#allocation11 + $0x130] sm:$0xff] %v6486
    %8169 = vst [vmem:[#allocation11 + $0x138] sm:$0xff] %v6488
    %8170 = vst [vmem:[#allocation11 + $0x140] sm:$0xff] %v6588
    %8171 = vst [vmem:[#allocation11 + $0x148] sm:$0xff] %v6590
    %8172 = vst [vmem:[#allocation11 + $0x150] sm:$0xff] %v6690
    %8173 = vst [vmem:[#allocation11 + $0x158] sm:$0xff] %v6692
    %8174 = vst [vmem:[#allocation11 + $0x160] sm:$0xff] %v6792
    %8175 = vst [vmem:[#allocation11 + $0x168] sm:$0xff] %v6794
    %8176 = vst [vmem:[#allocation11 + $0x170] sm:$0xff] %v6894
    %8177 = vst [vmem:[#allocation11 + $0x178] sm:$0xff] %v6896
    %8178 = vst [vmem:[#allocation11 + $0x180] sm:$0xff] %v6996
    %8179 = vst [vmem:[#allocation11 + $0x188] sm:$0xff] %v6998
    %8180 = vst [vmem:[#allocation11 + $0x190] sm:$0xff] %v7098
    %8181 = vst [vmem:[#allocation11 + $0x198] sm:$0xff] %v7100
    %8182 = vst [vmem:[#allocation11 + $0x1a0] sm:$0xff] %v7200
    %8183 = vst [vmem:[#allocation11 + $0x1a8] sm:$0xff] %v7202
    %8184 = vst [vmem:[#allocation11 + $0x1b0] sm:$0xff] %v7302
    %8185 = vst [vmem:[#allocation11 + $0x1b8] sm:$0xff] %v7304
    %8186 = vst [vmem:[#allocation11 + $0x1c0] sm:$0xff] %v7404
    %8187 = vst [vmem:[#allocation11 + $0x1c8] sm:$0xff] %v7406
    %8188 = vst [vmem:[#allocation11 + $0x1d0] sm:$0xff] %v7506
    %8189 = vst [vmem:[#allocation11 + $0x1d8] sm:$0xff] %v7508
    %8190 = vst [vmem:[#allocation11 + $0x1e0] sm:$0xff] %v7608
    %8191 = vst [vmem:[#allocation11 + $0x1e8] sm:$0xff] %v7610
    %8192 = vst [vmem:[#allocation11 + $0x1f0] sm:$0xff] %v7710
    %8193 = vst [vmem:[#allocation11 + $0x1f8] sm:$0xff] %v7712
    %8194 = vst [vmem:[#allocation11 + $0x200] sm:$0xff] %v7812
    %8195 = vst [vmem:[#allocation11 + $0x208] sm:$0xff] %v7814
    %8196 = vst [vmem:[#allocation11 + $0x210] sm:$0xff] %v7914
    %8197 = vst [vmem:[#allocation11 + $0x218] sm:$0xff] %v7916
    %8198 = vst [vmem:[#allocation11 + $0x220] sm:$0xff] %v8016
    %8199 = vst [vmem:[#allocation11 + $0x228] sm:$0xff] %v8018
    %8200 = vst [vmem:[#allocation11 + $0x230] sm:$0xff] %v8118
    %8201 = vst [vmem:[#allocation11 + $0x238] sm:$0xff] %v8120
    %8202 = vst [vmem:[#allocation11 + $0x240] sm:$0xff] %v6390
    %8203 = vst [vmem:[#allocation11 + $0x248] sm:$0xff] %v6392
    %8204 = vst [vmem:[#allocation11 + $0x250] sm:$0xff] %v6492
    %8205 = vst [vmem:[#allocation11 + $0x258] sm:$0xff] %v6494
    %8206 = vst [vmem:[#allocation11 + $0x260] sm:$0xff] %v6594
    %8207 = vst [vmem:[#allocation11 + $0x268] sm:$0xff] %v6596
    %8208 = vst [vmem:[#allocation11 + $0x270] sm:$0xff] %v6696
    %8209 = vst [vmem:[#allocation11 + $0x278] sm:$0xff] %v6698
    %8210 = vst [vmem:[#allocation11 + $0x280] sm:$0xff] %v6798
    %8211 = vst [vmem:[#allocation11 + $0x288] sm:$0xff] %v6800
    %8212 = vst [vmem:[#allocation11 + $0x290] sm:$0xff] %v6900
    %8213 = vst [vmem:[#allocation11 + $0x298] sm:$0xff] %v6902
    %8214 = vst [vmem:[#allocation11 + $0x2a0] sm:$0xff] %v7002
    %8215 = vst [vmem:[#allocation11 + $0x2a8] sm:$0xff] %v7004
    %8216 = vst [vmem:[#allocation11 + $0x2b0] sm:$0xff] %v7104
    %8217 = vst [vmem:[#allocation11 + $0x2b8] sm:$0xff] %v7106
    %8218 = vst [vmem:[#allocation11 + $0x2c0] sm:$0xff] %v7206
    %8219 = vst [vmem:[#allocation11 + $0x2c8] sm:$0xff] %v7208
    %8220 = vst [vmem:[#allocation11 + $0x2d0] sm:$0xff] %v7308
    %8221 = vst [vmem:[#allocation11 + $0x2d8] sm:$0xff] %v7310
    %8222 = vst [vmem:[#allocation11 + $0x2e0] sm:$0xff] %v7410
    %8223 = vst [vmem:[#allocation11 + $0x2e8] sm:$0xff] %v7412
    %8224 = vst [vmem:[#allocation11 + $0x2f0] sm:$0xff] %v7512
    %8225 = vst [vmem:[#allocation11 + $0x2f8] sm:$0xff] %v7514
    %8226 = vst [vmem:[#allocation11 + $0x300] sm:$0xff] %v7614
    %8227 = vst [vmem:[#allocation11 + $0x308] sm:$0xff] %v7616
    %8228 = vst [vmem:[#allocation11 + $0x310] sm:$0xff] %v7716
    %8229 = vst [vmem:[#allocation11 + $0x318] sm:$0xff] %v7718
    %8230 = vst [vmem:[#allocation11 + $0x320] sm:$0xff] %v7818
    %8231 = vst [vmem:[#allocation11 + $0x328] sm:$0xff] %v7820
    %8232 = vst [vmem:[#allocation11 + $0x330] sm:$0xff] %v7920
    %8233 = vst [vmem:[#allocation11 + $0x338] sm:$0xff] %v7922
    %8234 = vst [vmem:[#allocation11 + $0x340] sm:$0xff] %v8022
    %8235 = vst [vmem:[#allocation11 + $0x348] sm:$0xff] %v8024
    %8236 = vst [vmem:[#allocation11 + $0x350] sm:$0xff] %v8124
    %8237 = vst [vmem:[#allocation11 + $0x358] sm:$0xff] %v8126
    // Predicated region
    $region46: #{tpu_custom_call.1} parent=1 // pred_check
      _
    $region47: #{tpu_custom_call.1} parent=1 // pred_check_branch
      %8239 = sbr.rel (0) target = $region49
    $region48: #{tpu_custom_call.1} parent=1 // pred_region
      %s8241 = ssub.s32 13824, 13824
      %8242 = vsyncadd [#allocation4], %s8241
      %s8243 = sshll.u32 [#allocation11], 4
      %s8244 = int_to_ptr.vmem [resolvable:$true] %s8243
      %8249 = dma.vmem_to_hbm [thread:$0]  %s8244, 13824, %s6, [#allocation4], 4608, 4608, 288
    $region49: #{tpu_custom_call.1} parent=1 // pred_fallthru
      _
    // Predicated region
    $region50: #{tpu_custom_call.1} parent=1 // pred_check
      _
    $region51: #{tpu_custom_call.1} parent=1 // pred_check_branch
      %8251 = sbr.rel (0) target = $region53
    $region52: #{tpu_custom_call.1} parent=1 // pred_region
      %8252 = dma.done [#allocation4], 13824
    $region53: #{tpu_custom_call.1} parent=1 // pred_fallthru
      _
    %8253 = vsyncpa [#allocation3], 1
    %8254 = vsyncpa [#allocation6], 1
    %8255 = vsyncpa [#allocation9], 1
    %8256 = vsyncpa [#allocation4], 1

</llo_original>
